<compile_context>
chip_gen: v7x
topology: tpu7x:2x2x1
jax: 0.10.0
libtpu: 0.0.40
codegen_flags: <defaults>
</compile_context>

<pallas_src>
import functools

import jax
import jax.numpy as jnp
from jax import lax
from jax.experimental import pallas as pl
from jax.experimental.pallas import tpu as pltpu


def _round_up(x, m):
    return (x + m - 1) // m * m


def _arm_kernel(xf_ref, mask_ref, w1_ref, b1_ref, wa_ref, s2_ref, b2_ref,
                out_ref, xs1_ref, xs2_ref, *, Wa, TL, NC, inv_hw):
    """One batch element per grid step.

    xf_ref:   (LF, Cin)   bf16  zero-padded image, flattened Hrows*Wa rows;
                                Wa (row pitch) is a multiple of 16 so every
                                dh*Wa offset below is sublane-aligned.
    mask_ref: (1, Lp)     bf16  1.0 for valid rows (r < H*Wa and r % Wa < W)
    w1_ref:   (9, Cin, Cp) bf16 3x3 taps, BN1 scale folded, Cout padded to Cp
    b1_ref:   (1, Cp)     f32   folded eval-mode BN1 bias
    wa_ref:   (Cp, Cp)    bf16  1x1 attention conv weight
    s2/b2:    (1, Cp)     f32   folded eval-mode BN2 scale / bias
    out_ref:  (Lp, Cp)    bf16  feat * sigmoid(att), padded-width row layout
    xs1/xs2:  (LR, Cin)   bf16  VMEM scratch: input shifted by 1 / 2 rows
    """
    # Build the dw = 1, 2 shifted views once (2 relayout copies per image
    # instead of one per tap); all later tap slices start at base + dh*Wa,
    # a multiple of 16, i.e. aligned and relayout-free.
    LR = xs1_ref.shape[0]
    xs1_ref[...] = xf_ref[pl.ds(1, LR), :]
    xs2_ref[...] = xf_ref[pl.ds(2, LR), :]
    srcs = (xf_ref, xs1_ref, xs2_ref)

    # 3x3 conv (bf16 MXU, f32 accumulate) + folded BN1 bias + ReLU, chunked
    # over rows so the accumulator stays a small hot tile.
    for c in range(NC):
        base = c * TL
        acc = None
        for dh in range(3):
            for dw in range(3):
                start = base + dh * Wa              # static, multiple of 16
                src = srcs[dw][start:start + TL, :]
                part = jnp.dot(src, w1_ref[3 * dh + dw],
                               preferred_element_type=jnp.float32)
                acc = part if acc is None else acc + part
        feat = jnp.maximum(acc + b1_ref[...], 0.0)   # (TL, Cp) f32
        out_ref[base:base + TL, :] = feat.astype(out_ref.dtype)

    # Global average pool over the H*W valid rows as one bf16 MXU matvec
    # (the mask zeroes padded-width columns and chunk-padding rows).
    psum = jnp.dot(mask_ref[...], out_ref[...],
                   preferred_element_type=jnp.float32)        # (1, Cp)
    pooled = psum * inv_hw

    # 1x1 attention conv + BN2 + sigmoid (tiny -> keep it in f32).
    att = jnp.dot(pooled, wa_ref[...].astype(jnp.float32),
                  preferred_element_type=jnp.float32)          # (1, Cp)
    att = jax.nn.sigmoid(att * s2_ref[...] + b2_ref[...])

    # Channel attention: rescale the staged feature map in place.
    out_ref[...] = (out_ref[...].astype(jnp.float32) * att).astype(out_ref.dtype)


def attention_refinement_module(x_nchw, params):
    """Forward pass. x_nchw: (N, Cin, H, W) f32 -> (N, Cout, H, W) f32."""
    w1, s1, b1, wa, s2, b2 = (params["w1"], params["s1"], params["b1"],
                              params["wa"], params["s2"], params["b2"])
    N, Cin, H, W = x_nchw.shape
    Cout = wa.shape[0]

    Wa = _round_up(W + 2, 16)        # row pitch, multiple of 16 (bf16 sublane)
    L = H * Wa                       # valid output rows (padded-width layout)
    TL = min(256, L)                 # rows per conv chunk (multiple of 16)
    NC = pl.cdiv(L, TL)
    Lp = NC * TL                     # output rows incl. chunk padding
    LR = Lp + 2 * Wa                 # rows needed of each dw-shifted view
    Hrows = pl.cdiv(LR + 2, Wa)      # padded image rows so 2 + LR <= LF
    LF = Hrows * Wa
    Cp = _round_up(Cout, 128)        # lane-dense output channels

    # --- glue: cast to bf16 FIRST, then a single pad + reshape ---
    xb = jnp.transpose(x_nchw.astype(jnp.bfloat16), (0, 2, 3, 1))  # N,H,W,Cin
    xb = jnp.pad(xb, ((0, 0), (1, Hrows - H - 1), (1, Wa - W - 1), (0, 0)))
    xf = xb.reshape(N, LF, Cin)                                    # (N,LF,Cin)

    # Pool mask: 1.0 on valid rows, bf16 so the pool is a bf16 MXU matvec.
    r = jnp.arange(Lp)
    mask = ((r < L) & ((r % Wa) < W)).astype(jnp.bfloat16).reshape(1, Lp)

    # Weights: fold BN1 scale into the conv taps (f32 fold, then bf16 cast),
    # pad Cout to Cp; BN biases/scales stay f32.
    cpad = Cp - Cout
    w1f = (w1 * s1[None, None, None, :]).reshape(9, Cin, Cout)
    w1f = jnp.pad(w1f, ((0, 0), (0, 0), (0, cpad))).astype(jnp.bfloat16)
    # NOTE: wa is stored (in_chan, out_chan); a PyTorch Conv2d 1x1 checkpoint
    # weight is (out, in, 1, 1) and must be transposed when porting weights.
    wa_p = jnp.pad(wa, ((0, cpad), (0, cpad))).astype(jnp.bfloat16)
    b1_p = jnp.pad(b1.reshape(1, Cout), ((0, 0), (0, cpad)))
    s2_p = jnp.pad(s2.reshape(1, Cout), ((0, 0), (0, cpad)))
    b2_p = jnp.pad(b2.reshape(1, Cout), ((0, 0), (0, cpad)))

    kernel = functools.partial(_arm_kernel, Wa=Wa, TL=TL, NC=NC,
                               inv_hw=1.0 / (H * W))

    out = pl.pallas_call(
        kernel,
        out_shape=jax.ShapeDtypeStruct((N, Lp, Cp), jnp.bfloat16),
        grid_spec=pltpu.PrefetchScalarGridSpec(
            num_scalar_prefetch=0,
            grid=(N,),
            in_specs=[
                pl.BlockSpec((None, LF, Cin), lambda n: (n, 0, 0)),
                pl.BlockSpec((1, Lp), lambda n: (0, 0)),
                pl.BlockSpec((9, Cin, Cp), lambda n: (0, 0, 0)),
                pl.BlockSpec((1, Cp), lambda n: (0, 0)),
                pl.BlockSpec((Cp, Cp), lambda n: (0, 0)),
                pl.BlockSpec((1, Cp), lambda n: (0, 0)),
                pl.BlockSpec((1, Cp), lambda n: (0, 0)),
            ],
            out_specs=pl.BlockSpec((None, Lp, Cp), lambda n: (n, 0, 0)),
            scratch_shapes=[pltpu.VMEM((LR, Cin), jnp.bfloat16),
                            pltpu.VMEM((LR, Cin), jnp.bfloat16)],
        ),
        # TODO(synk): batch-1 serving on v7x (2 TensorCores) would need a
        # two-pass L-tiled grid to engage both cores; batch >= 2 covers it.
        compiler_params=pltpu.CompilerParams(
            dimension_semantics=("parallel",)),
    )(xf, mask, w1f, b1_p, wa_p, s2_p, b2_p)

    # glue: drop chunk-pad rows, padded-width cols & padded channels -> NCHW,
    # cast to f32 in the same epilogue copy.
    out = out[:, :L, :].reshape(N, H, Wa, Cp)[:, :, :W, :Cout]
    return jnp.transpose(out, (0, 3, 1, 2)).astype(jnp.float32)


def init_params(key, in_chan, out_chan):
    """Kaiming-normal(a=1) convs (matching init_weight), eval-mode BatchNorm
    folded to per-channel scale/bias with non-identity stats."""
    k1, k2, k3, k4 = jax.random.split(key, 4)
    eps = 1e-5

    std1 = 1.0 / jnp.sqrt(in_chan * 9.0)          # fan_in = 9*Cin, gain(a=1)=1
    w1 = std1 * jax.random.normal(k1, (3, 3, in_chan, out_chan), jnp.float32)

    std2 = 1.0 / jnp.sqrt(float(out_chan))        # fan_in = Cout (1x1 conv)
    wa = std2 * jax.random.normal(k2, (out_chan, out_chan), jnp.float32)

    def fold_bn(k):
        kg, kb, km, kv = jax.random.split(k, 4)
        gamma = 1.0 + 0.2 * jax.random.normal(kg, (out_chan,), jnp.float32)
        beta = 0.1 * jax.random.normal(kb, (out_chan,), jnp.float32)
        mean = 0.1 * jax.random.normal(km, (out_chan,), jnp.float32)
        var = 1.0 + 0.2 * jax.random.uniform(kv, (out_chan,), jnp.float32)
        scale = gamma / jnp.sqrt(var + eps)
        return scale, beta - mean * scale

    s1, b1 = fold_bn(k3)
    s2, b2 = fold_bn(k4)
    return {"w1": w1, "s1": s1, "b1": b1, "wa": wa, "s2": s2, "b2": b2}


def reference(x_nchw, params):
    """Pure-JAX f32 reference of the PyTorch forward (eval-mode BN)."""
    w1, s1, b1, wa, s2, b2 = (params["w1"], params["s1"], params["b1"],
                              params["wa"], params["s2"], params["b2"])
    w_oihw = jnp.transpose(w1, (3, 2, 0, 1))                   # (Cout,Cin,3,3)
    conv = lax.conv_general_dilated(
        x_nchw, w_oihw, window_strides=(1, 1), padding="SAME",
        dimension_numbers=("NCHW", "OIHW", "NCHW"),
        precision=lax.Precision.HIGHEST)
    feat = jnp.maximum(conv * s1[None, :, None, None]
                       + b1[None, :, None, None], 0.0)
    att = jnp.mean(feat, axis=(2, 3))                          # (N, Cout)
    att = jnp.dot(att, wa, precision=lax.Precision.HIGHEST)    # 1x1 conv
    att = jax.nn.sigmoid(att * s2[None, :] + b2[None, :])
    return feat * att[:, :, None, None]


if __name__ == "__main__":
    N, Cin, Cout, H, W = 2, 4, 8, 16, 16

    key = jax.random.PRNGKey(0)
    kx, kp = jax.random.split(key)
    x = jax.random.normal(kx, (N, Cin, H, W), jnp.float32)
    params = init_params(kp, Cin, Cout)

    # Round the matmul operands to bf16-representable values so the f32
    # reference and the bf16-operand kernel compute (nearly) the same
    # function; residual error comes from folding s1 into bf16 weights and
    # from bf16 feature/output storage.
    x = x.astype(jnp.bfloat16).astype(jnp.float32)
    params["w1"] = params["w1"].astype(jnp.bfloat16).astype(jnp.float32)
    params["wa"] = params["wa"].astype(jnp.bfloat16).astype(jnp.float32)

    out = jax.block_until_ready(attention_refinement_module(x, params))
    ref = jax.block_until_ready(reference(x, params))

    assert out.shape == (N, Cout, H, W)
    max_err = float(jnp.max(jnp.abs(out - ref)))
    # bf16 feature/output storage + folded bf16 weights => ~1e-2-level error.
    assert jnp.allclose(out, ref, atol=3e-2, rtol=3e-2), max_err

    print("KERNEL_OK")
</pallas_src>

<mosaic_0001>
module attributes {stable_mosaic.version = 11 : i64} {
  func.func @_arm_kernel(%arg0: i32, %arg1: memref<1x608x4xbf16, #tpu.memory_space<vmem>>, %arg2: memref<1x512xbf16, #tpu.memory_space<vmem>>, %arg3: memref<9x4x128xbf16, #tpu.memory_space<vmem>>, %arg4: memref<1x128xf32, #tpu.memory_space<vmem>>, %arg5: memref<128x128xbf16, #tpu.memory_space<vmem>>, %arg6: memref<1x128xf32, #tpu.memory_space<vmem>>, %arg7: memref<1x128xf32, #tpu.memory_space<vmem>>, %arg8: memref<1x512x128xbf16, #tpu.memory_space<vmem>>, %arg9: memref<576x4xbf16, #tpu.memory_space<vmem>>, %arg10: memref<576x4xbf16, #tpu.memory_space<vmem>>) attributes {dimension_semantics = [#tpu.dimension_semantics<parallel>], iteration_bounds = array<i64: 2>, scalar_prefetch = 0 : i64, scratch_operands = 2 : i64, tpu.core_type = #tpu.core_type<tc>, window_params = [{transform_indices = @transform_0, window_bounds = array<i64: 1, 608, 4>}, {pipeline_mode = #tpu.pipeline_mode<synchronous>, transform_indices = @transform_1, window_bounds = array<i64: 1, 512>}, {pipeline_mode = #tpu.pipeline_mode<synchronous>, transform_indices = @transform_2, window_bounds = array<i64: 9, 4, 128>}, {pipeline_mode = #tpu.pipeline_mode<synchronous>, transform_indices = @transform_3, window_bounds = array<i64: 1, 128>}, {pipeline_mode = #tpu.pipeline_mode<synchronous>, transform_indices = @transform_4, window_bounds = array<i64: 128, 128>}, {pipeline_mode = #tpu.pipeline_mode<synchronous>, transform_indices = @transform_5, window_bounds = array<i64: 1, 128>}, {pipeline_mode = #tpu.pipeline_mode<synchronous>, transform_indices = @transform_6, window_bounds = array<i64: 1, 128>}, {transform_indices = @transform_7, window_bounds = array<i64: 1, 512, 128>}]} {
    %c0 = arith.constant 0 : index
    %c1 = arith.constant 1 : index
    %c0_0 = arith.constant 0 : index
    %0 = vector.load %arg1[%c0, %c1, %c0_0] : memref<1x608x4xbf16, #tpu.memory_space<vmem>>, vector<1x576x4xbf16>
    %1 = vector.shape_cast %0 : vector<1x576x4xbf16> to vector<576x4xbf16>
    %c0_1 = arith.constant 0 : index
    %c0_2 = arith.constant 0 : index
    %2 = vector.load %arg9[%c0_1, %c0_2] : memref<576x4xbf16, #tpu.memory_space<vmem>>, vector<576x4xbf16>
    tpu.vector_store %arg9[%c0_1, %c0_2], %1 {strides = array<i32>} : memref<576x4xbf16, #tpu.memory_space<vmem>>, vector<576x4xbf16>,
    %c0_3 = arith.constant 0 : index
    %c2 = arith.constant 2 : index
    %c0_4 = arith.constant 0 : index
    %3 = vector.load %arg1[%c0_3, %c2, %c0_4] : memref<1x608x4xbf16, #tpu.memory_space<vmem>>, vector<1x576x4xbf16>
    %4 = vector.shape_cast %3 : vector<1x576x4xbf16> to vector<576x4xbf16>
    %c0_5 = arith.constant 0 : index
    %c0_6 = arith.constant 0 : index
    %5 = vector.load %arg10[%c0_5, %c0_6] : memref<576x4xbf16, #tpu.memory_space<vmem>>, vector<576x4xbf16>
    tpu.vector_store %arg10[%c0_5, %c0_6], %4 {strides = array<i32>} : memref<576x4xbf16, #tpu.memory_space<vmem>>, vector<576x4xbf16>,
    %c0_7 = arith.constant 0 : index
    %c0_8 = arith.constant 0 : index
    %c0_9 = arith.constant 0 : index
    %6 = vector.load %arg1[%c0_7, %c0_8, %c0_9] : memref<1x608x4xbf16, #tpu.memory_space<vmem>>, vector<1x256x4xbf16>
    %7 = vector.shape_cast %6 : vector<1x256x4xbf16> to vector<256x4xbf16>
    %c0_10 = arith.constant 0 : index
    %c0_11 = arith.constant 0 : index
    %c0_12 = arith.constant 0 : index
    %8 = vector.load %arg3[%c0_10, %c0_11, %c0_12] : memref<9x4x128xbf16, #tpu.memory_space<vmem>>, vector<1x4x128xbf16>
    %9 = vector.shape_cast %8 : vector<1x4x128xbf16> to vector<4x128xbf16>
    %cst = arith.constant dense<0.000000e+00> : vector<256x128xf32>
    %10 = tpu.matmul %7, %9, %cst {dimension_numbers = #tpu.dot_dimension_numbers<[1], [0], [0], [1], [0, 0, 1, 1], [], []>} : vector<256x4xbf16>, vector<4x128xbf16>, vector<256x128xf32> -> vector<256x128xf32>
    %c0_13 = arith.constant 0 : index
    %c0_14 = arith.constant 0 : index
    %11 = vector.load %arg9[%c0_13, %c0_14] : memref<576x4xbf16, #tpu.memory_space<vmem>>, vector<256x4xbf16>
    %c1_15 = arith.constant 1 : index
    %c0_16 = arith.constant 0 : index
    %c0_17 = arith.constant 0 : index
    %12 = vector.load %arg3[%c1_15, %c0_16, %c0_17] : memref<9x4x128xbf16, #tpu.memory_space<vmem>>, vector<1x4x128xbf16>
    %13 = vector.shape_cast %12 : vector<1x4x128xbf16> to vector<4x128xbf16>
    %cst_18 = arith.constant dense<0.000000e+00> : vector<256x128xf32>
    %14 = tpu.matmul %11, %13, %cst_18 {dimension_numbers = #tpu.dot_dimension_numbers<[1], [0], [0], [1], [0, 0, 1, 1], [], []>} : vector<256x4xbf16>, vector<4x128xbf16>, vector<256x128xf32> -> vector<256x128xf32>
    %15 = arith.addf %10, %14 : vector<256x128xf32>
    %c0_19 = arith.constant 0 : index
    %c0_20 = arith.constant 0 : index
    %16 = vector.load %arg10[%c0_19, %c0_20] : memref<576x4xbf16, #tpu.memory_space<vmem>>, vector<256x4xbf16>
    %c2_21 = arith.constant 2 : index
    %c0_22 = arith.constant 0 : index
    %c0_23 = arith.constant 0 : index
    %17 = vector.load %arg3[%c2_21, %c0_22, %c0_23] : memref<9x4x128xbf16, #tpu.memory_space<vmem>>, vector<1x4x128xbf16>
    %18 = vector.shape_cast %17 : vector<1x4x128xbf16> to vector<4x128xbf16>
    %cst_24 = arith.constant dense<0.000000e+00> : vector<256x128xf32>
    %19 = tpu.matmul %16, %18, %cst_24 {dimension_numbers = #tpu.dot_dimension_numbers<[1], [0], [0], [1], [0, 0, 1, 1], [], []>} : vector<256x4xbf16>, vector<4x128xbf16>, vector<256x128xf32> -> vector<256x128xf32>
    %20 = arith.addf %15, %19 : vector<256x128xf32>
    %c0_25 = arith.constant 0 : index
    %c32 = arith.constant 32 : index
    %c0_26 = arith.constant 0 : index
    %21 = vector.load %arg1[%c0_25, %c32, %c0_26] : memref<1x608x4xbf16, #tpu.memory_space<vmem>>, vector<1x256x4xbf16>
    %22 = vector.shape_cast %21 : vector<1x256x4xbf16> to vector<256x4xbf16>
    %c3 = arith.constant 3 : index
    %c0_27 = arith.constant 0 : index
    %c0_28 = arith.constant 0 : index
    %23 = vector.load %arg3[%c3, %c0_27, %c0_28] : memref<9x4x128xbf16, #tpu.memory_space<vmem>>, vector<1x4x128xbf16>
    %24 = vector.shape_cast %23 : vector<1x4x128xbf16> to vector<4x128xbf16>
    %cst_29 = arith.constant dense<0.000000e+00> : vector<256x128xf32>
    %25 = tpu.matmul %22, %24, %cst_29 {dimension_numbers = #tpu.dot_dimension_numbers<[1], [0], [0], [1], [0, 0, 1, 1], [], []>} : vector<256x4xbf16>, vector<4x128xbf16>, vector<256x128xf32> -> vector<256x128xf32>
    %26 = arith.addf %20, %25 : vector<256x128xf32>
    %c32_30 = arith.constant 32 : index
    %c0_31 = arith.constant 0 : index
    %27 = vector.load %arg9[%c32_30, %c0_31] : memref<576x4xbf16, #tpu.memory_space<vmem>>, vector<256x4xbf16>
    %c4 = arith.constant 4 : index
    %c0_32 = arith.constant 0 : index
    %c0_33 = arith.constant 0 : index
    %28 = vector.load %arg3[%c4, %c0_32, %c0_33] : memref<9x4x128xbf16, #tpu.memory_space<vmem>>, vector<1x4x128xbf16>
    %29 = vector.shape_cast %28 : vector<1x4x128xbf16> to vector<4x128xbf16>
    %cst_34 = arith.constant dense<0.000000e+00> : vector<256x128xf32>
    %30 = tpu.matmul %27, %29, %cst_34 {dimension_numbers = #tpu.dot_dimension_numbers<[1], [0], [0], [1], [0, 0, 1, 1], [], []>} : vector<256x4xbf16>, vector<4x128xbf16>, vector<256x128xf32> -> vector<256x128xf32>
    %31 = arith.addf %26, %30 : vector<256x128xf32>
    %c32_35 = arith.constant 32 : index
    %c0_36 = arith.constant 0 : index
    %32 = vector.load %arg10[%c32_35, %c0_36] : memref<576x4xbf16, #tpu.memory_space<vmem>>, vector<256x4xbf16>
    %c5 = arith.constant 5 : index
    %c0_37 = arith.constant 0 : index
    %c0_38 = arith.constant 0 : index
    %33 = vector.load %arg3[%c5, %c0_37, %c0_38] : memref<9x4x128xbf16, #tpu.memory_space<vmem>>, vector<1x4x128xbf16>
    %34 = vector.shape_cast %33 : vector<1x4x128xbf16> to vector<4x128xbf16>
    %cst_39 = arith.constant dense<0.000000e+00> : vector<256x128xf32>
    %35 = tpu.matmul %32, %34, %cst_39 {dimension_numbers = #tpu.dot_dimension_numbers<[1], [0], [0], [1], [0, 0, 1, 1], [], []>} : vector<256x4xbf16>, vector<4x128xbf16>, vector<256x128xf32> -> vector<256x128xf32>
    %36 = arith.addf %31, %35 : vector<256x128xf32>
    %c0_40 = arith.constant 0 : index
    %c64 = arith.constant 64 : index
    %c0_41 = arith.constant 0 : index
    %37 = vector.load %arg1[%c0_40, %c64, %c0_41] : memref<1x608x4xbf16, #tpu.memory_space<vmem>>, vector<1x256x4xbf16>
    %38 = vector.shape_cast %37 : vector<1x256x4xbf16> to vector<256x4xbf16>
    %c6 = arith.constant 6 : index
    %c0_42 = arith.constant 0 : index
    %c0_43 = arith.constant 0 : index
    %39 = vector.load %arg3[%c6, %c0_42, %c0_43] : memref<9x4x128xbf16, #tpu.memory_space<vmem>>, vector<1x4x128xbf16>
    %40 = vector.shape_cast %39 : vector<1x4x128xbf16> to vector<4x128xbf16>
    %cst_44 = arith.constant dense<0.000000e+00> : vector<256x128xf32>
    %41 = tpu.matmul %38, %40, %cst_44 {dimension_numbers = #tpu.dot_dimension_numbers<[1], [0], [0], [1], [0, 0, 1, 1], [], []>} : vector<256x4xbf16>, vector<4x128xbf16>, vector<256x128xf32> -> vector<256x128xf32>
    %42 = arith.addf %36, %41 : vector<256x128xf32>
    %c64_45 = arith.constant 64 : index
    %c0_46 = arith.constant 0 : index
    %43 = vector.load %arg9[%c64_45, %c0_46] : memref<576x4xbf16, #tpu.memory_space<vmem>>, vector<256x4xbf16>
    %c7 = arith.constant 7 : index
    %c0_47 = arith.constant 0 : index
    %c0_48 = arith.constant 0 : index
    %44 = vector.load %arg3[%c7, %c0_47, %c0_48] : memref<9x4x128xbf16, #tpu.memory_space<vmem>>, vector<1x4x128xbf16>
    %45 = vector.shape_cast %44 : vector<1x4x128xbf16> to vector<4x128xbf16>
    %cst_49 = arith.constant dense<0.000000e+00> : vector<256x128xf32>
    %46 = tpu.matmul %43, %45, %cst_49 {dimension_numbers = #tpu.dot_dimension_numbers<[1], [0], [0], [1], [0, 0, 1, 1], [], []>} : vector<256x4xbf16>, vector<4x128xbf16>, vector<256x128xf32> -> vector<256x128xf32>
    %47 = arith.addf %42, %46 : vector<256x128xf32>
    %c64_50 = arith.constant 64 : index
    %c0_51 = arith.constant 0 : index
    %48 = vector.load %arg10[%c64_50, %c0_51] : memref<576x4xbf16, #tpu.memory_space<vmem>>, vector<256x4xbf16>
    %c8 = arith.constant 8 : index
    %c0_52 = arith.constant 0 : index
    %c0_53 = arith.constant 0 : index
    %49 = vector.load %arg3[%c8, %c0_52, %c0_53] : memref<9x4x128xbf16, #tpu.memory_space<vmem>>, vector<1x4x128xbf16>
    %50 = vector.shape_cast %49 : vector<1x4x128xbf16> to vector<4x128xbf16>
    %cst_54 = arith.constant dense<0.000000e+00> : vector<256x128xf32>
    %51 = tpu.matmul %48, %50, %cst_54 {dimension_numbers = #tpu.dot_dimension_numbers<[1], [0], [0], [1], [0, 0, 1, 1], [], []>} : vector<256x4xbf16>, vector<4x128xbf16>, vector<256x128xf32> -> vector<256x128xf32>
    %52 = arith.addf %47, %51 : vector<256x128xf32>
    %c0_55 = arith.constant 0 : index
    %c0_56 = arith.constant 0 : index
    %53 = vector.load %arg4[%c0_55, %c0_56] : memref<1x128xf32, #tpu.memory_space<vmem>>, vector<1x128xf32>
    %54 = vector.broadcast %53 : vector<1x128xf32> to vector<256x128xf32>
    %55 = arith.addf %52, %54 : vector<256x128xf32>
    %cst_57 = arith.constant 0.000000e+00 : f32
    %56 = vector.broadcast %cst_57 : f32 to vector<256x128xf32>
    %57 = arith.maximumf %55, %56 : vector<256x128xf32>
    %58 = arith.truncf %57 : vector<256x128xf32> to vector<256x128xbf16>
    %c0_58 = arith.constant 0 : index
    %c0_59 = arith.constant 0 : index
    %c0_60 = arith.constant 0 : index
    %59 = vector.load %arg8[%c0_58, %c0_59, %c0_60] : memref<1x512x128xbf16, #tpu.memory_space<vmem>>, vector<1x256x128xbf16>
    %60 = vector.shape_cast %59 : vector<1x256x128xbf16> to vector<256x128xbf16>
    %61 = vector.shape_cast %58 : vector<256x128xbf16> to vector<1x256x128xbf16>
    tpu.vector_store %arg8[%c0_58, %c0_59, %c0_60], %61 {strides = array<i32>} : memref<1x512x128xbf16, #tpu.memory_space<vmem>>, vector<1x256x128xbf16>,
    %c0_61 = arith.constant 0 : index
    %c256 = arith.constant 256 : index
    %c0_62 = arith.constant 0 : index
    %62 = vector.load %arg1[%c0_61, %c256, %c0_62] : memref<1x608x4xbf16, #tpu.memory_space<vmem>>, vector<1x256x4xbf16>
    %63 = vector.shape_cast %62 : vector<1x256x4xbf16> to vector<256x4xbf16>
    %c0_63 = arith.constant 0 : index
    %c0_64 = arith.constant 0 : index
    %c0_65 = arith.constant 0 : index
    %64 = vector.load %arg3[%c0_63, %c0_64, %c0_65] : memref<9x4x128xbf16, #tpu.memory_space<vmem>>, vector<1x4x128xbf16>
    %65 = vector.shape_cast %64 : vector<1x4x128xbf16> to vector<4x128xbf16>
    %cst_66 = arith.constant dense<0.000000e+00> : vector<256x128xf32>
    %66 = tpu.matmul %63, %65, %cst_66 {dimension_numbers = #tpu.dot_dimension_numbers<[1], [0], [0], [1], [0, 0, 1, 1], [], []>} : vector<256x4xbf16>, vector<4x128xbf16>, vector<256x128xf32> -> vector<256x128xf32>
    %c256_67 = arith.constant 256 : index
    %c0_68 = arith.constant 0 : index
    %67 = vector.load %arg9[%c256_67, %c0_68] : memref<576x4xbf16, #tpu.memory_space<vmem>>, vector<256x4xbf16>
    %c1_69 = arith.constant 1 : index
    %c0_70 = arith.constant 0 : index
    %c0_71 = arith.constant 0 : index
    %68 = vector.load %arg3[%c1_69, %c0_70, %c0_71] : memref<9x4x128xbf16, #tpu.memory_space<vmem>>, vector<1x4x128xbf16>
    %69 = vector.shape_cast %68 : vector<1x4x128xbf16> to vector<4x128xbf16>
    %cst_72 = arith.constant dense<0.000000e+00> : vector<256x128xf32>
    %70 = tpu.matmul %67, %69, %cst_72 {dimension_numbers = #tpu.dot_dimension_numbers<[1], [0], [0], [1], [0, 0, 1, 1], [], []>} : vector<256x4xbf16>, vector<4x128xbf16>, vector<256x128xf32> -> vector<256x128xf32>
    %71 = arith.addf %66, %70 : vector<256x128xf32>
    %c256_73 = arith.constant 256 : index
    %c0_74 = arith.constant 0 : index
    %72 = vector.load %arg10[%c256_73, %c0_74] : memref<576x4xbf16, #tpu.memory_space<vmem>>, vector<256x4xbf16>
    %c2_75 = arith.constant 2 : index
    %c0_76 = arith.constant 0 : index
    %c0_77 = arith.constant 0 : index
    %73 = vector.load %arg3[%c2_75, %c0_76, %c0_77] : memref<9x4x128xbf16, #tpu.memory_space<vmem>>, vector<1x4x128xbf16>
    %74 = vector.shape_cast %73 : vector<1x4x128xbf16> to vector<4x128xbf16>
    %cst_78 = arith.constant dense<0.000000e+00> : vector<256x128xf32>
    %75 = tpu.matmul %72, %74, %cst_78 {dimension_numbers = #tpu.dot_dimension_numbers<[1], [0], [0], [1], [0, 0, 1, 1], [], []>} : vector<256x4xbf16>, vector<4x128xbf16>, vector<256x128xf32> -> vector<256x128xf32>
    %76 = arith.addf %71, %75 : vector<256x128xf32>
    %c0_79 = arith.constant 0 : index
    %c288 = arith.constant 288 : index
    %c0_80 = arith.constant 0 : index
    %77 = vector.load %arg1[%c0_79, %c288, %c0_80] : memref<1x608x4xbf16, #tpu.memory_space<vmem>>, vector<1x256x4xbf16>
    %78 = vector.shape_cast %77 : vector<1x256x4xbf16> to vector<256x4xbf16>
    %c3_81 = arith.constant 3 : index
    %c0_82 = arith.constant 0 : index
    %c0_83 = arith.constant 0 : index
    %79 = vector.load %arg3[%c3_81, %c0_82, %c0_83] : memref<9x4x128xbf16, #tpu.memory_space<vmem>>, vector<1x4x128xbf16>
    %80 = vector.shape_cast %79 : vector<1x4x128xbf16> to vector<4x128xbf16>
    %cst_84 = arith.constant dense<0.000000e+00> : vector<256x128xf32>
    %81 = tpu.matmul %78, %80, %cst_84 {dimension_numbers = #tpu.dot_dimension_numbers<[1], [0], [0], [1], [0, 0, 1, 1], [], []>} : vector<256x4xbf16>, vector<4x128xbf16>, vector<256x128xf32> -> vector<256x128xf32>
    %82 = arith.addf %76, %81 : vector<256x128xf32>
    %c288_85 = arith.constant 288 : index
    %c0_86 = arith.constant 0 : index
    %83 = vector.load %arg9[%c288_85, %c0_86] : memref<576x4xbf16, #tpu.memory_space<vmem>>, vector<256x4xbf16>
    %c4_87 = arith.constant 4 : index
    %c0_88 = arith.constant 0 : index
    %c0_89 = arith.constant 0 : index
    %84 = vector.load %arg3[%c4_87, %c0_88, %c0_89] : memref<9x4x128xbf16, #tpu.memory_space<vmem>>, vector<1x4x128xbf16>
    %85 = vector.shape_cast %84 : vector<1x4x128xbf16> to vector<4x128xbf16>
    %cst_90 = arith.constant dense<0.000000e+00> : vector<256x128xf32>
    %86 = tpu.matmul %83, %85, %cst_90 {dimension_numbers = #tpu.dot_dimension_numbers<[1], [0], [0], [1], [0, 0, 1, 1], [], []>} : vector<256x4xbf16>, vector<4x128xbf16>, vector<256x128xf32> -> vector<256x128xf32>
    %87 = arith.addf %82, %86 : vector<256x128xf32>
    %c288_91 = arith.constant 288 : index
    %c0_92 = arith.constant 0 : index
    %88 = vector.load %arg10[%c288_91, %c0_92] : memref<576x4xbf16, #tpu.memory_space<vmem>>, vector<256x4xbf16>
    %c5_93 = arith.constant 5 : index
    %c0_94 = arith.constant 0 : index
    %c0_95 = arith.constant 0 : index
    %89 = vector.load %arg3[%c5_93, %c0_94, %c0_95] : memref<9x4x128xbf16, #tpu.memory_space<vmem>>, vector<1x4x128xbf16>
    %90 = vector.shape_cast %89 : vector<1x4x128xbf16> to vector<4x128xbf16>
    %cst_96 = arith.constant dense<0.000000e+00> : vector<256x128xf32>
    %91 = tpu.matmul %88, %90, %cst_96 {dimension_numbers = #tpu.dot_dimension_numbers<[1], [0], [0], [1], [0, 0, 1, 1], [], []>} : vector<256x4xbf16>, vector<4x128xbf16>, vector<256x128xf32> -> vector<256x128xf32>
    %92 = arith.addf %87, %91 : vector<256x128xf32>
    %c0_97 = arith.constant 0 : index
    %c320 = arith.constant 320 : index
    %c0_98 = arith.constant 0 : index
    %93 = vector.load %arg1[%c0_97, %c320, %c0_98] : memref<1x608x4xbf16, #tpu.memory_space<vmem>>, vector<1x256x4xbf16>
    %94 = vector.shape_cast %93 : vector<1x256x4xbf16> to vector<256x4xbf16>
    %c6_99 = arith.constant 6 : index
    %c0_100 = arith.constant 0 : index
    %c0_101 = arith.constant 0 : index
    %95 = vector.load %arg3[%c6_99, %c0_100, %c0_101] : memref<9x4x128xbf16, #tpu.memory_space<vmem>>, vector<1x4x128xbf16>
    %96 = vector.shape_cast %95 : vector<1x4x128xbf16> to vector<4x128xbf16>
    %cst_102 = arith.constant dense<0.000000e+00> : vector<256x128xf32>
    %97 = tpu.matmul %94, %96, %cst_102 {dimension_numbers = #tpu.dot_dimension_numbers<[1], [0], [0], [1], [0, 0, 1, 1], [], []>} : vector<256x4xbf16>, vector<4x128xbf16>, vector<256x128xf32> -> vector<256x128xf32>
    %98 = arith.addf %92, %97 : vector<256x128xf32>
    %c320_103 = arith.constant 320 : index
    %c0_104 = arith.constant 0 : index
    %99 = vector.load %arg9[%c320_103, %c0_104] : memref<576x4xbf16, #tpu.memory_space<vmem>>, vector<256x4xbf16>
    %c7_105 = arith.constant 7 : index
    %c0_106 = arith.constant 0 : index
    %c0_107 = arith.constant 0 : index
    %100 = vector.load %arg3[%c7_105, %c0_106, %c0_107] : memref<9x4x128xbf16, #tpu.memory_space<vmem>>, vector<1x4x128xbf16>
    %101 = vector.shape_cast %100 : vector<1x4x128xbf16> to vector<4x128xbf16>
    %cst_108 = arith.constant dense<0.000000e+00> : vector<256x128xf32>
    %102 = tpu.matmul %99, %101, %cst_108 {dimension_numbers = #tpu.dot_dimension_numbers<[1], [0], [0], [1], [0, 0, 1, 1], [], []>} : vector<256x4xbf16>, vector<4x128xbf16>, vector<256x128xf32> -> vector<256x128xf32>
    %103 = arith.addf %98, %102 : vector<256x128xf32>
    %c320_109 = arith.constant 320 : index
    %c0_110 = arith.constant 0 : index
    %104 = vector.load %arg10[%c320_109, %c0_110] : memref<576x4xbf16, #tpu.memory_space<vmem>>, vector<256x4xbf16>
    %c8_111 = arith.constant 8 : index
    %c0_112 = arith.constant 0 : index
    %c0_113 = arith.constant 0 : index
    %105 = vector.load %arg3[%c8_111, %c0_112, %c0_113] : memref<9x4x128xbf16, #tpu.memory_space<vmem>>, vector<1x4x128xbf16>
    %106 = vector.shape_cast %105 : vector<1x4x128xbf16> to vector<4x128xbf16>
    %cst_114 = arith.constant dense<0.000000e+00> : vector<256x128xf32>
    %107 = tpu.matmul %104, %106, %cst_114 {dimension_numbers = #tpu.dot_dimension_numbers<[1], [0], [0], [1], [0, 0, 1, 1], [], []>} : vector<256x4xbf16>, vector<4x128xbf16>, vector<256x128xf32> -> vector<256x128xf32>
    %108 = arith.addf %103, %107 : vector<256x128xf32>
    %c0_115 = arith.constant 0 : index
    %c0_116 = arith.constant 0 : index
    %109 = vector.load %arg4[%c0_115, %c0_116] : memref<1x128xf32, #tpu.memory_space<vmem>>, vector<1x128xf32>
    %110 = vector.broadcast %109 : vector<1x128xf32> to vector<256x128xf32>
    %111 = arith.addf %108, %110 : vector<256x128xf32>
    %cst_117 = arith.constant 0.000000e+00 : f32
    %112 = vector.broadcast %cst_117 : f32 to vector<256x128xf32>
    %113 = arith.maximumf %111, %112 : vector<256x128xf32>
    %114 = arith.truncf %113 : vector<256x128xf32> to vector<256x128xbf16>
    %c0_118 = arith.constant 0 : index
    %c256_119 = arith.constant 256 : index
    %c0_120 = arith.constant 0 : index
    %115 = vector.load %arg8[%c0_118, %c256_119, %c0_120] : memref<1x512x128xbf16, #tpu.memory_space<vmem>>, vector<1x256x128xbf16>
    %116 = vector.shape_cast %115 : vector<1x256x128xbf16> to vector<256x128xbf16>
    %117 = vector.shape_cast %114 : vector<256x128xbf16> to vector<1x256x128xbf16>
    tpu.vector_store %arg8[%c0_118, %c256_119, %c0_120], %117 {strides = array<i32>} : memref<1x512x128xbf16, #tpu.memory_space<vmem>>, vector<1x256x128xbf16>,
    %c0_121 = arith.constant 0 : index
    %c0_122 = arith.constant 0 : index
    %118 = vector.load %arg2[%c0_121, %c0_122] : memref<1x512xbf16, #tpu.memory_space<vmem>>, vector<1x512xbf16>
    %c0_123 = arith.constant 0 : index
    %c0_124 = arith.constant 0 : index
    %c0_125 = arith.constant 0 : index
    %119 = vector.load %arg8[%c0_123, %c0_124, %c0_125] : memref<1x512x128xbf16, #tpu.memory_space<vmem>>, vector<1x512x128xbf16>
    %120 = vector.shape_cast %119 : vector<1x512x128xbf16> to vector<512x128xbf16>
    %cst_126 = arith.constant dense<0.000000e+00> : vector<1x128xf32>
    %121 = tpu.matmul %118, %120, %cst_126 {dimension_numbers = #tpu.dot_dimension_numbers<[1], [0], [0], [1], [0, 0, 1, 1], [], []>} : vector<1x512xbf16>, vector<512x128xbf16>, vector<1x128xf32> -> vector<1x128xf32>
    %cst_127 = arith.constant 3.906250e-03 : f32
    %122 = vector.broadcast %cst_127 : f32 to vector<1x128xf32>
    %123 = arith.mulf %121, %122 : vector<1x128xf32>
    %c0_128 = arith.constant 0 : index
    %c0_129 = arith.constant 0 : index
    %124 = vector.load %arg5[%c0_128, %c0_129] : memref<128x128xbf16, #tpu.memory_space<vmem>>, vector<128x128xbf16>
    %125 = arith.extf %124 : vector<128x128xbf16> to vector<128x128xf32>
    %cst_130 = arith.constant dense<0.000000e+00> : vector<1x128xf32>
    %126 = tpu.matmul %123, %125, %cst_130 {dimension_numbers = #tpu.dot_dimension_numbers<[1], [0], [0], [1], [0, 0, 1, 1], [], []>} : vector<1x128xf32>, vector<128x128xf32>, vector<1x128xf32> -> vector<1x128xf32>
    %c0_131 = arith.constant 0 : index
    %c0_132 = arith.constant 0 : index
    %127 = vector.load %arg6[%c0_131, %c0_132] : memref<1x128xf32, #tpu.memory_space<vmem>>, vector<1x128xf32>
    %128 = arith.mulf %126, %127 : vector<1x128xf32>
    %c0_133 = arith.constant 0 : index
    %c0_134 = arith.constant 0 : index
    %129 = vector.load %arg7[%c0_133, %c0_134] : memref<1x128xf32, #tpu.memory_space<vmem>>, vector<1x128xf32>
    %130 = arith.addf %128, %129 : vector<1x128xf32>
    %131 = arith.negf %130 : vector<1x128xf32>
    %132 = math.exp %131 : vector<1x128xf32>
    %cst_135 = arith.constant 1.000000e+00 : f32
    %133 = vector.broadcast %cst_135 : f32 to vector<1x128xf32>
    %134 = arith.addf %133, %132 : vector<1x128xf32>
    %135 = arith.divf %133, %134 : vector<1x128xf32>
    %c0_136 = arith.constant 0 : index
    %c0_137 = arith.constant 0 : index
    %c0_138 = arith.constant 0 : index
    %136 = vector.load %arg8[%c0_136, %c0_137, %c0_138] : memref<1x512x128xbf16, #tpu.memory_space<vmem>>, vector<1x512x128xbf16>
    %137 = vector.shape_cast %136 : vector<1x512x128xbf16> to vector<512x128xbf16>
    %138 = arith.extf %137 : vector<512x128xbf16> to vector<512x128xf32>
    %139 = vector.broadcast %135 : vector<1x128xf32> to vector<512x128xf32>
    %140 = arith.mulf %138, %139 : vector<512x128xf32>
    %141 = arith.truncf %140 : vector<512x128xf32> to vector<512x128xbf16>
    %c0_139 = arith.constant 0 : index
    %c0_140 = arith.constant 0 : index
    %c0_141 = arith.constant 0 : index
    %142 = vector.load %arg8[%c0_139, %c0_140, %c0_141] : memref<1x512x128xbf16, #tpu.memory_space<vmem>>, vector<1x512x128xbf16>
    %143 = vector.shape_cast %142 : vector<1x512x128xbf16> to vector<512x128xbf16>
    %144 = vector.shape_cast %141 : vector<512x128xbf16> to vector<1x512x128xbf16>
    tpu.vector_store %arg8[%c0_139, %c0_140, %c0_141], %144 {strides = array<i32>} : memref<1x512x128xbf16, #tpu.memory_space<vmem>>, vector<1x512x128xbf16>,
    return
  }
  func.func @transform_0(%arg0: i32) -> (i32, i32, i32) {
    %c0_i32 = arith.constant 0 : i32
    %c0_i32_0 = arith.constant 0 : i32
    %c0_i32_1 = arith.constant 0 : i32
    return %arg0, %c0_i32, %c0_i32_0 : i32, i32, i32
  }
  func.func @transform_1(%arg0: i32) -> (i32, i32) {
    %c0_i32 = arith.constant 0 : i32
    %c0_i32_0 = arith.constant 0 : i32
    %c0_i32_1 = arith.constant 0 : i32
    return %c0_i32, %c0_i32_0 : i32, i32
  }
  func.func @transform_2(%arg0: i32) -> (i32, i32, i32) {
    %c0_i32 = arith.constant 0 : i32
    %c0_i32_0 = arith.constant 0 : i32
    %c0_i32_1 = arith.constant 0 : i32
    %c0_i32_2 = arith.constant 0 : i32
    return %c0_i32, %c0_i32_0, %c0_i32_1 : i32, i32, i32
  }
  func.func @transform_3(%arg0: i32) -> (i32, i32) {
    %c0_i32 = arith.constant 0 : i32
    %c0_i32_0 = arith.constant 0 : i32
    %c0_i32_1 = arith.constant 0 : i32
    return %c0_i32, %c0_i32_0 : i32, i32
  }
  func.func @transform_4(%arg0: i32) -> (i32, i32) {
    %c0_i32 = arith.constant 0 : i32
    %c0_i32_0 = arith.constant 0 : i32
    %c0_i32_1 = arith.constant 0 : i32
    return %c0_i32, %c0_i32_0 : i32, i32
  }
  func.func @transform_5(%arg0: i32) -> (i32, i32) {
    %c0_i32 = arith.constant 0 : i32
    %c0_i32_0 = arith.constant 0 : i32
    %c0_i32_1 = arith.constant 0 : i32
    return %c0_i32, %c0_i32_0 : i32, i32
  }
  func.func @transform_6(%arg0: i32) -> (i32, i32) {
    %c0_i32 = arith.constant 0 : i32
    %c0_i32_0 = arith.constant 0 : i32
    %c0_i32_1 = arith.constant 0 : i32
    return %c0_i32, %c0_i32_0 : i32, i32
  }
  func.func @transform_7(%arg0: i32) -> (i32, i32, i32) {
    %c0_i32 = arith.constant 0 : i32
    %c0_i32_0 = arith.constant 0 : i32
    %c0_i32_1 = arith.constant 0 : i32
    return %arg0, %c0_i32, %c0_i32_0 : i32, i32, i32
  }
}

</mosaic_0001>

<llo_original>
// kernel: tpu_custom_call.1
$region0: #{tpu_custom_call.1}
  #allocation0 [shape = 'u32[]', space=smem, size = 0x4, offset = 0x4, fixed_abs, tag = 'smem constant byte address 0x4 - core index']
  #allocation1 [shape = 'u32[144,128]{1,0:T(1,128)}', space=vmem, size = 0x12000, scoped, tag = 'internal scratch']
  #allocation2 [shape = 'bf16[576,4]{1,0:T(16,128)(2,1)}', space=vmem, size = 0x24000, scoped, tag = 'scratch operand']
  #allocation3 [shape = 'bf16[576,4]{1,0:T(16,128)(2,1)}', space=vmem, size = 0x24000, scoped, tag = 'scratch operand']
  %s0 = inlined_call_operand.vmem [shape: bf16[2,608,4], index: 0, kind: input, shape index: {}]
  %s1 = inlined_call_operand.vmem [shape: bf16[1,512], index: 1, kind: input, shape index: {}]
  %s2 = inlined_call_operand.vmem [shape: bf16[9,4,128], index: 2, kind: input, shape index: {}]
  %s3 = inlined_call_operand.vmem [shape: f32[1,128], index: 3, kind: input, shape index: {}]
  %s4 = inlined_call_operand.vmem [shape: bf16[128,128], index: 4, kind: input, shape index: {}]
  %s5 = inlined_call_operand.vmem [shape: f32[1,128], index: 5, kind: input, shape index: {}]
  %s6 = inlined_call_operand.vmem [shape: f32[1,128], index: 6, kind: input, shape index: {}]
  %s7 = inlined_call_operand.hbm [shape: bf16[2,512,128], index: 7, kind: output, shape index: {}]
  %s8 = sld [smem:[#allocation0]]
  $region61: #{tpu_custom_call.1} parent=0
    _
  %s10 = ssub.s32 1, %s8
  %s11 = scalar_select 0, %s10, %s8
  $region1: #{tpu_custom_call.1} parent=0
    #allocation4 [shape = 'u8[262144]{0}', space=vmem, size = 0x40000, scoped, tag = 'output window, operand 0']
    #allocation5 [shape = 's32[2]{0}', space=sflag, size = 0x8, scoped, tag = 'scoped memory for tpu_custom_call.1']
    %12 = vsyncpa [#allocation5], 0
    %s13 = scalar_lea.sflag [#allocation5], 1
    %14 = vsyncpa %s13, 0
    loop: start=0, step=1, limit=4
    $region2: #{tpu_custom_call.1} parent=1 // loop_pre_header
      _
    $region3: #{tpu_custom_call.1} parent=1 // loop_header
      %s16 = sphi 0, %s20
      %p17 = scmp.ge.s32.totalorder %s16, 4
      %s26 = sphi 0, %s28
      %s29 = sphi 0, %s26
      %s30 = sphi 0, %s29
      %s46 = sphi 0, %s30
      %s50 = sphi 0, %s50
      %s52 = sphi 0, %s50
      %s53 = sphi 0, %s52
      %s67 = sphi 0, %s53
      %s71 = sphi 0, %s71
      %s73 = sphi 0, %s71
      %s74 = sphi 0, %s73
      %s88 = sphi 0, %s74
      %s92 = sphi 0, %s92
      %s94 = sphi 0, %s92
      %s95 = sphi 0, %s94
      %s109 = sphi 0, %s95
      %s113 = sphi 0, %s113
      %s115 = sphi 0, %s113
      %s116 = sphi 0, %s115
      %s130 = sphi 0, %s116
      %s134 = sphi 0, %s134
      %s136 = sphi 0, %s134
      %s137 = sphi 0, %s136
      %s151 = sphi 0, %s137
      %s155 = sphi 0, %s155
      %s157 = sphi 0, %s155
      %s158 = sphi 0, %s157
      %s172 = sphi 0, %s158
      %s178 = sphi 0, %s180
      %s181 = sphi 0, %s178
      %s182 = sphi 0, %s181
      %s198 = sphi 0, %s182
    $region4: #{tpu_custom_call.1} parent=1 // loop_header_branch
      %19 = sbr.rel (%p17) target = $region8
    $region5: #{tpu_custom_call.1} parent=1 // loop_body
      %s21 = ssub.s32 %s16, 1
      %s22 = ssub.s32 %s16, 2
      %s23 = sadd.s32 %s16, 1
      %s24 = ssub.s32 %s16, %s23
      %p25 = scmp.eq.s32.totalorder %s24, 0
      %s27 = sadd.s32 %s26, 1
      %s28 = scalar_select %p25, %s26, %s27
      %p31 = pneg %p25
      %p32 = scmp.eq.s32.totalorder %s16, 1
      %p33 = por %p31, %p32
      %p34 = scmp.ne.s32.totalorder %s26, %s29
      %p35 = scmp.eq.s32.totalorder %s16, 0
      %p36 = por %p34, %p35
      %p37 = scmp.ne.s32.totalorder %s26, %s29
      %p38 = scmp.eq.s32.totalorder %s21, 1
      %p39 = por %p37, %p38
      %p40 = scmp.ne.s32.totalorder %s29, %s30
      %p41 = scmp.eq.s32.totalorder %s21, 0
      %p42 = por %p40, %p41
      %p43 = scmp.ne.s32.totalorder %s29, %s30
      %p44 = scmp.eq.s32.totalorder %s22, 1
      %p45 = por %p43, %p44
      %p47 = scmp.ne.s32.totalorder %s30, %s46
      %p48 = scmp.eq.s32.totalorder %s22, 0
      %p49 = por %p47, %p48
      %s51 = sadd.s32 %s50, 1
      %p54 = scmp.eq.s32.totalorder %s16, 1
      %p55 = scmp.ne.s32.totalorder %s50, %s52
      %p56 = scmp.eq.s32.totalorder %s16, 0
      %p57 = por %p55, %p56
      %p58 = scmp.ne.s32.totalorder %s50, %s52
      %p59 = scmp.eq.s32.totalorder %s21, 1
      %p60 = por %p58, %p59
      %p61 = scmp.ne.s32.totalorder %s52, %s53
      %p62 = scmp.eq.s32.totalorder %s21, 0
      %p63 = por %p61, %p62
      %p64 = scmp.ne.s32.totalorder %s52, %s53
      %p65 = scmp.eq.s32.totalorder %s22, 1
      %p66 = por %p64, %p65
      %p68 = scmp.ne.s32.totalorder %s53, %s67
      %p69 = scmp.eq.s32.totalorder %s22, 0
      %p70 = por %p68, %p69
      %s72 = sadd.s32 %s71, 1
      %p75 = scmp.eq.s32.totalorder %s16, 1
      %p76 = scmp.ne.s32.totalorder %s71, %s73
      %p77 = scmp.eq.s32.totalorder %s16, 0
      %p78 = por %p76, %p77
      %p79 = scmp.ne.s32.totalorder %s71, %s73
      %p80 = scmp.eq.s32.totalorder %s21, 1
      %p81 = por %p79, %p80
      %p82 = scmp.ne.s32.totalorder %s73, %s74
      %p83 = scmp.eq.s32.totalorder %s21, 0
      %p84 = por %p82, %p83
      %p85 = scmp.ne.s32.totalorder %s73, %s74
      %p86 = scmp.eq.s32.totalorder %s22, 1
      %p87 = por %p85, %p86
      %p89 = scmp.ne.s32.totalorder %s74, %s88
      %p90 = scmp.eq.s32.totalorder %s22, 0
      %p91 = por %p89, %p90
      %s93 = sadd.s32 %s92, 1
      %p96 = scmp.eq.s32.totalorder %s16, 1
      %p97 = scmp.ne.s32.totalorder %s92, %s94
      %p98 = scmp.eq.s32.totalorder %s16, 0
      %p99 = por %p97, %p98
      %p100 = scmp.ne.s32.totalorder %s92, %s94
      %p101 = scmp.eq.s32.totalorder %s21, 1
      %p102 = por %p100, %p101
      %p103 = scmp.ne.s32.totalorder %s94, %s95
      %p104 = scmp.eq.s32.totalorder %s21, 0
      %p105 = por %p103, %p104
      %p106 = scmp.ne.s32.totalorder %s94, %s95
      %p107 = scmp.eq.s32.totalorder %s22, 1
      %p108 = por %p106, %p107
      %p110 = scmp.ne.s32.totalorder %s95, %s109
      %p111 = scmp.eq.s32.totalorder %s22, 0
      %p112 = por %p110, %p111
      %s114 = sadd.s32 %s113, 1
      %p117 = scmp.eq.s32.totalorder %s16, 1
      %p118 = scmp.ne.s32.totalorder %s113, %s115
      %p119 = scmp.eq.s32.totalorder %s16, 0
      %p120 = por %p118, %p119
      %p121 = scmp.ne.s32.totalorder %s113, %s115
      %p122 = scmp.eq.s32.totalorder %s21, 1
      %p123 = por %p121, %p122
      %p124 = scmp.ne.s32.totalorder %s115, %s116
      %p125 = scmp.eq.s32.totalorder %s21, 0
      %p126 = por %p124, %p125
      %p127 = scmp.ne.s32.totalorder %s115, %s116
      %p128 = scmp.eq.s32.totalorder %s22, 1
      %p129 = por %p127, %p128
      %p131 = scmp.ne.s32.totalorder %s116, %s130
      %p132 = scmp.eq.s32.totalorder %s22, 0
      %p133 = por %p131, %p132
      %s135 = sadd.s32 %s134, 1
      %p138 = scmp.eq.s32.totalorder %s16, 1
      %p139 = scmp.ne.s32.totalorder %s134, %s136
      %p140 = scmp.eq.s32.totalorder %s16, 0
      %p141 = por %p139, %p140
      %p142 = scmp.ne.s32.totalorder %s134, %s136
      %p143 = scmp.eq.s32.totalorder %s21, 1
      %p144 = por %p142, %p143
      %p145 = scmp.ne.s32.totalorder %s136, %s137
      %p146 = scmp.eq.s32.totalorder %s21, 0
      %p147 = por %p145, %p146
      %p148 = scmp.ne.s32.totalorder %s136, %s137
      %p149 = scmp.eq.s32.totalorder %s22, 1
      %p150 = por %p148, %p149
      %p152 = scmp.ne.s32.totalorder %s137, %s151
      %p153 = scmp.eq.s32.totalorder %s22, 0
      %p154 = por %p152, %p153
      %s156 = sadd.s32 %s155, 1
      %p159 = scmp.eq.s32.totalorder %s16, 1
      %p160 = scmp.ne.s32.totalorder %s155, %s157
      %p161 = scmp.eq.s32.totalorder %s16, 0
      %p162 = por %p160, %p161
      %p163 = scmp.ne.s32.totalorder %s155, %s157
      %p164 = scmp.eq.s32.totalorder %s21, 1
      %p165 = por %p163, %p164
      %p166 = scmp.ne.s32.totalorder %s157, %s158
      %p167 = scmp.eq.s32.totalorder %s21, 0
      %p168 = por %p166, %p167
      %p169 = scmp.ne.s32.totalorder %s157, %s158
      %p170 = scmp.eq.s32.totalorder %s22, 1
      %p171 = por %p169, %p170
      %p173 = scmp.ne.s32.totalorder %s158, %s172
      %p174 = scmp.eq.s32.totalorder %s22, 0
      %p175 = por %p173, %p174
      %s176 = ssub.s32 %s16, %s23
      %p177 = scmp.eq.s32.totalorder %s176, 0
      %s179 = sadd.s32 %s178, 1
      %s180 = scalar_select %p177, %s178, %s179
      %p183 = pneg %p177
      %p184 = scmp.eq.s32.totalorder %s16, 1
      %p185 = por %p183, %p184
      %p186 = scmp.ne.s32.totalorder %s178, %s181
      %p187 = scmp.eq.s32.totalorder %s16, 0
      %p188 = por %p186, %p187
      %p189 = scmp.ne.s32.totalorder %s178, %s181
      %p190 = scmp.eq.s32.totalorder %s21, 1
      %p191 = por %p189, %p190
      %p192 = scmp.ne.s32.totalorder %s181, %s182
      %p193 = scmp.eq.s32.totalorder %s21, 0
      %p194 = por %p192, %p193
      %p195 = scmp.ne.s32.totalorder %s181, %s182
      %p196 = scmp.eq.s32.totalorder %s22, 1
      %p197 = por %p195, %p196
      %p199 = scmp.ne.s32.totalorder %s182, %s198
      %p200 = scmp.eq.s32.totalorder %s22, 0
      %p201 = por %p199, %p200
      %p202 = scmp.le.s32.totalorder 1, %s16
      %p203 = scmp.lt.s32.totalorder %s16, 3
      %p204 = pnand %p202, %p203
      %p205 = pneg %p204
      // Predicated region
      $region9: #{tpu_custom_call.1} parent=5 // pred_check
        _
      $region10: #{tpu_custom_call.1} parent=5 // pred_check_branch
        %207 = sbr.rel (%p204) target = $region12
      $region11: #{tpu_custom_call.1} parent=5 // pred_region
        %s208 = ssub.s32 %s16, 1
        // Predicated region
        $region13: #{tpu_custom_call.1} parent=11 // pred_check
          %p209 = pneg %p63
        $region14: #{tpu_custom_call.1} parent=11 // pred_check_branch
          %211 = sbr.rel (%p209) target = $region16
        $region15: #{tpu_custom_call.1} parent=11 // pred_region
          _
        $region16: #{tpu_custom_call.1} parent=11 // pred_fallthru
          _
        // Predicated region
        $region17: #{tpu_custom_call.1} parent=11 // pred_check
          %p212 = pneg %p84
        $region18: #{tpu_custom_call.1} parent=11 // pred_check_branch
          %214 = sbr.rel (%p212) target = $region20
        $region19: #{tpu_custom_call.1} parent=11 // pred_region
          _
        $region20: #{tpu_custom_call.1} parent=11 // pred_fallthru
          _
        // Predicated region
        $region21: #{tpu_custom_call.1} parent=11 // pred_check
          %p215 = pneg %p105
        $region22: #{tpu_custom_call.1} parent=11 // pred_check_branch
          %217 = sbr.rel (%p215) target = $region24
        $region23: #{tpu_custom_call.1} parent=11 // pred_region
          _
        $region24: #{tpu_custom_call.1} parent=11 // pred_fallthru
          _
        // Predicated region
        $region25: #{tpu_custom_call.1} parent=11 // pred_check
          %p218 = pneg %p126
        $region26: #{tpu_custom_call.1} parent=11 // pred_check_branch
          %220 = sbr.rel (%p218) target = $region28
        $region27: #{tpu_custom_call.1} parent=11 // pred_region
          _
        $region28: #{tpu_custom_call.1} parent=11 // pred_fallthru
          _
        // Predicated region
        $region29: #{tpu_custom_call.1} parent=11 // pred_check
          %p221 = pneg %p147
        $region30: #{tpu_custom_call.1} parent=11 // pred_check_branch
          %223 = sbr.rel (%p221) target = $region32
        $region31: #{tpu_custom_call.1} parent=11 // pred_region
          _
        $region32: #{tpu_custom_call.1} parent=11 // pred_fallthru
          _
        // Predicated region
        $region33: #{tpu_custom_call.1} parent=11 // pred_check
          %p224 = pneg %p168
        $region34: #{tpu_custom_call.1} parent=11 // pred_check_branch
          %226 = sbr.rel (%p224) target = $region36
        $region35: #{tpu_custom_call.1} parent=11 // pred_region
          _
        $region36: #{tpu_custom_call.1} parent=11 // pred_fallthru
          _
      $region12: #{tpu_custom_call.1} parent=5 // pred_fallthru
        _
      %p227 = scmp.lt.s32.totalorder %s16, 2
      // Predicated region
      $region37: #{tpu_custom_call.1} parent=5 // pred_check
        %p228 = pneg %p227
      $region38: #{tpu_custom_call.1} parent=5 // pred_check_branch
        %230 = sbr.rel (%p228) target = $region40
      $region39: #{tpu_custom_call.1} parent=5 // pred_region
        // Predicated region
        $region41: #{tpu_custom_call.1} parent=39 // pred_check
          %p231 = pneg %p36
        $region42: #{tpu_custom_call.1} parent=39 // pred_check_branch
          %233 = sbr.rel (%p231) target = $region44
        $region43: #{tpu_custom_call.1} parent=39 // pred_region
          %p234 = scmp.lt.s32.totalorder %s16, 1
          %s235 = scalar_select %p234, %s16, 1
          %s236 = smul.addr %s235, 76
          %s237 = smul.addr %s236, 4
          %s238 = scalar_lea.vmem %s0, %s237
        $region44: #{tpu_custom_call.1} parent=39 // pred_fallthru
          _
      $region40: #{tpu_custom_call.1} parent=5 // pred_fallthru
        _
      %p239 = scmp.le.s32.totalorder 1, %s16
      %p240 = scmp.lt.s32.totalorder %s16, 3
      %p241 = pnand %p239, %p240
      %p242 = pneg %p241
      // Predicated region
      $region45: #{tpu_custom_call.1} parent=5 // pred_check
        _
      $region46: #{tpu_custom_call.1} parent=5 // pred_check_branch
        %244 = sbr.rel (%p241) target = $region48
      $region47: #{tpu_custom_call.1} parent=5 // pred_region
        %s245 = ssub.s32 %s16, 1
        %p246 = scmp.lt.s32.totalorder %s21, 1
        %s247 = scalar_select %p246, %s21, 1
        %s248 = smul.addr %s247, 76
        %s249 = smul.addr %s248, 4
        %s250 = scalar_lea.vmem %s0, %s249
        %p251 = pneg %p42
        %p252 = pneg %p39
        %p253 = pneg %p63
        %p254 = pneg %p60
        %p255 = pneg %p84
        %p256 = pneg %p81
        %p257 = pneg %p105
        %p258 = pneg %p102
        %p259 = pneg %p126
        %p260 = pneg %p123
        %p261 = pneg %p147
        %p262 = pneg %p144
        %p263 = pneg %p168
        %p264 = pneg %p165
        %p265 = pneg %p194
        %p266 = pneg %p191
        %s267 = sand.u32 %s181, 1
        %s268 = scalar_lea.sflag [#allocation5], %s267
        %s269 = sand.u32 %s181, 1
        %s270 = smul.addr %s269, 256
        %s271 = scalar_lea.vmem [#allocation4], %s270
        %p272 = scmp.lt.s32.totalorder %s21, 1
        %s273 = scalar_select %p272, %s21, 1
        %s274 = smul.addr %s273, 76
        %s275 = smul.addr %s274, 4
        %s276 = scalar_lea.vmem %s0, %s275
        %v278 = vld [vmem:[%s276] sm:$0xf]
        %v279 = vld [vmem:[%s276 + $0x4] sm:$0xf]
        %v280 = vld [vmem:[%s276 + $0x8] sm:$0xf]
        %v281 = vld [vmem:[%s276 + $0xc] sm:$0xf]
        %v282 = vld [vmem:[%s276 + $0x10] sm:$0xf]
        %v283 = vld [vmem:[%s276 + $0x14] sm:$0xf]
        %v284 = vld [vmem:[%s276 + $0x18] sm:$0xf]
        %v285 = vld [vmem:[%s276 + $0x1c] sm:$0xf]
        %v286 = vld [vmem:[%s276 + $0x20] sm:$0xf]
        %v287 = vld [vmem:[%s276 + $0x24] sm:$0xf]
        %v288 = vld [vmem:[%s276 + $0x28] sm:$0xf]
        %v289 = vld [vmem:[%s276 + $0x2c] sm:$0xf]
        %v290 = vld [vmem:[%s276 + $0x30] sm:$0xf]
        %v291 = vld [vmem:[%s276 + $0x34] sm:$0xf]
        %v292 = vld [vmem:[%s276 + $0x38] sm:$0xf]
        %v293 = vld [vmem:[%s276 + $0x3c] sm:$0xf]
        %v294 = vld [vmem:[%s276 + $0x40] sm:$0xf]
        %v295 = vld [vmem:[%s276 + $0x44] sm:$0xf]
        %v296 = vld [vmem:[%s276 + $0x48] sm:$0xf]
        %v297 = vld [vmem:[%s276 + $0x4c] sm:$0xf]
        %v298 = vld [vmem:[%s276 + $0x50] sm:$0xf]
        %v299 = vld [vmem:[%s276 + $0x54] sm:$0xf]
        %v300 = vld [vmem:[%s276 + $0x58] sm:$0xf]
        %v301 = vld [vmem:[%s276 + $0x5c] sm:$0xf]
        %v302 = vld [vmem:[%s276 + $0x60] sm:$0xf]
        %v303 = vld [vmem:[%s276 + $0x64] sm:$0xf]
        %v304 = vld [vmem:[%s276 + $0x68] sm:$0xf]
        %v305 = vld [vmem:[%s276 + $0x6c] sm:$0xf]
        %v306 = vld [vmem:[%s276 + $0x70] sm:$0xf]
        %v307 = vld [vmem:[%s276 + $0x74] sm:$0xf]
        %v308 = vld [vmem:[%s276 + $0x78] sm:$0xf]
        %v309 = vld [vmem:[%s276 + $0x7c] sm:$0xf]
        %v310 = vld [vmem:[%s276 + $0x80] sm:$0xf]
        %v311 = vld [vmem:[%s276 + $0x84] sm:$0xf]
        %v312 = vld [vmem:[%s276 + $0x88] sm:$0xf]
        %v313 = vld [vmem:[%s276 + $0x8c] sm:$0xf]
        %v314 = vld [vmem:[%s276 + $0x90] sm:$0xf]
        %v315 = vld [vmem:[%s276 + $0x94] sm:$0xf]
        %v316 = vld [vmem:[%s276 + $0x98] sm:$0xf]
        %v317 = vld [vmem:[%s276 + $0x9c] sm:$0xf]
        %v318 = vld [vmem:[%s276 + $0xa0] sm:$0xf]
        %v319 = vld [vmem:[%s276 + $0xa4] sm:$0xf]
        %v320 = vld [vmem:[%s276 + $0xa8] sm:$0xf]
        %v321 = vld [vmem:[%s276 + $0xac] sm:$0xf]
        %v322 = vld [vmem:[%s276 + $0xb0] sm:$0xf]
        %v323 = vld [vmem:[%s276 + $0xb4] sm:$0xf]
        %v324 = vld [vmem:[%s276 + $0xb8] sm:$0xf]
        %v325 = vld [vmem:[%s276 + $0xbc] sm:$0xf]
        %v326 = vld [vmem:[%s276 + $0xc0] sm:$0xf]
        %v327 = vld [vmem:[%s276 + $0xc4] sm:$0xf]
        %v328 = vld [vmem:[%s276 + $0xc8] sm:$0xf]
        %v329 = vld [vmem:[%s276 + $0xcc] sm:$0xf]
        %v330 = vld [vmem:[%s276 + $0xd0] sm:$0xf]
        %v331 = vld [vmem:[%s276 + $0xd4] sm:$0xf]
        %v332 = vld [vmem:[%s276 + $0xd8] sm:$0xf]
        %v333 = vld [vmem:[%s276 + $0xdc] sm:$0xf]
        %v334 = vld [vmem:[%s276 + $0xe0] sm:$0xf]
        %v335 = vld [vmem:[%s276 + $0xe4] sm:$0xf]
        %v336 = vld [vmem:[%s276 + $0xe8] sm:$0xf]
        %v337 = vld [vmem:[%s276 + $0xec] sm:$0xf]
        %v338 = vld [vmem:[%s276 + $0xf0] sm:$0xf]
        %v339 = vld [vmem:[%s276 + $0xf4] sm:$0xf]
        %v340 = vld [vmem:[%s276 + $0xf8] sm:$0xf]
        %v341 = vld [vmem:[%s276 + $0xfc] sm:$0xf]
        %v342 = vld [vmem:[%s276 + $0x100] sm:$0xf]
        %v343 = vld [vmem:[%s276 + $0x104] sm:$0xf]
        %v344 = vld [vmem:[%s276 + $0x108] sm:$0xf]
        %v345 = vld [vmem:[%s276 + $0x10c] sm:$0xf]
        %v346 = vld [vmem:[%s276 + $0x110] sm:$0xf]
        %v347 = vld [vmem:[%s276 + $0x114] sm:$0xf]
        %v348 = vld [vmem:[%s276 + $0x118] sm:$0xf]
        %v349 = vld [vmem:[%s276 + $0x11c] sm:$0xf]
        %v350 = vld [vmem:[%s276 + $0x120] sm:$0x1]
        %v424 = vunpack.c.l.b16 %v278
        %v425 = vunpack.c.l.b16 %v279
        %v426 = vunpack.c.l.b16 %v280
        %v427 = vunpack.c.l.b16 %v281
        %v428 = vunpack.c.l.b16 %v282
        %v429 = vunpack.c.l.b16 %v283
        %v430 = vunpack.c.l.b16 %v284
        %v431 = vunpack.c.l.b16 %v285
        %v432 = vunpack.c.l.b16 %v286
        %v433 = vunpack.c.l.b16 %v287
        %v434 = vunpack.c.l.b16 %v288
        %v435 = vunpack.c.l.b16 %v289
        %v436 = vunpack.c.l.b16 %v290
        %v437 = vunpack.c.l.b16 %v291
        %v438 = vunpack.c.l.b16 %v292
        %v439 = vunpack.c.l.b16 %v293
        %v440 = vunpack.c.l.b16 %v294
        %v441 = vunpack.c.l.b16 %v295
        %v442 = vunpack.c.l.b16 %v296
        %v443 = vunpack.c.l.b16 %v297
        %v444 = vunpack.c.l.b16 %v298
        %v445 = vunpack.c.l.b16 %v299
        %v446 = vunpack.c.l.b16 %v300
        %v447 = vunpack.c.l.b16 %v301
        %v448 = vunpack.c.l.b16 %v302
        %v449 = vunpack.c.l.b16 %v303
        %v450 = vunpack.c.l.b16 %v304
        %v451 = vunpack.c.l.b16 %v305
        %v452 = vunpack.c.l.b16 %v306
        %v453 = vunpack.c.l.b16 %v307
        %v454 = vunpack.c.l.b16 %v308
        %v455 = vunpack.c.l.b16 %v309
        %v456 = vunpack.c.l.b16 %v310
        %v457 = vunpack.c.l.b16 %v311
        %v458 = vunpack.c.l.b16 %v312
        %v459 = vunpack.c.l.b16 %v313
        %v460 = vunpack.c.l.b16 %v314
        %v461 = vunpack.c.l.b16 %v315
        %v462 = vunpack.c.l.b16 %v316
        %v463 = vunpack.c.l.b16 %v317
        %v464 = vunpack.c.l.b16 %v318
        %v465 = vunpack.c.l.b16 %v319
        %v466 = vunpack.c.l.b16 %v320
        %v467 = vunpack.c.l.b16 %v321
        %v468 = vunpack.c.l.b16 %v322
        %v469 = vunpack.c.l.b16 %v323
        %v470 = vunpack.c.l.b16 %v324
        %v471 = vunpack.c.l.b16 %v325
        %v472 = vunpack.c.l.b16 %v326
        %v473 = vunpack.c.l.b16 %v327
        %v474 = vunpack.c.l.b16 %v328
        %v475 = vunpack.c.l.b16 %v329
        %v476 = vunpack.c.l.b16 %v330
        %v477 = vunpack.c.l.b16 %v331
        %v478 = vunpack.c.l.b16 %v332
        %v479 = vunpack.c.l.b16 %v333
        %v480 = vunpack.c.l.b16 %v334
        %v481 = vunpack.c.l.b16 %v335
        %v482 = vunpack.c.l.b16 %v336
        %v483 = vunpack.c.l.b16 %v337
        %v484 = vunpack.c.l.b16 %v338
        %v485 = vunpack.c.l.b16 %v339
        %v486 = vunpack.c.l.b16 %v340
        %v487 = vunpack.c.l.b16 %v341
        %v488 = vunpack.c.l.b16 %v342
        %v489 = vunpack.c.l.b16 %v343
        %v490 = vunpack.c.l.b16 %v344
        %v491 = vunpack.c.l.b16 %v345
        %v492 = vunpack.c.l.b16 %v346
        %v493 = vunpack.c.l.b16 %v347
        %v494 = vunpack.c.l.b16 %v348
        %v495 = vunpack.c.l.b16 %v349
        %v496 = vunpack.c.l.b16 %v350
        %v497 = vpack.c.b16 %v425, %v424
        %v498 = vpack.c.b16 %v427, %v426
        %v499 = vpack.c.b16 %v429, %v428
        %v500 = vpack.c.b16 %v431, %v430
        %v501 = vpack.c.b16 %v433, %v432
        %v502 = vpack.c.b16 %v435, %v434
        %v503 = vpack.c.b16 %v437, %v436
        %v504 = vpack.c.b16 %v439, %v438
        %v505 = vpack.c.b16 %v441, %v440
        %v506 = vpack.c.b16 %v443, %v442
        %v507 = vpack.c.b16 %v445, %v444
        %v508 = vpack.c.b16 %v447, %v446
        %v509 = vpack.c.b16 %v449, %v448
        %v510 = vpack.c.b16 %v451, %v450
        %v511 = vpack.c.b16 %v453, %v452
        %v512 = vpack.c.b16 %v455, %v454
        %v513 = vpack.c.b16 %v457, %v456
        %v514 = vpack.c.b16 %v459, %v458
        %v515 = vpack.c.b16 %v461, %v460
        %v516 = vpack.c.b16 %v463, %v462
        %v517 = vpack.c.b16 %v465, %v464
        %v518 = vpack.c.b16 %v467, %v466
        %v519 = vpack.c.b16 %v469, %v468
        %v520 = vpack.c.b16 %v471, %v470
        %v521 = vpack.c.b16 %v473, %v472
        %v522 = vpack.c.b16 %v475, %v474
        %v523 = vpack.c.b16 %v477, %v476
        %v524 = vpack.c.b16 %v479, %v478
        %v525 = vpack.c.b16 %v481, %v480
        %v526 = vpack.c.b16 %v483, %v482
        %v527 = vpack.c.b16 %v485, %v484
        %v528 = vpack.c.b16 %v487, %v486
        %v529 = vpack.c.b16 %v489, %v488
        %v530 = vpack.c.b16 %v491, %v490
        %v531 = vpack.c.b16 %v493, %v492
        %v532 = vpack.c.b16 %v495, %v494
        %v533 = vpack.c.b16 %v496, %v496
        %vm534 = vsmask.f32 7424
        %v536 = vshrl.u32 %v497, 16
        %v538 = vshll.u32 %v497, 16
        %v540 = vrot.slane %v538, 1
        %v541 = vor.u32 %v536, %v540
        %v543 = vshll.u32 %v498, 16
        %v545 = vrot.slane %v543, 1
        %v546 = vsel %vm534, %v541, %v545
        %v547 = vshrl.u32 %v498, 16
        %v549 = vor.u32 %v547, %v545
        %v551 = vshll.u32 %v499, 16
        %v553 = vrot.slane %v551, 1
        %v554 = vsel %vm534, %v549, %v553
        %v555 = vshrl.u32 %v499, 16
        %v557 = vor.u32 %v555, %v553
        %v559 = vshll.u32 %v500, 16
        %v561 = vrot.slane %v559, 1
        %v562 = vsel %vm534, %v557, %v561
        %v563 = vshrl.u32 %v500, 16
        %v565 = vor.u32 %v563, %v561
        %v567 = vshll.u32 %v501, 16
        %v569 = vrot.slane %v567, 1
        %v570 = vsel %vm534, %v565, %v569
        %v571 = vshrl.u32 %v501, 16
        %v573 = vor.u32 %v571, %v569
        %v575 = vshll.u32 %v502, 16
        %v577 = vrot.slane %v575, 1
        %v578 = vsel %vm534, %v573, %v577
        %v579 = vshrl.u32 %v502, 16
        %v581 = vor.u32 %v579, %v577
        %v583 = vshll.u32 %v503, 16
        %v585 = vrot.slane %v583, 1
        %v586 = vsel %vm534, %v581, %v585
        %v587 = vshrl.u32 %v503, 16
        %v589 = vor.u32 %v587, %v585
        %v591 = vshll.u32 %v504, 16
        %v593 = vrot.slane %v591, 1
        %v594 = vsel %vm534, %v589, %v593
        %v595 = vshrl.u32 %v504, 16
        %v597 = vor.u32 %v595, %v593
        %v599 = vshll.u32 %v505, 16
        %v601 = vrot.slane %v599, 1
        %v602 = vsel %vm534, %v597, %v601
        %v603 = vshrl.u32 %v505, 16
        %v605 = vor.u32 %v603, %v601
        %v607 = vshll.u32 %v506, 16
        %v609 = vrot.slane %v607, 1
        %v610 = vsel %vm534, %v605, %v609
        %v611 = vshrl.u32 %v506, 16
        %v613 = vor.u32 %v611, %v609
        %v615 = vshll.u32 %v507, 16
        %v617 = vrot.slane %v615, 1
        %v618 = vsel %vm534, %v613, %v617
        %v619 = vshrl.u32 %v507, 16
        %v621 = vor.u32 %v619, %v617
        %v623 = vshll.u32 %v508, 16
        %v625 = vrot.slane %v623, 1
        %v626 = vsel %vm534, %v621, %v625
        %v627 = vshrl.u32 %v508, 16
        %v629 = vor.u32 %v627, %v625
        %v631 = vshll.u32 %v509, 16
        %v633 = vrot.slane %v631, 1
        %v634 = vsel %vm534, %v629, %v633
        %v635 = vshrl.u32 %v509, 16
        %v637 = vor.u32 %v635, %v633
        %v639 = vshll.u32 %v510, 16
        %v641 = vrot.slane %v639, 1
        %v642 = vsel %vm534, %v637, %v641
        %v643 = vshrl.u32 %v510, 16
        %v645 = vor.u32 %v643, %v641
        %v647 = vshll.u32 %v511, 16
        %v649 = vrot.slane %v647, 1
        %v650 = vsel %vm534, %v645, %v649
        %v651 = vshrl.u32 %v511, 16
        %v653 = vor.u32 %v651, %v649
        %v655 = vshll.u32 %v512, 16
        %v657 = vrot.slane %v655, 1
        %v658 = vsel %vm534, %v653, %v657
        %v659 = vshrl.u32 %v512, 16
        %v661 = vor.u32 %v659, %v657
        %v663 = vshll.u32 %v513, 16
        %v665 = vrot.slane %v663, 1
        %v666 = vsel %vm534, %v661, %v665
        %v667 = vshrl.u32 %v513, 16
        %v669 = vor.u32 %v667, %v665
        %v671 = vshll.u32 %v514, 16
        %v673 = vrot.slane %v671, 1
        %v674 = vsel %vm534, %v669, %v673
        %v675 = vshrl.u32 %v514, 16
        %v677 = vor.u32 %v675, %v673
        %v679 = vshll.u32 %v515, 16
        %v681 = vrot.slane %v679, 1
        %v682 = vsel %vm534, %v677, %v681
        %v683 = vshrl.u32 %v515, 16
        %v685 = vor.u32 %v683, %v681
        %v687 = vshll.u32 %v516, 16
        %v689 = vrot.slane %v687, 1
        %v690 = vsel %vm534, %v685, %v689
        %v691 = vshrl.u32 %v516, 16
        %v693 = vor.u32 %v691, %v689
        %v695 = vshll.u32 %v517, 16
        %v697 = vrot.slane %v695, 1
        %v698 = vsel %vm534, %v693, %v697
        %v699 = vshrl.u32 %v517, 16
        %v701 = vor.u32 %v699, %v697
        %v703 = vshll.u32 %v518, 16
        %v705 = vrot.slane %v703, 1
        %v706 = vsel %vm534, %v701, %v705
        %v707 = vshrl.u32 %v518, 16
        %v709 = vor.u32 %v707, %v705
        %v711 = vshll.u32 %v519, 16
        %v713 = vrot.slane %v711, 1
        %v714 = vsel %vm534, %v709, %v713
        %v715 = vshrl.u32 %v519, 16
        %v717 = vor.u32 %v715, %v713
        %v719 = vshll.u32 %v520, 16
        %v721 = vrot.slane %v719, 1
        %v722 = vsel %vm534, %v717, %v721
        %v723 = vshrl.u32 %v520, 16
        %v725 = vor.u32 %v723, %v721
        %v727 = vshll.u32 %v521, 16
        %v729 = vrot.slane %v727, 1
        %v730 = vsel %vm534, %v725, %v729
        %v731 = vshrl.u32 %v521, 16
        %v733 = vor.u32 %v731, %v729
        %v735 = vshll.u32 %v522, 16
        %v737 = vrot.slane %v735, 1
        %v738 = vsel %vm534, %v733, %v737
        %v739 = vshrl.u32 %v522, 16
        %v741 = vor.u32 %v739, %v737
        %v743 = vshll.u32 %v523, 16
        %v745 = vrot.slane %v743, 1
        %v746 = vsel %vm534, %v741, %v745
        %v747 = vshrl.u32 %v523, 16
        %v749 = vor.u32 %v747, %v745
        %v751 = vshll.u32 %v524, 16
        %v753 = vrot.slane %v751, 1
        %v754 = vsel %vm534, %v749, %v753
        %v755 = vshrl.u32 %v524, 16
        %v757 = vor.u32 %v755, %v753
        %v759 = vshll.u32 %v525, 16
        %v761 = vrot.slane %v759, 1
        %v762 = vsel %vm534, %v757, %v761
        %v763 = vshrl.u32 %v525, 16
        %v765 = vor.u32 %v763, %v761
        %v767 = vshll.u32 %v526, 16
        %v769 = vrot.slane %v767, 1
        %v770 = vsel %vm534, %v765, %v769
        %v771 = vshrl.u32 %v526, 16
        %v773 = vor.u32 %v771, %v769
        %v775 = vshll.u32 %v527, 16
        %v777 = vrot.slane %v775, 1
        %v778 = vsel %vm534, %v773, %v777
        %v779 = vshrl.u32 %v527, 16
        %v781 = vor.u32 %v779, %v777
        %v783 = vshll.u32 %v528, 16
        %v785 = vrot.slane %v783, 1
        %v786 = vsel %vm534, %v781, %v785
        %v787 = vshrl.u32 %v528, 16
        %v789 = vor.u32 %v787, %v785
        %v791 = vshll.u32 %v529, 16
        %v793 = vrot.slane %v791, 1
        %v794 = vsel %vm534, %v789, %v793
        %v795 = vshrl.u32 %v529, 16
        %v797 = vor.u32 %v795, %v793
        %v799 = vshll.u32 %v530, 16
        %v801 = vrot.slane %v799, 1
        %v802 = vsel %vm534, %v797, %v801
        %v803 = vshrl.u32 %v530, 16
        %v805 = vor.u32 %v803, %v801
        %v807 = vshll.u32 %v531, 16
        %v809 = vrot.slane %v807, 1
        %v810 = vsel %vm534, %v805, %v809
        %v811 = vshrl.u32 %v531, 16
        %v813 = vor.u32 %v811, %v809
        %v815 = vshll.u32 %v532, 16
        %v817 = vrot.slane %v815, 1
        %v818 = vsel %vm534, %v813, %v817
        %v819 = vshrl.u32 %v532, 16
        %v821 = vor.u32 %v819, %v817
        %v823 = vshll.u32 %v533, 16
        %v825 = vrot.slane %v823, 1
        %v826 = vsel %vm534, %v821, %v825
        %vm863 = vcmask 31744
        %864 = vst.msk [vmem:[#allocation2] sm:$0xff] %vm863, %v546
        %865 = vst.msk [vmem:[#allocation2 + $0x8] sm:$0xff] %vm863, %v554
        %866 = vst.msk [vmem:[#allocation2 + $0x10] sm:$0xff] %vm863, %v562
        %867 = vst.msk [vmem:[#allocation2 + $0x18] sm:$0xff] %vm863, %v570
        %868 = vst.msk [vmem:[#allocation2 + $0x20] sm:$0xff] %vm863, %v578
        %869 = vst.msk [vmem:[#allocation2 + $0x28] sm:$0xff] %vm863, %v586
        %870 = vst.msk [vmem:[#allocation2 + $0x30] sm:$0xff] %vm863, %v594
        %871 = vst.msk [vmem:[#allocation2 + $0x38] sm:$0xff] %vm863, %v602
        %872 = vst.msk [vmem:[#allocation2 + $0x40] sm:$0xff] %vm863, %v610
        %873 = vst.msk [vmem:[#allocation2 + $0x48] sm:$0xff] %vm863, %v618
        %874 = vst.msk [vmem:[#allocation2 + $0x50] sm:$0xff] %vm863, %v626
        %875 = vst.msk [vmem:[#allocation2 + $0x58] sm:$0xff] %vm863, %v634
        %876 = vst.msk [vmem:[#allocation2 + $0x60] sm:$0xff] %vm863, %v642
        %877 = vst.msk [vmem:[#allocation2 + $0x68] sm:$0xff] %vm863, %v650
        %878 = vst.msk [vmem:[#allocation2 + $0x70] sm:$0xff] %vm863, %v658
        %879 = vst.msk [vmem:[#allocation2 + $0x78] sm:$0xff] %vm863, %v666
        %880 = vst.msk [vmem:[#allocation2 + $0x80] sm:$0xff] %vm863, %v674
        %881 = vst.msk [vmem:[#allocation2 + $0x88] sm:$0xff] %vm863, %v682
        %882 = vst.msk [vmem:[#allocation2 + $0x90] sm:$0xff] %vm863, %v690
        %883 = vst.msk [vmem:[#allocation2 + $0x98] sm:$0xff] %vm863, %v698
        %884 = vst.msk [vmem:[#allocation2 + $0xa0] sm:$0xff] %vm863, %v706
        %885 = vst.msk [vmem:[#allocation2 + $0xa8] sm:$0xff] %vm863, %v714
        %886 = vst.msk [vmem:[#allocation2 + $0xb0] sm:$0xff] %vm863, %v722
        %887 = vst.msk [vmem:[#allocation2 + $0xb8] sm:$0xff] %vm863, %v730
        %888 = vst.msk [vmem:[#allocation2 + $0xc0] sm:$0xff] %vm863, %v738
        %889 = vst.msk [vmem:[#allocation2 + $0xc8] sm:$0xff] %vm863, %v746
        %890 = vst.msk [vmem:[#allocation2 + $0xd0] sm:$0xff] %vm863, %v754
        %891 = vst.msk [vmem:[#allocation2 + $0xd8] sm:$0xff] %vm863, %v762
        %892 = vst.msk [vmem:[#allocation2 + $0xe0] sm:$0xff] %vm863, %v770
        %893 = vst.msk [vmem:[#allocation2 + $0xe8] sm:$0xff] %vm863, %v778
        %894 = vst.msk [vmem:[#allocation2 + $0xf0] sm:$0xff] %vm863, %v786
        %895 = vst.msk [vmem:[#allocation2 + $0xf8] sm:$0xff] %vm863, %v794
        %896 = vst.msk [vmem:[#allocation2 + $0x100] sm:$0xff] %vm863, %v802
        %897 = vst.msk [vmem:[#allocation2 + $0x108] sm:$0xff] %vm863, %v810
        %898 = vst.msk [vmem:[#allocation2 + $0x110] sm:$0xff] %vm863, %v818
        %899 = vst.msk [vmem:[#allocation2 + $0x118] sm:$0xff] %vm863, %v826
        %v900 = vld [vmem:[%s276] sm:$0xe]
        %v901 = vld [vmem:[%s276 + $0x4] sm:$0xf]
        %v902 = vld [vmem:[%s276 + $0x8] sm:$0xf]
        %v903 = vld [vmem:[%s276 + $0xc] sm:$0xf]
        %v904 = vld [vmem:[%s276 + $0x10] sm:$0xf]
        %v905 = vld [vmem:[%s276 + $0x14] sm:$0xf]
        %v906 = vld [vmem:[%s276 + $0x18] sm:$0xf]
        %v907 = vld [vmem:[%s276 + $0x1c] sm:$0xf]
        %v908 = vld [vmem:[%s276 + $0x20] sm:$0xf]
        %v909 = vld [vmem:[%s276 + $0x24] sm:$0xf]
        %v910 = vld [vmem:[%s276 + $0x28] sm:$0xf]
        %v911 = vld [vmem:[%s276 + $0x2c] sm:$0xf]
        %v912 = vld [vmem:[%s276 + $0x30] sm:$0xf]
        %v913 = vld [vmem:[%s276 + $0x34] sm:$0xf]
        %v914 = vld [vmem:[%s276 + $0x38] sm:$0xf]
        %v915 = vld [vmem:[%s276 + $0x3c] sm:$0xf]
        %v916 = vld [vmem:[%s276 + $0x40] sm:$0xf]
        %v917 = vld [vmem:[%s276 + $0x44] sm:$0xf]
        %v918 = vld [vmem:[%s276 + $0x48] sm:$0xf]
        %v919 = vld [vmem:[%s276 + $0x4c] sm:$0xf]
        %v920 = vld [vmem:[%s276 + $0x50] sm:$0xf]
        %v921 = vld [vmem:[%s276 + $0x54] sm:$0xf]
        %v922 = vld [vmem:[%s276 + $0x58] sm:$0xf]
        %v923 = vld [vmem:[%s276 + $0x5c] sm:$0xf]
        %v924 = vld [vmem:[%s276 + $0x60] sm:$0xf]
        %v925 = vld [vmem:[%s276 + $0x64] sm:$0xf]
        %v926 = vld [vmem:[%s276 + $0x68] sm:$0xf]
        %v927 = vld [vmem:[%s276 + $0x6c] sm:$0xf]
        %v928 = vld [vmem:[%s276 + $0x70] sm:$0xf]
        %v929 = vld [vmem:[%s276 + $0x74] sm:$0xf]
        %v930 = vld [vmem:[%s276 + $0x78] sm:$0xf]
        %v931 = vld [vmem:[%s276 + $0x7c] sm:$0xf]
        %v932 = vld [vmem:[%s276 + $0x80] sm:$0xf]
        %v933 = vld [vmem:[%s276 + $0x84] sm:$0xf]
        %v934 = vld [vmem:[%s276 + $0x88] sm:$0xf]
        %v935 = vld [vmem:[%s276 + $0x8c] sm:$0xf]
        %v936 = vld [vmem:[%s276 + $0x90] sm:$0xf]
        %v937 = vld [vmem:[%s276 + $0x94] sm:$0xf]
        %v938 = vld [vmem:[%s276 + $0x98] sm:$0xf]
        %v939 = vld [vmem:[%s276 + $0x9c] sm:$0xf]
        %v940 = vld [vmem:[%s276 + $0xa0] sm:$0xf]
        %v941 = vld [vmem:[%s276 + $0xa4] sm:$0xf]
        %v942 = vld [vmem:[%s276 + $0xa8] sm:$0xf]
        %v943 = vld [vmem:[%s276 + $0xac] sm:$0xf]
        %v944 = vld [vmem:[%s276 + $0xb0] sm:$0xf]
        %v945 = vld [vmem:[%s276 + $0xb4] sm:$0xf]
        %v946 = vld [vmem:[%s276 + $0xb8] sm:$0xf]
        %v947 = vld [vmem:[%s276 + $0xbc] sm:$0xf]
        %v948 = vld [vmem:[%s276 + $0xc0] sm:$0xf]
        %v949 = vld [vmem:[%s276 + $0xc4] sm:$0xf]
        %v950 = vld [vmem:[%s276 + $0xc8] sm:$0xf]
        %v951 = vld [vmem:[%s276 + $0xcc] sm:$0xf]
        %v952 = vld [vmem:[%s276 + $0xd0] sm:$0xf]
        %v953 = vld [vmem:[%s276 + $0xd4] sm:$0xf]
        %v954 = vld [vmem:[%s276 + $0xd8] sm:$0xf]
        %v955 = vld [vmem:[%s276 + $0xdc] sm:$0xf]
        %v956 = vld [vmem:[%s276 + $0xe0] sm:$0xf]
        %v957 = vld [vmem:[%s276 + $0xe4] sm:$0xf]
        %v958 = vld [vmem:[%s276 + $0xe8] sm:$0xf]
        %v959 = vld [vmem:[%s276 + $0xec] sm:$0xf]
        %v960 = vld [vmem:[%s276 + $0xf0] sm:$0xf]
        %v961 = vld [vmem:[%s276 + $0xf4] sm:$0xf]
        %v962 = vld [vmem:[%s276 + $0xf8] sm:$0xf]
        %v963 = vld [vmem:[%s276 + $0xfc] sm:$0xf]
        %v964 = vld [vmem:[%s276 + $0x100] sm:$0xf]
        %v965 = vld [vmem:[%s276 + $0x104] sm:$0xf]
        %v966 = vld [vmem:[%s276 + $0x108] sm:$0xf]
        %v967 = vld [vmem:[%s276 + $0x10c] sm:$0xf]
        %v968 = vld [vmem:[%s276 + $0x110] sm:$0xf]
        %v969 = vld [vmem:[%s276 + $0x114] sm:$0xf]
        %v970 = vld [vmem:[%s276 + $0x118] sm:$0xf]
        %v971 = vld [vmem:[%s276 + $0x11c] sm:$0xf]
        %v972 = vld [vmem:[%s276 + $0x120] sm:$0x1]
        %v1046 = vunpack.c.l.b16 %v900
        %v1047 = vunpack.c.l.b16 %v901
        %v1048 = vunpack.c.l.b16 %v902
        %v1049 = vunpack.c.l.b16 %v903
        %v1050 = vunpack.c.l.b16 %v904
        %v1051 = vunpack.c.l.b16 %v905
        %v1052 = vunpack.c.l.b16 %v906
        %v1053 = vunpack.c.l.b16 %v907
        %v1054 = vunpack.c.l.b16 %v908
        %v1055 = vunpack.c.l.b16 %v909
        %v1056 = vunpack.c.l.b16 %v910
        %v1057 = vunpack.c.l.b16 %v911
        %v1058 = vunpack.c.l.b16 %v912
        %v1059 = vunpack.c.l.b16 %v913
        %v1060 = vunpack.c.l.b16 %v914
        %v1061 = vunpack.c.l.b16 %v915
        %v1062 = vunpack.c.l.b16 %v916
        %v1063 = vunpack.c.l.b16 %v917
        %v1064 = vunpack.c.l.b16 %v918
        %v1065 = vunpack.c.l.b16 %v919
        %v1066 = vunpack.c.l.b16 %v920
        %v1067 = vunpack.c.l.b16 %v921
        %v1068 = vunpack.c.l.b16 %v922
        %v1069 = vunpack.c.l.b16 %v923
        %v1070 = vunpack.c.l.b16 %v924
        %v1071 = vunpack.c.l.b16 %v925
        %v1072 = vunpack.c.l.b16 %v926
        %v1073 = vunpack.c.l.b16 %v927
        %v1074 = vunpack.c.l.b16 %v928
        %v1075 = vunpack.c.l.b16 %v929
        %v1076 = vunpack.c.l.b16 %v930
        %v1077 = vunpack.c.l.b16 %v931
        %v1078 = vunpack.c.l.b16 %v932
        %v1079 = vunpack.c.l.b16 %v933
        %v1080 = vunpack.c.l.b16 %v934
        %v1081 = vunpack.c.l.b16 %v935
        %v1082 = vunpack.c.l.b16 %v936
        %v1083 = vunpack.c.l.b16 %v937
        %v1084 = vunpack.c.l.b16 %v938
        %v1085 = vunpack.c.l.b16 %v939
        %v1086 = vunpack.c.l.b16 %v940
        %v1087 = vunpack.c.l.b16 %v941
        %v1088 = vunpack.c.l.b16 %v942
        %v1089 = vunpack.c.l.b16 %v943
        %v1090 = vunpack.c.l.b16 %v944
        %v1091 = vunpack.c.l.b16 %v945
        %v1092 = vunpack.c.l.b16 %v946
        %v1093 = vunpack.c.l.b16 %v947
        %v1094 = vunpack.c.l.b16 %v948
        %v1095 = vunpack.c.l.b16 %v949
        %v1096 = vunpack.c.l.b16 %v950
        %v1097 = vunpack.c.l.b16 %v951
        %v1098 = vunpack.c.l.b16 %v952
        %v1099 = vunpack.c.l.b16 %v953
        %v1100 = vunpack.c.l.b16 %v954
        %v1101 = vunpack.c.l.b16 %v955
        %v1102 = vunpack.c.l.b16 %v956
        %v1103 = vunpack.c.l.b16 %v957
        %v1104 = vunpack.c.l.b16 %v958
        %v1105 = vunpack.c.l.b16 %v959
        %v1106 = vunpack.c.l.b16 %v960
        %v1107 = vunpack.c.l.b16 %v961
        %v1108 = vunpack.c.l.b16 %v962
        %v1109 = vunpack.c.l.b16 %v963
        %v1110 = vunpack.c.l.b16 %v964
        %v1111 = vunpack.c.l.b16 %v965
        %v1112 = vunpack.c.l.b16 %v966
        %v1113 = vunpack.c.l.b16 %v967
        %v1114 = vunpack.c.l.b16 %v968
        %v1115 = vunpack.c.l.b16 %v969
        %v1116 = vunpack.c.l.b16 %v970
        %v1117 = vunpack.c.l.b16 %v971
        %v1118 = vunpack.c.l.b16 %v972
        %v1119 = vpack.c.b16 %v1047, %v1046
        %v1120 = vpack.c.b16 %v1049, %v1048
        %v1121 = vpack.c.b16 %v1051, %v1050
        %v1122 = vpack.c.b16 %v1053, %v1052
        %v1123 = vpack.c.b16 %v1055, %v1054
        %v1124 = vpack.c.b16 %v1057, %v1056
        %v1125 = vpack.c.b16 %v1059, %v1058
        %v1126 = vpack.c.b16 %v1061, %v1060
        %v1127 = vpack.c.b16 %v1063, %v1062
        %v1128 = vpack.c.b16 %v1065, %v1064
        %v1129 = vpack.c.b16 %v1067, %v1066
        %v1130 = vpack.c.b16 %v1069, %v1068
        %v1131 = vpack.c.b16 %v1071, %v1070
        %v1132 = vpack.c.b16 %v1073, %v1072
        %v1133 = vpack.c.b16 %v1075, %v1074
        %v1134 = vpack.c.b16 %v1077, %v1076
        %v1135 = vpack.c.b16 %v1079, %v1078
        %v1136 = vpack.c.b16 %v1081, %v1080
        %v1137 = vpack.c.b16 %v1083, %v1082
        %v1138 = vpack.c.b16 %v1085, %v1084
        %v1139 = vpack.c.b16 %v1087, %v1086
        %v1140 = vpack.c.b16 %v1089, %v1088
        %v1141 = vpack.c.b16 %v1091, %v1090
        %v1142 = vpack.c.b16 %v1093, %v1092
        %v1143 = vpack.c.b16 %v1095, %v1094
        %v1144 = vpack.c.b16 %v1097, %v1096
        %v1145 = vpack.c.b16 %v1099, %v1098
        %v1146 = vpack.c.b16 %v1101, %v1100
        %v1147 = vpack.c.b16 %v1103, %v1102
        %v1148 = vpack.c.b16 %v1105, %v1104
        %v1149 = vpack.c.b16 %v1107, %v1106
        %v1150 = vpack.c.b16 %v1109, %v1108
        %v1151 = vpack.c.b16 %v1111, %v1110
        %v1152 = vpack.c.b16 %v1113, %v1112
        %v1153 = vpack.c.b16 %v1115, %v1114
        %v1154 = vpack.c.b16 %v1117, %v1116
        %v1155 = vpack.c.b16 %v1118, %v1118
        %vm1156 = vcmask 1046528
        %v1157 = vrot.slane %v1119, 1
        %v1158 = vrot.slane %v1120, 1
        %v1159 = vsel %vm1156, %v1157, %v1158
        %v1160 = vrot.slane %v1121, 1
        %v1161 = vsel %vm1156, %v1158, %v1160
        %v1162 = vrot.slane %v1122, 1
        %v1163 = vsel %vm1156, %v1160, %v1162
        %v1164 = vrot.slane %v1123, 1
        %v1165 = vsel %vm1156, %v1162, %v1164
        %v1166 = vrot.slane %v1124, 1
        %v1167 = vsel %vm1156, %v1164, %v1166
        %v1168 = vrot.slane %v1125, 1
        %v1169 = vsel %vm1156, %v1166, %v1168
        %v1170 = vrot.slane %v1126, 1
        %v1171 = vsel %vm1156, %v1168, %v1170
        %v1172 = vrot.slane %v1127, 1
        %v1173 = vsel %vm1156, %v1170, %v1172
        %v1174 = vrot.slane %v1128, 1
        %v1175 = vsel %vm1156, %v1172, %v1174
        %v1176 = vrot.slane %v1129, 1
        %v1177 = vsel %vm1156, %v1174, %v1176
        %v1178 = vrot.slane %v1130, 1
        %v1179 = vsel %vm1156, %v1176, %v1178
        %v1180 = vrot.slane %v1131, 1
        %v1181 = vsel %vm1156, %v1178, %v1180
        %v1182 = vrot.slane %v1132, 1
        %v1183 = vsel %vm1156, %v1180, %v1182
        %v1184 = vrot.slane %v1133, 1
        %v1185 = vsel %vm1156, %v1182, %v1184
        %v1186 = vrot.slane %v1134, 1
        %v1187 = vsel %vm1156, %v1184, %v1186
        %v1188 = vrot.slane %v1135, 1
        %v1189 = vsel %vm1156, %v1186, %v1188
        %v1190 = vrot.slane %v1136, 1
        %v1191 = vsel %vm1156, %v1188, %v1190
        %v1192 = vrot.slane %v1137, 1
        %v1193 = vsel %vm1156, %v1190, %v1192
        %v1194 = vrot.slane %v1138, 1
        %v1195 = vsel %vm1156, %v1192, %v1194
        %v1196 = vrot.slane %v1139, 1
        %v1197 = vsel %vm1156, %v1194, %v1196
        %v1198 = vrot.slane %v1140, 1
        %v1199 = vsel %vm1156, %v1196, %v1198
        %v1200 = vrot.slane %v1141, 1
        %v1201 = vsel %vm1156, %v1198, %v1200
        %v1202 = vrot.slane %v1142, 1
        %v1203 = vsel %vm1156, %v1200, %v1202
        %v1204 = vrot.slane %v1143, 1
        %v1205 = vsel %vm1156, %v1202, %v1204
        %v1206 = vrot.slane %v1144, 1
        %v1207 = vsel %vm1156, %v1204, %v1206
        %v1208 = vrot.slane %v1145, 1
        %v1209 = vsel %vm1156, %v1206, %v1208
        %v1210 = vrot.slane %v1146, 1
        %v1211 = vsel %vm1156, %v1208, %v1210
        %v1212 = vrot.slane %v1147, 1
        %v1213 = vsel %vm1156, %v1210, %v1212
        %v1214 = vrot.slane %v1148, 1
        %v1215 = vsel %vm1156, %v1212, %v1214
        %v1216 = vrot.slane %v1149, 1
        %v1217 = vsel %vm1156, %v1214, %v1216
        %v1218 = vrot.slane %v1150, 1
        %v1219 = vsel %vm1156, %v1216, %v1218
        %v1220 = vrot.slane %v1151, 1
        %v1221 = vsel %vm1156, %v1218, %v1220
        %v1222 = vrot.slane %v1152, 1
        %v1223 = vsel %vm1156, %v1220, %v1222
        %v1224 = vrot.slane %v1153, 1
        %v1225 = vsel %vm1156, %v1222, %v1224
        %v1226 = vrot.slane %v1154, 1
        %v1227 = vsel %vm1156, %v1224, %v1226
        %v1228 = vrot.slane %v1155, 1
        %v1229 = vsel %vm1156, %v1226, %v1228
        %1266 = vst.msk [vmem:[#allocation3] sm:$0xff] %vm863, %v1159
        %1267 = vst.msk [vmem:[#allocation3 + $0x8] sm:$0xff] %vm863, %v1161
        %1268 = vst.msk [vmem:[#allocation3 + $0x10] sm:$0xff] %vm863, %v1163
        %1269 = vst.msk [vmem:[#allocation3 + $0x18] sm:$0xff] %vm863, %v1165
        %1270 = vst.msk [vmem:[#allocation3 + $0x20] sm:$0xff] %vm863, %v1167
        %1271 = vst.msk [vmem:[#allocation3 + $0x28] sm:$0xff] %vm863, %v1169
        %1272 = vst.msk [vmem:[#allocation3 + $0x30] sm:$0xff] %vm863, %v1171
        %1273 = vst.msk [vmem:[#allocation3 + $0x38] sm:$0xff] %vm863, %v1173
        %1274 = vst.msk [vmem:[#allocation3 + $0x40] sm:$0xff] %vm863, %v1175
        %1275 = vst.msk [vmem:[#allocation3 + $0x48] sm:$0xff] %vm863, %v1177
        %1276 = vst.msk [vmem:[#allocation3 + $0x50] sm:$0xff] %vm863, %v1179
        %1277 = vst.msk [vmem:[#allocation3 + $0x58] sm:$0xff] %vm863, %v1181
        %1278 = vst.msk [vmem:[#allocation3 + $0x60] sm:$0xff] %vm863, %v1183
        %1279 = vst.msk [vmem:[#allocation3 + $0x68] sm:$0xff] %vm863, %v1185
        %1280 = vst.msk [vmem:[#allocation3 + $0x70] sm:$0xff] %vm863, %v1187
        %1281 = vst.msk [vmem:[#allocation3 + $0x78] sm:$0xff] %vm863, %v1189
        %1282 = vst.msk [vmem:[#allocation3 + $0x80] sm:$0xff] %vm863, %v1191
        %1283 = vst.msk [vmem:[#allocation3 + $0x88] sm:$0xff] %vm863, %v1193
        %1284 = vst.msk [vmem:[#allocation3 + $0x90] sm:$0xff] %vm863, %v1195
        %1285 = vst.msk [vmem:[#allocation3 + $0x98] sm:$0xff] %vm863, %v1197
        %1286 = vst.msk [vmem:[#allocation3 + $0xa0] sm:$0xff] %vm863, %v1199
        %1287 = vst.msk [vmem:[#allocation3 + $0xa8] sm:$0xff] %vm863, %v1201
        %1288 = vst.msk [vmem:[#allocation3 + $0xb0] sm:$0xff] %vm863, %v1203
        %1289 = vst.msk [vmem:[#allocation3 + $0xb8] sm:$0xff] %vm863, %v1205
        %1290 = vst.msk [vmem:[#allocation3 + $0xc0] sm:$0xff] %vm863, %v1207
        %1291 = vst.msk [vmem:[#allocation3 + $0xc8] sm:$0xff] %vm863, %v1209
        %1292 = vst.msk [vmem:[#allocation3 + $0xd0] sm:$0xff] %vm863, %v1211
        %1293 = vst.msk [vmem:[#allocation3 + $0xd8] sm:$0xff] %vm863, %v1213
        %1294 = vst.msk [vmem:[#allocation3 + $0xe0] sm:$0xff] %vm863, %v1215
        %1295 = vst.msk [vmem:[#allocation3 + $0xe8] sm:$0xff] %vm863, %v1217
        %1296 = vst.msk [vmem:[#allocation3 + $0xf0] sm:$0xff] %vm863, %v1219
        %1297 = vst.msk [vmem:[#allocation3 + $0xf8] sm:$0xff] %vm863, %v1221
        %1298 = vst.msk [vmem:[#allocation3 + $0x100] sm:$0xff] %vm863, %v1223
        %1299 = vst.msk [vmem:[#allocation3 + $0x108] sm:$0xff] %vm863, %v1225
        %1300 = vst.msk [vmem:[#allocation3 + $0x110] sm:$0xff] %vm863, %v1227
        %1301 = vst.msk [vmem:[#allocation3 + $0x118] sm:$0xff] %vm863, %v1229
        %v1302 = vld [vmem:[%s276] sm:$0xf]
        %v1303 = vld [vmem:[%s276 + $0x4] sm:$0xf]
        %v1304 = vld [vmem:[%s276 + $0x8] sm:$0xf]
        %v1305 = vld [vmem:[%s276 + $0xc] sm:$0xf]
        %v1306 = vld [vmem:[%s276 + $0x10] sm:$0xf]
        %v1307 = vld [vmem:[%s276 + $0x14] sm:$0xf]
        %v1308 = vld [vmem:[%s276 + $0x18] sm:$0xf]
        %v1309 = vld [vmem:[%s276 + $0x1c] sm:$0xf]
        %v1310 = vld [vmem:[%s276 + $0x20] sm:$0xf]
        %v1311 = vld [vmem:[%s276 + $0x24] sm:$0xf]
        %v1312 = vld [vmem:[%s276 + $0x28] sm:$0xf]
        %v1313 = vld [vmem:[%s276 + $0x2c] sm:$0xf]
        %v1314 = vld [vmem:[%s276 + $0x30] sm:$0xf]
        %v1315 = vld [vmem:[%s276 + $0x34] sm:$0xf]
        %v1316 = vld [vmem:[%s276 + $0x38] sm:$0xf]
        %v1317 = vld [vmem:[%s276 + $0x3c] sm:$0xf]
        %v1318 = vld [vmem:[%s276 + $0x40] sm:$0xf]
        %v1319 = vld [vmem:[%s276 + $0x44] sm:$0xf]
        %v1320 = vld [vmem:[%s276 + $0x48] sm:$0xf]
        %v1321 = vld [vmem:[%s276 + $0x4c] sm:$0xf]
        %v1322 = vld [vmem:[%s276 + $0x50] sm:$0xf]
        %v1323 = vld [vmem:[%s276 + $0x54] sm:$0xf]
        %v1324 = vld [vmem:[%s276 + $0x58] sm:$0xf]
        %v1325 = vld [vmem:[%s276 + $0x5c] sm:$0xf]
        %v1326 = vld [vmem:[%s276 + $0x60] sm:$0xf]
        %v1327 = vld [vmem:[%s276 + $0x64] sm:$0xf]
        %v1328 = vld [vmem:[%s276 + $0x68] sm:$0xf]
        %v1329 = vld [vmem:[%s276 + $0x6c] sm:$0xf]
        %v1330 = vld [vmem:[%s276 + $0x70] sm:$0xf]
        %v1331 = vld [vmem:[%s276 + $0x74] sm:$0xf]
        %v1332 = vld [vmem:[%s276 + $0x78] sm:$0xf]
        %v1333 = vld [vmem:[%s276 + $0x7c] sm:$0xf]
        %v1334 = vld [vmem:[%s2] sm:$0x3]
        %v1335 = vld [vmem:[#allocation2] sm:$0xff]
        %v1336 = vld [vmem:[#allocation2 + $0x8] sm:$0xff]
        %v1337 = vld [vmem:[#allocation2 + $0x10] sm:$0xff]
        %v1338 = vld [vmem:[#allocation2 + $0x18] sm:$0xff]
        %v1339 = vld [vmem:[#allocation2 + $0x20] sm:$0xff]
        %v1340 = vld [vmem:[#allocation2 + $0x28] sm:$0xff]
        %v1341 = vld [vmem:[#allocation2 + $0x30] sm:$0xff]
        %v1342 = vld [vmem:[#allocation2 + $0x38] sm:$0xff]
        %v1343 = vld [vmem:[#allocation2 + $0x40] sm:$0xff]
        %v1344 = vld [vmem:[#allocation2 + $0x48] sm:$0xff]
        %v1345 = vld [vmem:[#allocation2 + $0x50] sm:$0xff]
        %v1346 = vld [vmem:[#allocation2 + $0x58] sm:$0xff]
        %v1347 = vld [vmem:[#allocation2 + $0x60] sm:$0xff]
        %v1348 = vld [vmem:[#allocation2 + $0x68] sm:$0xff]
        %v1349 = vld [vmem:[#allocation2 + $0x70] sm:$0xff]
        %v1350 = vld [vmem:[#allocation2 + $0x78] sm:$0xff]
        %s1351 = scalar_lea.vmem %s2, 2
        %v1352 = vld [vmem:[%s1351] sm:$0x3]
        %v1354 = vsel %vm863, %v1335, 0
        %v1357 = vsel %vm863, %v1336, 0
        %v1360 = vsel %vm863, %v1337, 0
        %v1363 = vsel %vm863, %v1338, 0
        %v1366 = vsel %vm863, %v1339, 0
        %v1369 = vsel %vm863, %v1340, 0
        %v1372 = vsel %vm863, %v1341, 0
        %v1375 = vsel %vm863, %v1342, 0
        %v1378 = vsel %vm863, %v1343, 0
        %v1381 = vsel %vm863, %v1344, 0
        %v1384 = vsel %vm863, %v1345, 0
        %v1387 = vsel %vm863, %v1346, 0
        %v1390 = vsel %vm863, %v1347, 0
        %v1393 = vsel %vm863, %v1348, 0
        %v1396 = vsel %vm863, %v1349, 0
        %v1399 = vsel %vm863, %v1350, 0
        %vm1401 = vcmask 1041408
        %v1403 = vsel %vm1401, %v1352, 0
        %1405 = vmatprep.subr.bf16.mxu0 0
        %1406 = vmatpush1.bf16.msra.mxu0 %v1403
        %1407 = vmatprep.subr.bf16.mxu0 0
        %1408 = vmatpush1.bf16.msra.mxu0 0
        %1409 = vmatprep.subr.bf16.mxu0 0
        %1410 = vmatpush1.bf16.msra.mxu0 0
        %1411 = vmatprep.subr.bf16.mxu0 0
        %1412 = vmatpush1.bf16.msra.mxu0 0
        %1413 = vmatprep.subr.bf16.mxu0 0
        %1414 = vmatpush1.bf16.msra.mxu0 0
        %1415 = vmatprep.subr.bf16.mxu0 0
        %1416 = vmatpush1.bf16.msra.mxu0 0
        %1417 = vmatprep.subr.bf16.mxu0 0
        %1418 = vmatpush1.bf16.msra.mxu0 0
        %1419 = vmatprep.subr.bf16.mxu0 0
        %1420 = vmatpush1.bf16.msra.mxu0 0
        %1421 = vmatprep.subr.bf16.mxu0 0
        %1422 = vmatpush1.bf16.msra.mxu0 0
        %1423 = vmatprep.subr.bf16.mxu0 0
        %1424 = vmatpush1.bf16.msra.mxu0 0
        %1425 = vmatprep.subr.bf16.mxu0 0
        %1426 = vmatpush1.bf16.msra.mxu0 0
        %1427 = vmatprep.subr.bf16.mxu0 0
        %1428 = vmatpush1.bf16.msra.mxu0 0
        %1429 = vmatprep.subr.bf16.mxu0 0
        %1430 = vmatpush1.bf16.msra.mxu0 0
        %1431 = vmatprep.subr.bf16.mxu0 0
        %1432 = vmatpush1.bf16.msra.mxu0 0
        %1433 = vmatprep.subr.bf16.mxu0 0
        %1434 = vmatpush1.bf16.msra.mxu0 0
        %1435 = vmatprep.subr.bf16.mxu0 0
        %1436 = vmatpush1.bf16.msra.mxu0 0
        %1437 = vmatprep.mubr.bf16.mxu0 0
        %1438 = vmatmul.mubr.bf16.gmra.mrb[0].mxu0 %v1354
        %v1439 = vpop.f32.mrb[0].mxu0
        %v1440 = vadd.f32 0.0, %v1439
        %v1441 = vpop.f32.mrb[0].mxu0
        %v1442 = vpop.f32.mrb[0].mxu0
        %v1443 = vadd.f32 0.0, %v1442
        %v1444 = vpop.f32.mrb[0].mxu0
        %1445 = vmatprep.mubr.bf16.mxu0 0
        %1446 = vmatmul.mubr.bf16.gmra.mrb[0].mxu0 %v1357
        %v1447 = vpop.f32.mrb[0].mxu0
        %v1448 = vadd.f32 0.0, %v1447
        %v1449 = vpop.f32.mrb[0].mxu0
        %v1450 = vpop.f32.mrb[0].mxu0
        %v1451 = vadd.f32 0.0, %v1450
        %v1452 = vpop.f32.mrb[0].mxu0
        %1453 = vmatprep.mubr.bf16.mxu0 0
        %1454 = vmatmul.mubr.bf16.gmra.mrb[0].mxu0 %v1360
        %v1455 = vpop.f32.mrb[0].mxu0
        %v1456 = vadd.f32 0.0, %v1455
        %v1457 = vpop.f32.mrb[0].mxu0
        %v1458 = vpop.f32.mrb[0].mxu0
        %v1459 = vadd.f32 0.0, %v1458
        %v1460 = vpop.f32.mrb[0].mxu0
        %1461 = vmatprep.mubr.bf16.mxu0 0
        %1462 = vmatmul.mubr.bf16.gmra.mrb[0].mxu0 %v1363
        %v1463 = vpop.f32.mrb[0].mxu0
        %v1464 = vadd.f32 0.0, %v1463
        %v1465 = vpop.f32.mrb[0].mxu0
        %v1466 = vpop.f32.mrb[0].mxu0
        %v1467 = vadd.f32 0.0, %v1466
        %v1468 = vpop.f32.mrb[0].mxu0
        %1469 = vmatprep.mubr.bf16.mxu0 0
        %1470 = vmatmul.mubr.bf16.gmra.mrb[0].mxu0 %v1366
        %v1471 = vpop.f32.mrb[0].mxu0
        %v1472 = vadd.f32 0.0, %v1471
        %v1473 = vpop.f32.mrb[0].mxu0
        %v1474 = vpop.f32.mrb[0].mxu0
        %v1475 = vadd.f32 0.0, %v1474
        %v1476 = vpop.f32.mrb[0].mxu0
        %1477 = vmatprep.mubr.bf16.mxu0 0
        %1478 = vmatmul.mubr.bf16.gmra.mrb[0].mxu0 %v1369
        %v1479 = vpop.f32.mrb[0].mxu0
        %v1480 = vadd.f32 0.0, %v1479
        %v1481 = vpop.f32.mrb[0].mxu0
        %v1482 = vpop.f32.mrb[0].mxu0
        %v1483 = vadd.f32 0.0, %v1482
        %v1484 = vpop.f32.mrb[0].mxu0
        %1485 = vmatprep.mubr.bf16.mxu0 0
        %1486 = vmatmul.mubr.bf16.gmra.mrb[0].mxu0 %v1372
        %v1487 = vpop.f32.mrb[0].mxu0
        %v1488 = vadd.f32 0.0, %v1487
        %v1489 = vpop.f32.mrb[0].mxu0
        %v1490 = vpop.f32.mrb[0].mxu0
        %v1491 = vadd.f32 0.0, %v1490
        %v1492 = vpop.f32.mrb[0].mxu0
        %1493 = vmatprep.mubr.bf16.mxu0 0
        %1494 = vmatmul.mubr.bf16.gmra.mrb[0].mxu0 %v1375
        %v1495 = vpop.f32.mrb[0].mxu0
        %v1496 = vadd.f32 0.0, %v1495
        %v1497 = vpop.f32.mrb[0].mxu0
        %v1498 = vpop.f32.mrb[0].mxu0
        %v1499 = vadd.f32 0.0, %v1498
        %v1500 = vpop.f32.mrb[0].mxu0
        %1501 = vmatprep.mubr.bf16.mxu0 0
        %1502 = vmatmul.mubr.bf16.gmra.mrb[0].mxu0 %v1378
        %v1503 = vpop.f32.mrb[0].mxu0
        %v1504 = vadd.f32 0.0, %v1503
        %v1505 = vpop.f32.mrb[0].mxu0
        %v1506 = vpop.f32.mrb[0].mxu0
        %v1507 = vadd.f32 0.0, %v1506
        %v1508 = vpop.f32.mrb[0].mxu0
        %1509 = vmatprep.mubr.bf16.mxu0 0
        %1510 = vmatmul.mubr.bf16.gmra.mrb[0].mxu0 %v1381
        %v1511 = vpop.f32.mrb[0].mxu0
        %v1512 = vadd.f32 0.0, %v1511
        %v1513 = vpop.f32.mrb[0].mxu0
        %v1514 = vpop.f32.mrb[0].mxu0
        %v1515 = vadd.f32 0.0, %v1514
        %v1516 = vpop.f32.mrb[0].mxu0
        %1517 = vmatprep.mubr.bf16.mxu0 0
        %1518 = vmatmul.mubr.bf16.gmra.mrb[0].mxu0 %v1384
        %v1519 = vpop.f32.mrb[0].mxu0
        %v1520 = vadd.f32 0.0, %v1519
        %v1521 = vpop.f32.mrb[0].mxu0
        %v1522 = vpop.f32.mrb[0].mxu0
        %v1523 = vadd.f32 0.0, %v1522
        %v1524 = vpop.f32.mrb[0].mxu0
        %1525 = vmatprep.mubr.bf16.mxu0 0
        %1526 = vmatmul.mubr.bf16.gmra.mrb[0].mxu0 %v1387
        %v1527 = vpop.f32.mrb[0].mxu0
        %v1528 = vadd.f32 0.0, %v1527
        %v1529 = vpop.f32.mrb[0].mxu0
        %v1530 = vpop.f32.mrb[0].mxu0
        %v1531 = vadd.f32 0.0, %v1530
        %v1532 = vpop.f32.mrb[0].mxu0
        %1533 = vmatprep.mubr.bf16.mxu0 0
        %1534 = vmatmul.mubr.bf16.gmra.mrb[0].mxu0 %v1390
        %v1535 = vpop.f32.mrb[0].mxu0
        %v1536 = vadd.f32 0.0, %v1535
        %v1537 = vpop.f32.mrb[0].mxu0
        %v1538 = vpop.f32.mrb[0].mxu0
        %v1539 = vadd.f32 0.0, %v1538
        %v1540 = vpop.f32.mrb[0].mxu0
        %1541 = vmatprep.mubr.bf16.mxu0 0
        %1542 = vmatmul.mubr.bf16.gmra.mrb[0].mxu0 %v1393
        %v1543 = vpop.f32.mrb[0].mxu0
        %v1544 = vadd.f32 0.0, %v1543
        %v1545 = vpop.f32.mrb[0].mxu0
        %v1546 = vpop.f32.mrb[0].mxu0
        %v1547 = vadd.f32 0.0, %v1546
        %v1548 = vpop.f32.mrb[0].mxu0
        %1549 = vmatprep.mubr.bf16.mxu0 0
        %1550 = vmatmul.mubr.bf16.gmra.mrb[0].mxu0 %v1396
        %v1551 = vpop.f32.mrb[0].mxu0
        %v1552 = vadd.f32 0.0, %v1551
        %v1553 = vpop.f32.mrb[0].mxu0
        %v1554 = vpop.f32.mrb[0].mxu0
        %v1555 = vadd.f32 0.0, %v1554
        %v1556 = vpop.f32.mrb[0].mxu0
        %1557 = vmatprep.mubr.bf16.mxu0 0
        %1558 = vmatmul.mubr.bf16.gmra.mrb[0].mxu0 %v1399
        %v1559 = vpop.f32.mrb[0].mxu0
        %v1560 = vadd.f32 0.0, %v1559
        %v1561 = vpop.f32.mrb[0].mxu0
        %v1562 = vpop.f32.mrb[0].mxu0
        %v1563 = vadd.f32 0.0, %v1562
        %v1564 = vpop.f32.mrb[0].mxu0
        %1565 = vdwg.mxu0
        %v1598 = vunpack.c.l.b16 %v1302
        %v1599 = vunpack.c.l.b16 %v1303
        %v1600 = vunpack.c.l.b16 %v1304
        %v1601 = vunpack.c.l.b16 %v1305
        %v1602 = vunpack.c.l.b16 %v1306
        %v1603 = vunpack.c.l.b16 %v1307
        %v1604 = vunpack.c.l.b16 %v1308
        %v1605 = vunpack.c.l.b16 %v1309
        %v1606 = vunpack.c.l.b16 %v1310
        %v1607 = vunpack.c.l.b16 %v1311
        %v1608 = vunpack.c.l.b16 %v1312
        %v1609 = vunpack.c.l.b16 %v1313
        %v1610 = vunpack.c.l.b16 %v1314
        %v1611 = vunpack.c.l.b16 %v1315
        %v1612 = vunpack.c.l.b16 %v1316
        %v1613 = vunpack.c.l.b16 %v1317
        %v1614 = vunpack.c.l.b16 %v1318
        %v1615 = vunpack.c.l.b16 %v1319
        %v1616 = vunpack.c.l.b16 %v1320
        %v1617 = vunpack.c.l.b16 %v1321
        %v1618 = vunpack.c.l.b16 %v1322
        %v1619 = vunpack.c.l.b16 %v1323
        %v1620 = vunpack.c.l.b16 %v1324
        %v1621 = vunpack.c.l.b16 %v1325
        %v1622 = vunpack.c.l.b16 %v1326
        %v1623 = vunpack.c.l.b16 %v1327
        %v1624 = vunpack.c.l.b16 %v1328
        %v1625 = vunpack.c.l.b16 %v1329
        %v1626 = vunpack.c.l.b16 %v1330
        %v1627 = vunpack.c.l.b16 %v1331
        %v1628 = vunpack.c.l.b16 %v1332
        %v1629 = vunpack.c.l.b16 %v1333
        %v1630 = vpack.c.b16 %v1599, %v1598
        %v1631 = vpack.c.b16 %v1601, %v1600
        %v1632 = vpack.c.b16 %v1603, %v1602
        %v1633 = vpack.c.b16 %v1605, %v1604
        %v1634 = vpack.c.b16 %v1607, %v1606
        %v1635 = vpack.c.b16 %v1609, %v1608
        %v1636 = vpack.c.b16 %v1611, %v1610
        %v1637 = vpack.c.b16 %v1613, %v1612
        %v1638 = vpack.c.b16 %v1615, %v1614
        %v1639 = vpack.c.b16 %v1617, %v1616
        %v1640 = vpack.c.b16 %v1619, %v1618
        %v1641 = vpack.c.b16 %v1621, %v1620
        %v1642 = vpack.c.b16 %v1623, %v1622
        %v1643 = vpack.c.b16 %v1625, %v1624
        %v1644 = vpack.c.b16 %v1627, %v1626
        %v1645 = vpack.c.b16 %v1629, %v1628
        %v1647 = vsel %vm863, %v1630, 0
        %v1650 = vsel %vm863, %v1631, 0
        %v1653 = vsel %vm863, %v1632, 0
        %v1656 = vsel %vm863, %v1633, 0
        %v1659 = vsel %vm863, %v1634, 0
        %v1662 = vsel %vm863, %v1635, 0
        %v1665 = vsel %vm863, %v1636, 0
        %v1668 = vsel %vm863, %v1637, 0
        %v1671 = vsel %vm863, %v1638, 0
        %v1674 = vsel %vm863, %v1639, 0
        %v1677 = vsel %vm863, %v1640, 0
        %v1680 = vsel %vm863, %v1641, 0
        %v1683 = vsel %vm863, %v1642, 0
        %v1686 = vsel %vm863, %v1643, 0
        %v1689 = vsel %vm863, %v1644, 0
        %v1692 = vsel %vm863, %v1645, 0
        %v1695 = vsel %vm1401, %v1334, 0
        %1697 = vmatprep.subr.bf16.mxu0 0
        %1698 = vmatpush1.bf16.msra.mxu0 %v1695
        %1699 = vmatprep.subr.bf16.mxu0 0
        %1700 = vmatpush1.bf16.msra.mxu0 0
        %1701 = vmatprep.subr.bf16.mxu0 0
        %1702 = vmatpush1.bf16.msra.mxu0 0
        %1703 = vmatprep.subr.bf16.mxu0 0
        %1704 = vmatpush1.bf16.msra.mxu0 0
        %1705 = vmatprep.subr.bf16.mxu0 0
        %1706 = vmatpush1.bf16.msra.mxu0 0
        %1707 = vmatprep.subr.bf16.mxu0 0
        %1708 = vmatpush1.bf16.msra.mxu0 0
        %1709 = vmatprep.subr.bf16.mxu0 0
        %1710 = vmatpush1.bf16.msra.mxu0 0
        %1711 = vmatprep.subr.bf16.mxu0 0
        %1712 = vmatpush1.bf16.msra.mxu0 0
        %1713 = vmatprep.subr.bf16.mxu0 0
        %1714 = vmatpush1.bf16.msra.mxu0 0
        %1715 = vmatprep.subr.bf16.mxu0 0
        %1716 = vmatpush1.bf16.msra.mxu0 0
        %1717 = vmatprep.subr.bf16.mxu0 0
        %1718 = vmatpush1.bf16.msra.mxu0 0
        %1719 = vmatprep.subr.bf16.mxu0 0
        %1720 = vmatpush1.bf16.msra.mxu0 0
        %1721 = vmatprep.subr.bf16.mxu0 0
        %1722 = vmatpush1.bf16.msra.mxu0 0
        %1723 = vmatprep.subr.bf16.mxu0 0
        %1724 = vmatpush1.bf16.msra.mxu0 0
        %1725 = vmatprep.subr.bf16.mxu0 0
        %1726 = vmatpush1.bf16.msra.mxu0 0
        %1727 = vmatprep.subr.bf16.mxu0 0
        %1728 = vmatpush1.bf16.msra.mxu0 0
        %1729 = vmatprep.mubr.bf16.mxu0 0
        %1730 = vmatmul.mubr.bf16.gmra.mrb[0].mxu0 %v1647
        %v1731 = vpop.f32.mrb[0].mxu0
        %v1732 = vadd.f32 %v1440, %v1731
        %v1733 = vpop.f32.mrb[0].mxu0
        %v1734 = vpop.f32.mrb[0].mxu0
        %v1735 = vadd.f32 %v1443, %v1734
        %v1736 = vpop.f32.mrb[0].mxu0
        %1737 = vmatprep.mubr.bf16.mxu0 0
        %1738 = vmatmul.mubr.bf16.gmra.mrb[0].mxu0 %v1650
        %v1739 = vpop.f32.mrb[0].mxu0
        %v1740 = vadd.f32 %v1448, %v1739
        %v1741 = vpop.f32.mrb[0].mxu0
        %v1742 = vpop.f32.mrb[0].mxu0
        %v1743 = vadd.f32 %v1451, %v1742
        %v1744 = vpop.f32.mrb[0].mxu0
        %1745 = vmatprep.mubr.bf16.mxu0 0
        %1746 = vmatmul.mubr.bf16.gmra.mrb[0].mxu0 %v1653
        %v1747 = vpop.f32.mrb[0].mxu0
        %v1748 = vadd.f32 %v1456, %v1747
        %v1749 = vpop.f32.mrb[0].mxu0
        %v1750 = vpop.f32.mrb[0].mxu0
        %v1751 = vadd.f32 %v1459, %v1750
        %v1752 = vpop.f32.mrb[0].mxu0
        %1753 = vmatprep.mubr.bf16.mxu0 0
        %1754 = vmatmul.mubr.bf16.gmra.mrb[0].mxu0 %v1656
        %v1755 = vpop.f32.mrb[0].mxu0
        %v1756 = vadd.f32 %v1464, %v1755
        %v1757 = vpop.f32.mrb[0].mxu0
        %v1758 = vpop.f32.mrb[0].mxu0
        %v1759 = vadd.f32 %v1467, %v1758
        %v1760 = vpop.f32.mrb[0].mxu0
        %1761 = vmatprep.mubr.bf16.mxu0 0
        %1762 = vmatmul.mubr.bf16.gmra.mrb[0].mxu0 %v1659
        %v1763 = vpop.f32.mrb[0].mxu0
        %v1764 = vadd.f32 %v1472, %v1763
        %v1765 = vpop.f32.mrb[0].mxu0
        %v1766 = vpop.f32.mrb[0].mxu0
        %v1767 = vadd.f32 %v1475, %v1766
        %v1768 = vpop.f32.mrb[0].mxu0
        %1769 = vmatprep.mubr.bf16.mxu0 0
        %1770 = vmatmul.mubr.bf16.gmra.mrb[0].mxu0 %v1662
        %v1771 = vpop.f32.mrb[0].mxu0
        %v1772 = vadd.f32 %v1480, %v1771
        %v1773 = vpop.f32.mrb[0].mxu0
        %v1774 = vpop.f32.mrb[0].mxu0
        %v1775 = vadd.f32 %v1483, %v1774
        %v1776 = vpop.f32.mrb[0].mxu0
        %1777 = vmatprep.mubr.bf16.mxu0 0
        %1778 = vmatmul.mubr.bf16.gmra.mrb[0].mxu0 %v1665
        %v1779 = vpop.f32.mrb[0].mxu0
        %v1780 = vadd.f32 %v1488, %v1779
        %v1781 = vpop.f32.mrb[0].mxu0
        %v1782 = vpop.f32.mrb[0].mxu0
        %v1783 = vadd.f32 %v1491, %v1782
        %v1784 = vpop.f32.mrb[0].mxu0
        %1785 = vmatprep.mubr.bf16.mxu0 0
        %1786 = vmatmul.mubr.bf16.gmra.mrb[0].mxu0 %v1668
        %v1787 = vpop.f32.mrb[0].mxu0
        %v1788 = vadd.f32 %v1496, %v1787
        %v1789 = vpop.f32.mrb[0].mxu0
        %v1790 = vpop.f32.mrb[0].mxu0
        %v1791 = vadd.f32 %v1499, %v1790
        %v1792 = vpop.f32.mrb[0].mxu0
        %1793 = vmatprep.mubr.bf16.mxu0 0
        %1794 = vmatmul.mubr.bf16.gmra.mrb[0].mxu0 %v1671
        %v1795 = vpop.f32.mrb[0].mxu0
        %v1796 = vadd.f32 %v1504, %v1795
        %v1797 = vpop.f32.mrb[0].mxu0
        %v1798 = vpop.f32.mrb[0].mxu0
        %v1799 = vadd.f32 %v1507, %v1798
        %v1800 = vpop.f32.mrb[0].mxu0
        %1801 = vmatprep.mubr.bf16.mxu0 0
        %1802 = vmatmul.mubr.bf16.gmra.mrb[0].mxu0 %v1674
        %v1803 = vpop.f32.mrb[0].mxu0
        %v1804 = vadd.f32 %v1512, %v1803
        %v1805 = vpop.f32.mrb[0].mxu0
        %v1806 = vpop.f32.mrb[0].mxu0
        %v1807 = vadd.f32 %v1515, %v1806
        %v1808 = vpop.f32.mrb[0].mxu0
        %1809 = vmatprep.mubr.bf16.mxu0 0
        %1810 = vmatmul.mubr.bf16.gmra.mrb[0].mxu0 %v1677
        %v1811 = vpop.f32.mrb[0].mxu0
        %v1812 = vadd.f32 %v1520, %v1811
        %v1813 = vpop.f32.mrb[0].mxu0
        %v1814 = vpop.f32.mrb[0].mxu0
        %v1815 = vadd.f32 %v1523, %v1814
        %v1816 = vpop.f32.mrb[0].mxu0
        %1817 = vmatprep.mubr.bf16.mxu0 0
        %1818 = vmatmul.mubr.bf16.gmra.mrb[0].mxu0 %v1680
        %v1819 = vpop.f32.mrb[0].mxu0
        %v1820 = vadd.f32 %v1528, %v1819
        %v1821 = vpop.f32.mrb[0].mxu0
        %v1822 = vpop.f32.mrb[0].mxu0
        %v1823 = vadd.f32 %v1531, %v1822
        %v1824 = vpop.f32.mrb[0].mxu0
        %1825 = vmatprep.mubr.bf16.mxu0 0
        %1826 = vmatmul.mubr.bf16.gmra.mrb[0].mxu0 %v1683
        %v1827 = vpop.f32.mrb[0].mxu0
        %v1828 = vadd.f32 %v1536, %v1827
        %v1829 = vpop.f32.mrb[0].mxu0
        %v1830 = vpop.f32.mrb[0].mxu0
        %v1831 = vadd.f32 %v1539, %v1830
        %v1832 = vpop.f32.mrb[0].mxu0
        %1833 = vmatprep.mubr.bf16.mxu0 0
        %1834 = vmatmul.mubr.bf16.gmra.mrb[0].mxu0 %v1686
        %v1835 = vpop.f32.mrb[0].mxu0
        %v1836 = vadd.f32 %v1544, %v1835
        %v1837 = vpop.f32.mrb[0].mxu0
        %v1838 = vpop.f32.mrb[0].mxu0
        %v1839 = vadd.f32 %v1547, %v1838
        %v1840 = vpop.f32.mrb[0].mxu0
        %1841 = vmatprep.mubr.bf16.mxu0 0
        %1842 = vmatmul.mubr.bf16.gmra.mrb[0].mxu0 %v1689
        %v1843 = vpop.f32.mrb[0].mxu0
        %v1844 = vadd.f32 %v1552, %v1843
        %v1845 = vpop.f32.mrb[0].mxu0
        %v1846 = vpop.f32.mrb[0].mxu0
        %v1847 = vadd.f32 %v1555, %v1846
        %v1848 = vpop.f32.mrb[0].mxu0
        %1849 = vmatprep.mubr.bf16.mxu0 0
        %1850 = vmatmul.mubr.bf16.gmra.mrb[0].mxu0 %v1692
        %v1851 = vpop.f32.mrb[0].mxu0
        %v1852 = vadd.f32 %v1560, %v1851
        %v1853 = vpop.f32.mrb[0].mxu0
        %v1854 = vpop.f32.mrb[0].mxu0
        %v1855 = vadd.f32 %v1563, %v1854
        %v1856 = vpop.f32.mrb[0].mxu0
        %1857 = vdwg.mxu0
        %v1858 = vld [vmem:[#allocation3] sm:$0xff]
        %v1859 = vld [vmem:[#allocation3 + $0x8] sm:$0xff]
        %v1860 = vld [vmem:[#allocation3 + $0x10] sm:$0xff]
        %v1861 = vld [vmem:[#allocation3 + $0x18] sm:$0xff]
        %v1862 = vld [vmem:[#allocation3 + $0x20] sm:$0xff]
        %v1863 = vld [vmem:[#allocation3 + $0x28] sm:$0xff]
        %v1864 = vld [vmem:[#allocation3 + $0x30] sm:$0xff]
        %v1865 = vld [vmem:[#allocation3 + $0x38] sm:$0xff]
        %v1866 = vld [vmem:[#allocation3 + $0x40] sm:$0xff]
        %v1867 = vld [vmem:[#allocation3 + $0x48] sm:$0xff]
        %v1868 = vld [vmem:[#allocation3 + $0x50] sm:$0xff]
        %v1869 = vld [vmem:[#allocation3 + $0x58] sm:$0xff]
        %v1870 = vld [vmem:[#allocation3 + $0x60] sm:$0xff]
        %v1871 = vld [vmem:[#allocation3 + $0x68] sm:$0xff]
        %v1872 = vld [vmem:[#allocation3 + $0x70] sm:$0xff]
        %v1873 = vld [vmem:[#allocation3 + $0x78] sm:$0xff]
        %s1874 = scalar_lea.vmem %s2, 4
        %v1875 = vld [vmem:[%s1874] sm:$0x3]
        %v1877 = vsel %vm863, %v1858, 0
        %v1880 = vsel %vm863, %v1859, 0
        %v1883 = vsel %vm863, %v1860, 0
        %v1886 = vsel %vm863, %v1861, 0
        %v1889 = vsel %vm863, %v1862, 0
        %v1892 = vsel %vm863, %v1863, 0
        %v1895 = vsel %vm863, %v1864, 0
        %v1898 = vsel %vm863, %v1865, 0
        %v1901 = vsel %vm863, %v1866, 0
        %v1904 = vsel %vm863, %v1867, 0
        %v1907 = vsel %vm863, %v1868, 0
        %v1910 = vsel %vm863, %v1869, 0
        %v1913 = vsel %vm863, %v1870, 0
        %v1916 = vsel %vm863, %v1871, 0
        %v1919 = vsel %vm863, %v1872, 0
        %v1922 = vsel %vm863, %v1873, 0
        %v1925 = vsel %vm1401, %v1875, 0
        %1927 = vmatprep.subr.bf16.mxu0 0
        %1928 = vmatpush1.bf16.msra.mxu0 %v1925
        %1929 = vmatprep.subr.bf16.mxu0 0
        %1930 = vmatpush1.bf16.msra.mxu0 0
        %1931 = vmatprep.subr.bf16.mxu0 0
        %1932 = vmatpush1.bf16.msra.mxu0 0
        %1933 = vmatprep.subr.bf16.mxu0 0
        %1934 = vmatpush1.bf16.msra.mxu0 0
        %1935 = vmatprep.subr.bf16.mxu0 0
        %1936 = vmatpush1.bf16.msra.mxu0 0
        %1937 = vmatprep.subr.bf16.mxu0 0
        %1938 = vmatpush1.bf16.msra.mxu0 0
        %1939 = vmatprep.subr.bf16.mxu0 0
        %1940 = vmatpush1.bf16.msra.mxu0 0
        %1941 = vmatprep.subr.bf16.mxu0 0
        %1942 = vmatpush1.bf16.msra.mxu0 0
        %1943 = vmatprep.subr.bf16.mxu0 0
        %1944 = vmatpush1.bf16.msra.mxu0 0
        %1945 = vmatprep.subr.bf16.mxu0 0
        %1946 = vmatpush1.bf16.msra.mxu0 0
        %1947 = vmatprep.subr.bf16.mxu0 0
        %1948 = vmatpush1.bf16.msra.mxu0 0
        %1949 = vmatprep.subr.bf16.mxu0 0
        %1950 = vmatpush1.bf16.msra.mxu0 0
        %1951 = vmatprep.subr.bf16.mxu0 0
        %1952 = vmatpush1.bf16.msra.mxu0 0
        %1953 = vmatprep.subr.bf16.mxu0 0
        %1954 = vmatpush1.bf16.msra.mxu0 0
        %1955 = vmatprep.subr.bf16.mxu0 0
        %1956 = vmatpush1.bf16.msra.mxu0 0
        %1957 = vmatprep.subr.bf16.mxu0 0
        %1958 = vmatpush1.bf16.msra.mxu0 0
        %1959 = vmatprep.mubr.bf16.mxu0 0
        %1960 = vmatmul.mubr.bf16.gmra.mrb[0].mxu0 %v1877
        %v1961 = vpop.f32.mrb[0].mxu0
        %v1962 = vadd.f32 0.0, %v1961
        %v1963 = vpop.f32.mrb[0].mxu0
        %v1964 = vpop.f32.mrb[0].mxu0
        %v1965 = vadd.f32 0.0, %v1964
        %v1966 = vpop.f32.mrb[0].mxu0
        %1967 = vmatprep.mubr.bf16.mxu0 0
        %1968 = vmatmul.mubr.bf16.gmra.mrb[0].mxu0 %v1880
        %v1969 = vpop.f32.mrb[0].mxu0
        %v1970 = vadd.f32 0.0, %v1969
        %v1971 = vpop.f32.mrb[0].mxu0
        %v1972 = vpop.f32.mrb[0].mxu0
        %v1973 = vadd.f32 0.0, %v1972
        %v1974 = vpop.f32.mrb[0].mxu0
        %1975 = vmatprep.mubr.bf16.mxu0 0
        %1976 = vmatmul.mubr.bf16.gmra.mrb[0].mxu0 %v1883
        %v1977 = vpop.f32.mrb[0].mxu0
        %v1978 = vadd.f32 0.0, %v1977
        %v1979 = vpop.f32.mrb[0].mxu0
        %v1980 = vpop.f32.mrb[0].mxu0
        %v1981 = vadd.f32 0.0, %v1980
        %v1982 = vpop.f32.mrb[0].mxu0
        %1983 = vmatprep.mubr.bf16.mxu0 0
        %1984 = vmatmul.mubr.bf16.gmra.mrb[0].mxu0 %v1886
        %v1985 = vpop.f32.mrb[0].mxu0
        %v1986 = vadd.f32 0.0, %v1985
        %v1987 = vpop.f32.mrb[0].mxu0
        %v1988 = vpop.f32.mrb[0].mxu0
        %v1989 = vadd.f32 0.0, %v1988
        %v1990 = vpop.f32.mrb[0].mxu0
        %1991 = vmatprep.mubr.bf16.mxu0 0
        %1992 = vmatmul.mubr.bf16.gmra.mrb[0].mxu0 %v1889
        %v1993 = vpop.f32.mrb[0].mxu0
        %v1994 = vadd.f32 0.0, %v1993
        %v1995 = vpop.f32.mrb[0].mxu0
        %v1996 = vpop.f32.mrb[0].mxu0
        %v1997 = vadd.f32 0.0, %v1996
        %v1998 = vpop.f32.mrb[0].mxu0
        %1999 = vmatprep.mubr.bf16.mxu0 0
        %2000 = vmatmul.mubr.bf16.gmra.mrb[0].mxu0 %v1892
        %v2001 = vpop.f32.mrb[0].mxu0
        %v2002 = vadd.f32 0.0, %v2001
        %v2003 = vpop.f32.mrb[0].mxu0
        %v2004 = vpop.f32.mrb[0].mxu0
        %v2005 = vadd.f32 0.0, %v2004
        %v2006 = vpop.f32.mrb[0].mxu0
        %2007 = vmatprep.mubr.bf16.mxu0 0
        %2008 = vmatmul.mubr.bf16.gmra.mrb[0].mxu0 %v1895
        %v2009 = vpop.f32.mrb[0].mxu0
        %v2010 = vadd.f32 0.0, %v2009
        %v2011 = vpop.f32.mrb[0].mxu0
        %v2012 = vpop.f32.mrb[0].mxu0
        %v2013 = vadd.f32 0.0, %v2012
        %v2014 = vpop.f32.mrb[0].mxu0
        %2015 = vmatprep.mubr.bf16.mxu0 0
        %2016 = vmatmul.mubr.bf16.gmra.mrb[0].mxu0 %v1898
        %v2017 = vpop.f32.mrb[0].mxu0
        %v2018 = vadd.f32 0.0, %v2017
        %v2019 = vpop.f32.mrb[0].mxu0
        %v2020 = vpop.f32.mrb[0].mxu0
        %v2021 = vadd.f32 0.0, %v2020
        %v2022 = vpop.f32.mrb[0].mxu0
        %2023 = vmatprep.mubr.bf16.mxu0 0
        %2024 = vmatmul.mubr.bf16.gmra.mrb[0].mxu0 %v1901
        %v2025 = vpop.f32.mrb[0].mxu0
        %v2026 = vadd.f32 0.0, %v2025
        %v2027 = vpop.f32.mrb[0].mxu0
        %v2028 = vpop.f32.mrb[0].mxu0
        %v2029 = vadd.f32 0.0, %v2028
        %v2030 = vpop.f32.mrb[0].mxu0
        %2031 = vmatprep.mubr.bf16.mxu0 0
        %2032 = vmatmul.mubr.bf16.gmra.mrb[0].mxu0 %v1904
        %v2033 = vpop.f32.mrb[0].mxu0
        %v2034 = vadd.f32 0.0, %v2033
        %v2035 = vpop.f32.mrb[0].mxu0
        %v2036 = vpop.f32.mrb[0].mxu0
        %v2037 = vadd.f32 0.0, %v2036
        %v2038 = vpop.f32.mrb[0].mxu0
        %2039 = vmatprep.mubr.bf16.mxu0 0
        %2040 = vmatmul.mubr.bf16.gmra.mrb[0].mxu0 %v1907
        %v2041 = vpop.f32.mrb[0].mxu0
        %v2042 = vadd.f32 0.0, %v2041
        %v2043 = vpop.f32.mrb[0].mxu0
        %v2044 = vpop.f32.mrb[0].mxu0
        %v2045 = vadd.f32 0.0, %v2044
        %v2046 = vpop.f32.mrb[0].mxu0
        %2047 = vmatprep.mubr.bf16.mxu0 0
        %2048 = vmatmul.mubr.bf16.gmra.mrb[0].mxu0 %v1910
        %v2049 = vpop.f32.mrb[0].mxu0
        %v2050 = vadd.f32 0.0, %v2049
        %v2051 = vpop.f32.mrb[0].mxu0
        %v2052 = vpop.f32.mrb[0].mxu0
        %v2053 = vadd.f32 0.0, %v2052
        %v2054 = vpop.f32.mrb[0].mxu0
        %2055 = vmatprep.mubr.bf16.mxu0 0
        %2056 = vmatmul.mubr.bf16.gmra.mrb[0].mxu0 %v1913
        %v2057 = vpop.f32.mrb[0].mxu0
        %v2058 = vadd.f32 0.0, %v2057
        %v2059 = vpop.f32.mrb[0].mxu0
        %v2060 = vpop.f32.mrb[0].mxu0
        %v2061 = vadd.f32 0.0, %v2060
        %v2062 = vpop.f32.mrb[0].mxu0
        %2063 = vmatprep.mubr.bf16.mxu0 0
        %2064 = vmatmul.mubr.bf16.gmra.mrb[0].mxu0 %v1916
        %v2065 = vpop.f32.mrb[0].mxu0
        %v2066 = vadd.f32 0.0, %v2065
        %v2067 = vpop.f32.mrb[0].mxu0
        %v2068 = vpop.f32.mrb[0].mxu0
        %v2069 = vadd.f32 0.0, %v2068
        %v2070 = vpop.f32.mrb[0].mxu0
        %2071 = vmatprep.mubr.bf16.mxu0 0
        %2072 = vmatmul.mubr.bf16.gmra.mrb[0].mxu0 %v1919
        %v2073 = vpop.f32.mrb[0].mxu0
        %v2074 = vadd.f32 0.0, %v2073
        %v2075 = vpop.f32.mrb[0].mxu0
        %v2076 = vpop.f32.mrb[0].mxu0
        %v2077 = vadd.f32 0.0, %v2076
        %v2078 = vpop.f32.mrb[0].mxu0
        %2079 = vmatprep.mubr.bf16.mxu0 0
        %2080 = vmatmul.mubr.bf16.gmra.mrb[0].mxu0 %v1922
        %v2081 = vpop.f32.mrb[0].mxu0
        %v2082 = vadd.f32 0.0, %v2081
        %v2083 = vpop.f32.mrb[0].mxu0
        %v2084 = vpop.f32.mrb[0].mxu0
        %v2085 = vadd.f32 0.0, %v2084
        %v2086 = vpop.f32.mrb[0].mxu0
        %2087 = vdwg.mxu0
        %v2088 = vadd.f32 %v1732, %v1962
        %v2089 = vadd.f32 %v1735, %v1965
        %v2090 = vadd.f32 %v1740, %v1970
        %v2091 = vadd.f32 %v1743, %v1973
        %v2092 = vadd.f32 %v1748, %v1978
        %v2093 = vadd.f32 %v1751, %v1981
        %v2094 = vadd.f32 %v1756, %v1986
        %v2095 = vadd.f32 %v1759, %v1989
        %v2096 = vadd.f32 %v1764, %v1994
        %v2097 = vadd.f32 %v1767, %v1997
        %v2098 = vadd.f32 %v1772, %v2002
        %v2099 = vadd.f32 %v1775, %v2005
        %v2100 = vadd.f32 %v1780, %v2010
        %v2101 = vadd.f32 %v1783, %v2013
        %v2102 = vadd.f32 %v1788, %v2018
        %v2103 = vadd.f32 %v1791, %v2021
        %v2104 = vadd.f32 %v1796, %v2026
        %v2105 = vadd.f32 %v1799, %v2029
        %v2106 = vadd.f32 %v1804, %v2034
        %v2107 = vadd.f32 %v1807, %v2037
        %v2108 = vadd.f32 %v1812, %v2042
        %v2109 = vadd.f32 %v1815, %v2045
        %v2110 = vadd.f32 %v1820, %v2050
        %v2111 = vadd.f32 %v1823, %v2053
        %v2112 = vadd.f32 %v1828, %v2058
        %v2113 = vadd.f32 %v1831, %v2061
        %v2114 = vadd.f32 %v1836, %v2066
        %v2115 = vadd.f32 %v1839, %v2069
        %v2116 = vadd.f32 %v1844, %v2074
        %v2117 = vadd.f32 %v1847, %v2077
        %v2118 = vadd.f32 %v1852, %v2082
        %v2119 = vadd.f32 %v1855, %v2085
        %v2120 = vld [vmem:[%s276 + $0x10] sm:$0xf]
        %v2121 = vld [vmem:[%s276 + $0x14] sm:$0xf]
        %v2122 = vld [vmem:[%s276 + $0x18] sm:$0xf]
        %v2123 = vld [vmem:[%s276 + $0x1c] sm:$0xf]
        %v2124 = vld [vmem:[%s276 + $0x20] sm:$0xf]
        %v2125 = vld [vmem:[%s276 + $0x24] sm:$0xf]
        %v2126 = vld [vmem:[%s276 + $0x28] sm:$0xf]
        %v2127 = vld [vmem:[%s276 + $0x2c] sm:$0xf]
        %v2128 = vld [vmem:[%s276 + $0x30] sm:$0xf]
        %v2129 = vld [vmem:[%s276 + $0x34] sm:$0xf]
        %v2130 = vld [vmem:[%s276 + $0x38] sm:$0xf]
        %v2131 = vld [vmem:[%s276 + $0x3c] sm:$0xf]
        %v2132 = vld [vmem:[%s276 + $0x40] sm:$0xf]
        %v2133 = vld [vmem:[%s276 + $0x44] sm:$0xf]
        %v2134 = vld [vmem:[%s276 + $0x48] sm:$0xf]
        %v2135 = vld [vmem:[%s276 + $0x4c] sm:$0xf]
        %v2136 = vld [vmem:[%s276 + $0x50] sm:$0xf]
        %v2137 = vld [vmem:[%s276 + $0x54] sm:$0xf]
        %v2138 = vld [vmem:[%s276 + $0x58] sm:$0xf]
        %v2139 = vld [vmem:[%s276 + $0x5c] sm:$0xf]
        %v2140 = vld [vmem:[%s276 + $0x60] sm:$0xf]
        %v2141 = vld [vmem:[%s276 + $0x64] sm:$0xf]
        %v2142 = vld [vmem:[%s276 + $0x68] sm:$0xf]
        %v2143 = vld [vmem:[%s276 + $0x6c] sm:$0xf]
        %v2144 = vld [vmem:[%s276 + $0x70] sm:$0xf]
        %v2145 = vld [vmem:[%s276 + $0x74] sm:$0xf]
        %v2146 = vld [vmem:[%s276 + $0x78] sm:$0xf]
        %v2147 = vld [vmem:[%s276 + $0x7c] sm:$0xf]
        %v2148 = vld [vmem:[%s276 + $0x80] sm:$0xf]
        %v2149 = vld [vmem:[%s276 + $0x84] sm:$0xf]
        %v2150 = vld [vmem:[%s276 + $0x88] sm:$0xf]
        %v2151 = vld [vmem:[%s276 + $0x8c] sm:$0xf]
        %s2152 = scalar_lea.vmem %s2, 6
        %v2153 = vld [vmem:[%s2152] sm:$0x3]
        %v2186 = vunpack.c.l.b16 %v2120
        %v2187 = vunpack.c.l.b16 %v2121
        %v2188 = vunpack.c.l.b16 %v2122
        %v2189 = vunpack.c.l.b16 %v2123
        %v2190 = vunpack.c.l.b16 %v2124
        %v2191 = vunpack.c.l.b16 %v2125
        %v2192 = vunpack.c.l.b16 %v2126
        %v2193 = vunpack.c.l.b16 %v2127
        %v2194 = vunpack.c.l.b16 %v2128
        %v2195 = vunpack.c.l.b16 %v2129
        %v2196 = vunpack.c.l.b16 %v2130
        %v2197 = vunpack.c.l.b16 %v2131
        %v2198 = vunpack.c.l.b16 %v2132
        %v2199 = vunpack.c.l.b16 %v2133
        %v2200 = vunpack.c.l.b16 %v2134
        %v2201 = vunpack.c.l.b16 %v2135
        %v2202 = vunpack.c.l.b16 %v2136
        %v2203 = vunpack.c.l.b16 %v2137
        %v2204 = vunpack.c.l.b16 %v2138
        %v2205 = vunpack.c.l.b16 %v2139
        %v2206 = vunpack.c.l.b16 %v2140
        %v2207 = vunpack.c.l.b16 %v2141
        %v2208 = vunpack.c.l.b16 %v2142
        %v2209 = vunpack.c.l.b16 %v2143
        %v2210 = vunpack.c.l.b16 %v2144
        %v2211 = vunpack.c.l.b16 %v2145
        %v2212 = vunpack.c.l.b16 %v2146
        %v2213 = vunpack.c.l.b16 %v2147
        %v2214 = vunpack.c.l.b16 %v2148
        %v2215 = vunpack.c.l.b16 %v2149
        %v2216 = vunpack.c.l.b16 %v2150
        %v2217 = vunpack.c.l.b16 %v2151
        %v2218 = vpack.c.b16 %v2187, %v2186
        %v2219 = vpack.c.b16 %v2189, %v2188
        %v2220 = vpack.c.b16 %v2191, %v2190
        %v2221 = vpack.c.b16 %v2193, %v2192
        %v2222 = vpack.c.b16 %v2195, %v2194
        %v2223 = vpack.c.b16 %v2197, %v2196
        %v2224 = vpack.c.b16 %v2199, %v2198
        %v2225 = vpack.c.b16 %v2201, %v2200
        %v2226 = vpack.c.b16 %v2203, %v2202
        %v2227 = vpack.c.b16 %v2205, %v2204
        %v2228 = vpack.c.b16 %v2207, %v2206
        %v2229 = vpack.c.b16 %v2209, %v2208
        %v2230 = vpack.c.b16 %v2211, %v2210
        %v2231 = vpack.c.b16 %v2213, %v2212
        %v2232 = vpack.c.b16 %v2215, %v2214
        %v2233 = vpack.c.b16 %v2217, %v2216
        %v2235 = vsel %vm863, %v2218, 0
        %v2238 = vsel %vm863, %v2219, 0
        %v2241 = vsel %vm863, %v2220, 0
        %v2244 = vsel %vm863, %v2221, 0
        %v2247 = vsel %vm863, %v2222, 0
        %v2250 = vsel %vm863, %v2223, 0
        %v2253 = vsel %vm863, %v2224, 0
        %v2256 = vsel %vm863, %v2225, 0
        %v2259 = vsel %vm863, %v2226, 0
        %v2262 = vsel %vm863, %v2227, 0
        %v2265 = vsel %vm863, %v2228, 0
        %v2268 = vsel %vm863, %v2229, 0
        %v2271 = vsel %vm863, %v2230, 0
        %v2274 = vsel %vm863, %v2231, 0
        %v2277 = vsel %vm863, %v2232, 0
        %v2280 = vsel %vm863, %v2233, 0
        %v2283 = vsel %vm1401, %v2153, 0
        %2285 = vmatprep.subr.bf16.mxu0 0
        %2286 = vmatpush1.bf16.msra.mxu0 %v2283
        %2287 = vmatprep.subr.bf16.mxu0 0
        %2288 = vmatpush1.bf16.msra.mxu0 0
        %2289 = vmatprep.subr.bf16.mxu0 0
        %2290 = vmatpush1.bf16.msra.mxu0 0
        %2291 = vmatprep.subr.bf16.mxu0 0
        %2292 = vmatpush1.bf16.msra.mxu0 0
        %2293 = vmatprep.subr.bf16.mxu0 0
        %2294 = vmatpush1.bf16.msra.mxu0 0
        %2295 = vmatprep.subr.bf16.mxu0 0
        %2296 = vmatpush1.bf16.msra.mxu0 0
        %2297 = vmatprep.subr.bf16.mxu0 0
        %2298 = vmatpush1.bf16.msra.mxu0 0
        %2299 = vmatprep.subr.bf16.mxu0 0
        %2300 = vmatpush1.bf16.msra.mxu0 0
        %2301 = vmatprep.subr.bf16.mxu0 0
        %2302 = vmatpush1.bf16.msra.mxu0 0
        %2303 = vmatprep.subr.bf16.mxu0 0
        %2304 = vmatpush1.bf16.msra.mxu0 0
        %2305 = vmatprep.subr.bf16.mxu0 0
        %2306 = vmatpush1.bf16.msra.mxu0 0
        %2307 = vmatprep.subr.bf16.mxu0 0
        %2308 = vmatpush1.bf16.msra.mxu0 0
        %2309 = vmatprep.subr.bf16.mxu0 0
        %2310 = vmatpush1.bf16.msra.mxu0 0
        %2311 = vmatprep.subr.bf16.mxu0 0
        %2312 = vmatpush1.bf16.msra.mxu0 0
        %2313 = vmatprep.subr.bf16.mxu0 0
        %2314 = vmatpush1.bf16.msra.mxu0 0
        %2315 = vmatprep.subr.bf16.mxu0 0
        %2316 = vmatpush1.bf16.msra.mxu0 0
        %2317 = vmatprep.mubr.bf16.mxu0 0
        %2318 = vmatmul.mubr.bf16.gmra.mrb[0].mxu0 %v2235
        %v2319 = vpop.f32.mrb[0].mxu0
        %v2320 = vadd.f32 0.0, %v2319
        %v2321 = vpop.f32.mrb[0].mxu0
        %v2322 = vpop.f32.mrb[0].mxu0
        %v2323 = vadd.f32 0.0, %v2322
        %v2324 = vpop.f32.mrb[0].mxu0
        %2325 = vmatprep.mubr.bf16.mxu0 0
        %2326 = vmatmul.mubr.bf16.gmra.mrb[0].mxu0 %v2238
        %v2327 = vpop.f32.mrb[0].mxu0
        %v2328 = vadd.f32 0.0, %v2327
        %v2329 = vpop.f32.mrb[0].mxu0
        %v2330 = vpop.f32.mrb[0].mxu0
        %v2331 = vadd.f32 0.0, %v2330
        %v2332 = vpop.f32.mrb[0].mxu0
        %2333 = vmatprep.mubr.bf16.mxu0 0
        %2334 = vmatmul.mubr.bf16.gmra.mrb[0].mxu0 %v2241
        %v2335 = vpop.f32.mrb[0].mxu0
        %v2336 = vadd.f32 0.0, %v2335
        %v2337 = vpop.f32.mrb[0].mxu0
        %v2338 = vpop.f32.mrb[0].mxu0
        %v2339 = vadd.f32 0.0, %v2338
        %v2340 = vpop.f32.mrb[0].mxu0
        %2341 = vmatprep.mubr.bf16.mxu0 0
        %2342 = vmatmul.mubr.bf16.gmra.mrb[0].mxu0 %v2244
        %v2343 = vpop.f32.mrb[0].mxu0
        %v2344 = vadd.f32 0.0, %v2343
        %v2345 = vpop.f32.mrb[0].mxu0
        %v2346 = vpop.f32.mrb[0].mxu0
        %v2347 = vadd.f32 0.0, %v2346
        %v2348 = vpop.f32.mrb[0].mxu0
        %2349 = vmatprep.mubr.bf16.mxu0 0
        %2350 = vmatmul.mubr.bf16.gmra.mrb[0].mxu0 %v2247
        %v2351 = vpop.f32.mrb[0].mxu0
        %v2352 = vadd.f32 0.0, %v2351
        %v2353 = vpop.f32.mrb[0].mxu0
        %v2354 = vpop.f32.mrb[0].mxu0
        %v2355 = vadd.f32 0.0, %v2354
        %v2356 = vpop.f32.mrb[0].mxu0
        %2357 = vmatprep.mubr.bf16.mxu0 0
        %2358 = vmatmul.mubr.bf16.gmra.mrb[0].mxu0 %v2250
        %v2359 = vpop.f32.mrb[0].mxu0
        %v2360 = vadd.f32 0.0, %v2359
        %v2361 = vpop.f32.mrb[0].mxu0
        %v2362 = vpop.f32.mrb[0].mxu0
        %v2363 = vadd.f32 0.0, %v2362
        %v2364 = vpop.f32.mrb[0].mxu0
        %2365 = vmatprep.mubr.bf16.mxu0 0
        %2366 = vmatmul.mubr.bf16.gmra.mrb[0].mxu0 %v2253
        %v2367 = vpop.f32.mrb[0].mxu0
        %v2368 = vadd.f32 0.0, %v2367
        %v2369 = vpop.f32.mrb[0].mxu0
        %v2370 = vpop.f32.mrb[0].mxu0
        %v2371 = vadd.f32 0.0, %v2370
        %v2372 = vpop.f32.mrb[0].mxu0
        %2373 = vmatprep.mubr.bf16.mxu0 0
        %2374 = vmatmul.mubr.bf16.gmra.mrb[0].mxu0 %v2256
        %v2375 = vpop.f32.mrb[0].mxu0
        %v2376 = vadd.f32 0.0, %v2375
        %v2377 = vpop.f32.mrb[0].mxu0
        %v2378 = vpop.f32.mrb[0].mxu0
        %v2379 = vadd.f32 0.0, %v2378
        %v2380 = vpop.f32.mrb[0].mxu0
        %2381 = vmatprep.mubr.bf16.mxu0 0
        %2382 = vmatmul.mubr.bf16.gmra.mrb[0].mxu0 %v2259
        %v2383 = vpop.f32.mrb[0].mxu0
        %v2384 = vadd.f32 0.0, %v2383
        %v2385 = vpop.f32.mrb[0].mxu0
        %v2386 = vpop.f32.mrb[0].mxu0
        %v2387 = vadd.f32 0.0, %v2386
        %v2388 = vpop.f32.mrb[0].mxu0
        %2389 = vmatprep.mubr.bf16.mxu0 0
        %2390 = vmatmul.mubr.bf16.gmra.mrb[0].mxu0 %v2262
        %v2391 = vpop.f32.mrb[0].mxu0
        %v2392 = vadd.f32 0.0, %v2391
        %v2393 = vpop.f32.mrb[0].mxu0
        %v2394 = vpop.f32.mrb[0].mxu0
        %v2395 = vadd.f32 0.0, %v2394
        %v2396 = vpop.f32.mrb[0].mxu0
        %2397 = vmatprep.mubr.bf16.mxu0 0
        %2398 = vmatmul.mubr.bf16.gmra.mrb[0].mxu0 %v2265
        %v2399 = vpop.f32.mrb[0].mxu0
        %v2400 = vadd.f32 0.0, %v2399
        %v2401 = vpop.f32.mrb[0].mxu0
        %v2402 = vpop.f32.mrb[0].mxu0
        %v2403 = vadd.f32 0.0, %v2402
        %v2404 = vpop.f32.mrb[0].mxu0
        %2405 = vmatprep.mubr.bf16.mxu0 0
        %2406 = vmatmul.mubr.bf16.gmra.mrb[0].mxu0 %v2268
        %v2407 = vpop.f32.mrb[0].mxu0
        %v2408 = vadd.f32 0.0, %v2407
        %v2409 = vpop.f32.mrb[0].mxu0
        %v2410 = vpop.f32.mrb[0].mxu0
        %v2411 = vadd.f32 0.0, %v2410
        %v2412 = vpop.f32.mrb[0].mxu0
        %2413 = vmatprep.mubr.bf16.mxu0 0
        %2414 = vmatmul.mubr.bf16.gmra.mrb[0].mxu0 %v2271
        %v2415 = vpop.f32.mrb[0].mxu0
        %v2416 = vadd.f32 0.0, %v2415
        %v2417 = vpop.f32.mrb[0].mxu0
        %v2418 = vpop.f32.mrb[0].mxu0
        %v2419 = vadd.f32 0.0, %v2418
        %v2420 = vpop.f32.mrb[0].mxu0
        %2421 = vmatprep.mubr.bf16.mxu0 0
        %2422 = vmatmul.mubr.bf16.gmra.mrb[0].mxu0 %v2274
        %v2423 = vpop.f32.mrb[0].mxu0
        %v2424 = vadd.f32 0.0, %v2423
        %v2425 = vpop.f32.mrb[0].mxu0
        %v2426 = vpop.f32.mrb[0].mxu0
        %v2427 = vadd.f32 0.0, %v2426
        %v2428 = vpop.f32.mrb[0].mxu0
        %2429 = vmatprep.mubr.bf16.mxu0 0
        %2430 = vmatmul.mubr.bf16.gmra.mrb[0].mxu0 %v2277
        %v2431 = vpop.f32.mrb[0].mxu0
        %v2432 = vadd.f32 0.0, %v2431
        %v2433 = vpop.f32.mrb[0].mxu0
        %v2434 = vpop.f32.mrb[0].mxu0
        %v2435 = vadd.f32 0.0, %v2434
        %v2436 = vpop.f32.mrb[0].mxu0
        %2437 = vmatprep.mubr.bf16.mxu0 0
        %2438 = vmatmul.mubr.bf16.gmra.mrb[0].mxu0 %v2280
        %v2439 = vpop.f32.mrb[0].mxu0
        %v2440 = vadd.f32 0.0, %v2439
        %v2441 = vpop.f32.mrb[0].mxu0
        %v2442 = vpop.f32.mrb[0].mxu0
        %v2443 = vadd.f32 0.0, %v2442
        %v2444 = vpop.f32.mrb[0].mxu0
        %2445 = vdwg.mxu0
        %v2446 = vadd.f32 %v2088, %v2320
        %v2447 = vadd.f32 %v2089, %v2323
        %v2448 = vadd.f32 %v2090, %v2328
        %v2449 = vadd.f32 %v2091, %v2331
        %v2450 = vadd.f32 %v2092, %v2336
        %v2451 = vadd.f32 %v2093, %v2339
        %v2452 = vadd.f32 %v2094, %v2344
        %v2453 = vadd.f32 %v2095, %v2347
        %v2454 = vadd.f32 %v2096, %v2352
        %v2455 = vadd.f32 %v2097, %v2355
        %v2456 = vadd.f32 %v2098, %v2360
        %v2457 = vadd.f32 %v2099, %v2363
        %v2458 = vadd.f32 %v2100, %v2368
        %v2459 = vadd.f32 %v2101, %v2371
        %v2460 = vadd.f32 %v2102, %v2376
        %v2461 = vadd.f32 %v2103, %v2379
        %v2462 = vadd.f32 %v2104, %v2384
        %v2463 = vadd.f32 %v2105, %v2387
        %v2464 = vadd.f32 %v2106, %v2392
        %v2465 = vadd.f32 %v2107, %v2395
        %v2466 = vadd.f32 %v2108, %v2400
        %v2467 = vadd.f32 %v2109, %v2403
        %v2468 = vadd.f32 %v2110, %v2408
        %v2469 = vadd.f32 %v2111, %v2411
        %v2470 = vadd.f32 %v2112, %v2416
        %v2471 = vadd.f32 %v2113, %v2419
        %v2472 = vadd.f32 %v2114, %v2424
        %v2473 = vadd.f32 %v2115, %v2427
        %v2474 = vadd.f32 %v2116, %v2432
        %v2475 = vadd.f32 %v2117, %v2435
        %v2476 = vadd.f32 %v2118, %v2440
        %v2477 = vadd.f32 %v2119, %v2443
        %v2478 = vld [vmem:[#allocation2 + $0x10] sm:$0xff]
        %v2479 = vld [vmem:[#allocation2 + $0x18] sm:$0xff]
        %v2480 = vld [vmem:[#allocation2 + $0x20] sm:$0xff]
        %v2481 = vld [vmem:[#allocation2 + $0x28] sm:$0xff]
        %v2482 = vld [vmem:[#allocation2 + $0x30] sm:$0xff]
        %v2483 = vld [vmem:[#allocation2 + $0x38] sm:$0xff]
        %v2484 = vld [vmem:[#allocation2 + $0x40] sm:$0xff]
        %v2485 = vld [vmem:[#allocation2 + $0x48] sm:$0xff]
        %v2486 = vld [vmem:[#allocation2 + $0x50] sm:$0xff]
        %v2487 = vld [vmem:[#allocation2 + $0x58] sm:$0xff]
        %v2488 = vld [vmem:[#allocation2 + $0x60] sm:$0xff]
        %v2489 = vld [vmem:[#allocation2 + $0x68] sm:$0xff]
        %v2490 = vld [vmem:[#allocation2 + $0x70] sm:$0xff]
        %v2491 = vld [vmem:[#allocation2 + $0x78] sm:$0xff]
        %v2492 = vld [vmem:[#allocation2 + $0x80] sm:$0xff]
        %v2493 = vld [vmem:[#allocation2 + $0x88] sm:$0xff]
        %s2494 = scalar_lea.vmem %s2, 8
        %v2495 = vld [vmem:[%s2494] sm:$0x3]
        %v2497 = vsel %vm863, %v2478, 0
        %v2500 = vsel %vm863, %v2479, 0
        %v2503 = vsel %vm863, %v2480, 0
        %v2506 = vsel %vm863, %v2481, 0
        %v2509 = vsel %vm863, %v2482, 0
        %v2512 = vsel %vm863, %v2483, 0
        %v2515 = vsel %vm863, %v2484, 0
        %v2518 = vsel %vm863, %v2485, 0
        %v2521 = vsel %vm863, %v2486, 0
        %v2524 = vsel %vm863, %v2487, 0
        %v2527 = vsel %vm863, %v2488, 0
        %v2530 = vsel %vm863, %v2489, 0
        %v2533 = vsel %vm863, %v2490, 0
        %v2536 = vsel %vm863, %v2491, 0
        %v2539 = vsel %vm863, %v2492, 0
        %v2542 = vsel %vm863, %v2493, 0
        %v2545 = vsel %vm1401, %v2495, 0
        %2547 = vmatprep.subr.bf16.mxu0 0
        %2548 = vmatpush1.bf16.msra.mxu0 %v2545
        %2549 = vmatprep.subr.bf16.mxu0 0
        %2550 = vmatpush1.bf16.msra.mxu0 0
        %2551 = vmatprep.subr.bf16.mxu0 0
        %2552 = vmatpush1.bf16.msra.mxu0 0
        %2553 = vmatprep.subr.bf16.mxu0 0
        %2554 = vmatpush1.bf16.msra.mxu0 0
        %2555 = vmatprep.subr.bf16.mxu0 0
        %2556 = vmatpush1.bf16.msra.mxu0 0
        %2557 = vmatprep.subr.bf16.mxu0 0
        %2558 = vmatpush1.bf16.msra.mxu0 0
        %2559 = vmatprep.subr.bf16.mxu0 0
        %2560 = vmatpush1.bf16.msra.mxu0 0
        %2561 = vmatprep.subr.bf16.mxu0 0
        %2562 = vmatpush1.bf16.msra.mxu0 0
        %2563 = vmatprep.subr.bf16.mxu0 0
        %2564 = vmatpush1.bf16.msra.mxu0 0
        %2565 = vmatprep.subr.bf16.mxu0 0
        %2566 = vmatpush1.bf16.msra.mxu0 0
        %2567 = vmatprep.subr.bf16.mxu0 0
        %2568 = vmatpush1.bf16.msra.mxu0 0
        %2569 = vmatprep.subr.bf16.mxu0 0
        %2570 = vmatpush1.bf16.msra.mxu0 0
        %2571 = vmatprep.subr.bf16.mxu0 0
        %2572 = vmatpush1.bf16.msra.mxu0 0
        %2573 = vmatprep.subr.bf16.mxu0 0
        %2574 = vmatpush1.bf16.msra.mxu0 0
        %2575 = vmatprep.subr.bf16.mxu0 0
        %2576 = vmatpush1.bf16.msra.mxu0 0
        %2577 = vmatprep.subr.bf16.mxu0 0
        %2578 = vmatpush1.bf16.msra.mxu0 0
        %2579 = vmatprep.mubr.bf16.mxu0 0
        %2580 = vmatmul.mubr.bf16.gmra.mrb[0].mxu0 %v2497
        %v2581 = vpop.f32.mrb[0].mxu0
        %v2582 = vadd.f32 0.0, %v2581
        %v2583 = vpop.f32.mrb[0].mxu0
        %v2584 = vpop.f32.mrb[0].mxu0
        %v2585 = vadd.f32 0.0, %v2584
        %v2586 = vpop.f32.mrb[0].mxu0
        %2587 = vmatprep.mubr.bf16.mxu0 0
        %2588 = vmatmul.mubr.bf16.gmra.mrb[0].mxu0 %v2500
        %v2589 = vpop.f32.mrb[0].mxu0
        %v2590 = vadd.f32 0.0, %v2589
        %v2591 = vpop.f32.mrb[0].mxu0
        %v2592 = vpop.f32.mrb[0].mxu0
        %v2593 = vadd.f32 0.0, %v2592
        %v2594 = vpop.f32.mrb[0].mxu0
        %2595 = vmatprep.mubr.bf16.mxu0 0
        %2596 = vmatmul.mubr.bf16.gmra.mrb[0].mxu0 %v2503
        %v2597 = vpop.f32.mrb[0].mxu0
        %v2598 = vadd.f32 0.0, %v2597
        %v2599 = vpop.f32.mrb[0].mxu0
        %v2600 = vpop.f32.mrb[0].mxu0
        %v2601 = vadd.f32 0.0, %v2600
        %v2602 = vpop.f32.mrb[0].mxu0
        %2603 = vmatprep.mubr.bf16.mxu0 0
        %2604 = vmatmul.mubr.bf16.gmra.mrb[0].mxu0 %v2506
        %v2605 = vpop.f32.mrb[0].mxu0
        %v2606 = vadd.f32 0.0, %v2605
        %v2607 = vpop.f32.mrb[0].mxu0
        %v2608 = vpop.f32.mrb[0].mxu0
        %v2609 = vadd.f32 0.0, %v2608
        %v2610 = vpop.f32.mrb[0].mxu0
        %2611 = vmatprep.mubr.bf16.mxu0 0
        %2612 = vmatmul.mubr.bf16.gmra.mrb[0].mxu0 %v2509
        %v2613 = vpop.f32.mrb[0].mxu0
        %v2614 = vadd.f32 0.0, %v2613
        %v2615 = vpop.f32.mrb[0].mxu0
        %v2616 = vpop.f32.mrb[0].mxu0
        %v2617 = vadd.f32 0.0, %v2616
        %v2618 = vpop.f32.mrb[0].mxu0
        %2619 = vmatprep.mubr.bf16.mxu0 0
        %2620 = vmatmul.mubr.bf16.gmra.mrb[0].mxu0 %v2512
        %v2621 = vpop.f32.mrb[0].mxu0
        %v2622 = vadd.f32 0.0, %v2621
        %v2623 = vpop.f32.mrb[0].mxu0
        %v2624 = vpop.f32.mrb[0].mxu0
        %v2625 = vadd.f32 0.0, %v2624
        %v2626 = vpop.f32.mrb[0].mxu0
        %2627 = vmatprep.mubr.bf16.mxu0 0
        %2628 = vmatmul.mubr.bf16.gmra.mrb[0].mxu0 %v2515
        %v2629 = vpop.f32.mrb[0].mxu0
        %v2630 = vadd.f32 0.0, %v2629
        %v2631 = vpop.f32.mrb[0].mxu0
        %v2632 = vpop.f32.mrb[0].mxu0
        %v2633 = vadd.f32 0.0, %v2632
        %v2634 = vpop.f32.mrb[0].mxu0
        %2635 = vmatprep.mubr.bf16.mxu0 0
        %2636 = vmatmul.mubr.bf16.gmra.mrb[0].mxu0 %v2518
        %v2637 = vpop.f32.mrb[0].mxu0
        %v2638 = vadd.f32 0.0, %v2637
        %v2639 = vpop.f32.mrb[0].mxu0
        %v2640 = vpop.f32.mrb[0].mxu0
        %v2641 = vadd.f32 0.0, %v2640
        %v2642 = vpop.f32.mrb[0].mxu0
        %2643 = vmatprep.mubr.bf16.mxu0 0
        %2644 = vmatmul.mubr.bf16.gmra.mrb[0].mxu0 %v2521
        %v2645 = vpop.f32.mrb[0].mxu0
        %v2646 = vadd.f32 0.0, %v2645
        %v2647 = vpop.f32.mrb[0].mxu0
        %v2648 = vpop.f32.mrb[0].mxu0
        %v2649 = vadd.f32 0.0, %v2648
        %v2650 = vpop.f32.mrb[0].mxu0
        %2651 = vmatprep.mubr.bf16.mxu0 0
        %2652 = vmatmul.mubr.bf16.gmra.mrb[0].mxu0 %v2524
        %v2653 = vpop.f32.mrb[0].mxu0
        %v2654 = vadd.f32 0.0, %v2653
        %v2655 = vpop.f32.mrb[0].mxu0
        %v2656 = vpop.f32.mrb[0].mxu0
        %v2657 = vadd.f32 0.0, %v2656
        %v2658 = vpop.f32.mrb[0].mxu0
        %2659 = vmatprep.mubr.bf16.mxu0 0
        %2660 = vmatmul.mubr.bf16.gmra.mrb[0].mxu0 %v2527
        %v2661 = vpop.f32.mrb[0].mxu0
        %v2662 = vadd.f32 0.0, %v2661
        %v2663 = vpop.f32.mrb[0].mxu0
        %v2664 = vpop.f32.mrb[0].mxu0
        %v2665 = vadd.f32 0.0, %v2664
        %v2666 = vpop.f32.mrb[0].mxu0
        %2667 = vmatprep.mubr.bf16.mxu0 0
        %2668 = vmatmul.mubr.bf16.gmra.mrb[0].mxu0 %v2530
        %v2669 = vpop.f32.mrb[0].mxu0
        %v2670 = vadd.f32 0.0, %v2669
        %v2671 = vpop.f32.mrb[0].mxu0
        %v2672 = vpop.f32.mrb[0].mxu0
        %v2673 = vadd.f32 0.0, %v2672
        %v2674 = vpop.f32.mrb[0].mxu0
        %2675 = vmatprep.mubr.bf16.mxu0 0
        %2676 = vmatmul.mubr.bf16.gmra.mrb[0].mxu0 %v2533
        %v2677 = vpop.f32.mrb[0].mxu0
        %v2678 = vadd.f32 0.0, %v2677
        %v2679 = vpop.f32.mrb[0].mxu0
        %v2680 = vpop.f32.mrb[0].mxu0
        %v2681 = vadd.f32 0.0, %v2680
        %v2682 = vpop.f32.mrb[0].mxu0
        %2683 = vmatprep.mubr.bf16.mxu0 0
        %2684 = vmatmul.mubr.bf16.gmra.mrb[0].mxu0 %v2536
        %v2685 = vpop.f32.mrb[0].mxu0
        %v2686 = vadd.f32 0.0, %v2685
        %v2687 = vpop.f32.mrb[0].mxu0
        %v2688 = vpop.f32.mrb[0].mxu0
        %v2689 = vadd.f32 0.0, %v2688
        %v2690 = vpop.f32.mrb[0].mxu0
        %2691 = vmatprep.mubr.bf16.mxu0 0
        %2692 = vmatmul.mubr.bf16.gmra.mrb[0].mxu0 %v2539
        %v2693 = vpop.f32.mrb[0].mxu0
        %v2694 = vadd.f32 0.0, %v2693
        %v2695 = vpop.f32.mrb[0].mxu0
        %v2696 = vpop.f32.mrb[0].mxu0
        %v2697 = vadd.f32 0.0, %v2696
        %v2698 = vpop.f32.mrb[0].mxu0
        %2699 = vmatprep.mubr.bf16.mxu0 0
        %2700 = vmatmul.mubr.bf16.gmra.mrb[0].mxu0 %v2542
        %v2701 = vpop.f32.mrb[0].mxu0
        %v2702 = vadd.f32 0.0, %v2701
        %v2703 = vpop.f32.mrb[0].mxu0
        %v2704 = vpop.f32.mrb[0].mxu0
        %v2705 = vadd.f32 0.0, %v2704
        %v2706 = vpop.f32.mrb[0].mxu0
        %2707 = vdwg.mxu0
        %v2708 = vadd.f32 %v2446, %v2582
        %v2709 = vadd.f32 %v2447, %v2585
        %v2710 = vadd.f32 %v2448, %v2590
        %v2711 = vadd.f32 %v2449, %v2593
        %v2712 = vadd.f32 %v2450, %v2598
        %v2713 = vadd.f32 %v2451, %v2601
        %v2714 = vadd.f32 %v2452, %v2606
        %v2715 = vadd.f32 %v2453, %v2609
        %v2716 = vadd.f32 %v2454, %v2614
        %v2717 = vadd.f32 %v2455, %v2617
        %v2718 = vadd.f32 %v2456, %v2622
        %v2719 = vadd.f32 %v2457, %v2625
        %v2720 = vadd.f32 %v2458, %v2630
        %v2721 = vadd.f32 %v2459, %v2633
        %v2722 = vadd.f32 %v2460, %v2638
        %v2723 = vadd.f32 %v2461, %v2641
        %v2724 = vadd.f32 %v2462, %v2646
        %v2725 = vadd.f32 %v2463, %v2649
        %v2726 = vadd.f32 %v2464, %v2654
        %v2727 = vadd.f32 %v2465, %v2657
        %v2728 = vadd.f32 %v2466, %v2662
        %v2729 = vadd.f32 %v2467, %v2665
        %v2730 = vadd.f32 %v2468, %v2670
        %v2731 = vadd.f32 %v2469, %v2673
        %v2732 = vadd.f32 %v2470, %v2678
        %v2733 = vadd.f32 %v2471, %v2681
        %v2734 = vadd.f32 %v2472, %v2686
        %v2735 = vadd.f32 %v2473, %v2689
        %v2736 = vadd.f32 %v2474, %v2694
        %v2737 = vadd.f32 %v2475, %v2697
        %v2738 = vadd.f32 %v2476, %v2702
        %v2739 = vadd.f32 %v2477, %v2705
        %v2740 = vld [vmem:[#allocation3 + $0x10] sm:$0xff]
        %v2741 = vld [vmem:[#allocation3 + $0x18] sm:$0xff]
        %v2742 = vld [vmem:[#allocation3 + $0x20] sm:$0xff]
        %v2743 = vld [vmem:[#allocation3 + $0x28] sm:$0xff]
        %v2744 = vld [vmem:[#allocation3 + $0x30] sm:$0xff]
        %v2745 = vld [vmem:[#allocation3 + $0x38] sm:$0xff]
        %v2746 = vld [vmem:[#allocation3 + $0x40] sm:$0xff]
        %v2747 = vld [vmem:[#allocation3 + $0x48] sm:$0xff]
        %v2748 = vld [vmem:[#allocation3 + $0x50] sm:$0xff]
        %v2749 = vld [vmem:[#allocation3 + $0x58] sm:$0xff]
        %v2750 = vld [vmem:[#allocation3 + $0x60] sm:$0xff]
        %v2751 = vld [vmem:[#allocation3 + $0x68] sm:$0xff]
        %v2752 = vld [vmem:[#allocation3 + $0x70] sm:$0xff]
        %v2753 = vld [vmem:[#allocation3 + $0x78] sm:$0xff]
        %v2754 = vld [vmem:[#allocation3 + $0x80] sm:$0xff]
        %v2755 = vld [vmem:[#allocation3 + $0x88] sm:$0xff]
        %s2756 = scalar_lea.vmem %s2, 10
        %v2757 = vld [vmem:[%s2756] sm:$0x3]
        %v2759 = vsel %vm863, %v2740, 0
        %v2762 = vsel %vm863, %v2741, 0
        %v2765 = vsel %vm863, %v2742, 0
        %v2768 = vsel %vm863, %v2743, 0
        %v2771 = vsel %vm863, %v2744, 0
        %v2774 = vsel %vm863, %v2745, 0
        %v2777 = vsel %vm863, %v2746, 0
        %v2780 = vsel %vm863, %v2747, 0
        %v2783 = vsel %vm863, %v2748, 0
        %v2786 = vsel %vm863, %v2749, 0
        %v2789 = vsel %vm863, %v2750, 0
        %v2792 = vsel %vm863, %v2751, 0
        %v2795 = vsel %vm863, %v2752, 0
        %v2798 = vsel %vm863, %v2753, 0
        %v2801 = vsel %vm863, %v2754, 0
        %v2804 = vsel %vm863, %v2755, 0
        %v2807 = vsel %vm1401, %v2757, 0
        %2809 = vmatprep.subr.bf16.mxu0 0
        %2810 = vmatpush1.bf16.msra.mxu0 %v2807
        %2811 = vmatprep.subr.bf16.mxu0 0
        %2812 = vmatpush1.bf16.msra.mxu0 0
        %2813 = vmatprep.subr.bf16.mxu0 0
        %2814 = vmatpush1.bf16.msra.mxu0 0
        %2815 = vmatprep.subr.bf16.mxu0 0
        %2816 = vmatpush1.bf16.msra.mxu0 0
        %2817 = vmatprep.subr.bf16.mxu0 0
        %2818 = vmatpush1.bf16.msra.mxu0 0
        %2819 = vmatprep.subr.bf16.mxu0 0
        %2820 = vmatpush1.bf16.msra.mxu0 0
        %2821 = vmatprep.subr.bf16.mxu0 0
        %2822 = vmatpush1.bf16.msra.mxu0 0
        %2823 = vmatprep.subr.bf16.mxu0 0
        %2824 = vmatpush1.bf16.msra.mxu0 0
        %2825 = vmatprep.subr.bf16.mxu0 0
        %2826 = vmatpush1.bf16.msra.mxu0 0
        %2827 = vmatprep.subr.bf16.mxu0 0
        %2828 = vmatpush1.bf16.msra.mxu0 0
        %2829 = vmatprep.subr.bf16.mxu0 0
        %2830 = vmatpush1.bf16.msra.mxu0 0
        %2831 = vmatprep.subr.bf16.mxu0 0
        %2832 = vmatpush1.bf16.msra.mxu0 0
        %2833 = vmatprep.subr.bf16.mxu0 0
        %2834 = vmatpush1.bf16.msra.mxu0 0
        %2835 = vmatprep.subr.bf16.mxu0 0
        %2836 = vmatpush1.bf16.msra.mxu0 0
        %2837 = vmatprep.subr.bf16.mxu0 0
        %2838 = vmatpush1.bf16.msra.mxu0 0
        %2839 = vmatprep.subr.bf16.mxu0 0
        %2840 = vmatpush1.bf16.msra.mxu0 0
        %2841 = vmatprep.mubr.bf16.mxu0 0
        %2842 = vmatmul.mubr.bf16.gmra.mrb[0].mxu0 %v2759
        %v2843 = vpop.f32.mrb[0].mxu0
        %v2844 = vadd.f32 0.0, %v2843
        %v2845 = vpop.f32.mrb[0].mxu0
        %v2846 = vpop.f32.mrb[0].mxu0
        %v2847 = vadd.f32 0.0, %v2846
        %v2848 = vpop.f32.mrb[0].mxu0
        %2849 = vmatprep.mubr.bf16.mxu0 0
        %2850 = vmatmul.mubr.bf16.gmra.mrb[0].mxu0 %v2762
        %v2851 = vpop.f32.mrb[0].mxu0
        %v2852 = vadd.f32 0.0, %v2851
        %v2853 = vpop.f32.mrb[0].mxu0
        %v2854 = vpop.f32.mrb[0].mxu0
        %v2855 = vadd.f32 0.0, %v2854
        %v2856 = vpop.f32.mrb[0].mxu0
        %2857 = vmatprep.mubr.bf16.mxu0 0
        %2858 = vmatmul.mubr.bf16.gmra.mrb[0].mxu0 %v2765
        %v2859 = vpop.f32.mrb[0].mxu0
        %v2860 = vadd.f32 0.0, %v2859
        %v2861 = vpop.f32.mrb[0].mxu0
        %v2862 = vpop.f32.mrb[0].mxu0
        %v2863 = vadd.f32 0.0, %v2862
        %v2864 = vpop.f32.mrb[0].mxu0
        %2865 = vmatprep.mubr.bf16.mxu0 0
        %2866 = vmatmul.mubr.bf16.gmra.mrb[0].mxu0 %v2768
        %v2867 = vpop.f32.mrb[0].mxu0
        %v2868 = vadd.f32 0.0, %v2867
        %v2869 = vpop.f32.mrb[0].mxu0
        %v2870 = vpop.f32.mrb[0].mxu0
        %v2871 = vadd.f32 0.0, %v2870
        %v2872 = vpop.f32.mrb[0].mxu0
        %2873 = vmatprep.mubr.bf16.mxu0 0
        %2874 = vmatmul.mubr.bf16.gmra.mrb[0].mxu0 %v2771
        %v2875 = vpop.f32.mrb[0].mxu0
        %v2876 = vadd.f32 0.0, %v2875
        %v2877 = vpop.f32.mrb[0].mxu0
        %v2878 = vpop.f32.mrb[0].mxu0
        %v2879 = vadd.f32 0.0, %v2878
        %v2880 = vpop.f32.mrb[0].mxu0
        %2881 = vmatprep.mubr.bf16.mxu0 0
        %2882 = vmatmul.mubr.bf16.gmra.mrb[0].mxu0 %v2774
        %v2883 = vpop.f32.mrb[0].mxu0
        %v2884 = vadd.f32 0.0, %v2883
        %v2885 = vpop.f32.mrb[0].mxu0
        %v2886 = vpop.f32.mrb[0].mxu0
        %v2887 = vadd.f32 0.0, %v2886
        %v2888 = vpop.f32.mrb[0].mxu0
        %2889 = vmatprep.mubr.bf16.mxu0 0
        %2890 = vmatmul.mubr.bf16.gmra.mrb[0].mxu0 %v2777
        %v2891 = vpop.f32.mrb[0].mxu0
        %v2892 = vadd.f32 0.0, %v2891
        %v2893 = vpop.f32.mrb[0].mxu0
        %v2894 = vpop.f32.mrb[0].mxu0
        %v2895 = vadd.f32 0.0, %v2894
        %v2896 = vpop.f32.mrb[0].mxu0
        %2897 = vmatprep.mubr.bf16.mxu0 0
        %2898 = vmatmul.mubr.bf16.gmra.mrb[0].mxu0 %v2780
        %v2899 = vpop.f32.mrb[0].mxu0
        %v2900 = vadd.f32 0.0, %v2899
        %v2901 = vpop.f32.mrb[0].mxu0
        %v2902 = vpop.f32.mrb[0].mxu0
        %v2903 = vadd.f32 0.0, %v2902
        %v2904 = vpop.f32.mrb[0].mxu0
        %2905 = vmatprep.mubr.bf16.mxu0 0
        %2906 = vmatmul.mubr.bf16.gmra.mrb[0].mxu0 %v2783
        %v2907 = vpop.f32.mrb[0].mxu0
        %v2908 = vadd.f32 0.0, %v2907
        %v2909 = vpop.f32.mrb[0].mxu0
        %v2910 = vpop.f32.mrb[0].mxu0
        %v2911 = vadd.f32 0.0, %v2910
        %v2912 = vpop.f32.mrb[0].mxu0
        %2913 = vmatprep.mubr.bf16.mxu0 0
        %2914 = vmatmul.mubr.bf16.gmra.mrb[0].mxu0 %v2786
        %v2915 = vpop.f32.mrb[0].mxu0
        %v2916 = vadd.f32 0.0, %v2915
        %v2917 = vpop.f32.mrb[0].mxu0
        %v2918 = vpop.f32.mrb[0].mxu0
        %v2919 = vadd.f32 0.0, %v2918
        %v2920 = vpop.f32.mrb[0].mxu0
        %2921 = vmatprep.mubr.bf16.mxu0 0
        %2922 = vmatmul.mubr.bf16.gmra.mrb[0].mxu0 %v2789
        %v2923 = vpop.f32.mrb[0].mxu0
        %v2924 = vadd.f32 0.0, %v2923
        %v2925 = vpop.f32.mrb[0].mxu0
        %v2926 = vpop.f32.mrb[0].mxu0
        %v2927 = vadd.f32 0.0, %v2926
        %v2928 = vpop.f32.mrb[0].mxu0
        %2929 = vmatprep.mubr.bf16.mxu0 0
        %2930 = vmatmul.mubr.bf16.gmra.mrb[0].mxu0 %v2792
        %v2931 = vpop.f32.mrb[0].mxu0
        %v2932 = vadd.f32 0.0, %v2931
        %v2933 = vpop.f32.mrb[0].mxu0
        %v2934 = vpop.f32.mrb[0].mxu0
        %v2935 = vadd.f32 0.0, %v2934
        %v2936 = vpop.f32.mrb[0].mxu0
        %2937 = vmatprep.mubr.bf16.mxu0 0
        %2938 = vmatmul.mubr.bf16.gmra.mrb[0].mxu0 %v2795
        %v2939 = vpop.f32.mrb[0].mxu0
        %v2940 = vadd.f32 0.0, %v2939
        %v2941 = vpop.f32.mrb[0].mxu0
        %v2942 = vpop.f32.mrb[0].mxu0
        %v2943 = vadd.f32 0.0, %v2942
        %v2944 = vpop.f32.mrb[0].mxu0
        %2945 = vmatprep.mubr.bf16.mxu0 0
        %2946 = vmatmul.mubr.bf16.gmra.mrb[0].mxu0 %v2798
        %v2947 = vpop.f32.mrb[0].mxu0
        %v2948 = vadd.f32 0.0, %v2947
        %v2949 = vpop.f32.mrb[0].mxu0
        %v2950 = vpop.f32.mrb[0].mxu0
        %v2951 = vadd.f32 0.0, %v2950
        %v2952 = vpop.f32.mrb[0].mxu0
        %2953 = vmatprep.mubr.bf16.mxu0 0
        %2954 = vmatmul.mubr.bf16.gmra.mrb[0].mxu0 %v2801
        %v2955 = vpop.f32.mrb[0].mxu0
        %v2956 = vadd.f32 0.0, %v2955
        %v2957 = vpop.f32.mrb[0].mxu0
        %v2958 = vpop.f32.mrb[0].mxu0
        %v2959 = vadd.f32 0.0, %v2958
        %v2960 = vpop.f32.mrb[0].mxu0
        %2961 = vmatprep.mubr.bf16.mxu0 0
        %2962 = vmatmul.mubr.bf16.gmra.mrb[0].mxu0 %v2804
        %v2963 = vpop.f32.mrb[0].mxu0
        %v2964 = vadd.f32 0.0, %v2963
        %v2965 = vpop.f32.mrb[0].mxu0
        %v2966 = vpop.f32.mrb[0].mxu0
        %v2967 = vadd.f32 0.0, %v2966
        %v2968 = vpop.f32.mrb[0].mxu0
        %2969 = vdwg.mxu0
        %v2970 = vadd.f32 %v2708, %v2844
        %v2971 = vadd.f32 %v2709, %v2847
        %v2972 = vadd.f32 %v2710, %v2852
        %v2973 = vadd.f32 %v2711, %v2855
        %v2974 = vadd.f32 %v2712, %v2860
        %v2975 = vadd.f32 %v2713, %v2863
        %v2976 = vadd.f32 %v2714, %v2868
        %v2977 = vadd.f32 %v2715, %v2871
        %v2978 = vadd.f32 %v2716, %v2876
        %v2979 = vadd.f32 %v2717, %v2879
        %v2980 = vadd.f32 %v2718, %v2884
        %v2981 = vadd.f32 %v2719, %v2887
        %v2982 = vadd.f32 %v2720, %v2892
        %v2983 = vadd.f32 %v2721, %v2895
        %v2984 = vadd.f32 %v2722, %v2900
        %v2985 = vadd.f32 %v2723, %v2903
        %v2986 = vadd.f32 %v2724, %v2908
        %v2987 = vadd.f32 %v2725, %v2911
        %v2988 = vadd.f32 %v2726, %v2916
        %v2989 = vadd.f32 %v2727, %v2919
        %v2990 = vadd.f32 %v2728, %v2924
        %v2991 = vadd.f32 %v2729, %v2927
        %v2992 = vadd.f32 %v2730, %v2932
        %v2993 = vadd.f32 %v2731, %v2935
        %v2994 = vadd.f32 %v2732, %v2940
        %v2995 = vadd.f32 %v2733, %v2943
        %v2996 = vadd.f32 %v2734, %v2948
        %v2997 = vadd.f32 %v2735, %v2951
        %v2998 = vadd.f32 %v2736, %v2956
        %v2999 = vadd.f32 %v2737, %v2959
        %v3000 = vadd.f32 %v2738, %v2964
        %v3001 = vadd.f32 %v2739, %v2967
        %v3002 = vld [vmem:[%s276 + $0x20] sm:$0xf]
        %v3003 = vld [vmem:[%s276 + $0x24] sm:$0xf]
        %v3004 = vld [vmem:[%s276 + $0x28] sm:$0xf]
        %v3005 = vld [vmem:[%s276 + $0x2c] sm:$0xf]
        %v3006 = vld [vmem:[%s276 + $0x30] sm:$0xf]
        %v3007 = vld [vmem:[%s276 + $0x34] sm:$0xf]
        %v3008 = vld [vmem:[%s276 + $0x38] sm:$0xf]
        %v3009 = vld [vmem:[%s276 + $0x3c] sm:$0xf]
        %v3010 = vld [vmem:[%s276 + $0x40] sm:$0xf]
        %v3011 = vld [vmem:[%s276 + $0x44] sm:$0xf]
        %v3012 = vld [vmem:[%s276 + $0x48] sm:$0xf]
        %v3013 = vld [vmem:[%s276 + $0x4c] sm:$0xf]
        %v3014 = vld [vmem:[%s276 + $0x50] sm:$0xf]
        %v3015 = vld [vmem:[%s276 + $0x54] sm:$0xf]
        %v3016 = vld [vmem:[%s276 + $0x58] sm:$0xf]
        %v3017 = vld [vmem:[%s276 + $0x5c] sm:$0xf]
        %v3018 = vld [vmem:[%s276 + $0x60] sm:$0xf]
        %v3019 = vld [vmem:[%s276 + $0x64] sm:$0xf]
        %v3020 = vld [vmem:[%s276 + $0x68] sm:$0xf]
        %v3021 = vld [vmem:[%s276 + $0x6c] sm:$0xf]
        %v3022 = vld [vmem:[%s276 + $0x70] sm:$0xf]
        %v3023 = vld [vmem:[%s276 + $0x74] sm:$0xf]
        %v3024 = vld [vmem:[%s276 + $0x78] sm:$0xf]
        %v3025 = vld [vmem:[%s276 + $0x7c] sm:$0xf]
        %v3026 = vld [vmem:[%s276 + $0x80] sm:$0xf]
        %v3027 = vld [vmem:[%s276 + $0x84] sm:$0xf]
        %v3028 = vld [vmem:[%s276 + $0x88] sm:$0xf]
        %v3029 = vld [vmem:[%s276 + $0x8c] sm:$0xf]
        %v3030 = vld [vmem:[%s276 + $0x90] sm:$0xf]
        %v3031 = vld [vmem:[%s276 + $0x94] sm:$0xf]
        %v3032 = vld [vmem:[%s276 + $0x98] sm:$0xf]
        %v3033 = vld [vmem:[%s276 + $0x9c] sm:$0xf]
        %s3034 = scalar_lea.vmem %s2, 12
        %v3035 = vld [vmem:[%s3034] sm:$0x3]
        %v3068 = vunpack.c.l.b16 %v3002
        %v3069 = vunpack.c.l.b16 %v3003
        %v3070 = vunpack.c.l.b16 %v3004
        %v3071 = vunpack.c.l.b16 %v3005
        %v3072 = vunpack.c.l.b16 %v3006
        %v3073 = vunpack.c.l.b16 %v3007
        %v3074 = vunpack.c.l.b16 %v3008
        %v3075 = vunpack.c.l.b16 %v3009
        %v3076 = vunpack.c.l.b16 %v3010
        %v3077 = vunpack.c.l.b16 %v3011
        %v3078 = vunpack.c.l.b16 %v3012
        %v3079 = vunpack.c.l.b16 %v3013
        %v3080 = vunpack.c.l.b16 %v3014
        %v3081 = vunpack.c.l.b16 %v3015
        %v3082 = vunpack.c.l.b16 %v3016
        %v3083 = vunpack.c.l.b16 %v3017
        %v3084 = vunpack.c.l.b16 %v3018
        %v3085 = vunpack.c.l.b16 %v3019
        %v3086 = vunpack.c.l.b16 %v3020
        %v3087 = vunpack.c.l.b16 %v3021
        %v3088 = vunpack.c.l.b16 %v3022
        %v3089 = vunpack.c.l.b16 %v3023
        %v3090 = vunpack.c.l.b16 %v3024
        %v3091 = vunpack.c.l.b16 %v3025
        %v3092 = vunpack.c.l.b16 %v3026
        %v3093 = vunpack.c.l.b16 %v3027
        %v3094 = vunpack.c.l.b16 %v3028
        %v3095 = vunpack.c.l.b16 %v3029
        %v3096 = vunpack.c.l.b16 %v3030
        %v3097 = vunpack.c.l.b16 %v3031
        %v3098 = vunpack.c.l.b16 %v3032
        %v3099 = vunpack.c.l.b16 %v3033
        %v3100 = vpack.c.b16 %v3069, %v3068
        %v3101 = vpack.c.b16 %v3071, %v3070
        %v3102 = vpack.c.b16 %v3073, %v3072
        %v3103 = vpack.c.b16 %v3075, %v3074
        %v3104 = vpack.c.b16 %v3077, %v3076
        %v3105 = vpack.c.b16 %v3079, %v3078
        %v3106 = vpack.c.b16 %v3081, %v3080
        %v3107 = vpack.c.b16 %v3083, %v3082
        %v3108 = vpack.c.b16 %v3085, %v3084
        %v3109 = vpack.c.b16 %v3087, %v3086
        %v3110 = vpack.c.b16 %v3089, %v3088
        %v3111 = vpack.c.b16 %v3091, %v3090
        %v3112 = vpack.c.b16 %v3093, %v3092
        %v3113 = vpack.c.b16 %v3095, %v3094
        %v3114 = vpack.c.b16 %v3097, %v3096
        %v3115 = vpack.c.b16 %v3099, %v3098
        %v3117 = vsel %vm863, %v3100, 0
        %v3120 = vsel %vm863, %v3101, 0
        %v3123 = vsel %vm863, %v3102, 0
        %v3126 = vsel %vm863, %v3103, 0
        %v3129 = vsel %vm863, %v3104, 0
        %v3132 = vsel %vm863, %v3105, 0
        %v3135 = vsel %vm863, %v3106, 0
        %v3138 = vsel %vm863, %v3107, 0
        %v3141 = vsel %vm863, %v3108, 0
        %v3144 = vsel %vm863, %v3109, 0
        %v3147 = vsel %vm863, %v3110, 0
        %v3150 = vsel %vm863, %v3111, 0
        %v3153 = vsel %vm863, %v3112, 0
        %v3156 = vsel %vm863, %v3113, 0
        %v3159 = vsel %vm863, %v3114, 0
        %v3162 = vsel %vm863, %v3115, 0
        %v3165 = vsel %vm1401, %v3035, 0
        %3167 = vmatprep.subr.bf16.mxu0 0
        %3168 = vmatpush1.bf16.msra.mxu0 %v3165
        %3169 = vmatprep.subr.bf16.mxu0 0
        %3170 = vmatpush1.bf16.msra.mxu0 0
        %3171 = vmatprep.subr.bf16.mxu0 0
        %3172 = vmatpush1.bf16.msra.mxu0 0
        %3173 = vmatprep.subr.bf16.mxu0 0
        %3174 = vmatpush1.bf16.msra.mxu0 0
        %3175 = vmatprep.subr.bf16.mxu0 0
        %3176 = vmatpush1.bf16.msra.mxu0 0
        %3177 = vmatprep.subr.bf16.mxu0 0
        %3178 = vmatpush1.bf16.msra.mxu0 0
        %3179 = vmatprep.subr.bf16.mxu0 0
        %3180 = vmatpush1.bf16.msra.mxu0 0
        %3181 = vmatprep.subr.bf16.mxu0 0
        %3182 = vmatpush1.bf16.msra.mxu0 0
        %3183 = vmatprep.subr.bf16.mxu0 0
        %3184 = vmatpush1.bf16.msra.mxu0 0
        %3185 = vmatprep.subr.bf16.mxu0 0
        %3186 = vmatpush1.bf16.msra.mxu0 0
        %3187 = vmatprep.subr.bf16.mxu0 0
        %3188 = vmatpush1.bf16.msra.mxu0 0
        %3189 = vmatprep.subr.bf16.mxu0 0
        %3190 = vmatpush1.bf16.msra.mxu0 0
        %3191 = vmatprep.subr.bf16.mxu0 0
        %3192 = vmatpush1.bf16.msra.mxu0 0
        %3193 = vmatprep.subr.bf16.mxu0 0
        %3194 = vmatpush1.bf16.msra.mxu0 0
        %3195 = vmatprep.subr.bf16.mxu0 0
        %3196 = vmatpush1.bf16.msra.mxu0 0
        %3197 = vmatprep.subr.bf16.mxu0 0
        %3198 = vmatpush1.bf16.msra.mxu0 0
        %3199 = vmatprep.mubr.bf16.mxu0 0
        %3200 = vmatmul.mubr.bf16.gmra.mrb[0].mxu0 %v3117
        %v3201 = vpop.f32.mrb[0].mxu0
        %v3202 = vadd.f32 0.0, %v3201
        %v3203 = vpop.f32.mrb[0].mxu0
        %v3204 = vpop.f32.mrb[0].mxu0
        %v3205 = vadd.f32 0.0, %v3204
        %v3206 = vpop.f32.mrb[0].mxu0
        %3207 = vmatprep.mubr.bf16.mxu0 0
        %3208 = vmatmul.mubr.bf16.gmra.mrb[0].mxu0 %v3120
        %v3209 = vpop.f32.mrb[0].mxu0
        %v3210 = vadd.f32 0.0, %v3209
        %v3211 = vpop.f32.mrb[0].mxu0
        %v3212 = vpop.f32.mrb[0].mxu0
        %v3213 = vadd.f32 0.0, %v3212
        %v3214 = vpop.f32.mrb[0].mxu0
        %3215 = vmatprep.mubr.bf16.mxu0 0
        %3216 = vmatmul.mubr.bf16.gmra.mrb[0].mxu0 %v3123
        %v3217 = vpop.f32.mrb[0].mxu0
        %v3218 = vadd.f32 0.0, %v3217
        %v3219 = vpop.f32.mrb[0].mxu0
        %v3220 = vpop.f32.mrb[0].mxu0
        %v3221 = vadd.f32 0.0, %v3220
        %v3222 = vpop.f32.mrb[0].mxu0
        %3223 = vmatprep.mubr.bf16.mxu0 0
        %3224 = vmatmul.mubr.bf16.gmra.mrb[0].mxu0 %v3126
        %v3225 = vpop.f32.mrb[0].mxu0
        %v3226 = vadd.f32 0.0, %v3225
        %v3227 = vpop.f32.mrb[0].mxu0
        %v3228 = vpop.f32.mrb[0].mxu0
        %v3229 = vadd.f32 0.0, %v3228
        %v3230 = vpop.f32.mrb[0].mxu0
        %3231 = vmatprep.mubr.bf16.mxu0 0
        %3232 = vmatmul.mubr.bf16.gmra.mrb[0].mxu0 %v3129
        %v3233 = vpop.f32.mrb[0].mxu0
        %v3234 = vadd.f32 0.0, %v3233
        %v3235 = vpop.f32.mrb[0].mxu0
        %v3236 = vpop.f32.mrb[0].mxu0
        %v3237 = vadd.f32 0.0, %v3236
        %v3238 = vpop.f32.mrb[0].mxu0
        %3239 = vmatprep.mubr.bf16.mxu0 0
        %3240 = vmatmul.mubr.bf16.gmra.mrb[0].mxu0 %v3132
        %v3241 = vpop.f32.mrb[0].mxu0
        %v3242 = vadd.f32 0.0, %v3241
        %v3243 = vpop.f32.mrb[0].mxu0
        %v3244 = vpop.f32.mrb[0].mxu0
        %v3245 = vadd.f32 0.0, %v3244
        %v3246 = vpop.f32.mrb[0].mxu0
        %3247 = vmatprep.mubr.bf16.mxu0 0
        %3248 = vmatmul.mubr.bf16.gmra.mrb[0].mxu0 %v3135
        %v3249 = vpop.f32.mrb[0].mxu0
        %v3250 = vadd.f32 0.0, %v3249
        %v3251 = vpop.f32.mrb[0].mxu0
        %v3252 = vpop.f32.mrb[0].mxu0
        %v3253 = vadd.f32 0.0, %v3252
        %v3254 = vpop.f32.mrb[0].mxu0
        %3255 = vmatprep.mubr.bf16.mxu0 0
        %3256 = vmatmul.mubr.bf16.gmra.mrb[0].mxu0 %v3138
        %v3257 = vpop.f32.mrb[0].mxu0
        %v3258 = vadd.f32 0.0, %v3257
        %v3259 = vpop.f32.mrb[0].mxu0
        %v3260 = vpop.f32.mrb[0].mxu0
        %v3261 = vadd.f32 0.0, %v3260
        %v3262 = vpop.f32.mrb[0].mxu0
        %3263 = vmatprep.mubr.bf16.mxu0 0
        %3264 = vmatmul.mubr.bf16.gmra.mrb[0].mxu0 %v3141
        %v3265 = vpop.f32.mrb[0].mxu0
        %v3266 = vadd.f32 0.0, %v3265
        %v3267 = vpop.f32.mrb[0].mxu0
        %v3268 = vpop.f32.mrb[0].mxu0
        %v3269 = vadd.f32 0.0, %v3268
        %v3270 = vpop.f32.mrb[0].mxu0
        %3271 = vmatprep.mubr.bf16.mxu0 0
        %3272 = vmatmul.mubr.bf16.gmra.mrb[0].mxu0 %v3144
        %v3273 = vpop.f32.mrb[0].mxu0
        %v3274 = vadd.f32 0.0, %v3273
        %v3275 = vpop.f32.mrb[0].mxu0
        %v3276 = vpop.f32.mrb[0].mxu0
        %v3277 = vadd.f32 0.0, %v3276
        %v3278 = vpop.f32.mrb[0].mxu0
        %3279 = vmatprep.mubr.bf16.mxu0 0
        %3280 = vmatmul.mubr.bf16.gmra.mrb[0].mxu0 %v3147
        %v3281 = vpop.f32.mrb[0].mxu0
        %v3282 = vadd.f32 0.0, %v3281
        %v3283 = vpop.f32.mrb[0].mxu0
        %v3284 = vpop.f32.mrb[0].mxu0
        %v3285 = vadd.f32 0.0, %v3284
        %v3286 = vpop.f32.mrb[0].mxu0
        %3287 = vmatprep.mubr.bf16.mxu0 0
        %3288 = vmatmul.mubr.bf16.gmra.mrb[0].mxu0 %v3150
        %v3289 = vpop.f32.mrb[0].mxu0
        %v3290 = vadd.f32 0.0, %v3289
        %v3291 = vpop.f32.mrb[0].mxu0
        %v3292 = vpop.f32.mrb[0].mxu0
        %v3293 = vadd.f32 0.0, %v3292
        %v3294 = vpop.f32.mrb[0].mxu0
        %3295 = vmatprep.mubr.bf16.mxu0 0
        %3296 = vmatmul.mubr.bf16.gmra.mrb[0].mxu0 %v3153
        %v3297 = vpop.f32.mrb[0].mxu0
        %v3298 = vadd.f32 0.0, %v3297
        %v3299 = vpop.f32.mrb[0].mxu0
        %v3300 = vpop.f32.mrb[0].mxu0
        %v3301 = vadd.f32 0.0, %v3300
        %v3302 = vpop.f32.mrb[0].mxu0
        %3303 = vmatprep.mubr.bf16.mxu0 0
        %3304 = vmatmul.mubr.bf16.gmra.mrb[0].mxu0 %v3156
        %v3305 = vpop.f32.mrb[0].mxu0
        %v3306 = vadd.f32 0.0, %v3305
        %v3307 = vpop.f32.mrb[0].mxu0
        %v3308 = vpop.f32.mrb[0].mxu0
        %v3309 = vadd.f32 0.0, %v3308
        %v3310 = vpop.f32.mrb[0].mxu0
        %3311 = vmatprep.mubr.bf16.mxu0 0
        %3312 = vmatmul.mubr.bf16.gmra.mrb[0].mxu0 %v3159
        %v3313 = vpop.f32.mrb[0].mxu0
        %v3314 = vadd.f32 0.0, %v3313
        %v3315 = vpop.f32.mrb[0].mxu0
        %v3316 = vpop.f32.mrb[0].mxu0
        %v3317 = vadd.f32 0.0, %v3316
        %v3318 = vpop.f32.mrb[0].mxu0
        %3319 = vmatprep.mubr.bf16.mxu0 0
        %3320 = vmatmul.mubr.bf16.gmra.mrb[0].mxu0 %v3162
        %v3321 = vpop.f32.mrb[0].mxu0
        %v3322 = vadd.f32 0.0, %v3321
        %v3323 = vpop.f32.mrb[0].mxu0
        %v3324 = vpop.f32.mrb[0].mxu0
        %v3325 = vadd.f32 0.0, %v3324
        %v3326 = vpop.f32.mrb[0].mxu0
        %3327 = vdwg.mxu0
        %v3328 = vadd.f32 %v2970, %v3202
        %v3329 = vadd.f32 %v2971, %v3205
        %v3330 = vadd.f32 %v2972, %v3210
        %v3331 = vadd.f32 %v2973, %v3213
        %v3332 = vadd.f32 %v2974, %v3218
        %v3333 = vadd.f32 %v2975, %v3221
        %v3334 = vadd.f32 %v2976, %v3226
        %v3335 = vadd.f32 %v2977, %v3229
        %v3336 = vadd.f32 %v2978, %v3234
        %v3337 = vadd.f32 %v2979, %v3237
        %v3338 = vadd.f32 %v2980, %v3242
        %v3339 = vadd.f32 %v2981, %v3245
        %v3340 = vadd.f32 %v2982, %v3250
        %v3341 = vadd.f32 %v2983, %v3253
        %v3342 = vadd.f32 %v2984, %v3258
        %v3343 = vadd.f32 %v2985, %v3261
        %v3344 = vadd.f32 %v2986, %v3266
        %v3345 = vadd.f32 %v2987, %v3269
        %v3346 = vadd.f32 %v2988, %v3274
        %v3347 = vadd.f32 %v2989, %v3277
        %v3348 = vadd.f32 %v2990, %v3282
        %v3349 = vadd.f32 %v2991, %v3285
        %v3350 = vadd.f32 %v2992, %v3290
        %v3351 = vadd.f32 %v2993, %v3293
        %v3352 = vadd.f32 %v2994, %v3298
        %v3353 = vadd.f32 %v2995, %v3301
        %v3354 = vadd.f32 %v2996, %v3306
        %v3355 = vadd.f32 %v2997, %v3309
        %v3356 = vadd.f32 %v2998, %v3314
        %v3357 = vadd.f32 %v2999, %v3317
        %v3358 = vadd.f32 %v3000, %v3322
        %v3359 = vadd.f32 %v3001, %v3325
        %v3360 = vld [vmem:[#allocation2 + $0x20] sm:$0xff]
        %v3361 = vld [vmem:[#allocation2 + $0x28] sm:$0xff]
        %v3362 = vld [vmem:[#allocation2 + $0x30] sm:$0xff]
        %v3363 = vld [vmem:[#allocation2 + $0x38] sm:$0xff]
        %v3364 = vld [vmem:[#allocation2 + $0x40] sm:$0xff]
        %v3365 = vld [vmem:[#allocation2 + $0x48] sm:$0xff]
        %v3366 = vld [vmem:[#allocation2 + $0x50] sm:$0xff]
        %v3367 = vld [vmem:[#allocation2 + $0x58] sm:$0xff]
        %v3368 = vld [vmem:[#allocation2 + $0x60] sm:$0xff]
        %v3369 = vld [vmem:[#allocation2 + $0x68] sm:$0xff]
        %v3370 = vld [vmem:[#allocation2 + $0x70] sm:$0xff]
        %v3371 = vld [vmem:[#allocation2 + $0x78] sm:$0xff]
        %v3372 = vld [vmem:[#allocation2 + $0x80] sm:$0xff]
        %v3373 = vld [vmem:[#allocation2 + $0x88] sm:$0xff]
        %v3374 = vld [vmem:[#allocation2 + $0x90] sm:$0xff]
        %v3375 = vld [vmem:[#allocation2 + $0x98] sm:$0xff]
        %s3376 = scalar_lea.vmem %s2, 14
        %v3377 = vld [vmem:[%s3376] sm:$0x3]
        %v3379 = vsel %vm863, %v3360, 0
        %v3382 = vsel %vm863, %v3361, 0
        %v3385 = vsel %vm863, %v3362, 0
        %v3388 = vsel %vm863, %v3363, 0
        %v3391 = vsel %vm863, %v3364, 0
        %v3394 = vsel %vm863, %v3365, 0
        %v3397 = vsel %vm863, %v3366, 0
        %v3400 = vsel %vm863, %v3367, 0
        %v3403 = vsel %vm863, %v3368, 0
        %v3406 = vsel %vm863, %v3369, 0
        %v3409 = vsel %vm863, %v3370, 0
        %v3412 = vsel %vm863, %v3371, 0
        %v3415 = vsel %vm863, %v3372, 0
        %v3418 = vsel %vm863, %v3373, 0
        %v3421 = vsel %vm863, %v3374, 0
        %v3424 = vsel %vm863, %v3375, 0
        %v3427 = vsel %vm1401, %v3377, 0
        %3429 = vmatprep.subr.bf16.mxu0 0
        %3430 = vmatpush1.bf16.msra.mxu0 %v3427
        %3431 = vmatprep.subr.bf16.mxu0 0
        %3432 = vmatpush1.bf16.msra.mxu0 0
        %3433 = vmatprep.subr.bf16.mxu0 0
        %3434 = vmatpush1.bf16.msra.mxu0 0
        %3435 = vmatprep.subr.bf16.mxu0 0
        %3436 = vmatpush1.bf16.msra.mxu0 0
        %3437 = vmatprep.subr.bf16.mxu0 0
        %3438 = vmatpush1.bf16.msra.mxu0 0
        %3439 = vmatprep.subr.bf16.mxu0 0
        %3440 = vmatpush1.bf16.msra.mxu0 0
        %3441 = vmatprep.subr.bf16.mxu0 0
        %3442 = vmatpush1.bf16.msra.mxu0 0
        %3443 = vmatprep.subr.bf16.mxu0 0
        %3444 = vmatpush1.bf16.msra.mxu0 0
        %3445 = vmatprep.subr.bf16.mxu0 0
        %3446 = vmatpush1.bf16.msra.mxu0 0
        %3447 = vmatprep.subr.bf16.mxu0 0
        %3448 = vmatpush1.bf16.msra.mxu0 0
        %3449 = vmatprep.subr.bf16.mxu0 0
        %3450 = vmatpush1.bf16.msra.mxu0 0
        %3451 = vmatprep.subr.bf16.mxu0 0
        %3452 = vmatpush1.bf16.msra.mxu0 0
        %3453 = vmatprep.subr.bf16.mxu0 0
        %3454 = vmatpush1.bf16.msra.mxu0 0
        %3455 = vmatprep.subr.bf16.mxu0 0
        %3456 = vmatpush1.bf16.msra.mxu0 0
        %3457 = vmatprep.subr.bf16.mxu0 0
        %3458 = vmatpush1.bf16.msra.mxu0 0
        %3459 = vmatprep.subr.bf16.mxu0 0
        %3460 = vmatpush1.bf16.msra.mxu0 0
        %3461 = vmatprep.mubr.bf16.mxu0 0
        %3462 = vmatmul.mubr.bf16.gmra.mrb[0].mxu0 %v3379
        %v3463 = vpop.f32.mrb[0].mxu0
        %v3464 = vadd.f32 0.0, %v3463
        %v3465 = vpop.f32.mrb[0].mxu0
        %v3466 = vpop.f32.mrb[0].mxu0
        %v3467 = vadd.f32 0.0, %v3466
        %v3468 = vpop.f32.mrb[0].mxu0
        %3469 = vmatprep.mubr.bf16.mxu0 0
        %3470 = vmatmul.mubr.bf16.gmra.mrb[0].mxu0 %v3382
        %v3471 = vpop.f32.mrb[0].mxu0
        %v3472 = vadd.f32 0.0, %v3471
        %v3473 = vpop.f32.mrb[0].mxu0
        %v3474 = vpop.f32.mrb[0].mxu0
        %v3475 = vadd.f32 0.0, %v3474
        %v3476 = vpop.f32.mrb[0].mxu0
        %3477 = vmatprep.mubr.bf16.mxu0 0
        %3478 = vmatmul.mubr.bf16.gmra.mrb[0].mxu0 %v3385
        %v3479 = vpop.f32.mrb[0].mxu0
        %v3480 = vadd.f32 0.0, %v3479
        %v3481 = vpop.f32.mrb[0].mxu0
        %v3482 = vpop.f32.mrb[0].mxu0
        %v3483 = vadd.f32 0.0, %v3482
        %v3484 = vpop.f32.mrb[0].mxu0
        %3485 = vmatprep.mubr.bf16.mxu0 0
        %3486 = vmatmul.mubr.bf16.gmra.mrb[0].mxu0 %v3388
        %v3487 = vpop.f32.mrb[0].mxu0
        %v3488 = vadd.f32 0.0, %v3487
        %v3489 = vpop.f32.mrb[0].mxu0
        %v3490 = vpop.f32.mrb[0].mxu0
        %v3491 = vadd.f32 0.0, %v3490
        %v3492 = vpop.f32.mrb[0].mxu0
        %3493 = vmatprep.mubr.bf16.mxu0 0
        %3494 = vmatmul.mubr.bf16.gmra.mrb[0].mxu0 %v3391
        %v3495 = vpop.f32.mrb[0].mxu0
        %v3496 = vadd.f32 0.0, %v3495
        %v3497 = vpop.f32.mrb[0].mxu0
        %v3498 = vpop.f32.mrb[0].mxu0
        %v3499 = vadd.f32 0.0, %v3498
        %v3500 = vpop.f32.mrb[0].mxu0
        %3501 = vmatprep.mubr.bf16.mxu0 0
        %3502 = vmatmul.mubr.bf16.gmra.mrb[0].mxu0 %v3394
        %v3503 = vpop.f32.mrb[0].mxu0
        %v3504 = vadd.f32 0.0, %v3503
        %v3505 = vpop.f32.mrb[0].mxu0
        %v3506 = vpop.f32.mrb[0].mxu0
        %v3507 = vadd.f32 0.0, %v3506
        %v3508 = vpop.f32.mrb[0].mxu0
        %3509 = vmatprep.mubr.bf16.mxu0 0
        %3510 = vmatmul.mubr.bf16.gmra.mrb[0].mxu0 %v3397
        %v3511 = vpop.f32.mrb[0].mxu0
        %v3512 = vadd.f32 0.0, %v3511
        %v3513 = vpop.f32.mrb[0].mxu0
        %v3514 = vpop.f32.mrb[0].mxu0
        %v3515 = vadd.f32 0.0, %v3514
        %v3516 = vpop.f32.mrb[0].mxu0
        %3517 = vmatprep.mubr.bf16.mxu0 0
        %3518 = vmatmul.mubr.bf16.gmra.mrb[0].mxu0 %v3400
        %v3519 = vpop.f32.mrb[0].mxu0
        %v3520 = vadd.f32 0.0, %v3519
        %v3521 = vpop.f32.mrb[0].mxu0
        %v3522 = vpop.f32.mrb[0].mxu0
        %v3523 = vadd.f32 0.0, %v3522
        %v3524 = vpop.f32.mrb[0].mxu0
        %3525 = vmatprep.mubr.bf16.mxu0 0
        %3526 = vmatmul.mubr.bf16.gmra.mrb[0].mxu0 %v3403
        %v3527 = vpop.f32.mrb[0].mxu0
        %v3528 = vadd.f32 0.0, %v3527
        %v3529 = vpop.f32.mrb[0].mxu0
        %v3530 = vpop.f32.mrb[0].mxu0
        %v3531 = vadd.f32 0.0, %v3530
        %v3532 = vpop.f32.mrb[0].mxu0
        %3533 = vmatprep.mubr.bf16.mxu0 0
        %3534 = vmatmul.mubr.bf16.gmra.mrb[0].mxu0 %v3406
        %v3535 = vpop.f32.mrb[0].mxu0
        %v3536 = vadd.f32 0.0, %v3535
        %v3537 = vpop.f32.mrb[0].mxu0
        %v3538 = vpop.f32.mrb[0].mxu0
        %v3539 = vadd.f32 0.0, %v3538
        %v3540 = vpop.f32.mrb[0].mxu0
        %3541 = vmatprep.mubr.bf16.mxu0 0
        %3542 = vmatmul.mubr.bf16.gmra.mrb[0].mxu0 %v3409
        %v3543 = vpop.f32.mrb[0].mxu0
        %v3544 = vadd.f32 0.0, %v3543
        %v3545 = vpop.f32.mrb[0].mxu0
        %v3546 = vpop.f32.mrb[0].mxu0
        %v3547 = vadd.f32 0.0, %v3546
        %v3548 = vpop.f32.mrb[0].mxu0
        %3549 = vmatprep.mubr.bf16.mxu0 0
        %3550 = vmatmul.mubr.bf16.gmra.mrb[0].mxu0 %v3412
        %v3551 = vpop.f32.mrb[0].mxu0
        %v3552 = vadd.f32 0.0, %v3551
        %v3553 = vpop.f32.mrb[0].mxu0
        %v3554 = vpop.f32.mrb[0].mxu0
        %v3555 = vadd.f32 0.0, %v3554
        %v3556 = vpop.f32.mrb[0].mxu0
        %3557 = vmatprep.mubr.bf16.mxu0 0
        %3558 = vmatmul.mubr.bf16.gmra.mrb[0].mxu0 %v3415
        %v3559 = vpop.f32.mrb[0].mxu0
        %v3560 = vadd.f32 0.0, %v3559
        %v3561 = vpop.f32.mrb[0].mxu0
        %v3562 = vpop.f32.mrb[0].mxu0
        %v3563 = vadd.f32 0.0, %v3562
        %v3564 = vpop.f32.mrb[0].mxu0
        %3565 = vmatprep.mubr.bf16.mxu0 0
        %3566 = vmatmul.mubr.bf16.gmra.mrb[0].mxu0 %v3418
        %v3567 = vpop.f32.mrb[0].mxu0
        %v3568 = vadd.f32 0.0, %v3567
        %v3569 = vpop.f32.mrb[0].mxu0
        %v3570 = vpop.f32.mrb[0].mxu0
        %v3571 = vadd.f32 0.0, %v3570
        %v3572 = vpop.f32.mrb[0].mxu0
        %3573 = vmatprep.mubr.bf16.mxu0 0
        %3574 = vmatmul.mubr.bf16.gmra.mrb[0].mxu0 %v3421
        %v3575 = vpop.f32.mrb[0].mxu0
        %v3576 = vadd.f32 0.0, %v3575
        %v3577 = vpop.f32.mrb[0].mxu0
        %v3578 = vpop.f32.mrb[0].mxu0
        %v3579 = vadd.f32 0.0, %v3578
        %v3580 = vpop.f32.mrb[0].mxu0
        %3581 = vmatprep.mubr.bf16.mxu0 0
        %3582 = vmatmul.mubr.bf16.gmra.mrb[0].mxu0 %v3424
        %v3583 = vpop.f32.mrb[0].mxu0
        %v3584 = vadd.f32 0.0, %v3583
        %v3585 = vpop.f32.mrb[0].mxu0
        %v3586 = vpop.f32.mrb[0].mxu0
        %v3587 = vadd.f32 0.0, %v3586
        %v3588 = vpop.f32.mrb[0].mxu0
        %3589 = vdwg.mxu0
        %v3590 = vadd.f32 %v3328, %v3464
        %v3591 = vadd.f32 %v3329, %v3467
        %v3592 = vadd.f32 %v3330, %v3472
        %v3593 = vadd.f32 %v3331, %v3475
        %v3594 = vadd.f32 %v3332, %v3480
        %v3595 = vadd.f32 %v3333, %v3483
        %v3596 = vadd.f32 %v3334, %v3488
        %v3597 = vadd.f32 %v3335, %v3491
        %v3598 = vadd.f32 %v3336, %v3496
        %v3599 = vadd.f32 %v3337, %v3499
        %v3600 = vadd.f32 %v3338, %v3504
        %v3601 = vadd.f32 %v3339, %v3507
        %v3602 = vadd.f32 %v3340, %v3512
        %v3603 = vadd.f32 %v3341, %v3515
        %v3604 = vadd.f32 %v3342, %v3520
        %v3605 = vadd.f32 %v3343, %v3523
        %v3606 = vadd.f32 %v3344, %v3528
        %v3607 = vadd.f32 %v3345, %v3531
        %v3608 = vadd.f32 %v3346, %v3536
        %v3609 = vadd.f32 %v3347, %v3539
        %v3610 = vadd.f32 %v3348, %v3544
        %v3611 = vadd.f32 %v3349, %v3547
        %v3612 = vadd.f32 %v3350, %v3552
        %v3613 = vadd.f32 %v3351, %v3555
        %v3614 = vadd.f32 %v3352, %v3560
        %v3615 = vadd.f32 %v3353, %v3563
        %v3616 = vadd.f32 %v3354, %v3568
        %v3617 = vadd.f32 %v3355, %v3571
        %v3618 = vadd.f32 %v3356, %v3576
        %v3619 = vadd.f32 %v3357, %v3579
        %v3620 = vadd.f32 %v3358, %v3584
        %v3621 = vadd.f32 %v3359, %v3587
        %v3622 = vld [vmem:[#allocation3 + $0x20] sm:$0xff]
        %v3623 = vld [vmem:[#allocation3 + $0x28] sm:$0xff]
        %v3624 = vld [vmem:[#allocation3 + $0x30] sm:$0xff]
        %v3625 = vld [vmem:[#allocation3 + $0x38] sm:$0xff]
        %v3626 = vld [vmem:[#allocation3 + $0x40] sm:$0xff]
        %v3627 = vld [vmem:[#allocation3 + $0x48] sm:$0xff]
        %v3628 = vld [vmem:[#allocation3 + $0x50] sm:$0xff]
        %v3629 = vld [vmem:[#allocation3 + $0x58] sm:$0xff]
        %v3630 = vld [vmem:[#allocation3 + $0x60] sm:$0xff]
        %v3631 = vld [vmem:[#allocation3 + $0x68] sm:$0xff]
        %v3632 = vld [vmem:[#allocation3 + $0x70] sm:$0xff]
        %v3633 = vld [vmem:[#allocation3 + $0x78] sm:$0xff]
        %v3634 = vld [vmem:[#allocation3 + $0x80] sm:$0xff]
        %v3635 = vld [vmem:[#allocation3 + $0x88] sm:$0xff]
        %v3636 = vld [vmem:[#allocation3 + $0x90] sm:$0xff]
        %v3637 = vld [vmem:[#allocation3 + $0x98] sm:$0xff]
        %s3638 = scalar_lea.vmem %s2, 16
        %v3639 = vld [vmem:[%s3638] sm:$0x3]
        %v3641 = vsel %vm863, %v3622, 0
        %v3644 = vsel %vm863, %v3623, 0
        %v3647 = vsel %vm863, %v3624, 0
        %v3650 = vsel %vm863, %v3625, 0
        %v3653 = vsel %vm863, %v3626, 0
        %v3656 = vsel %vm863, %v3627, 0
        %v3659 = vsel %vm863, %v3628, 0
        %v3662 = vsel %vm863, %v3629, 0
        %v3665 = vsel %vm863, %v3630, 0
        %v3668 = vsel %vm863, %v3631, 0
        %v3671 = vsel %vm863, %v3632, 0
        %v3674 = vsel %vm863, %v3633, 0
        %v3677 = vsel %vm863, %v3634, 0
        %v3680 = vsel %vm863, %v3635, 0
        %v3683 = vsel %vm863, %v3636, 0
        %v3686 = vsel %vm863, %v3637, 0
        %v3689 = vsel %vm1401, %v3639, 0
        %3691 = vmatprep.subr.bf16.mxu0 0
        %3692 = vmatpush1.bf16.msra.mxu0 %v3689
        %3693 = vmatprep.subr.bf16.mxu0 0
        %3694 = vmatpush1.bf16.msra.mxu0 0
        %3695 = vmatprep.subr.bf16.mxu0 0
        %3696 = vmatpush1.bf16.msra.mxu0 0
        %3697 = vmatprep.subr.bf16.mxu0 0
        %3698 = vmatpush1.bf16.msra.mxu0 0
        %3699 = vmatprep.subr.bf16.mxu0 0
        %3700 = vmatpush1.bf16.msra.mxu0 0
        %3701 = vmatprep.subr.bf16.mxu0 0
        %3702 = vmatpush1.bf16.msra.mxu0 0
        %3703 = vmatprep.subr.bf16.mxu0 0
        %3704 = vmatpush1.bf16.msra.mxu0 0
        %3705 = vmatprep.subr.bf16.mxu0 0
        %3706 = vmatpush1.bf16.msra.mxu0 0
        %3707 = vmatprep.subr.bf16.mxu0 0
        %3708 = vmatpush1.bf16.msra.mxu0 0
        %3709 = vmatprep.subr.bf16.mxu0 0
        %3710 = vmatpush1.bf16.msra.mxu0 0
        %3711 = vmatprep.subr.bf16.mxu0 0
        %3712 = vmatpush1.bf16.msra.mxu0 0
        %3713 = vmatprep.subr.bf16.mxu0 0
        %3714 = vmatpush1.bf16.msra.mxu0 0
        %3715 = vmatprep.subr.bf16.mxu0 0
        %3716 = vmatpush1.bf16.msra.mxu0 0
        %3717 = vmatprep.subr.bf16.mxu0 0
        %3718 = vmatpush1.bf16.msra.mxu0 0
        %3719 = vmatprep.subr.bf16.mxu0 0
        %3720 = vmatpush1.bf16.msra.mxu0 0
        %3721 = vmatprep.subr.bf16.mxu0 0
        %3722 = vmatpush1.bf16.msra.mxu0 0
        %3723 = vmatprep.mubr.bf16.mxu0 0
        %3724 = vmatmul.mubr.bf16.gmra.mrb[0].mxu0 %v3641
        %v3725 = vpop.f32.mrb[0].mxu0
        %v3726 = vadd.f32 0.0, %v3725
        %v3727 = vpop.f32.mrb[0].mxu0
        %v3728 = vpop.f32.mrb[0].mxu0
        %v3729 = vadd.f32 0.0, %v3728
        %v3730 = vpop.f32.mrb[0].mxu0
        %3731 = vmatprep.mubr.bf16.mxu0 0
        %3732 = vmatmul.mubr.bf16.gmra.mrb[0].mxu0 %v3644
        %v3733 = vpop.f32.mrb[0].mxu0
        %v3734 = vadd.f32 0.0, %v3733
        %v3735 = vpop.f32.mrb[0].mxu0
        %v3736 = vpop.f32.mrb[0].mxu0
        %v3737 = vadd.f32 0.0, %v3736
        %v3738 = vpop.f32.mrb[0].mxu0
        %3739 = vmatprep.mubr.bf16.mxu0 0
        %3740 = vmatmul.mubr.bf16.gmra.mrb[0].mxu0 %v3647
        %v3741 = vpop.f32.mrb[0].mxu0
        %v3742 = vadd.f32 0.0, %v3741
        %v3743 = vpop.f32.mrb[0].mxu0
        %v3744 = vpop.f32.mrb[0].mxu0
        %v3745 = vadd.f32 0.0, %v3744
        %v3746 = vpop.f32.mrb[0].mxu0
        %3747 = vmatprep.mubr.bf16.mxu0 0
        %3748 = vmatmul.mubr.bf16.gmra.mrb[0].mxu0 %v3650
        %v3749 = vpop.f32.mrb[0].mxu0
        %v3750 = vadd.f32 0.0, %v3749
        %v3751 = vpop.f32.mrb[0].mxu0
        %v3752 = vpop.f32.mrb[0].mxu0
        %v3753 = vadd.f32 0.0, %v3752
        %v3754 = vpop.f32.mrb[0].mxu0
        %3755 = vmatprep.mubr.bf16.mxu0 0
        %3756 = vmatmul.mubr.bf16.gmra.mrb[0].mxu0 %v3653
        %v3757 = vpop.f32.mrb[0].mxu0
        %v3758 = vadd.f32 0.0, %v3757
        %v3759 = vpop.f32.mrb[0].mxu0
        %v3760 = vpop.f32.mrb[0].mxu0
        %v3761 = vadd.f32 0.0, %v3760
        %v3762 = vpop.f32.mrb[0].mxu0
        %3763 = vmatprep.mubr.bf16.mxu0 0
        %3764 = vmatmul.mubr.bf16.gmra.mrb[0].mxu0 %v3656
        %v3765 = vpop.f32.mrb[0].mxu0
        %v3766 = vadd.f32 0.0, %v3765
        %v3767 = vpop.f32.mrb[0].mxu0
        %v3768 = vpop.f32.mrb[0].mxu0
        %v3769 = vadd.f32 0.0, %v3768
        %v3770 = vpop.f32.mrb[0].mxu0
        %3771 = vmatprep.mubr.bf16.mxu0 0
        %3772 = vmatmul.mubr.bf16.gmra.mrb[0].mxu0 %v3659
        %v3773 = vpop.f32.mrb[0].mxu0
        %v3774 = vadd.f32 0.0, %v3773
        %v3775 = vpop.f32.mrb[0].mxu0
        %v3776 = vpop.f32.mrb[0].mxu0
        %v3777 = vadd.f32 0.0, %v3776
        %v3778 = vpop.f32.mrb[0].mxu0
        %3779 = vmatprep.mubr.bf16.mxu0 0
        %3780 = vmatmul.mubr.bf16.gmra.mrb[0].mxu0 %v3662
        %v3781 = vpop.f32.mrb[0].mxu0
        %v3782 = vadd.f32 0.0, %v3781
        %v3783 = vpop.f32.mrb[0].mxu0
        %v3784 = vpop.f32.mrb[0].mxu0
        %v3785 = vadd.f32 0.0, %v3784
        %v3786 = vpop.f32.mrb[0].mxu0
        %3787 = vmatprep.mubr.bf16.mxu0 0
        %3788 = vmatmul.mubr.bf16.gmra.mrb[0].mxu0 %v3665
        %v3789 = vpop.f32.mrb[0].mxu0
        %v3790 = vadd.f32 0.0, %v3789
        %v3791 = vpop.f32.mrb[0].mxu0
        %v3792 = vpop.f32.mrb[0].mxu0
        %v3793 = vadd.f32 0.0, %v3792
        %v3794 = vpop.f32.mrb[0].mxu0
        %3795 = vmatprep.mubr.bf16.mxu0 0
        %3796 = vmatmul.mubr.bf16.gmra.mrb[0].mxu0 %v3668
        %v3797 = vpop.f32.mrb[0].mxu0
        %v3798 = vadd.f32 0.0, %v3797
        %v3799 = vpop.f32.mrb[0].mxu0
        %v3800 = vpop.f32.mrb[0].mxu0
        %v3801 = vadd.f32 0.0, %v3800
        %v3802 = vpop.f32.mrb[0].mxu0
        %3803 = vmatprep.mubr.bf16.mxu0 0
        %3804 = vmatmul.mubr.bf16.gmra.mrb[0].mxu0 %v3671
        %v3805 = vpop.f32.mrb[0].mxu0
        %v3806 = vadd.f32 0.0, %v3805
        %v3807 = vpop.f32.mrb[0].mxu0
        %v3808 = vpop.f32.mrb[0].mxu0
        %v3809 = vadd.f32 0.0, %v3808
        %v3810 = vpop.f32.mrb[0].mxu0
        %3811 = vmatprep.mubr.bf16.mxu0 0
        %3812 = vmatmul.mubr.bf16.gmra.mrb[0].mxu0 %v3674
        %v3813 = vpop.f32.mrb[0].mxu0
        %v3814 = vadd.f32 0.0, %v3813
        %v3815 = vpop.f32.mrb[0].mxu0
        %v3816 = vpop.f32.mrb[0].mxu0
        %v3817 = vadd.f32 0.0, %v3816
        %v3818 = vpop.f32.mrb[0].mxu0
        %3819 = vmatprep.mubr.bf16.mxu0 0
        %3820 = vmatmul.mubr.bf16.gmra.mrb[0].mxu0 %v3677
        %v3821 = vpop.f32.mrb[0].mxu0
        %v3822 = vadd.f32 0.0, %v3821
        %v3823 = vpop.f32.mrb[0].mxu0
        %v3824 = vpop.f32.mrb[0].mxu0
        %v3825 = vadd.f32 0.0, %v3824
        %v3826 = vpop.f32.mrb[0].mxu0
        %3827 = vmatprep.mubr.bf16.mxu0 0
        %3828 = vmatmul.mubr.bf16.gmra.mrb[0].mxu0 %v3680
        %v3829 = vpop.f32.mrb[0].mxu0
        %v3830 = vadd.f32 0.0, %v3829
        %v3831 = vpop.f32.mrb[0].mxu0
        %v3832 = vpop.f32.mrb[0].mxu0
        %v3833 = vadd.f32 0.0, %v3832
        %v3834 = vpop.f32.mrb[0].mxu0
        %3835 = vmatprep.mubr.bf16.mxu0 0
        %3836 = vmatmul.mubr.bf16.gmra.mrb[0].mxu0 %v3683
        %v3837 = vpop.f32.mrb[0].mxu0
        %v3838 = vadd.f32 0.0, %v3837
        %v3839 = vpop.f32.mrb[0].mxu0
        %v3840 = vpop.f32.mrb[0].mxu0
        %v3841 = vadd.f32 0.0, %v3840
        %v3842 = vpop.f32.mrb[0].mxu0
        %3843 = vmatprep.mubr.bf16.mxu0 0
        %3844 = vmatmul.mubr.bf16.gmra.mrb[0].mxu0 %v3686
        %v3845 = vpop.f32.mrb[0].mxu0
        %v3846 = vadd.f32 0.0, %v3845
        %v3847 = vpop.f32.mrb[0].mxu0
        %v3848 = vpop.f32.mrb[0].mxu0
        %v3849 = vadd.f32 0.0, %v3848
        %v3850 = vpop.f32.mrb[0].mxu0
        %3851 = vdwg.mxu0
        %v3852 = vadd.f32 %v3590, %v3726
        %v3853 = vadd.f32 %v3591, %v3729
        %v3854 = vadd.f32 %v3592, %v3734
        %v3855 = vadd.f32 %v3593, %v3737
        %v3856 = vadd.f32 %v3594, %v3742
        %v3857 = vadd.f32 %v3595, %v3745
        %v3858 = vadd.f32 %v3596, %v3750
        %v3859 = vadd.f32 %v3597, %v3753
        %v3860 = vadd.f32 %v3598, %v3758
        %v3861 = vadd.f32 %v3599, %v3761
        %v3862 = vadd.f32 %v3600, %v3766
        %v3863 = vadd.f32 %v3601, %v3769
        %v3864 = vadd.f32 %v3602, %v3774
        %v3865 = vadd.f32 %v3603, %v3777
        %v3866 = vadd.f32 %v3604, %v3782
        %v3867 = vadd.f32 %v3605, %v3785
        %v3868 = vadd.f32 %v3606, %v3790
        %v3869 = vadd.f32 %v3607, %v3793
        %v3870 = vadd.f32 %v3608, %v3798
        %v3871 = vadd.f32 %v3609, %v3801
        %v3872 = vadd.f32 %v3610, %v3806
        %v3873 = vadd.f32 %v3611, %v3809
        %v3874 = vadd.f32 %v3612, %v3814
        %v3875 = vadd.f32 %v3613, %v3817
        %v3876 = vadd.f32 %v3614, %v3822
        %v3877 = vadd.f32 %v3615, %v3825
        %v3878 = vadd.f32 %v3616, %v3830
        %v3879 = vadd.f32 %v3617, %v3833
        %v3880 = vadd.f32 %v3618, %v3838
        %v3881 = vadd.f32 %v3619, %v3841
        %v3882 = vadd.f32 %v3620, %v3846
        %v3883 = vadd.f32 %v3621, %v3849
        %v3884 = vld [vmem:[%s3] sm:$0x1]
        %v3886 = vlaneseq
        %v3887 = vshrl.u32 %v3886, 7
        %v3888 = vsub.s32 0, %v3887
        %v3889 = vrot.slane %v3884, %v3888
        %v3891 = vadd.f32 %v3852, %v3889
        %v3892 = vadd.f32 %v3853, %v3889
        %v3893 = vadd.f32 %v3854, %v3889
        %v3894 = vadd.f32 %v3855, %v3889
        %v3895 = vadd.f32 %v3856, %v3889
        %v3896 = vadd.f32 %v3857, %v3889
        %v3897 = vadd.f32 %v3858, %v3889
        %v3898 = vadd.f32 %v3859, %v3889
        %v3899 = vadd.f32 %v3860, %v3889
        %v3900 = vadd.f32 %v3861, %v3889
        %v3901 = vadd.f32 %v3862, %v3889
        %v3902 = vadd.f32 %v3863, %v3889
        %v3903 = vadd.f32 %v3864, %v3889
        %v3904 = vadd.f32 %v3865, %v3889
        %v3905 = vadd.f32 %v3866, %v3889
        %v3906 = vadd.f32 %v3867, %v3889
        %v3907 = vadd.f32 %v3868, %v3889
        %v3908 = vadd.f32 %v3869, %v3889
        %v3909 = vadd.f32 %v3870, %v3889
        %v3910 = vadd.f32 %v3871, %v3889
        %v3911 = vadd.f32 %v3872, %v3889
        %v3912 = vadd.f32 %v3873, %v3889
        %v3913 = vadd.f32 %v3874, %v3889
        %v3914 = vadd.f32 %v3875, %v3889
        %v3915 = vadd.f32 %v3876, %v3889
        %v3916 = vadd.f32 %v3877, %v3889
        %v3917 = vadd.f32 %v3878, %v3889
        %v3918 = vadd.f32 %v3879, %v3889
        %v3919 = vadd.f32 %v3880, %v3889
        %v3920 = vadd.f32 %v3881, %v3889
        %v3921 = vadd.f32 %v3882, %v3889
        %v3922 = vadd.f32 %v3883, %v3889
        %v3923 = vmax.f32 %v3891, 0.0
        %v3924 = vmax.f32 %v3892, 0.0
        %v3925 = vmax.f32 %v3893, 0.0
        %v3926 = vmax.f32 %v3894, 0.0
        %v3927 = vmax.f32 %v3895, 0.0
        %v3928 = vmax.f32 %v3896, 0.0
        %v3929 = vmax.f32 %v3897, 0.0
        %v3930 = vmax.f32 %v3898, 0.0
        %v3931 = vmax.f32 %v3899, 0.0
        %v3932 = vmax.f32 %v3900, 0.0
        %v3933 = vmax.f32 %v3901, 0.0
        %v3934 = vmax.f32 %v3902, 0.0
        %v3935 = vmax.f32 %v3903, 0.0
        %v3936 = vmax.f32 %v3904, 0.0
        %v3937 = vmax.f32 %v3905, 0.0
        %v3938 = vmax.f32 %v3906, 0.0
        %v3939 = vmax.f32 %v3907, 0.0
        %v3940 = vmax.f32 %v3908, 0.0
        %v3941 = vmax.f32 %v3909, 0.0
        %v3942 = vmax.f32 %v3910, 0.0
        %v3943 = vmax.f32 %v3911, 0.0
        %v3944 = vmax.f32 %v3912, 0.0
        %v3945 = vmax.f32 %v3913, 0.0
        %v3946 = vmax.f32 %v3914, 0.0
        %v3947 = vmax.f32 %v3915, 0.0
        %v3948 = vmax.f32 %v3916, 0.0
        %v3949 = vmax.f32 %v3917, 0.0
        %v3950 = vmax.f32 %v3918, 0.0
        %v3951 = vmax.f32 %v3919, 0.0
        %v3952 = vmax.f32 %v3920, 0.0
        %v3953 = vmax.f32 %v3921, 0.0
        %v3954 = vmax.f32 %v3922, 0.0
        %v3955 = vpack.c.bf16 %v3924, %v3923
        %v3956 = vpack.c.bf16 %v3926, %v3925
        %v3957 = vpack.c.bf16 %v3928, %v3927
        %v3958 = vpack.c.bf16 %v3930, %v3929
        %v3959 = vpack.c.bf16 %v3932, %v3931
        %v3960 = vpack.c.bf16 %v3934, %v3933
        %v3961 = vpack.c.bf16 %v3936, %v3935
        %v3962 = vpack.c.bf16 %v3938, %v3937
        %v3963 = vpack.c.bf16 %v3940, %v3939
        %v3964 = vpack.c.bf16 %v3942, %v3941
        %v3965 = vpack.c.bf16 %v3944, %v3943
        %v3966 = vpack.c.bf16 %v3946, %v3945
        %v3967 = vpack.c.bf16 %v3948, %v3947
        %v3968 = vpack.c.bf16 %v3950, %v3949
        %v3969 = vpack.c.bf16 %v3952, %v3951
        %v3970 = vpack.c.bf16 %v3954, %v3953
        %v3987 = vunpack.c.l.b16 %v3955
        %v3988 = vunpack.c.h.b16 %v3955
        %v3989 = vunpack.c.l.b16 %v3956
        %v3990 = vunpack.c.h.b16 %v3956
        %v3991 = vunpack.c.l.b16 %v3957
        %v3992 = vunpack.c.h.b16 %v3957
        %v3993 = vunpack.c.l.b16 %v3958
        %v3994 = vunpack.c.h.b16 %v3958
        %v3995 = vunpack.c.l.b16 %v3959
        %v3996 = vunpack.c.h.b16 %v3959
        %v3997 = vunpack.c.l.b16 %v3960
        %v3998 = vunpack.c.h.b16 %v3960
        %v3999 = vunpack.c.l.b16 %v3961
        %v4000 = vunpack.c.h.b16 %v3961
        %v4001 = vunpack.c.l.b16 %v3962
        %v4002 = vunpack.c.h.b16 %v3962
        %v4003 = vunpack.c.l.b16 %v3963
        %v4004 = vunpack.c.h.b16 %v3963
        %v4005 = vunpack.c.l.b16 %v3964
        %v4006 = vunpack.c.h.b16 %v3964
        %v4007 = vunpack.c.l.b16 %v3965
        %v4008 = vunpack.c.h.b16 %v3965
        %v4009 = vunpack.c.l.b16 %v3966
        %v4010 = vunpack.c.h.b16 %v3966
        %v4011 = vunpack.c.l.b16 %v3967
        %v4012 = vunpack.c.h.b16 %v3967
        %v4013 = vunpack.c.l.b16 %v3968
        %v4014 = vunpack.c.h.b16 %v3968
        %v4015 = vunpack.c.l.b16 %v3969
        %v4016 = vunpack.c.h.b16 %v3969
        %v4017 = vunpack.c.l.b16 %v3970
        %v4018 = vunpack.c.h.b16 %v3970
        %v4019 = vpack.c.b16 %v3987, %v3987
        %v4020 = vpack.c.b16 %v3988, %v3988
        %v4021 = vpack.c.b16 %v3989, %v3989
        %v4022 = vpack.c.b16 %v3990, %v3990
        %v4023 = vpack.c.b16 %v3991, %v3991
        %v4024 = vpack.c.b16 %v3992, %v3992
        %v4025 = vpack.c.b16 %v3993, %v3993
        %v4026 = vpack.c.b16 %v3994, %v3994
        %v4027 = vpack.c.b16 %v3995, %v3995
        %v4028 = vpack.c.b16 %v3996, %v3996
        %v4029 = vpack.c.b16 %v3997, %v3997
        %v4030 = vpack.c.b16 %v3998, %v3998
        %v4031 = vpack.c.b16 %v3999, %v3999
        %v4032 = vpack.c.b16 %v4000, %v4000
        %v4033 = vpack.c.b16 %v4001, %v4001
        %v4034 = vpack.c.b16 %v4002, %v4002
        %v4035 = vpack.c.b16 %v4003, %v4003
        %v4036 = vpack.c.b16 %v4004, %v4004
        %v4037 = vpack.c.b16 %v4005, %v4005
        %v4038 = vpack.c.b16 %v4006, %v4006
        %v4039 = vpack.c.b16 %v4007, %v4007
        %v4040 = vpack.c.b16 %v4008, %v4008
        %v4041 = vpack.c.b16 %v4009, %v4009
        %v4042 = vpack.c.b16 %v4010, %v4010
        %v4043 = vpack.c.b16 %v4011, %v4011
        %v4044 = vpack.c.b16 %v4012, %v4012
        %v4045 = vpack.c.b16 %v4013, %v4013
        %v4046 = vpack.c.b16 %v4014, %v4014
        %v4047 = vpack.c.b16 %v4015, %v4015
        %v4048 = vpack.c.b16 %v4016, %v4016
        %v4049 = vpack.c.b16 %v4017, %v4017
        %v4050 = vpack.c.b16 %v4018, %v4018
        %4083 = vst [vmem:[%s271] sm:$0xf] %v4019
        %4084 = vst [vmem:[%s271 + $0x4] sm:$0xf] %v4020
        %4085 = vst [vmem:[%s271 + $0x8] sm:$0xf] %v4021
        %4086 = vst [vmem:[%s271 + $0xc] sm:$0xf] %v4022
        %4087 = vst [vmem:[%s271 + $0x10] sm:$0xf] %v4023
        %4088 = vst [vmem:[%s271 + $0x14] sm:$0xf] %v4024
        %4089 = vst [vmem:[%s271 + $0x18] sm:$0xf] %v4025
        %4090 = vst [vmem:[%s271 + $0x1c] sm:$0xf] %v4026
        %4091 = vst [vmem:[%s271 + $0x20] sm:$0xf] %v4027
        %4092 = vst [vmem:[%s271 + $0x24] sm:$0xf] %v4028
        %4093 = vst [vmem:[%s271 + $0x28] sm:$0xf] %v4029
        %4094 = vst [vmem:[%s271 + $0x2c] sm:$0xf] %v4030
        %4095 = vst [vmem:[%s271 + $0x30] sm:$0xf] %v4031
        %4096 = vst [vmem:[%s271 + $0x34] sm:$0xf] %v4032
        %4097 = vst [vmem:[%s271 + $0x38] sm:$0xf] %v4033
        %4098 = vst [vmem:[%s271 + $0x3c] sm:$0xf] %v4034
        %4099 = vst [vmem:[%s271 + $0x40] sm:$0xf] %v4035
        %4100 = vst [vmem:[%s271 + $0x44] sm:$0xf] %v4036
        %4101 = vst [vmem:[%s271 + $0x48] sm:$0xf] %v4037
        %4102 = vst [vmem:[%s271 + $0x4c] sm:$0xf] %v4038
        %4103 = vst [vmem:[%s271 + $0x50] sm:$0xf] %v4039
        %4104 = vst [vmem:[%s271 + $0x54] sm:$0xf] %v4040
        %4105 = vst [vmem:[%s271 + $0x58] sm:$0xf] %v4041
        %4106 = vst [vmem:[%s271 + $0x5c] sm:$0xf] %v4042
        %4107 = vst [vmem:[%s271 + $0x60] sm:$0xf] %v4043
        %4108 = vst [vmem:[%s271 + $0x64] sm:$0xf] %v4044
        %4109 = vst [vmem:[%s271 + $0x68] sm:$0xf] %v4045
        %4110 = vst [vmem:[%s271 + $0x6c] sm:$0xf] %v4046
        %4111 = vst [vmem:[%s271 + $0x70] sm:$0xf] %v4047
        %4112 = vst [vmem:[%s271 + $0x74] sm:$0xf] %v4048
        %4113 = vst [vmem:[%s271 + $0x78] sm:$0xf] %v4049
        %4114 = vst [vmem:[%s271 + $0x7c] sm:$0xf] %v4050
        %v4115 = vld [vmem:[%s276 + $0x80] sm:$0xf]
        %v4116 = vld [vmem:[%s276 + $0x84] sm:$0xf]
        %v4117 = vld [vmem:[%s276 + $0x88] sm:$0xf]
        %v4118 = vld [vmem:[%s276 + $0x8c] sm:$0xf]
        %v4119 = vld [vmem:[%s276 + $0x90] sm:$0xf]
        %v4120 = vld [vmem:[%s276 + $0x94] sm:$0xf]
        %v4121 = vld [vmem:[%s276 + $0x98] sm:$0xf]
        %v4122 = vld [vmem:[%s276 + $0x9c] sm:$0xf]
        %v4123 = vld [vmem:[%s276 + $0xa0] sm:$0xf]
        %v4124 = vld [vmem:[%s276 + $0xa4] sm:$0xf]
        %v4125 = vld [vmem:[%s276 + $0xa8] sm:$0xf]
        %v4126 = vld [vmem:[%s276 + $0xac] sm:$0xf]
        %v4127 = vld [vmem:[%s276 + $0xb0] sm:$0xf]
        %v4128 = vld [vmem:[%s276 + $0xb4] sm:$0xf]
        %v4129 = vld [vmem:[%s276 + $0xb8] sm:$0xf]
        %v4130 = vld [vmem:[%s276 + $0xbc] sm:$0xf]
        %v4131 = vld [vmem:[%s276 + $0xc0] sm:$0xf]
        %v4132 = vld [vmem:[%s276 + $0xc4] sm:$0xf]
        %v4133 = vld [vmem:[%s276 + $0xc8] sm:$0xf]
        %v4134 = vld [vmem:[%s276 + $0xcc] sm:$0xf]
        %v4135 = vld [vmem:[%s276 + $0xd0] sm:$0xf]
        %v4136 = vld [vmem:[%s276 + $0xd4] sm:$0xf]
        %v4137 = vld [vmem:[%s276 + $0xd8] sm:$0xf]
        %v4138 = vld [vmem:[%s276 + $0xdc] sm:$0xf]
        %v4139 = vld [vmem:[%s276 + $0xe0] sm:$0xf]
        %v4140 = vld [vmem:[%s276 + $0xe4] sm:$0xf]
        %v4141 = vld [vmem:[%s276 + $0xe8] sm:$0xf]
        %v4142 = vld [vmem:[%s276 + $0xec] sm:$0xf]
        %v4143 = vld [vmem:[%s276 + $0xf0] sm:$0xf]
        %v4144 = vld [vmem:[%s276 + $0xf4] sm:$0xf]
        %v4145 = vld [vmem:[%s276 + $0xf8] sm:$0xf]
        %v4146 = vld [vmem:[%s276 + $0xfc] sm:$0xf]
        %v4147 = vld [vmem:[%s2] sm:$0x3]
        %v4148 = vld [vmem:[#allocation2 + $0x80] sm:$0xff]
        %v4149 = vld [vmem:[#allocation2 + $0x88] sm:$0xff]
        %v4150 = vld [vmem:[#allocation2 + $0x90] sm:$0xff]
        %v4151 = vld [vmem:[#allocation2 + $0x98] sm:$0xff]
        %v4152 = vld [vmem:[#allocation2 + $0xa0] sm:$0xff]
        %v4153 = vld [vmem:[#allocation2 + $0xa8] sm:$0xff]
        %v4154 = vld [vmem:[#allocation2 + $0xb0] sm:$0xff]
        %v4155 = vld [vmem:[#allocation2 + $0xb8] sm:$0xff]
        %v4156 = vld [vmem:[#allocation2 + $0xc0] sm:$0xff]
        %v4157 = vld [vmem:[#allocation2 + $0xc8] sm:$0xff]
        %v4158 = vld [vmem:[#allocation2 + $0xd0] sm:$0xff]
        %v4159 = vld [vmem:[#allocation2 + $0xd8] sm:$0xff]
        %v4160 = vld [vmem:[#allocation2 + $0xe0] sm:$0xff]
        %v4161 = vld [vmem:[#allocation2 + $0xe8] sm:$0xff]
        %v4162 = vld [vmem:[#allocation2 + $0xf0] sm:$0xff]
        %v4163 = vld [vmem:[#allocation2 + $0xf8] sm:$0xff]
        %v4164 = vld [vmem:[%s1351] sm:$0x3]
        %v4166 = vsel %vm863, %v4148, 0
        %v4169 = vsel %vm863, %v4149, 0
        %v4172 = vsel %vm863, %v4150, 0
        %v4175 = vsel %vm863, %v4151, 0
        %v4178 = vsel %vm863, %v4152, 0
        %v4181 = vsel %vm863, %v4153, 0
        %v4184 = vsel %vm863, %v4154, 0
        %v4187 = vsel %vm863, %v4155, 0
        %v4190 = vsel %vm863, %v4156, 0
        %v4193 = vsel %vm863, %v4157, 0
        %v4196 = vsel %vm863, %v4158, 0
        %v4199 = vsel %vm863, %v4159, 0
        %v4202 = vsel %vm863, %v4160, 0
        %v4205 = vsel %vm863, %v4161, 0
        %v4208 = vsel %vm863, %v4162, 0
        %v4211 = vsel %vm863, %v4163, 0
        %v4214 = vsel %vm1401, %v4164, 0
        %4216 = vmatprep.subr.bf16.mxu0 0
        %4217 = vmatpush1.bf16.msra.mxu0 %v4214
        %4218 = vmatprep.subr.bf16.mxu0 0
        %4219 = vmatpush1.bf16.msra.mxu0 0
        %4220 = vmatprep.subr.bf16.mxu0 0
        %4221 = vmatpush1.bf16.msra.mxu0 0
        %4222 = vmatprep.subr.bf16.mxu0 0
        %4223 = vmatpush1.bf16.msra.mxu0 0
        %4224 = vmatprep.subr.bf16.mxu0 0
        %4225 = vmatpush1.bf16.msra.mxu0 0
        %4226 = vmatprep.subr.bf16.mxu0 0
        %4227 = vmatpush1.bf16.msra.mxu0 0
        %4228 = vmatprep.subr.bf16.mxu0 0
        %4229 = vmatpush1.bf16.msra.mxu0 0
        %4230 = vmatprep.subr.bf16.mxu0 0
        %4231 = vmatpush1.bf16.msra.mxu0 0
        %4232 = vmatprep.subr.bf16.mxu0 0
        %4233 = vmatpush1.bf16.msra.mxu0 0
        %4234 = vmatprep.subr.bf16.mxu0 0
        %4235 = vmatpush1.bf16.msra.mxu0 0
        %4236 = vmatprep.subr.bf16.mxu0 0
        %4237 = vmatpush1.bf16.msra.mxu0 0
        %4238 = vmatprep.subr.bf16.mxu0 0
        %4239 = vmatpush1.bf16.msra.mxu0 0
        %4240 = vmatprep.subr.bf16.mxu0 0
        %4241 = vmatpush1.bf16.msra.mxu0 0
        %4242 = vmatprep.subr.bf16.mxu0 0
        %4243 = vmatpush1.bf16.msra.mxu0 0
        %4244 = vmatprep.subr.bf16.mxu0 0
        %4245 = vmatpush1.bf16.msra.mxu0 0
        %4246 = vmatprep.subr.bf16.mxu0 0
        %4247 = vmatpush1.bf16.msra.mxu0 0
        %4248 = vmatprep.mubr.bf16.mxu0 0
        %4249 = vmatmul.mubr.bf16.gmra.mrb[0].mxu0 %v4166
        %v4250 = vpop.f32.mrb[0].mxu0
        %v4251 = vadd.f32 0.0, %v4250
        %v4252 = vpop.f32.mrb[0].mxu0
        %v4253 = vpop.f32.mrb[0].mxu0
        %v4254 = vadd.f32 0.0, %v4253
        %v4255 = vpop.f32.mrb[0].mxu0
        %4256 = vmatprep.mubr.bf16.mxu0 0
        %4257 = vmatmul.mubr.bf16.gmra.mrb[0].mxu0 %v4169
        %v4258 = vpop.f32.mrb[0].mxu0
        %v4259 = vadd.f32 0.0, %v4258
        %v4260 = vpop.f32.mrb[0].mxu0
        %v4261 = vpop.f32.mrb[0].mxu0
        %v4262 = vadd.f32 0.0, %v4261
        %v4263 = vpop.f32.mrb[0].mxu0
        %4264 = vmatprep.mubr.bf16.mxu0 0
        %4265 = vmatmul.mubr.bf16.gmra.mrb[0].mxu0 %v4172
        %v4266 = vpop.f32.mrb[0].mxu0
        %v4267 = vadd.f32 0.0, %v4266
        %v4268 = vpop.f32.mrb[0].mxu0
        %v4269 = vpop.f32.mrb[0].mxu0
        %v4270 = vadd.f32 0.0, %v4269
        %v4271 = vpop.f32.mrb[0].mxu0
        %4272 = vmatprep.mubr.bf16.mxu0 0
        %4273 = vmatmul.mubr.bf16.gmra.mrb[0].mxu0 %v4175
        %v4274 = vpop.f32.mrb[0].mxu0
        %v4275 = vadd.f32 0.0, %v4274
        %v4276 = vpop.f32.mrb[0].mxu0
        %v4277 = vpop.f32.mrb[0].mxu0
        %v4278 = vadd.f32 0.0, %v4277
        %v4279 = vpop.f32.mrb[0].mxu0
        %4280 = vmatprep.mubr.bf16.mxu0 0
        %4281 = vmatmul.mubr.bf16.gmra.mrb[0].mxu0 %v4178
        %v4282 = vpop.f32.mrb[0].mxu0
        %v4283 = vadd.f32 0.0, %v4282
        %v4284 = vpop.f32.mrb[0].mxu0
        %v4285 = vpop.f32.mrb[0].mxu0
        %v4286 = vadd.f32 0.0, %v4285
        %v4287 = vpop.f32.mrb[0].mxu0
        %4288 = vmatprep.mubr.bf16.mxu0 0
        %4289 = vmatmul.mubr.bf16.gmra.mrb[0].mxu0 %v4181
        %v4290 = vpop.f32.mrb[0].mxu0
        %v4291 = vadd.f32 0.0, %v4290
        %v4292 = vpop.f32.mrb[0].mxu0
        %v4293 = vpop.f32.mrb[0].mxu0
        %v4294 = vadd.f32 0.0, %v4293
        %v4295 = vpop.f32.mrb[0].mxu0
        %4296 = vmatprep.mubr.bf16.mxu0 0
        %4297 = vmatmul.mubr.bf16.gmra.mrb[0].mxu0 %v4184
        %v4298 = vpop.f32.mrb[0].mxu0
        %v4299 = vadd.f32 0.0, %v4298
        %v4300 = vpop.f32.mrb[0].mxu0
        %v4301 = vpop.f32.mrb[0].mxu0
        %v4302 = vadd.f32 0.0, %v4301
        %v4303 = vpop.f32.mrb[0].mxu0
        %4304 = vmatprep.mubr.bf16.mxu0 0
        %4305 = vmatmul.mubr.bf16.gmra.mrb[0].mxu0 %v4187
        %v4306 = vpop.f32.mrb[0].mxu0
        %v4307 = vadd.f32 0.0, %v4306
        %v4308 = vpop.f32.mrb[0].mxu0
        %v4309 = vpop.f32.mrb[0].mxu0
        %v4310 = vadd.f32 0.0, %v4309
        %v4311 = vpop.f32.mrb[0].mxu0
        %4312 = vmatprep.mubr.bf16.mxu0 0
        %4313 = vmatmul.mubr.bf16.gmra.mrb[0].mxu0 %v4190
        %v4314 = vpop.f32.mrb[0].mxu0
        %v4315 = vadd.f32 0.0, %v4314
        %v4316 = vpop.f32.mrb[0].mxu0
        %v4317 = vpop.f32.mrb[0].mxu0
        %v4318 = vadd.f32 0.0, %v4317
        %v4319 = vpop.f32.mrb[0].mxu0
        %4320 = vmatprep.mubr.bf16.mxu0 0
        %4321 = vmatmul.mubr.bf16.gmra.mrb[0].mxu0 %v4193
        %v4322 = vpop.f32.mrb[0].mxu0
        %v4323 = vadd.f32 0.0, %v4322
        %v4324 = vpop.f32.mrb[0].mxu0
        %v4325 = vpop.f32.mrb[0].mxu0
        %v4326 = vadd.f32 0.0, %v4325
        %v4327 = vpop.f32.mrb[0].mxu0
        %4328 = vmatprep.mubr.bf16.mxu0 0
        %4329 = vmatmul.mubr.bf16.gmra.mrb[0].mxu0 %v4196
        %v4330 = vpop.f32.mrb[0].mxu0
        %v4331 = vadd.f32 0.0, %v4330
        %v4332 = vpop.f32.mrb[0].mxu0
        %v4333 = vpop.f32.mrb[0].mxu0
        %v4334 = vadd.f32 0.0, %v4333
        %v4335 = vpop.f32.mrb[0].mxu0
        %4336 = vmatprep.mubr.bf16.mxu0 0
        %4337 = vmatmul.mubr.bf16.gmra.mrb[0].mxu0 %v4199
        %v4338 = vpop.f32.mrb[0].mxu0
        %v4339 = vadd.f32 0.0, %v4338
        %v4340 = vpop.f32.mrb[0].mxu0
        %v4341 = vpop.f32.mrb[0].mxu0
        %v4342 = vadd.f32 0.0, %v4341
        %v4343 = vpop.f32.mrb[0].mxu0
        %4344 = vmatprep.mubr.bf16.mxu0 0
        %4345 = vmatmul.mubr.bf16.gmra.mrb[0].mxu0 %v4202
        %v4346 = vpop.f32.mrb[0].mxu0
        %v4347 = vadd.f32 0.0, %v4346
        %v4348 = vpop.f32.mrb[0].mxu0
        %v4349 = vpop.f32.mrb[0].mxu0
        %v4350 = vadd.f32 0.0, %v4349
        %v4351 = vpop.f32.mrb[0].mxu0
        %4352 = vmatprep.mubr.bf16.mxu0 0
        %4353 = vmatmul.mubr.bf16.gmra.mrb[0].mxu0 %v4205
        %v4354 = vpop.f32.mrb[0].mxu0
        %v4355 = vadd.f32 0.0, %v4354
        %v4356 = vpop.f32.mrb[0].mxu0
        %v4357 = vpop.f32.mrb[0].mxu0
        %v4358 = vadd.f32 0.0, %v4357
        %v4359 = vpop.f32.mrb[0].mxu0
        %4360 = vmatprep.mubr.bf16.mxu0 0
        %4361 = vmatmul.mubr.bf16.gmra.mrb[0].mxu0 %v4208
        %v4362 = vpop.f32.mrb[0].mxu0
        %v4363 = vadd.f32 0.0, %v4362
        %v4364 = vpop.f32.mrb[0].mxu0
        %v4365 = vpop.f32.mrb[0].mxu0
        %v4366 = vadd.f32 0.0, %v4365
        %v4367 = vpop.f32.mrb[0].mxu0
        %4368 = vmatprep.mubr.bf16.mxu0 0
        %4369 = vmatmul.mubr.bf16.gmra.mrb[0].mxu0 %v4211
        %v4370 = vpop.f32.mrb[0].mxu0
        %v4371 = vadd.f32 0.0, %v4370
        %v4372 = vpop.f32.mrb[0].mxu0
        %v4373 = vpop.f32.mrb[0].mxu0
        %v4374 = vadd.f32 0.0, %v4373
        %v4375 = vpop.f32.mrb[0].mxu0
        %4376 = vdwg.mxu0
        %v4409 = vunpack.c.l.b16 %v4115
        %v4410 = vunpack.c.l.b16 %v4116
        %v4411 = vunpack.c.l.b16 %v4117
        %v4412 = vunpack.c.l.b16 %v4118
        %v4413 = vunpack.c.l.b16 %v4119
        %v4414 = vunpack.c.l.b16 %v4120
        %v4415 = vunpack.c.l.b16 %v4121
        %v4416 = vunpack.c.l.b16 %v4122
        %v4417 = vunpack.c.l.b16 %v4123
        %v4418 = vunpack.c.l.b16 %v4124
        %v4419 = vunpack.c.l.b16 %v4125
        %v4420 = vunpack.c.l.b16 %v4126
        %v4421 = vunpack.c.l.b16 %v4127
        %v4422 = vunpack.c.l.b16 %v4128
        %v4423 = vunpack.c.l.b16 %v4129
        %v4424 = vunpack.c.l.b16 %v4130
        %v4425 = vunpack.c.l.b16 %v4131
        %v4426 = vunpack.c.l.b16 %v4132
        %v4427 = vunpack.c.l.b16 %v4133
        %v4428 = vunpack.c.l.b16 %v4134
        %v4429 = vunpack.c.l.b16 %v4135
        %v4430 = vunpack.c.l.b16 %v4136
        %v4431 = vunpack.c.l.b16 %v4137
        %v4432 = vunpack.c.l.b16 %v4138
        %v4433 = vunpack.c.l.b16 %v4139
        %v4434 = vunpack.c.l.b16 %v4140
        %v4435 = vunpack.c.l.b16 %v4141
        %v4436 = vunpack.c.l.b16 %v4142
        %v4437 = vunpack.c.l.b16 %v4143
        %v4438 = vunpack.c.l.b16 %v4144
        %v4439 = vunpack.c.l.b16 %v4145
        %v4440 = vunpack.c.l.b16 %v4146
        %v4441 = vpack.c.b16 %v4410, %v4409
        %v4442 = vpack.c.b16 %v4412, %v4411
        %v4443 = vpack.c.b16 %v4414, %v4413
        %v4444 = vpack.c.b16 %v4416, %v4415
        %v4445 = vpack.c.b16 %v4418, %v4417
        %v4446 = vpack.c.b16 %v4420, %v4419
        %v4447 = vpack.c.b16 %v4422, %v4421
        %v4448 = vpack.c.b16 %v4424, %v4423
        %v4449 = vpack.c.b16 %v4426, %v4425
        %v4450 = vpack.c.b16 %v4428, %v4427
        %v4451 = vpack.c.b16 %v4430, %v4429
        %v4452 = vpack.c.b16 %v4432, %v4431
        %v4453 = vpack.c.b16 %v4434, %v4433
        %v4454 = vpack.c.b16 %v4436, %v4435
        %v4455 = vpack.c.b16 %v4438, %v4437
        %v4456 = vpack.c.b16 %v4440, %v4439
        %v4458 = vsel %vm863, %v4441, 0
        %v4461 = vsel %vm863, %v4442, 0
        %v4464 = vsel %vm863, %v4443, 0
        %v4467 = vsel %vm863, %v4444, 0
        %v4470 = vsel %vm863, %v4445, 0
        %v4473 = vsel %vm863, %v4446, 0
        %v4476 = vsel %vm863, %v4447, 0
        %v4479 = vsel %vm863, %v4448, 0
        %v4482 = vsel %vm863, %v4449, 0
        %v4485 = vsel %vm863, %v4450, 0
        %v4488 = vsel %vm863, %v4451, 0
        %v4491 = vsel %vm863, %v4452, 0
        %v4494 = vsel %vm863, %v4453, 0
        %v4497 = vsel %vm863, %v4454, 0
        %v4500 = vsel %vm863, %v4455, 0
        %v4503 = vsel %vm863, %v4456, 0
        %v4506 = vsel %vm1401, %v4147, 0
        %4508 = vmatprep.subr.bf16.mxu0 0
        %4509 = vmatpush1.bf16.msra.mxu0 %v4506
        %4510 = vmatprep.subr.bf16.mxu0 0
        %4511 = vmatpush1.bf16.msra.mxu0 0
        %4512 = vmatprep.subr.bf16.mxu0 0
        %4513 = vmatpush1.bf16.msra.mxu0 0
        %4514 = vmatprep.subr.bf16.mxu0 0
        %4515 = vmatpush1.bf16.msra.mxu0 0
        %4516 = vmatprep.subr.bf16.mxu0 0
        %4517 = vmatpush1.bf16.msra.mxu0 0
        %4518 = vmatprep.subr.bf16.mxu0 0
        %4519 = vmatpush1.bf16.msra.mxu0 0
        %4520 = vmatprep.subr.bf16.mxu0 0
        %4521 = vmatpush1.bf16.msra.mxu0 0
        %4522 = vmatprep.subr.bf16.mxu0 0
        %4523 = vmatpush1.bf16.msra.mxu0 0
        %4524 = vmatprep.subr.bf16.mxu0 0
        %4525 = vmatpush1.bf16.msra.mxu0 0
        %4526 = vmatprep.subr.bf16.mxu0 0
        %4527 = vmatpush1.bf16.msra.mxu0 0
        %4528 = vmatprep.subr.bf16.mxu0 0
        %4529 = vmatpush1.bf16.msra.mxu0 0
        %4530 = vmatprep.subr.bf16.mxu0 0
        %4531 = vmatpush1.bf16.msra.mxu0 0
        %4532 = vmatprep.subr.bf16.mxu0 0
        %4533 = vmatpush1.bf16.msra.mxu0 0
        %4534 = vmatprep.subr.bf16.mxu0 0
        %4535 = vmatpush1.bf16.msra.mxu0 0
        %4536 = vmatprep.subr.bf16.mxu0 0
        %4537 = vmatpush1.bf16.msra.mxu0 0
        %4538 = vmatprep.subr.bf16.mxu0 0
        %4539 = vmatpush1.bf16.msra.mxu0 0
        %4540 = vmatprep.mubr.bf16.mxu0 0
        %4541 = vmatmul.mubr.bf16.gmra.mrb[0].mxu0 %v4458
        %v4542 = vpop.f32.mrb[0].mxu0
        %v4543 = vadd.f32 %v4251, %v4542
        %v4544 = vpop.f32.mrb[0].mxu0
        %v4545 = vpop.f32.mrb[0].mxu0
        %v4546 = vadd.f32 %v4254, %v4545
        %v4547 = vpop.f32.mrb[0].mxu0
        %4548 = vmatprep.mubr.bf16.mxu0 0
        %4549 = vmatmul.mubr.bf16.gmra.mrb[0].mxu0 %v4461
        %v4550 = vpop.f32.mrb[0].mxu0
        %v4551 = vadd.f32 %v4259, %v4550
        %v4552 = vpop.f32.mrb[0].mxu0
        %v4553 = vpop.f32.mrb[0].mxu0
        %v4554 = vadd.f32 %v4262, %v4553
        %v4555 = vpop.f32.mrb[0].mxu0
        %4556 = vmatprep.mubr.bf16.mxu0 0
        %4557 = vmatmul.mubr.bf16.gmra.mrb[0].mxu0 %v4464
        %v4558 = vpop.f32.mrb[0].mxu0
        %v4559 = vadd.f32 %v4267, %v4558
        %v4560 = vpop.f32.mrb[0].mxu0
        %v4561 = vpop.f32.mrb[0].mxu0
        %v4562 = vadd.f32 %v4270, %v4561
        %v4563 = vpop.f32.mrb[0].mxu0
        %4564 = vmatprep.mubr.bf16.mxu0 0
        %4565 = vmatmul.mubr.bf16.gmra.mrb[0].mxu0 %v4467
        %v4566 = vpop.f32.mrb[0].mxu0
        %v4567 = vadd.f32 %v4275, %v4566
        %v4568 = vpop.f32.mrb[0].mxu0
        %v4569 = vpop.f32.mrb[0].mxu0
        %v4570 = vadd.f32 %v4278, %v4569
        %v4571 = vpop.f32.mrb[0].mxu0
        %4572 = vmatprep.mubr.bf16.mxu0 0
        %4573 = vmatmul.mubr.bf16.gmra.mrb[0].mxu0 %v4470
        %v4574 = vpop.f32.mrb[0].mxu0
        %v4575 = vadd.f32 %v4283, %v4574
        %v4576 = vpop.f32.mrb[0].mxu0
        %v4577 = vpop.f32.mrb[0].mxu0
        %v4578 = vadd.f32 %v4286, %v4577
        %v4579 = vpop.f32.mrb[0].mxu0
        %4580 = vmatprep.mubr.bf16.mxu0 0
        %4581 = vmatmul.mubr.bf16.gmra.mrb[0].mxu0 %v4473
        %v4582 = vpop.f32.mrb[0].mxu0
        %v4583 = vadd.f32 %v4291, %v4582
        %v4584 = vpop.f32.mrb[0].mxu0
        %v4585 = vpop.f32.mrb[0].mxu0
        %v4586 = vadd.f32 %v4294, %v4585
        %v4587 = vpop.f32.mrb[0].mxu0
        %4588 = vmatprep.mubr.bf16.mxu0 0
        %4589 = vmatmul.mubr.bf16.gmra.mrb[0].mxu0 %v4476
        %v4590 = vpop.f32.mrb[0].mxu0
        %v4591 = vadd.f32 %v4299, %v4590
        %v4592 = vpop.f32.mrb[0].mxu0
        %v4593 = vpop.f32.mrb[0].mxu0
        %v4594 = vadd.f32 %v4302, %v4593
        %v4595 = vpop.f32.mrb[0].mxu0
        %4596 = vmatprep.mubr.bf16.mxu0 0
        %4597 = vmatmul.mubr.bf16.gmra.mrb[0].mxu0 %v4479
        %v4598 = vpop.f32.mrb[0].mxu0
        %v4599 = vadd.f32 %v4307, %v4598
        %v4600 = vpop.f32.mrb[0].mxu0
        %v4601 = vpop.f32.mrb[0].mxu0
        %v4602 = vadd.f32 %v4310, %v4601
        %v4603 = vpop.f32.mrb[0].mxu0
        %4604 = vmatprep.mubr.bf16.mxu0 0
        %4605 = vmatmul.mubr.bf16.gmra.mrb[0].mxu0 %v4482
        %v4606 = vpop.f32.mrb[0].mxu0
        %v4607 = vadd.f32 %v4315, %v4606
        %v4608 = vpop.f32.mrb[0].mxu0
        %v4609 = vpop.f32.mrb[0].mxu0
        %v4610 = vadd.f32 %v4318, %v4609
        %v4611 = vpop.f32.mrb[0].mxu0
        %4612 = vmatprep.mubr.bf16.mxu0 0
        %4613 = vmatmul.mubr.bf16.gmra.mrb[0].mxu0 %v4485
        %v4614 = vpop.f32.mrb[0].mxu0
        %v4615 = vadd.f32 %v4323, %v4614
        %v4616 = vpop.f32.mrb[0].mxu0
        %v4617 = vpop.f32.mrb[0].mxu0
        %v4618 = vadd.f32 %v4326, %v4617
        %v4619 = vpop.f32.mrb[0].mxu0
        %4620 = vmatprep.mubr.bf16.mxu0 0
        %4621 = vmatmul.mubr.bf16.gmra.mrb[0].mxu0 %v4488
        %v4622 = vpop.f32.mrb[0].mxu0
        %v4623 = vadd.f32 %v4331, %v4622
        %v4624 = vpop.f32.mrb[0].mxu0
        %v4625 = vpop.f32.mrb[0].mxu0
        %v4626 = vadd.f32 %v4334, %v4625
        %v4627 = vpop.f32.mrb[0].mxu0
        %4628 = vmatprep.mubr.bf16.mxu0 0
        %4629 = vmatmul.mubr.bf16.gmra.mrb[0].mxu0 %v4491
        %v4630 = vpop.f32.mrb[0].mxu0
        %v4631 = vadd.f32 %v4339, %v4630
        %v4632 = vpop.f32.mrb[0].mxu0
        %v4633 = vpop.f32.mrb[0].mxu0
        %v4634 = vadd.f32 %v4342, %v4633
        %v4635 = vpop.f32.mrb[0].mxu0
        %4636 = vmatprep.mubr.bf16.mxu0 0
        %4637 = vmatmul.mubr.bf16.gmra.mrb[0].mxu0 %v4494
        %v4638 = vpop.f32.mrb[0].mxu0
        %v4639 = vadd.f32 %v4347, %v4638
        %v4640 = vpop.f32.mrb[0].mxu0
        %v4641 = vpop.f32.mrb[0].mxu0
        %v4642 = vadd.f32 %v4350, %v4641
        %v4643 = vpop.f32.mrb[0].mxu0
        %4644 = vmatprep.mubr.bf16.mxu0 0
        %4645 = vmatmul.mubr.bf16.gmra.mrb[0].mxu0 %v4497
        %v4646 = vpop.f32.mrb[0].mxu0
        %v4647 = vadd.f32 %v4355, %v4646
        %v4648 = vpop.f32.mrb[0].mxu0
        %v4649 = vpop.f32.mrb[0].mxu0
        %v4650 = vadd.f32 %v4358, %v4649
        %v4651 = vpop.f32.mrb[0].mxu0
        %4652 = vmatprep.mubr.bf16.mxu0 0
        %4653 = vmatmul.mubr.bf16.gmra.mrb[0].mxu0 %v4500
        %v4654 = vpop.f32.mrb[0].mxu0
        %v4655 = vadd.f32 %v4363, %v4654
        %v4656 = vpop.f32.mrb[0].mxu0
        %v4657 = vpop.f32.mrb[0].mxu0
        %v4658 = vadd.f32 %v4366, %v4657
        %v4659 = vpop.f32.mrb[0].mxu0
        %4660 = vmatprep.mubr.bf16.mxu0 0
        %4661 = vmatmul.mubr.bf16.gmra.mrb[0].mxu0 %v4503
        %v4662 = vpop.f32.mrb[0].mxu0
        %v4663 = vadd.f32 %v4371, %v4662
        %v4664 = vpop.f32.mrb[0].mxu0
        %v4665 = vpop.f32.mrb[0].mxu0
        %v4666 = vadd.f32 %v4374, %v4665
        %v4667 = vpop.f32.mrb[0].mxu0
        %4668 = vdwg.mxu0
        %v4669 = vld [vmem:[#allocation3 + $0x80] sm:$0xff]
        %v4670 = vld [vmem:[#allocation3 + $0x88] sm:$0xff]
        %v4671 = vld [vmem:[#allocation3 + $0x90] sm:$0xff]
        %v4672 = vld [vmem:[#allocation3 + $0x98] sm:$0xff]
        %v4673 = vld [vmem:[#allocation3 + $0xa0] sm:$0xff]
        %v4674 = vld [vmem:[#allocation3 + $0xa8] sm:$0xff]
        %v4675 = vld [vmem:[#allocation3 + $0xb0] sm:$0xff]
        %v4676 = vld [vmem:[#allocation3 + $0xb8] sm:$0xff]
        %v4677 = vld [vmem:[#allocation3 + $0xc0] sm:$0xff]
        %v4678 = vld [vmem:[#allocation3 + $0xc8] sm:$0xff]
        %v4679 = vld [vmem:[#allocation3 + $0xd0] sm:$0xff]
        %v4680 = vld [vmem:[#allocation3 + $0xd8] sm:$0xff]
        %v4681 = vld [vmem:[#allocation3 + $0xe0] sm:$0xff]
        %v4682 = vld [vmem:[#allocation3 + $0xe8] sm:$0xff]
        %v4683 = vld [vmem:[#allocation3 + $0xf0] sm:$0xff]
        %v4684 = vld [vmem:[#allocation3 + $0xf8] sm:$0xff]
        %v4685 = vld [vmem:[%s1874] sm:$0x3]
        %v4687 = vsel %vm863, %v4669, 0
        %v4690 = vsel %vm863, %v4670, 0
        %v4693 = vsel %vm863, %v4671, 0
        %v4696 = vsel %vm863, %v4672, 0
        %v4699 = vsel %vm863, %v4673, 0
        %v4702 = vsel %vm863, %v4674, 0
        %v4705 = vsel %vm863, %v4675, 0
        %v4708 = vsel %vm863, %v4676, 0
        %v4711 = vsel %vm863, %v4677, 0
        %v4714 = vsel %vm863, %v4678, 0
        %v4717 = vsel %vm863, %v4679, 0
        %v4720 = vsel %vm863, %v4680, 0
        %v4723 = vsel %vm863, %v4681, 0
        %v4726 = vsel %vm863, %v4682, 0
        %v4729 = vsel %vm863, %v4683, 0
        %v4732 = vsel %vm863, %v4684, 0
        %v4735 = vsel %vm1401, %v4685, 0
        %4737 = vmatprep.subr.bf16.mxu0 0
        %4738 = vmatpush1.bf16.msra.mxu0 %v4735
        %4739 = vmatprep.subr.bf16.mxu0 0
        %4740 = vmatpush1.bf16.msra.mxu0 0
        %4741 = vmatprep.subr.bf16.mxu0 0
        %4742 = vmatpush1.bf16.msra.mxu0 0
        %4743 = vmatprep.subr.bf16.mxu0 0
        %4744 = vmatpush1.bf16.msra.mxu0 0
        %4745 = vmatprep.subr.bf16.mxu0 0
        %4746 = vmatpush1.bf16.msra.mxu0 0
        %4747 = vmatprep.subr.bf16.mxu0 0
        %4748 = vmatpush1.bf16.msra.mxu0 0
        %4749 = vmatprep.subr.bf16.mxu0 0
        %4750 = vmatpush1.bf16.msra.mxu0 0
        %4751 = vmatprep.subr.bf16.mxu0 0
        %4752 = vmatpush1.bf16.msra.mxu0 0
        %4753 = vmatprep.subr.bf16.mxu0 0
        %4754 = vmatpush1.bf16.msra.mxu0 0
        %4755 = vmatprep.subr.bf16.mxu0 0
        %4756 = vmatpush1.bf16.msra.mxu0 0
        %4757 = vmatprep.subr.bf16.mxu0 0
        %4758 = vmatpush1.bf16.msra.mxu0 0
        %4759 = vmatprep.subr.bf16.mxu0 0
        %4760 = vmatpush1.bf16.msra.mxu0 0
        %4761 = vmatprep.subr.bf16.mxu0 0
        %4762 = vmatpush1.bf16.msra.mxu0 0
        %4763 = vmatprep.subr.bf16.mxu0 0
        %4764 = vmatpush1.bf16.msra.mxu0 0
        %4765 = vmatprep.subr.bf16.mxu0 0
        %4766 = vmatpush1.bf16.msra.mxu0 0
        %4767 = vmatprep.subr.bf16.mxu0 0
        %4768 = vmatpush1.bf16.msra.mxu0 0
        %4769 = vmatprep.mubr.bf16.mxu0 0
        %4770 = vmatmul.mubr.bf16.gmra.mrb[0].mxu0 %v4687
        %v4771 = vpop.f32.mrb[0].mxu0
        %v4772 = vadd.f32 0.0, %v4771
        %v4773 = vpop.f32.mrb[0].mxu0
        %v4774 = vpop.f32.mrb[0].mxu0
        %v4775 = vadd.f32 0.0, %v4774
        %v4776 = vpop.f32.mrb[0].mxu0
        %4777 = vmatprep.mubr.bf16.mxu0 0
        %4778 = vmatmul.mubr.bf16.gmra.mrb[0].mxu0 %v4690
        %v4779 = vpop.f32.mrb[0].mxu0
        %v4780 = vadd.f32 0.0, %v4779
        %v4781 = vpop.f32.mrb[0].mxu0
        %v4782 = vpop.f32.mrb[0].mxu0
        %v4783 = vadd.f32 0.0, %v4782
        %v4784 = vpop.f32.mrb[0].mxu0
        %4785 = vmatprep.mubr.bf16.mxu0 0
        %4786 = vmatmul.mubr.bf16.gmra.mrb[0].mxu0 %v4693
        %v4787 = vpop.f32.mrb[0].mxu0
        %v4788 = vadd.f32 0.0, %v4787
        %v4789 = vpop.f32.mrb[0].mxu0
        %v4790 = vpop.f32.mrb[0].mxu0
        %v4791 = vadd.f32 0.0, %v4790
        %v4792 = vpop.f32.mrb[0].mxu0
        %4793 = vmatprep.mubr.bf16.mxu0 0
        %4794 = vmatmul.mubr.bf16.gmra.mrb[0].mxu0 %v4696
        %v4795 = vpop.f32.mrb[0].mxu0
        %v4796 = vadd.f32 0.0, %v4795
        %v4797 = vpop.f32.mrb[0].mxu0
        %v4798 = vpop.f32.mrb[0].mxu0
        %v4799 = vadd.f32 0.0, %v4798
        %v4800 = vpop.f32.mrb[0].mxu0
        %4801 = vmatprep.mubr.bf16.mxu0 0
        %4802 = vmatmul.mubr.bf16.gmra.mrb[0].mxu0 %v4699
        %v4803 = vpop.f32.mrb[0].mxu0
        %v4804 = vadd.f32 0.0, %v4803
        %v4805 = vpop.f32.mrb[0].mxu0
        %v4806 = vpop.f32.mrb[0].mxu0
        %v4807 = vadd.f32 0.0, %v4806
        %v4808 = vpop.f32.mrb[0].mxu0
        %4809 = vmatprep.mubr.bf16.mxu0 0
        %4810 = vmatmul.mubr.bf16.gmra.mrb[0].mxu0 %v4702
        %v4811 = vpop.f32.mrb[0].mxu0
        %v4812 = vadd.f32 0.0, %v4811
        %v4813 = vpop.f32.mrb[0].mxu0
        %v4814 = vpop.f32.mrb[0].mxu0
        %v4815 = vadd.f32 0.0, %v4814
        %v4816 = vpop.f32.mrb[0].mxu0
        %4817 = vmatprep.mubr.bf16.mxu0 0
        %4818 = vmatmul.mubr.bf16.gmra.mrb[0].mxu0 %v4705
        %v4819 = vpop.f32.mrb[0].mxu0
        %v4820 = vadd.f32 0.0, %v4819
        %v4821 = vpop.f32.mrb[0].mxu0
        %v4822 = vpop.f32.mrb[0].mxu0
        %v4823 = vadd.f32 0.0, %v4822
        %v4824 = vpop.f32.mrb[0].mxu0
        %4825 = vmatprep.mubr.bf16.mxu0 0
        %4826 = vmatmul.mubr.bf16.gmra.mrb[0].mxu0 %v4708
        %v4827 = vpop.f32.mrb[0].mxu0
        %v4828 = vadd.f32 0.0, %v4827
        %v4829 = vpop.f32.mrb[0].mxu0
        %v4830 = vpop.f32.mrb[0].mxu0
        %v4831 = vadd.f32 0.0, %v4830
        %v4832 = vpop.f32.mrb[0].mxu0
        %4833 = vmatprep.mubr.bf16.mxu0 0
        %4834 = vmatmul.mubr.bf16.gmra.mrb[0].mxu0 %v4711
        %v4835 = vpop.f32.mrb[0].mxu0
        %v4836 = vadd.f32 0.0, %v4835
        %v4837 = vpop.f32.mrb[0].mxu0
        %v4838 = vpop.f32.mrb[0].mxu0
        %v4839 = vadd.f32 0.0, %v4838
        %v4840 = vpop.f32.mrb[0].mxu0
        %4841 = vmatprep.mubr.bf16.mxu0 0
        %4842 = vmatmul.mubr.bf16.gmra.mrb[0].mxu0 %v4714
        %v4843 = vpop.f32.mrb[0].mxu0
        %v4844 = vadd.f32 0.0, %v4843
        %v4845 = vpop.f32.mrb[0].mxu0
        %v4846 = vpop.f32.mrb[0].mxu0
        %v4847 = vadd.f32 0.0, %v4846
        %v4848 = vpop.f32.mrb[0].mxu0
        %4849 = vmatprep.mubr.bf16.mxu0 0
        %4850 = vmatmul.mubr.bf16.gmra.mrb[0].mxu0 %v4717
        %v4851 = vpop.f32.mrb[0].mxu0
        %v4852 = vadd.f32 0.0, %v4851
        %v4853 = vpop.f32.mrb[0].mxu0
        %v4854 = vpop.f32.mrb[0].mxu0
        %v4855 = vadd.f32 0.0, %v4854
        %v4856 = vpop.f32.mrb[0].mxu0
        %4857 = vmatprep.mubr.bf16.mxu0 0
        %4858 = vmatmul.mubr.bf16.gmra.mrb[0].mxu0 %v4720
        %v4859 = vpop.f32.mrb[0].mxu0
        %v4860 = vadd.f32 0.0, %v4859
        %v4861 = vpop.f32.mrb[0].mxu0
        %v4862 = vpop.f32.mrb[0].mxu0
        %v4863 = vadd.f32 0.0, %v4862
        %v4864 = vpop.f32.mrb[0].mxu0
        %4865 = vmatprep.mubr.bf16.mxu0 0
        %4866 = vmatmul.mubr.bf16.gmra.mrb[0].mxu0 %v4723
        %v4867 = vpop.f32.mrb[0].mxu0
        %v4868 = vadd.f32 0.0, %v4867
        %v4869 = vpop.f32.mrb[0].mxu0
        %v4870 = vpop.f32.mrb[0].mxu0
        %v4871 = vadd.f32 0.0, %v4870
        %v4872 = vpop.f32.mrb[0].mxu0
        %4873 = vmatprep.mubr.bf16.mxu0 0
        %4874 = vmatmul.mubr.bf16.gmra.mrb[0].mxu0 %v4726
        %v4875 = vpop.f32.mrb[0].mxu0
        %v4876 = vadd.f32 0.0, %v4875
        %v4877 = vpop.f32.mrb[0].mxu0
        %v4878 = vpop.f32.mrb[0].mxu0
        %v4879 = vadd.f32 0.0, %v4878
        %v4880 = vpop.f32.mrb[0].mxu0
        %4881 = vmatprep.mubr.bf16.mxu0 0
        %4882 = vmatmul.mubr.bf16.gmra.mrb[0].mxu0 %v4729
        %v4883 = vpop.f32.mrb[0].mxu0
        %v4884 = vadd.f32 0.0, %v4883
        %v4885 = vpop.f32.mrb[0].mxu0
        %v4886 = vpop.f32.mrb[0].mxu0
        %v4887 = vadd.f32 0.0, %v4886
        %v4888 = vpop.f32.mrb[0].mxu0
        %4889 = vmatprep.mubr.bf16.mxu0 0
        %4890 = vmatmul.mubr.bf16.gmra.mrb[0].mxu0 %v4732
        %v4891 = vpop.f32.mrb[0].mxu0
        %v4892 = vadd.f32 0.0, %v4891
        %v4893 = vpop.f32.mrb[0].mxu0
        %v4894 = vpop.f32.mrb[0].mxu0
        %v4895 = vadd.f32 0.0, %v4894
        %v4896 = vpop.f32.mrb[0].mxu0
        %4897 = vdwg.mxu0
        %v4898 = vadd.f32 %v4543, %v4772
        %v4899 = vadd.f32 %v4546, %v4775
        %v4900 = vadd.f32 %v4551, %v4780
        %v4901 = vadd.f32 %v4554, %v4783
        %v4902 = vadd.f32 %v4559, %v4788
        %v4903 = vadd.f32 %v4562, %v4791
        %v4904 = vadd.f32 %v4567, %v4796
        %v4905 = vadd.f32 %v4570, %v4799
        %v4906 = vadd.f32 %v4575, %v4804
        %v4907 = vadd.f32 %v4578, %v4807
        %v4908 = vadd.f32 %v4583, %v4812
        %v4909 = vadd.f32 %v4586, %v4815
        %v4910 = vadd.f32 %v4591, %v4820
        %v4911 = vadd.f32 %v4594, %v4823
        %v4912 = vadd.f32 %v4599, %v4828
        %v4913 = vadd.f32 %v4602, %v4831
        %v4914 = vadd.f32 %v4607, %v4836
        %v4915 = vadd.f32 %v4610, %v4839
        %v4916 = vadd.f32 %v4615, %v4844
        %v4917 = vadd.f32 %v4618, %v4847
        %v4918 = vadd.f32 %v4623, %v4852
        %v4919 = vadd.f32 %v4626, %v4855
        %v4920 = vadd.f32 %v4631, %v4860
        %v4921 = vadd.f32 %v4634, %v4863
        %v4922 = vadd.f32 %v4639, %v4868
        %v4923 = vadd.f32 %v4642, %v4871
        %v4924 = vadd.f32 %v4647, %v4876
        %v4925 = vadd.f32 %v4650, %v4879
        %v4926 = vadd.f32 %v4655, %v4884
        %v4927 = vadd.f32 %v4658, %v4887
        %v4928 = vadd.f32 %v4663, %v4892
        %v4929 = vadd.f32 %v4666, %v4895
        %v4930 = vld [vmem:[%s276 + $0x90] sm:$0xf]
        %v4931 = vld [vmem:[%s276 + $0x94] sm:$0xf]
        %v4932 = vld [vmem:[%s276 + $0x98] sm:$0xf]
        %v4933 = vld [vmem:[%s276 + $0x9c] sm:$0xf]
        %v4934 = vld [vmem:[%s276 + $0xa0] sm:$0xf]
        %v4935 = vld [vmem:[%s276 + $0xa4] sm:$0xf]
        %v4936 = vld [vmem:[%s276 + $0xa8] sm:$0xf]
        %v4937 = vld [vmem:[%s276 + $0xac] sm:$0xf]
        %v4938 = vld [vmem:[%s276 + $0xb0] sm:$0xf]
        %v4939 = vld [vmem:[%s276 + $0xb4] sm:$0xf]
        %v4940 = vld [vmem:[%s276 + $0xb8] sm:$0xf]
        %v4941 = vld [vmem:[%s276 + $0xbc] sm:$0xf]
        %v4942 = vld [vmem:[%s276 + $0xc0] sm:$0xf]
        %v4943 = vld [vmem:[%s276 + $0xc4] sm:$0xf]
        %v4944 = vld [vmem:[%s276 + $0xc8] sm:$0xf]
        %v4945 = vld [vmem:[%s276 + $0xcc] sm:$0xf]
        %v4946 = vld [vmem:[%s276 + $0xd0] sm:$0xf]
        %v4947 = vld [vmem:[%s276 + $0xd4] sm:$0xf]
        %v4948 = vld [vmem:[%s276 + $0xd8] sm:$0xf]
        %v4949 = vld [vmem:[%s276 + $0xdc] sm:$0xf]
        %v4950 = vld [vmem:[%s276 + $0xe0] sm:$0xf]
        %v4951 = vld [vmem:[%s276 + $0xe4] sm:$0xf]
        %v4952 = vld [vmem:[%s276 + $0xe8] sm:$0xf]
        %v4953 = vld [vmem:[%s276 + $0xec] sm:$0xf]
        %v4954 = vld [vmem:[%s276 + $0xf0] sm:$0xf]
        %v4955 = vld [vmem:[%s276 + $0xf4] sm:$0xf]
        %v4956 = vld [vmem:[%s276 + $0xf8] sm:$0xf]
        %v4957 = vld [vmem:[%s276 + $0xfc] sm:$0xf]
        %v4958 = vld [vmem:[%s276 + $0x100] sm:$0xf]
        %v4959 = vld [vmem:[%s276 + $0x104] sm:$0xf]
        %v4960 = vld [vmem:[%s276 + $0x108] sm:$0xf]
        %v4961 = vld [vmem:[%s276 + $0x10c] sm:$0xf]
        %v4962 = vld [vmem:[%s2152] sm:$0x3]
        %v4995 = vunpack.c.l.b16 %v4930
        %v4996 = vunpack.c.l.b16 %v4931
        %v4997 = vunpack.c.l.b16 %v4932
        %v4998 = vunpack.c.l.b16 %v4933
        %v4999 = vunpack.c.l.b16 %v4934
        %v5000 = vunpack.c.l.b16 %v4935
        %v5001 = vunpack.c.l.b16 %v4936
        %v5002 = vunpack.c.l.b16 %v4937
        %v5003 = vunpack.c.l.b16 %v4938
        %v5004 = vunpack.c.l.b16 %v4939
        %v5005 = vunpack.c.l.b16 %v4940
        %v5006 = vunpack.c.l.b16 %v4941
        %v5007 = vunpack.c.l.b16 %v4942
        %v5008 = vunpack.c.l.b16 %v4943
        %v5009 = vunpack.c.l.b16 %v4944
        %v5010 = vunpack.c.l.b16 %v4945
        %v5011 = vunpack.c.l.b16 %v4946
        %v5012 = vunpack.c.l.b16 %v4947
        %v5013 = vunpack.c.l.b16 %v4948
        %v5014 = vunpack.c.l.b16 %v4949
        %v5015 = vunpack.c.l.b16 %v4950
        %v5016 = vunpack.c.l.b16 %v4951
        %v5017 = vunpack.c.l.b16 %v4952
        %v5018 = vunpack.c.l.b16 %v4953
        %v5019 = vunpack.c.l.b16 %v4954
        %v5020 = vunpack.c.l.b16 %v4955
        %v5021 = vunpack.c.l.b16 %v4956
        %v5022 = vunpack.c.l.b16 %v4957
        %v5023 = vunpack.c.l.b16 %v4958
        %v5024 = vunpack.c.l.b16 %v4959
        %v5025 = vunpack.c.l.b16 %v4960
        %v5026 = vunpack.c.l.b16 %v4961
        %v5027 = vpack.c.b16 %v4996, %v4995
        %v5028 = vpack.c.b16 %v4998, %v4997
        %v5029 = vpack.c.b16 %v5000, %v4999
        %v5030 = vpack.c.b16 %v5002, %v5001
        %v5031 = vpack.c.b16 %v5004, %v5003
        %v5032 = vpack.c.b16 %v5006, %v5005
        %v5033 = vpack.c.b16 %v5008, %v5007
        %v5034 = vpack.c.b16 %v5010, %v5009
        %v5035 = vpack.c.b16 %v5012, %v5011
        %v5036 = vpack.c.b16 %v5014, %v5013
        %v5037 = vpack.c.b16 %v5016, %v5015
        %v5038 = vpack.c.b16 %v5018, %v5017
        %v5039 = vpack.c.b16 %v5020, %v5019
        %v5040 = vpack.c.b16 %v5022, %v5021
        %v5041 = vpack.c.b16 %v5024, %v5023
        %v5042 = vpack.c.b16 %v5026, %v5025
        %v5044 = vsel %vm863, %v5027, 0
        %v5047 = vsel %vm863, %v5028, 0
        %v5050 = vsel %vm863, %v5029, 0
        %v5053 = vsel %vm863, %v5030, 0
        %v5056 = vsel %vm863, %v5031, 0
        %v5059 = vsel %vm863, %v5032, 0
        %v5062 = vsel %vm863, %v5033, 0
        %v5065 = vsel %vm863, %v5034, 0
        %v5068 = vsel %vm863, %v5035, 0
        %v5071 = vsel %vm863, %v5036, 0
        %v5074 = vsel %vm863, %v5037, 0
        %v5077 = vsel %vm863, %v5038, 0
        %v5080 = vsel %vm863, %v5039, 0
        %v5083 = vsel %vm863, %v5040, 0
        %v5086 = vsel %vm863, %v5041, 0
        %v5089 = vsel %vm863, %v5042, 0
        %v5092 = vsel %vm1401, %v4962, 0
        %5094 = vmatprep.subr.bf16.mxu0 0
        %5095 = vmatpush1.bf16.msra.mxu0 %v5092
        %5096 = vmatprep.subr.bf16.mxu0 0
        %5097 = vmatpush1.bf16.msra.mxu0 0
        %5098 = vmatprep.subr.bf16.mxu0 0
        %5099 = vmatpush1.bf16.msra.mxu0 0
        %5100 = vmatprep.subr.bf16.mxu0 0
        %5101 = vmatpush1.bf16.msra.mxu0 0
        %5102 = vmatprep.subr.bf16.mxu0 0
        %5103 = vmatpush1.bf16.msra.mxu0 0
        %5104 = vmatprep.subr.bf16.mxu0 0
        %5105 = vmatpush1.bf16.msra.mxu0 0
        %5106 = vmatprep.subr.bf16.mxu0 0
        %5107 = vmatpush1.bf16.msra.mxu0 0
        %5108 = vmatprep.subr.bf16.mxu0 0
        %5109 = vmatpush1.bf16.msra.mxu0 0
        %5110 = vmatprep.subr.bf16.mxu0 0
        %5111 = vmatpush1.bf16.msra.mxu0 0
        %5112 = vmatprep.subr.bf16.mxu0 0
        %5113 = vmatpush1.bf16.msra.mxu0 0
        %5114 = vmatprep.subr.bf16.mxu0 0
        %5115 = vmatpush1.bf16.msra.mxu0 0
        %5116 = vmatprep.subr.bf16.mxu0 0
        %5117 = vmatpush1.bf16.msra.mxu0 0
        %5118 = vmatprep.subr.bf16.mxu0 0
        %5119 = vmatpush1.bf16.msra.mxu0 0
        %5120 = vmatprep.subr.bf16.mxu0 0
        %5121 = vmatpush1.bf16.msra.mxu0 0
        %5122 = vmatprep.subr.bf16.mxu0 0
        %5123 = vmatpush1.bf16.msra.mxu0 0
        %5124 = vmatprep.subr.bf16.mxu0 0
        %5125 = vmatpush1.bf16.msra.mxu0 0
        %5126 = vmatprep.mubr.bf16.mxu0 0
        %5127 = vmatmul.mubr.bf16.gmra.mrb[0].mxu0 %v5044
        %v5128 = vpop.f32.mrb[0].mxu0
        %v5129 = vadd.f32 0.0, %v5128
        %v5130 = vpop.f32.mrb[0].mxu0
        %v5131 = vpop.f32.mrb[0].mxu0
        %v5132 = vadd.f32 0.0, %v5131
        %v5133 = vpop.f32.mrb[0].mxu0
        %5134 = vmatprep.mubr.bf16.mxu0 0
        %5135 = vmatmul.mubr.bf16.gmra.mrb[0].mxu0 %v5047
        %v5136 = vpop.f32.mrb[0].mxu0
        %v5137 = vadd.f32 0.0, %v5136
        %v5138 = vpop.f32.mrb[0].mxu0
        %v5139 = vpop.f32.mrb[0].mxu0
        %v5140 = vadd.f32 0.0, %v5139
        %v5141 = vpop.f32.mrb[0].mxu0
        %5142 = vmatprep.mubr.bf16.mxu0 0
        %5143 = vmatmul.mubr.bf16.gmra.mrb[0].mxu0 %v5050
        %v5144 = vpop.f32.mrb[0].mxu0
        %v5145 = vadd.f32 0.0, %v5144
        %v5146 = vpop.f32.mrb[0].mxu0
        %v5147 = vpop.f32.mrb[0].mxu0
        %v5148 = vadd.f32 0.0, %v5147
        %v5149 = vpop.f32.mrb[0].mxu0
        %5150 = vmatprep.mubr.bf16.mxu0 0
        %5151 = vmatmul.mubr.bf16.gmra.mrb[0].mxu0 %v5053
        %v5152 = vpop.f32.mrb[0].mxu0
        %v5153 = vadd.f32 0.0, %v5152
        %v5154 = vpop.f32.mrb[0].mxu0
        %v5155 = vpop.f32.mrb[0].mxu0
        %v5156 = vadd.f32 0.0, %v5155
        %v5157 = vpop.f32.mrb[0].mxu0
        %5158 = vmatprep.mubr.bf16.mxu0 0
        %5159 = vmatmul.mubr.bf16.gmra.mrb[0].mxu0 %v5056
        %v5160 = vpop.f32.mrb[0].mxu0
        %v5161 = vadd.f32 0.0, %v5160
        %v5162 = vpop.f32.mrb[0].mxu0
        %v5163 = vpop.f32.mrb[0].mxu0
        %v5164 = vadd.f32 0.0, %v5163
        %v5165 = vpop.f32.mrb[0].mxu0
        %5166 = vmatprep.mubr.bf16.mxu0 0
        %5167 = vmatmul.mubr.bf16.gmra.mrb[0].mxu0 %v5059
        %v5168 = vpop.f32.mrb[0].mxu0
        %v5169 = vadd.f32 0.0, %v5168
        %v5170 = vpop.f32.mrb[0].mxu0
        %v5171 = vpop.f32.mrb[0].mxu0
        %v5172 = vadd.f32 0.0, %v5171
        %v5173 = vpop.f32.mrb[0].mxu0
        %5174 = vmatprep.mubr.bf16.mxu0 0
        %5175 = vmatmul.mubr.bf16.gmra.mrb[0].mxu0 %v5062
        %v5176 = vpop.f32.mrb[0].mxu0
        %v5177 = vadd.f32 0.0, %v5176
        %v5178 = vpop.f32.mrb[0].mxu0
        %v5179 = vpop.f32.mrb[0].mxu0
        %v5180 = vadd.f32 0.0, %v5179
        %v5181 = vpop.f32.mrb[0].mxu0
        %5182 = vmatprep.mubr.bf16.mxu0 0
        %5183 = vmatmul.mubr.bf16.gmra.mrb[0].mxu0 %v5065
        %v5184 = vpop.f32.mrb[0].mxu0
        %v5185 = vadd.f32 0.0, %v5184
        %v5186 = vpop.f32.mrb[0].mxu0
        %v5187 = vpop.f32.mrb[0].mxu0
        %v5188 = vadd.f32 0.0, %v5187
        %v5189 = vpop.f32.mrb[0].mxu0
        %5190 = vmatprep.mubr.bf16.mxu0 0
        %5191 = vmatmul.mubr.bf16.gmra.mrb[0].mxu0 %v5068
        %v5192 = vpop.f32.mrb[0].mxu0
        %v5193 = vadd.f32 0.0, %v5192
        %v5194 = vpop.f32.mrb[0].mxu0
        %v5195 = vpop.f32.mrb[0].mxu0
        %v5196 = vadd.f32 0.0, %v5195
        %v5197 = vpop.f32.mrb[0].mxu0
        %5198 = vmatprep.mubr.bf16.mxu0 0
        %5199 = vmatmul.mubr.bf16.gmra.mrb[0].mxu0 %v5071
        %v5200 = vpop.f32.mrb[0].mxu0
        %v5201 = vadd.f32 0.0, %v5200
        %v5202 = vpop.f32.mrb[0].mxu0
        %v5203 = vpop.f32.mrb[0].mxu0
        %v5204 = vadd.f32 0.0, %v5203
        %v5205 = vpop.f32.mrb[0].mxu0
        %5206 = vmatprep.mubr.bf16.mxu0 0
        %5207 = vmatmul.mubr.bf16.gmra.mrb[0].mxu0 %v5074
        %v5208 = vpop.f32.mrb[0].mxu0
        %v5209 = vadd.f32 0.0, %v5208
        %v5210 = vpop.f32.mrb[0].mxu0
        %v5211 = vpop.f32.mrb[0].mxu0
        %v5212 = vadd.f32 0.0, %v5211
        %v5213 = vpop.f32.mrb[0].mxu0
        %5214 = vmatprep.mubr.bf16.mxu0 0
        %5215 = vmatmul.mubr.bf16.gmra.mrb[0].mxu0 %v5077
        %v5216 = vpop.f32.mrb[0].mxu0
        %v5217 = vadd.f32 0.0, %v5216
        %v5218 = vpop.f32.mrb[0].mxu0
        %v5219 = vpop.f32.mrb[0].mxu0
        %v5220 = vadd.f32 0.0, %v5219
        %v5221 = vpop.f32.mrb[0].mxu0
        %5222 = vmatprep.mubr.bf16.mxu0 0
        %5223 = vmatmul.mubr.bf16.gmra.mrb[0].mxu0 %v5080
        %v5224 = vpop.f32.mrb[0].mxu0
        %v5225 = vadd.f32 0.0, %v5224
        %v5226 = vpop.f32.mrb[0].mxu0
        %v5227 = vpop.f32.mrb[0].mxu0
        %v5228 = vadd.f32 0.0, %v5227
        %v5229 = vpop.f32.mrb[0].mxu0
        %5230 = vmatprep.mubr.bf16.mxu0 0
        %5231 = vmatmul.mubr.bf16.gmra.mrb[0].mxu0 %v5083
        %v5232 = vpop.f32.mrb[0].mxu0
        %v5233 = vadd.f32 0.0, %v5232
        %v5234 = vpop.f32.mrb[0].mxu0
        %v5235 = vpop.f32.mrb[0].mxu0
        %v5236 = vadd.f32 0.0, %v5235
        %v5237 = vpop.f32.mrb[0].mxu0
        %5238 = vmatprep.mubr.bf16.mxu0 0
        %5239 = vmatmul.mubr.bf16.gmra.mrb[0].mxu0 %v5086
        %v5240 = vpop.f32.mrb[0].mxu0
        %v5241 = vadd.f32 0.0, %v5240
        %v5242 = vpop.f32.mrb[0].mxu0
        %v5243 = vpop.f32.mrb[0].mxu0
        %v5244 = vadd.f32 0.0, %v5243
        %v5245 = vpop.f32.mrb[0].mxu0
        %5246 = vmatprep.mubr.bf16.mxu0 0
        %5247 = vmatmul.mubr.bf16.gmra.mrb[0].mxu0 %v5089
        %v5248 = vpop.f32.mrb[0].mxu0
        %v5249 = vadd.f32 0.0, %v5248
        %v5250 = vpop.f32.mrb[0].mxu0
        %v5251 = vpop.f32.mrb[0].mxu0
        %v5252 = vadd.f32 0.0, %v5251
        %v5253 = vpop.f32.mrb[0].mxu0
        %5254 = vdwg.mxu0
        %v5255 = vadd.f32 %v4898, %v5129
        %v5256 = vadd.f32 %v4899, %v5132
        %v5257 = vadd.f32 %v4900, %v5137
        %v5258 = vadd.f32 %v4901, %v5140
        %v5259 = vadd.f32 %v4902, %v5145
        %v5260 = vadd.f32 %v4903, %v5148
        %v5261 = vadd.f32 %v4904, %v5153
        %v5262 = vadd.f32 %v4905, %v5156
        %v5263 = vadd.f32 %v4906, %v5161
        %v5264 = vadd.f32 %v4907, %v5164
        %v5265 = vadd.f32 %v4908, %v5169
        %v5266 = vadd.f32 %v4909, %v5172
        %v5267 = vadd.f32 %v4910, %v5177
        %v5268 = vadd.f32 %v4911, %v5180
        %v5269 = vadd.f32 %v4912, %v5185
        %v5270 = vadd.f32 %v4913, %v5188
        %v5271 = vadd.f32 %v4914, %v5193
        %v5272 = vadd.f32 %v4915, %v5196
        %v5273 = vadd.f32 %v4916, %v5201
        %v5274 = vadd.f32 %v4917, %v5204
        %v5275 = vadd.f32 %v4918, %v5209
        %v5276 = vadd.f32 %v4919, %v5212
        %v5277 = vadd.f32 %v4920, %v5217
        %v5278 = vadd.f32 %v4921, %v5220
        %v5279 = vadd.f32 %v4922, %v5225
        %v5280 = vadd.f32 %v4923, %v5228
        %v5281 = vadd.f32 %v4924, %v5233
        %v5282 = vadd.f32 %v4925, %v5236
        %v5283 = vadd.f32 %v4926, %v5241
        %v5284 = vadd.f32 %v4927, %v5244
        %v5285 = vadd.f32 %v4928, %v5249
        %v5286 = vadd.f32 %v4929, %v5252
        %v5287 = vld [vmem:[#allocation2 + $0x90] sm:$0xff]
        %v5288 = vld [vmem:[#allocation2 + $0x98] sm:$0xff]
        %v5289 = vld [vmem:[#allocation2 + $0xa0] sm:$0xff]
        %v5290 = vld [vmem:[#allocation2 + $0xa8] sm:$0xff]
        %v5291 = vld [vmem:[#allocation2 + $0xb0] sm:$0xff]
        %v5292 = vld [vmem:[#allocation2 + $0xb8] sm:$0xff]
        %v5293 = vld [vmem:[#allocation2 + $0xc0] sm:$0xff]
        %v5294 = vld [vmem:[#allocation2 + $0xc8] sm:$0xff]
        %v5295 = vld [vmem:[#allocation2 + $0xd0] sm:$0xff]
        %v5296 = vld [vmem:[#allocation2 + $0xd8] sm:$0xff]
        %v5297 = vld [vmem:[#allocation2 + $0xe0] sm:$0xff]
        %v5298 = vld [vmem:[#allocation2 + $0xe8] sm:$0xff]
        %v5299 = vld [vmem:[#allocation2 + $0xf0] sm:$0xff]
        %v5300 = vld [vmem:[#allocation2 + $0xf8] sm:$0xff]
        %v5301 = vld [vmem:[#allocation2 + $0x100] sm:$0xff]
        %v5302 = vld [vmem:[#allocation2 + $0x108] sm:$0xff]
        %v5303 = vld [vmem:[%s2494] sm:$0x3]
        %v5305 = vsel %vm863, %v5287, 0
        %v5308 = vsel %vm863, %v5288, 0
        %v5311 = vsel %vm863, %v5289, 0
        %v5314 = vsel %vm863, %v5290, 0
        %v5317 = vsel %vm863, %v5291, 0
        %v5320 = vsel %vm863, %v5292, 0
        %v5323 = vsel %vm863, %v5293, 0
        %v5326 = vsel %vm863, %v5294, 0
        %v5329 = vsel %vm863, %v5295, 0
        %v5332 = vsel %vm863, %v5296, 0
        %v5335 = vsel %vm863, %v5297, 0
        %v5338 = vsel %vm863, %v5298, 0
        %v5341 = vsel %vm863, %v5299, 0
        %v5344 = vsel %vm863, %v5300, 0
        %v5347 = vsel %vm863, %v5301, 0
        %v5350 = vsel %vm863, %v5302, 0
        %v5353 = vsel %vm1401, %v5303, 0
        %5355 = vmatprep.subr.bf16.mxu0 0
        %5356 = vmatpush1.bf16.msra.mxu0 %v5353
        %5357 = vmatprep.subr.bf16.mxu0 0
        %5358 = vmatpush1.bf16.msra.mxu0 0
        %5359 = vmatprep.subr.bf16.mxu0 0
        %5360 = vmatpush1.bf16.msra.mxu0 0
        %5361 = vmatprep.subr.bf16.mxu0 0
        %5362 = vmatpush1.bf16.msra.mxu0 0
        %5363 = vmatprep.subr.bf16.mxu0 0
        %5364 = vmatpush1.bf16.msra.mxu0 0
        %5365 = vmatprep.subr.bf16.mxu0 0
        %5366 = vmatpush1.bf16.msra.mxu0 0
        %5367 = vmatprep.subr.bf16.mxu0 0
        %5368 = vmatpush1.bf16.msra.mxu0 0
        %5369 = vmatprep.subr.bf16.mxu0 0
        %5370 = vmatpush1.bf16.msra.mxu0 0
        %5371 = vmatprep.subr.bf16.mxu0 0
        %5372 = vmatpush1.bf16.msra.mxu0 0
        %5373 = vmatprep.subr.bf16.mxu0 0
        %5374 = vmatpush1.bf16.msra.mxu0 0
        %5375 = vmatprep.subr.bf16.mxu0 0
        %5376 = vmatpush1.bf16.msra.mxu0 0
        %5377 = vmatprep.subr.bf16.mxu0 0
        %5378 = vmatpush1.bf16.msra.mxu0 0
        %5379 = vmatprep.subr.bf16.mxu0 0
        %5380 = vmatpush1.bf16.msra.mxu0 0
        %5381 = vmatprep.subr.bf16.mxu0 0
        %5382 = vmatpush1.bf16.msra.mxu0 0
        %5383 = vmatprep.subr.bf16.mxu0 0
        %5384 = vmatpush1.bf16.msra.mxu0 0
        %5385 = vmatprep.subr.bf16.mxu0 0
        %5386 = vmatpush1.bf16.msra.mxu0 0
        %5387 = vmatprep.mubr.bf16.mxu0 0
        %5388 = vmatmul.mubr.bf16.gmra.mrb[0].mxu0 %v5305
        %v5389 = vpop.f32.mrb[0].mxu0
        %v5390 = vadd.f32 0.0, %v5389
        %v5391 = vpop.f32.mrb[0].mxu0
        %v5392 = vpop.f32.mrb[0].mxu0
        %v5393 = vadd.f32 0.0, %v5392
        %v5394 = vpop.f32.mrb[0].mxu0
        %5395 = vmatprep.mubr.bf16.mxu0 0
        %5396 = vmatmul.mubr.bf16.gmra.mrb[0].mxu0 %v5308
        %v5397 = vpop.f32.mrb[0].mxu0
        %v5398 = vadd.f32 0.0, %v5397
        %v5399 = vpop.f32.mrb[0].mxu0
        %v5400 = vpop.f32.mrb[0].mxu0
        %v5401 = vadd.f32 0.0, %v5400
        %v5402 = vpop.f32.mrb[0].mxu0
        %5403 = vmatprep.mubr.bf16.mxu0 0
        %5404 = vmatmul.mubr.bf16.gmra.mrb[0].mxu0 %v5311
        %v5405 = vpop.f32.mrb[0].mxu0
        %v5406 = vadd.f32 0.0, %v5405
        %v5407 = vpop.f32.mrb[0].mxu0
        %v5408 = vpop.f32.mrb[0].mxu0
        %v5409 = vadd.f32 0.0, %v5408
        %v5410 = vpop.f32.mrb[0].mxu0
        %5411 = vmatprep.mubr.bf16.mxu0 0
        %5412 = vmatmul.mubr.bf16.gmra.mrb[0].mxu0 %v5314
        %v5413 = vpop.f32.mrb[0].mxu0
        %v5414 = vadd.f32 0.0, %v5413
        %v5415 = vpop.f32.mrb[0].mxu0
        %v5416 = vpop.f32.mrb[0].mxu0
        %v5417 = vadd.f32 0.0, %v5416
        %v5418 = vpop.f32.mrb[0].mxu0
        %5419 = vmatprep.mubr.bf16.mxu0 0
        %5420 = vmatmul.mubr.bf16.gmra.mrb[0].mxu0 %v5317
        %v5421 = vpop.f32.mrb[0].mxu0
        %v5422 = vadd.f32 0.0, %v5421
        %v5423 = vpop.f32.mrb[0].mxu0
        %v5424 = vpop.f32.mrb[0].mxu0
        %v5425 = vadd.f32 0.0, %v5424
        %v5426 = vpop.f32.mrb[0].mxu0
        %5427 = vmatprep.mubr.bf16.mxu0 0
        %5428 = vmatmul.mubr.bf16.gmra.mrb[0].mxu0 %v5320
        %v5429 = vpop.f32.mrb[0].mxu0
        %v5430 = vadd.f32 0.0, %v5429
        %v5431 = vpop.f32.mrb[0].mxu0
        %v5432 = vpop.f32.mrb[0].mxu0
        %v5433 = vadd.f32 0.0, %v5432
        %v5434 = vpop.f32.mrb[0].mxu0
        %5435 = vmatprep.mubr.bf16.mxu0 0
        %5436 = vmatmul.mubr.bf16.gmra.mrb[0].mxu0 %v5323
        %v5437 = vpop.f32.mrb[0].mxu0
        %v5438 = vadd.f32 0.0, %v5437
        %v5439 = vpop.f32.mrb[0].mxu0
        %v5440 = vpop.f32.mrb[0].mxu0
        %v5441 = vadd.f32 0.0, %v5440
        %v5442 = vpop.f32.mrb[0].mxu0
        %5443 = vmatprep.mubr.bf16.mxu0 0
        %5444 = vmatmul.mubr.bf16.gmra.mrb[0].mxu0 %v5326
        %v5445 = vpop.f32.mrb[0].mxu0
        %v5446 = vadd.f32 0.0, %v5445
        %v5447 = vpop.f32.mrb[0].mxu0
        %v5448 = vpop.f32.mrb[0].mxu0
        %v5449 = vadd.f32 0.0, %v5448
        %v5450 = vpop.f32.mrb[0].mxu0
        %5451 = vmatprep.mubr.bf16.mxu0 0
        %5452 = vmatmul.mubr.bf16.gmra.mrb[0].mxu0 %v5329
        %v5453 = vpop.f32.mrb[0].mxu0
        %v5454 = vadd.f32 0.0, %v5453
        %v5455 = vpop.f32.mrb[0].mxu0
        %v5456 = vpop.f32.mrb[0].mxu0
        %v5457 = vadd.f32 0.0, %v5456
        %v5458 = vpop.f32.mrb[0].mxu0
        %5459 = vmatprep.mubr.bf16.mxu0 0
        %5460 = vmatmul.mubr.bf16.gmra.mrb[0].mxu0 %v5332
        %v5461 = vpop.f32.mrb[0].mxu0
        %v5462 = vadd.f32 0.0, %v5461
        %v5463 = vpop.f32.mrb[0].mxu0
        %v5464 = vpop.f32.mrb[0].mxu0
        %v5465 = vadd.f32 0.0, %v5464
        %v5466 = vpop.f32.mrb[0].mxu0
        %5467 = vmatprep.mubr.bf16.mxu0 0
        %5468 = vmatmul.mubr.bf16.gmra.mrb[0].mxu0 %v5335
        %v5469 = vpop.f32.mrb[0].mxu0
        %v5470 = vadd.f32 0.0, %v5469
        %v5471 = vpop.f32.mrb[0].mxu0
        %v5472 = vpop.f32.mrb[0].mxu0
        %v5473 = vadd.f32 0.0, %v5472
        %v5474 = vpop.f32.mrb[0].mxu0
        %5475 = vmatprep.mubr.bf16.mxu0 0
        %5476 = vmatmul.mubr.bf16.gmra.mrb[0].mxu0 %v5338
        %v5477 = vpop.f32.mrb[0].mxu0
        %v5478 = vadd.f32 0.0, %v5477
        %v5479 = vpop.f32.mrb[0].mxu0
        %v5480 = vpop.f32.mrb[0].mxu0
        %v5481 = vadd.f32 0.0, %v5480
        %v5482 = vpop.f32.mrb[0].mxu0
        %5483 = vmatprep.mubr.bf16.mxu0 0
        %5484 = vmatmul.mubr.bf16.gmra.mrb[0].mxu0 %v5341
        %v5485 = vpop.f32.mrb[0].mxu0
        %v5486 = vadd.f32 0.0, %v5485
        %v5487 = vpop.f32.mrb[0].mxu0
        %v5488 = vpop.f32.mrb[0].mxu0
        %v5489 = vadd.f32 0.0, %v5488
        %v5490 = vpop.f32.mrb[0].mxu0
        %5491 = vmatprep.mubr.bf16.mxu0 0
        %5492 = vmatmul.mubr.bf16.gmra.mrb[0].mxu0 %v5344
        %v5493 = vpop.f32.mrb[0].mxu0
        %v5494 = vadd.f32 0.0, %v5493
        %v5495 = vpop.f32.mrb[0].mxu0
        %v5496 = vpop.f32.mrb[0].mxu0
        %v5497 = vadd.f32 0.0, %v5496
        %v5498 = vpop.f32.mrb[0].mxu0
        %5499 = vmatprep.mubr.bf16.mxu0 0
        %5500 = vmatmul.mubr.bf16.gmra.mrb[0].mxu0 %v5347
        %v5501 = vpop.f32.mrb[0].mxu0
        %v5502 = vadd.f32 0.0, %v5501
        %v5503 = vpop.f32.mrb[0].mxu0
        %v5504 = vpop.f32.mrb[0].mxu0
        %v5505 = vadd.f32 0.0, %v5504
        %v5506 = vpop.f32.mrb[0].mxu0
        %5507 = vmatprep.mubr.bf16.mxu0 0
        %5508 = vmatmul.mubr.bf16.gmra.mrb[0].mxu0 %v5350
        %v5509 = vpop.f32.mrb[0].mxu0
        %v5510 = vadd.f32 0.0, %v5509
        %v5511 = vpop.f32.mrb[0].mxu0
        %v5512 = vpop.f32.mrb[0].mxu0
        %v5513 = vadd.f32 0.0, %v5512
        %v5514 = vpop.f32.mrb[0].mxu0
        %5515 = vdwg.mxu0
        %v5516 = vadd.f32 %v5255, %v5390
        %v5517 = vadd.f32 %v5256, %v5393
        %v5518 = vadd.f32 %v5257, %v5398
        %v5519 = vadd.f32 %v5258, %v5401
        %v5520 = vadd.f32 %v5259, %v5406
        %v5521 = vadd.f32 %v5260, %v5409
        %v5522 = vadd.f32 %v5261, %v5414
        %v5523 = vadd.f32 %v5262, %v5417
        %v5524 = vadd.f32 %v5263, %v5422
        %v5525 = vadd.f32 %v5264, %v5425
        %v5526 = vadd.f32 %v5265, %v5430
        %v5527 = vadd.f32 %v5266, %v5433
        %v5528 = vadd.f32 %v5267, %v5438
        %v5529 = vadd.f32 %v5268, %v5441
        %v5530 = vadd.f32 %v5269, %v5446
        %v5531 = vadd.f32 %v5270, %v5449
        %v5532 = vadd.f32 %v5271, %v5454
        %v5533 = vadd.f32 %v5272, %v5457
        %v5534 = vadd.f32 %v5273, %v5462
        %v5535 = vadd.f32 %v5274, %v5465
        %v5536 = vadd.f32 %v5275, %v5470
        %v5537 = vadd.f32 %v5276, %v5473
        %v5538 = vadd.f32 %v5277, %v5478
        %v5539 = vadd.f32 %v5278, %v5481
        %v5540 = vadd.f32 %v5279, %v5486
        %v5541 = vadd.f32 %v5280, %v5489
        %v5542 = vadd.f32 %v5281, %v5494
        %v5543 = vadd.f32 %v5282, %v5497
        %v5544 = vadd.f32 %v5283, %v5502
        %v5545 = vadd.f32 %v5284, %v5505
        %v5546 = vadd.f32 %v5285, %v5510
        %v5547 = vadd.f32 %v5286, %v5513
        %v5548 = vld [vmem:[#allocation3 + $0x90] sm:$0xff]
        %v5549 = vld [vmem:[#allocation3 + $0x98] sm:$0xff]
        %v5550 = vld [vmem:[#allocation3 + $0xa0] sm:$0xff]
        %v5551 = vld [vmem:[#allocation3 + $0xa8] sm:$0xff]
        %v5552 = vld [vmem:[#allocation3 + $0xb0] sm:$0xff]
        %v5553 = vld [vmem:[#allocation3 + $0xb8] sm:$0xff]
        %v5554 = vld [vmem:[#allocation3 + $0xc0] sm:$0xff]
        %v5555 = vld [vmem:[#allocation3 + $0xc8] sm:$0xff]
        %v5556 = vld [vmem:[#allocation3 + $0xd0] sm:$0xff]
        %v5557 = vld [vmem:[#allocation3 + $0xd8] sm:$0xff]
        %v5558 = vld [vmem:[#allocation3 + $0xe0] sm:$0xff]
        %v5559 = vld [vmem:[#allocation3 + $0xe8] sm:$0xff]
        %v5560 = vld [vmem:[#allocation3 + $0xf0] sm:$0xff]
        %v5561 = vld [vmem:[#allocation3 + $0xf8] sm:$0xff]
        %v5562 = vld [vmem:[#allocation3 + $0x100] sm:$0xff]
        %v5563 = vld [vmem:[#allocation3 + $0x108] sm:$0xff]
        %v5564 = vld [vmem:[%s2756] sm:$0x3]
        %v5566 = vsel %vm863, %v5548, 0
        %v5569 = vsel %vm863, %v5549, 0
        %v5572 = vsel %vm863, %v5550, 0
        %v5575 = vsel %vm863, %v5551, 0
        %v5578 = vsel %vm863, %v5552, 0
        %v5581 = vsel %vm863, %v5553, 0
        %v5584 = vsel %vm863, %v5554, 0
        %v5587 = vsel %vm863, %v5555, 0
        %v5590 = vsel %vm863, %v5556, 0
        %v5593 = vsel %vm863, %v5557, 0
        %v5596 = vsel %vm863, %v5558, 0
        %v5599 = vsel %vm863, %v5559, 0
        %v5602 = vsel %vm863, %v5560, 0
        %v5605 = vsel %vm863, %v5561, 0
        %v5608 = vsel %vm863, %v5562, 0
        %v5611 = vsel %vm863, %v5563, 0
        %v5614 = vsel %vm1401, %v5564, 0
        %5616 = vmatprep.subr.bf16.mxu0 0
        %5617 = vmatpush1.bf16.msra.mxu0 %v5614
        %5618 = vmatprep.subr.bf16.mxu0 0
        %5619 = vmatpush1.bf16.msra.mxu0 0
        %5620 = vmatprep.subr.bf16.mxu0 0
        %5621 = vmatpush1.bf16.msra.mxu0 0
        %5622 = vmatprep.subr.bf16.mxu0 0
        %5623 = vmatpush1.bf16.msra.mxu0 0
        %5624 = vmatprep.subr.bf16.mxu0 0
        %5625 = vmatpush1.bf16.msra.mxu0 0
        %5626 = vmatprep.subr.bf16.mxu0 0
        %5627 = vmatpush1.bf16.msra.mxu0 0
        %5628 = vmatprep.subr.bf16.mxu0 0
        %5629 = vmatpush1.bf16.msra.mxu0 0
        %5630 = vmatprep.subr.bf16.mxu0 0
        %5631 = vmatpush1.bf16.msra.mxu0 0
        %5632 = vmatprep.subr.bf16.mxu0 0
        %5633 = vmatpush1.bf16.msra.mxu0 0
        %5634 = vmatprep.subr.bf16.mxu0 0
        %5635 = vmatpush1.bf16.msra.mxu0 0
        %5636 = vmatprep.subr.bf16.mxu0 0
        %5637 = vmatpush1.bf16.msra.mxu0 0
        %5638 = vmatprep.subr.bf16.mxu0 0
        %5639 = vmatpush1.bf16.msra.mxu0 0
        %5640 = vmatprep.subr.bf16.mxu0 0
        %5641 = vmatpush1.bf16.msra.mxu0 0
        %5642 = vmatprep.subr.bf16.mxu0 0
        %5643 = vmatpush1.bf16.msra.mxu0 0
        %5644 = vmatprep.subr.bf16.mxu0 0
        %5645 = vmatpush1.bf16.msra.mxu0 0
        %5646 = vmatprep.subr.bf16.mxu0 0
        %5647 = vmatpush1.bf16.msra.mxu0 0
        %5648 = vmatprep.mubr.bf16.mxu0 0
        %5649 = vmatmul.mubr.bf16.gmra.mrb[0].mxu0 %v5566
        %v5650 = vpop.f32.mrb[0].mxu0
        %v5651 = vadd.f32 0.0, %v5650
        %v5652 = vpop.f32.mrb[0].mxu0
        %v5653 = vpop.f32.mrb[0].mxu0
        %v5654 = vadd.f32 0.0, %v5653
        %v5655 = vpop.f32.mrb[0].mxu0
        %5656 = vmatprep.mubr.bf16.mxu0 0
        %5657 = vmatmul.mubr.bf16.gmra.mrb[0].mxu0 %v5569
        %v5658 = vpop.f32.mrb[0].mxu0
        %v5659 = vadd.f32 0.0, %v5658
        %v5660 = vpop.f32.mrb[0].mxu0
        %v5661 = vpop.f32.mrb[0].mxu0
        %v5662 = vadd.f32 0.0, %v5661
        %v5663 = vpop.f32.mrb[0].mxu0
        %5664 = vmatprep.mubr.bf16.mxu0 0
        %5665 = vmatmul.mubr.bf16.gmra.mrb[0].mxu0 %v5572
        %v5666 = vpop.f32.mrb[0].mxu0
        %v5667 = vadd.f32 0.0, %v5666
        %v5668 = vpop.f32.mrb[0].mxu0
        %v5669 = vpop.f32.mrb[0].mxu0
        %v5670 = vadd.f32 0.0, %v5669
        %v5671 = vpop.f32.mrb[0].mxu0
        %5672 = vmatprep.mubr.bf16.mxu0 0
        %5673 = vmatmul.mubr.bf16.gmra.mrb[0].mxu0 %v5575
        %v5674 = vpop.f32.mrb[0].mxu0
        %v5675 = vadd.f32 0.0, %v5674
        %v5676 = vpop.f32.mrb[0].mxu0
        %v5677 = vpop.f32.mrb[0].mxu0
        %v5678 = vadd.f32 0.0, %v5677
        %v5679 = vpop.f32.mrb[0].mxu0
        %5680 = vmatprep.mubr.bf16.mxu0 0
        %5681 = vmatmul.mubr.bf16.gmra.mrb[0].mxu0 %v5578
        %v5682 = vpop.f32.mrb[0].mxu0
        %v5683 = vadd.f32 0.0, %v5682
        %v5684 = vpop.f32.mrb[0].mxu0
        %v5685 = vpop.f32.mrb[0].mxu0
        %v5686 = vadd.f32 0.0, %v5685
        %v5687 = vpop.f32.mrb[0].mxu0
        %5688 = vmatprep.mubr.bf16.mxu0 0
        %5689 = vmatmul.mubr.bf16.gmra.mrb[0].mxu0 %v5581
        %v5690 = vpop.f32.mrb[0].mxu0
        %v5691 = vadd.f32 0.0, %v5690
        %v5692 = vpop.f32.mrb[0].mxu0
        %v5693 = vpop.f32.mrb[0].mxu0
        %v5694 = vadd.f32 0.0, %v5693
        %v5695 = vpop.f32.mrb[0].mxu0
        %5696 = vmatprep.mubr.bf16.mxu0 0
        %5697 = vmatmul.mubr.bf16.gmra.mrb[0].mxu0 %v5584
        %v5698 = vpop.f32.mrb[0].mxu0
        %v5699 = vadd.f32 0.0, %v5698
        %v5700 = vpop.f32.mrb[0].mxu0
        %v5701 = vpop.f32.mrb[0].mxu0
        %v5702 = vadd.f32 0.0, %v5701
        %v5703 = vpop.f32.mrb[0].mxu0
        %5704 = vmatprep.mubr.bf16.mxu0 0
        %5705 = vmatmul.mubr.bf16.gmra.mrb[0].mxu0 %v5587
        %v5706 = vpop.f32.mrb[0].mxu0
        %v5707 = vadd.f32 0.0, %v5706
        %v5708 = vpop.f32.mrb[0].mxu0
        %v5709 = vpop.f32.mrb[0].mxu0
        %v5710 = vadd.f32 0.0, %v5709
        %v5711 = vpop.f32.mrb[0].mxu0
        %5712 = vmatprep.mubr.bf16.mxu0 0
        %5713 = vmatmul.mubr.bf16.gmra.mrb[0].mxu0 %v5590
        %v5714 = vpop.f32.mrb[0].mxu0
        %v5715 = vadd.f32 0.0, %v5714
        %v5716 = vpop.f32.mrb[0].mxu0
        %v5717 = vpop.f32.mrb[0].mxu0
        %v5718 = vadd.f32 0.0, %v5717
        %v5719 = vpop.f32.mrb[0].mxu0
        %5720 = vmatprep.mubr.bf16.mxu0 0
        %5721 = vmatmul.mubr.bf16.gmra.mrb[0].mxu0 %v5593
        %v5722 = vpop.f32.mrb[0].mxu0
        %v5723 = vadd.f32 0.0, %v5722
        %v5724 = vpop.f32.mrb[0].mxu0
        %v5725 = vpop.f32.mrb[0].mxu0
        %v5726 = vadd.f32 0.0, %v5725
        %v5727 = vpop.f32.mrb[0].mxu0
        %5728 = vmatprep.mubr.bf16.mxu0 0
        %5729 = vmatmul.mubr.bf16.gmra.mrb[0].mxu0 %v5596
        %v5730 = vpop.f32.mrb[0].mxu0
        %v5731 = vadd.f32 0.0, %v5730
        %v5732 = vpop.f32.mrb[0].mxu0
        %v5733 = vpop.f32.mrb[0].mxu0
        %v5734 = vadd.f32 0.0, %v5733
        %v5735 = vpop.f32.mrb[0].mxu0
        %5736 = vmatprep.mubr.bf16.mxu0 0
        %5737 = vmatmul.mubr.bf16.gmra.mrb[0].mxu0 %v5599
        %v5738 = vpop.f32.mrb[0].mxu0
        %v5739 = vadd.f32 0.0, %v5738
        %v5740 = vpop.f32.mrb[0].mxu0
        %v5741 = vpop.f32.mrb[0].mxu0
        %v5742 = vadd.f32 0.0, %v5741
        %v5743 = vpop.f32.mrb[0].mxu0
        %5744 = vmatprep.mubr.bf16.mxu0 0
        %5745 = vmatmul.mubr.bf16.gmra.mrb[0].mxu0 %v5602
        %v5746 = vpop.f32.mrb[0].mxu0
        %v5747 = vadd.f32 0.0, %v5746
        %v5748 = vpop.f32.mrb[0].mxu0
        %v5749 = vpop.f32.mrb[0].mxu0
        %v5750 = vadd.f32 0.0, %v5749
        %v5751 = vpop.f32.mrb[0].mxu0
        %5752 = vmatprep.mubr.bf16.mxu0 0
        %5753 = vmatmul.mubr.bf16.gmra.mrb[0].mxu0 %v5605
        %v5754 = vpop.f32.mrb[0].mxu0
        %v5755 = vadd.f32 0.0, %v5754
        %v5756 = vpop.f32.mrb[0].mxu0
        %v5757 = vpop.f32.mrb[0].mxu0
        %v5758 = vadd.f32 0.0, %v5757
        %v5759 = vpop.f32.mrb[0].mxu0
        %5760 = vmatprep.mubr.bf16.mxu0 0
        %5761 = vmatmul.mubr.bf16.gmra.mrb[0].mxu0 %v5608
        %v5762 = vpop.f32.mrb[0].mxu0
        %v5763 = vadd.f32 0.0, %v5762
        %v5764 = vpop.f32.mrb[0].mxu0
        %v5765 = vpop.f32.mrb[0].mxu0
        %v5766 = vadd.f32 0.0, %v5765
        %v5767 = vpop.f32.mrb[0].mxu0
        %5768 = vmatprep.mubr.bf16.mxu0 0
        %5769 = vmatmul.mubr.bf16.gmra.mrb[0].mxu0 %v5611
        %v5770 = vpop.f32.mrb[0].mxu0
        %v5771 = vadd.f32 0.0, %v5770
        %v5772 = vpop.f32.mrb[0].mxu0
        %v5773 = vpop.f32.mrb[0].mxu0
        %v5774 = vadd.f32 0.0, %v5773
        %v5775 = vpop.f32.mrb[0].mxu0
        %5776 = vdwg.mxu0
        %v5777 = vadd.f32 %v5516, %v5651
        %v5778 = vadd.f32 %v5517, %v5654
        %v5779 = vadd.f32 %v5518, %v5659
        %v5780 = vadd.f32 %v5519, %v5662
        %v5781 = vadd.f32 %v5520, %v5667
        %v5782 = vadd.f32 %v5521, %v5670
        %v5783 = vadd.f32 %v5522, %v5675
        %v5784 = vadd.f32 %v5523, %v5678
        %v5785 = vadd.f32 %v5524, %v5683
        %v5786 = vadd.f32 %v5525, %v5686
        %v5787 = vadd.f32 %v5526, %v5691
        %v5788 = vadd.f32 %v5527, %v5694
        %v5789 = vadd.f32 %v5528, %v5699
        %v5790 = vadd.f32 %v5529, %v5702
        %v5791 = vadd.f32 %v5530, %v5707
        %v5792 = vadd.f32 %v5531, %v5710
        %v5793 = vadd.f32 %v5532, %v5715
        %v5794 = vadd.f32 %v5533, %v5718
        %v5795 = vadd.f32 %v5534, %v5723
        %v5796 = vadd.f32 %v5535, %v5726
        %v5797 = vadd.f32 %v5536, %v5731
        %v5798 = vadd.f32 %v5537, %v5734
        %v5799 = vadd.f32 %v5538, %v5739
        %v5800 = vadd.f32 %v5539, %v5742
        %v5801 = vadd.f32 %v5540, %v5747
        %v5802 = vadd.f32 %v5541, %v5750
        %v5803 = vadd.f32 %v5542, %v5755
        %v5804 = vadd.f32 %v5543, %v5758
        %v5805 = vadd.f32 %v5544, %v5763
        %v5806 = vadd.f32 %v5545, %v5766
        %v5807 = vadd.f32 %v5546, %v5771
        %v5808 = vadd.f32 %v5547, %v5774
        %v5809 = vld [vmem:[%s276 + $0xa0] sm:$0xf]
        %v5810 = vld [vmem:[%s276 + $0xa4] sm:$0xf]
        %v5811 = vld [vmem:[%s276 + $0xa8] sm:$0xf]
        %v5812 = vld [vmem:[%s276 + $0xac] sm:$0xf]
        %v5813 = vld [vmem:[%s276 + $0xb0] sm:$0xf]
        %v5814 = vld [vmem:[%s276 + $0xb4] sm:$0xf]
        %v5815 = vld [vmem:[%s276 + $0xb8] sm:$0xf]
        %v5816 = vld [vmem:[%s276 + $0xbc] sm:$0xf]
        %v5817 = vld [vmem:[%s276 + $0xc0] sm:$0xf]
        %v5818 = vld [vmem:[%s276 + $0xc4] sm:$0xf]
        %v5819 = vld [vmem:[%s276 + $0xc8] sm:$0xf]
        %v5820 = vld [vmem:[%s276 + $0xcc] sm:$0xf]
        %v5821 = vld [vmem:[%s276 + $0xd0] sm:$0xf]
        %v5822 = vld [vmem:[%s276 + $0xd4] sm:$0xf]
        %v5823 = vld [vmem:[%s276 + $0xd8] sm:$0xf]
        %v5824 = vld [vmem:[%s276 + $0xdc] sm:$0xf]
        %v5825 = vld [vmem:[%s276 + $0xe0] sm:$0xf]
        %v5826 = vld [vmem:[%s276 + $0xe4] sm:$0xf]
        %v5827 = vld [vmem:[%s276 + $0xe8] sm:$0xf]
        %v5828 = vld [vmem:[%s276 + $0xec] sm:$0xf]
        %v5829 = vld [vmem:[%s276 + $0xf0] sm:$0xf]
        %v5830 = vld [vmem:[%s276 + $0xf4] sm:$0xf]
        %v5831 = vld [vmem:[%s276 + $0xf8] sm:$0xf]
        %v5832 = vld [vmem:[%s276 + $0xfc] sm:$0xf]
        %v5833 = vld [vmem:[%s276 + $0x100] sm:$0xf]
        %v5834 = vld [vmem:[%s276 + $0x104] sm:$0xf]
        %v5835 = vld [vmem:[%s276 + $0x108] sm:$0xf]
        %v5836 = vld [vmem:[%s276 + $0x10c] sm:$0xf]
        %v5837 = vld [vmem:[%s276 + $0x110] sm:$0xf]
        %v5838 = vld [vmem:[%s276 + $0x114] sm:$0xf]
        %v5839 = vld [vmem:[%s276 + $0x118] sm:$0xf]
        %v5840 = vld [vmem:[%s276 + $0x11c] sm:$0xf]
        %v5841 = vld [vmem:[%s3034] sm:$0x3]
        %v5874 = vunpack.c.l.b16 %v5809
        %v5875 = vunpack.c.l.b16 %v5810
        %v5876 = vunpack.c.l.b16 %v5811
        %v5877 = vunpack.c.l.b16 %v5812
        %v5878 = vunpack.c.l.b16 %v5813
        %v5879 = vunpack.c.l.b16 %v5814
        %v5880 = vunpack.c.l.b16 %v5815
        %v5881 = vunpack.c.l.b16 %v5816
        %v5882 = vunpack.c.l.b16 %v5817
        %v5883 = vunpack.c.l.b16 %v5818
        %v5884 = vunpack.c.l.b16 %v5819
        %v5885 = vunpack.c.l.b16 %v5820
        %v5886 = vunpack.c.l.b16 %v5821
        %v5887 = vunpack.c.l.b16 %v5822
        %v5888 = vunpack.c.l.b16 %v5823
        %v5889 = vunpack.c.l.b16 %v5824
        %v5890 = vunpack.c.l.b16 %v5825
        %v5891 = vunpack.c.l.b16 %v5826
        %v5892 = vunpack.c.l.b16 %v5827
        %v5893 = vunpack.c.l.b16 %v5828
        %v5894 = vunpack.c.l.b16 %v5829
        %v5895 = vunpack.c.l.b16 %v5830
        %v5896 = vunpack.c.l.b16 %v5831
        %v5897 = vunpack.c.l.b16 %v5832
        %v5898 = vunpack.c.l.b16 %v5833
        %v5899 = vunpack.c.l.b16 %v5834
        %v5900 = vunpack.c.l.b16 %v5835
        %v5901 = vunpack.c.l.b16 %v5836
        %v5902 = vunpack.c.l.b16 %v5837
        %v5903 = vunpack.c.l.b16 %v5838
        %v5904 = vunpack.c.l.b16 %v5839
        %v5905 = vunpack.c.l.b16 %v5840
        %v5906 = vpack.c.b16 %v5875, %v5874
        %v5907 = vpack.c.b16 %v5877, %v5876
        %v5908 = vpack.c.b16 %v5879, %v5878
        %v5909 = vpack.c.b16 %v5881, %v5880
        %v5910 = vpack.c.b16 %v5883, %v5882
        %v5911 = vpack.c.b16 %v5885, %v5884
        %v5912 = vpack.c.b16 %v5887, %v5886
        %v5913 = vpack.c.b16 %v5889, %v5888
        %v5914 = vpack.c.b16 %v5891, %v5890
        %v5915 = vpack.c.b16 %v5893, %v5892
        %v5916 = vpack.c.b16 %v5895, %v5894
        %v5917 = vpack.c.b16 %v5897, %v5896
        %v5918 = vpack.c.b16 %v5899, %v5898
        %v5919 = vpack.c.b16 %v5901, %v5900
        %v5920 = vpack.c.b16 %v5903, %v5902
        %v5921 = vpack.c.b16 %v5905, %v5904
        %v5923 = vsel %vm863, %v5906, 0
        %v5926 = vsel %vm863, %v5907, 0
        %v5929 = vsel %vm863, %v5908, 0
        %v5932 = vsel %vm863, %v5909, 0
        %v5935 = vsel %vm863, %v5910, 0
        %v5938 = vsel %vm863, %v5911, 0
        %v5941 = vsel %vm863, %v5912, 0
        %v5944 = vsel %vm863, %v5913, 0
        %v5947 = vsel %vm863, %v5914, 0
        %v5950 = vsel %vm863, %v5915, 0
        %v5953 = vsel %vm863, %v5916, 0
        %v5956 = vsel %vm863, %v5917, 0
        %v5959 = vsel %vm863, %v5918, 0
        %v5962 = vsel %vm863, %v5919, 0
        %v5965 = vsel %vm863, %v5920, 0
        %v5968 = vsel %vm863, %v5921, 0
        %v5971 = vsel %vm1401, %v5841, 0
        %5973 = vmatprep.subr.bf16.mxu0 0
        %5974 = vmatpush1.bf16.msra.mxu0 %v5971
        %5975 = vmatprep.subr.bf16.mxu0 0
        %5976 = vmatpush1.bf16.msra.mxu0 0
        %5977 = vmatprep.subr.bf16.mxu0 0
        %5978 = vmatpush1.bf16.msra.mxu0 0
        %5979 = vmatprep.subr.bf16.mxu0 0
        %5980 = vmatpush1.bf16.msra.mxu0 0
        %5981 = vmatprep.subr.bf16.mxu0 0
        %5982 = vmatpush1.bf16.msra.mxu0 0
        %5983 = vmatprep.subr.bf16.mxu0 0
        %5984 = vmatpush1.bf16.msra.mxu0 0
        %5985 = vmatprep.subr.bf16.mxu0 0
        %5986 = vmatpush1.bf16.msra.mxu0 0
        %5987 = vmatprep.subr.bf16.mxu0 0
        %5988 = vmatpush1.bf16.msra.mxu0 0
        %5989 = vmatprep.subr.bf16.mxu0 0
        %5990 = vmatpush1.bf16.msra.mxu0 0
        %5991 = vmatprep.subr.bf16.mxu0 0
        %5992 = vmatpush1.bf16.msra.mxu0 0
        %5993 = vmatprep.subr.bf16.mxu0 0
        %5994 = vmatpush1.bf16.msra.mxu0 0
        %5995 = vmatprep.subr.bf16.mxu0 0
        %5996 = vmatpush1.bf16.msra.mxu0 0
        %5997 = vmatprep.subr.bf16.mxu0 0
        %5998 = vmatpush1.bf16.msra.mxu0 0
        %5999 = vmatprep.subr.bf16.mxu0 0
        %6000 = vmatpush1.bf16.msra.mxu0 0
        %6001 = vmatprep.subr.bf16.mxu0 0
        %6002 = vmatpush1.bf16.msra.mxu0 0
        %6003 = vmatprep.subr.bf16.mxu0 0
        %6004 = vmatpush1.bf16.msra.mxu0 0
        %6005 = vmatprep.mubr.bf16.mxu0 0
        %6006 = vmatmul.mubr.bf16.gmra.mrb[0].mxu0 %v5923
        %v6007 = vpop.f32.mrb[0].mxu0
        %v6008 = vadd.f32 0.0, %v6007
        %v6009 = vpop.f32.mrb[0].mxu0
        %v6010 = vpop.f32.mrb[0].mxu0
        %v6011 = vadd.f32 0.0, %v6010
        %v6012 = vpop.f32.mrb[0].mxu0
        %6013 = vmatprep.mubr.bf16.mxu0 0
        %6014 = vmatmul.mubr.bf16.gmra.mrb[0].mxu0 %v5926
        %v6015 = vpop.f32.mrb[0].mxu0
        %v6016 = vadd.f32 0.0, %v6015
        %v6017 = vpop.f32.mrb[0].mxu0
        %v6018 = vpop.f32.mrb[0].mxu0
        %v6019 = vadd.f32 0.0, %v6018
        %v6020 = vpop.f32.mrb[0].mxu0
        %6021 = vmatprep.mubr.bf16.mxu0 0
        %6022 = vmatmul.mubr.bf16.gmra.mrb[0].mxu0 %v5929
        %v6023 = vpop.f32.mrb[0].mxu0
        %v6024 = vadd.f32 0.0, %v6023
        %v6025 = vpop.f32.mrb[0].mxu0
        %v6026 = vpop.f32.mrb[0].mxu0
        %v6027 = vadd.f32 0.0, %v6026
        %v6028 = vpop.f32.mrb[0].mxu0
        %6029 = vmatprep.mubr.bf16.mxu0 0
        %6030 = vmatmul.mubr.bf16.gmra.mrb[0].mxu0 %v5932
        %v6031 = vpop.f32.mrb[0].mxu0
        %v6032 = vadd.f32 0.0, %v6031
        %v6033 = vpop.f32.mrb[0].mxu0
        %v6034 = vpop.f32.mrb[0].mxu0
        %v6035 = vadd.f32 0.0, %v6034
        %v6036 = vpop.f32.mrb[0].mxu0
        %6037 = vmatprep.mubr.bf16.mxu0 0
        %6038 = vmatmul.mubr.bf16.gmra.mrb[0].mxu0 %v5935
        %v6039 = vpop.f32.mrb[0].mxu0
        %v6040 = vadd.f32 0.0, %v6039
        %v6041 = vpop.f32.mrb[0].mxu0
        %v6042 = vpop.f32.mrb[0].mxu0
        %v6043 = vadd.f32 0.0, %v6042
        %v6044 = vpop.f32.mrb[0].mxu0
        %6045 = vmatprep.mubr.bf16.mxu0 0
        %6046 = vmatmul.mubr.bf16.gmra.mrb[0].mxu0 %v5938
        %v6047 = vpop.f32.mrb[0].mxu0
        %v6048 = vadd.f32 0.0, %v6047
        %v6049 = vpop.f32.mrb[0].mxu0
        %v6050 = vpop.f32.mrb[0].mxu0
        %v6051 = vadd.f32 0.0, %v6050
        %v6052 = vpop.f32.mrb[0].mxu0
        %6053 = vmatprep.mubr.bf16.mxu0 0
        %6054 = vmatmul.mubr.bf16.gmra.mrb[0].mxu0 %v5941
        %v6055 = vpop.f32.mrb[0].mxu0
        %v6056 = vadd.f32 0.0, %v6055
        %v6057 = vpop.f32.mrb[0].mxu0
        %v6058 = vpop.f32.mrb[0].mxu0
        %v6059 = vadd.f32 0.0, %v6058
        %v6060 = vpop.f32.mrb[0].mxu0
        %6061 = vmatprep.mubr.bf16.mxu0 0
        %6062 = vmatmul.mubr.bf16.gmra.mrb[0].mxu0 %v5944
        %v6063 = vpop.f32.mrb[0].mxu0
        %v6064 = vadd.f32 0.0, %v6063
        %v6065 = vpop.f32.mrb[0].mxu0
        %v6066 = vpop.f32.mrb[0].mxu0
        %v6067 = vadd.f32 0.0, %v6066
        %v6068 = vpop.f32.mrb[0].mxu0
        %6069 = vmatprep.mubr.bf16.mxu0 0
        %6070 = vmatmul.mubr.bf16.gmra.mrb[0].mxu0 %v5947
        %v6071 = vpop.f32.mrb[0].mxu0
        %v6072 = vadd.f32 0.0, %v6071
        %v6073 = vpop.f32.mrb[0].mxu0
        %v6074 = vpop.f32.mrb[0].mxu0
        %v6075 = vadd.f32 0.0, %v6074
        %v6076 = vpop.f32.mrb[0].mxu0
        %6077 = vmatprep.mubr.bf16.mxu0 0
        %6078 = vmatmul.mubr.bf16.gmra.mrb[0].mxu0 %v5950
        %v6079 = vpop.f32.mrb[0].mxu0
        %v6080 = vadd.f32 0.0, %v6079
        %v6081 = vpop.f32.mrb[0].mxu0
        %v6082 = vpop.f32.mrb[0].mxu0
        %v6083 = vadd.f32 0.0, %v6082
        %v6084 = vpop.f32.mrb[0].mxu0
        %6085 = vmatprep.mubr.bf16.mxu0 0
        %6086 = vmatmul.mubr.bf16.gmra.mrb[0].mxu0 %v5953
        %v6087 = vpop.f32.mrb[0].mxu0
        %v6088 = vadd.f32 0.0, %v6087
        %v6089 = vpop.f32.mrb[0].mxu0
        %v6090 = vpop.f32.mrb[0].mxu0
        %v6091 = vadd.f32 0.0, %v6090
        %v6092 = vpop.f32.mrb[0].mxu0
        %6093 = vmatprep.mubr.bf16.mxu0 0
        %6094 = vmatmul.mubr.bf16.gmra.mrb[0].mxu0 %v5956
        %v6095 = vpop.f32.mrb[0].mxu0
        %v6096 = vadd.f32 0.0, %v6095
        %v6097 = vpop.f32.mrb[0].mxu0
        %v6098 = vpop.f32.mrb[0].mxu0
        %v6099 = vadd.f32 0.0, %v6098
        %v6100 = vpop.f32.mrb[0].mxu0
        %6101 = vmatprep.mubr.bf16.mxu0 0
        %6102 = vmatmul.mubr.bf16.gmra.mrb[0].mxu0 %v5959
        %v6103 = vpop.f32.mrb[0].mxu0
        %v6104 = vadd.f32 0.0, %v6103
        %v6105 = vpop.f32.mrb[0].mxu0
        %v6106 = vpop.f32.mrb[0].mxu0
        %v6107 = vadd.f32 0.0, %v6106
        %v6108 = vpop.f32.mrb[0].mxu0
        %6109 = vmatprep.mubr.bf16.mxu0 0
        %6110 = vmatmul.mubr.bf16.gmra.mrb[0].mxu0 %v5962
        %v6111 = vpop.f32.mrb[0].mxu0
        %v6112 = vadd.f32 0.0, %v6111
        %v6113 = vpop.f32.mrb[0].mxu0
        %v6114 = vpop.f32.mrb[0].mxu0
        %v6115 = vadd.f32 0.0, %v6114
        %v6116 = vpop.f32.mrb[0].mxu0
        %6117 = vmatprep.mubr.bf16.mxu0 0
        %6118 = vmatmul.mubr.bf16.gmra.mrb[0].mxu0 %v5965
        %v6119 = vpop.f32.mrb[0].mxu0
        %v6120 = vadd.f32 0.0, %v6119
        %v6121 = vpop.f32.mrb[0].mxu0
        %v6122 = vpop.f32.mrb[0].mxu0
        %v6123 = vadd.f32 0.0, %v6122
        %v6124 = vpop.f32.mrb[0].mxu0
        %6125 = vmatprep.mubr.bf16.mxu0 0
        %6126 = vmatmul.mubr.bf16.gmra.mrb[0].mxu0 %v5968
        %v6127 = vpop.f32.mrb[0].mxu0
        %v6128 = vadd.f32 0.0, %v6127
        %v6129 = vpop.f32.mrb[0].mxu0
        %v6130 = vpop.f32.mrb[0].mxu0
        %v6131 = vadd.f32 0.0, %v6130
        %v6132 = vpop.f32.mrb[0].mxu0
        %6133 = vdwg.mxu0
        %v6134 = vadd.f32 %v5777, %v6008
        %v6135 = vadd.f32 %v5778, %v6011
        %v6136 = vadd.f32 %v5779, %v6016
        %v6137 = vadd.f32 %v5780, %v6019
        %v6138 = vadd.f32 %v5781, %v6024
        %v6139 = vadd.f32 %v5782, %v6027
        %v6140 = vadd.f32 %v5783, %v6032
        %v6141 = vadd.f32 %v5784, %v6035
        %v6142 = vadd.f32 %v5785, %v6040
        %v6143 = vadd.f32 %v5786, %v6043
        %v6144 = vadd.f32 %v5787, %v6048
        %v6145 = vadd.f32 %v5788, %v6051
        %v6146 = vadd.f32 %v5789, %v6056
        %v6147 = vadd.f32 %v5790, %v6059
        %v6148 = vadd.f32 %v5791, %v6064
        %v6149 = vadd.f32 %v5792, %v6067
        %v6150 = vadd.f32 %v5793, %v6072
        %v6151 = vadd.f32 %v5794, %v6075
        %v6152 = vadd.f32 %v5795, %v6080
        %v6153 = vadd.f32 %v5796, %v6083
        %v6154 = vadd.f32 %v5797, %v6088
        %v6155 = vadd.f32 %v5798, %v6091
        %v6156 = vadd.f32 %v5799, %v6096
        %v6157 = vadd.f32 %v5800, %v6099
        %v6158 = vadd.f32 %v5801, %v6104
        %v6159 = vadd.f32 %v5802, %v6107
        %v6160 = vadd.f32 %v5803, %v6112
        %v6161 = vadd.f32 %v5804, %v6115
        %v6162 = vadd.f32 %v5805, %v6120
        %v6163 = vadd.f32 %v5806, %v6123
        %v6164 = vadd.f32 %v5807, %v6128
        %v6165 = vadd.f32 %v5808, %v6131
        %v6166 = vld [vmem:[#allocation2 + $0xa0] sm:$0xff]
        %v6167 = vld [vmem:[#allocation2 + $0xa8] sm:$0xff]
        %v6168 = vld [vmem:[#allocation2 + $0xb0] sm:$0xff]
        %v6169 = vld [vmem:[#allocation2 + $0xb8] sm:$0xff]
        %v6170 = vld [vmem:[#allocation2 + $0xc0] sm:$0xff]
        %v6171 = vld [vmem:[#allocation2 + $0xc8] sm:$0xff]
        %v6172 = vld [vmem:[#allocation2 + $0xd0] sm:$0xff]
        %v6173 = vld [vmem:[#allocation2 + $0xd8] sm:$0xff]
        %v6174 = vld [vmem:[#allocation2 + $0xe0] sm:$0xff]
        %v6175 = vld [vmem:[#allocation2 + $0xe8] sm:$0xff]
        %v6176 = vld [vmem:[#allocation2 + $0xf0] sm:$0xff]
        %v6177 = vld [vmem:[#allocation2 + $0xf8] sm:$0xff]
        %v6178 = vld [vmem:[#allocation2 + $0x100] sm:$0xff]
        %v6179 = vld [vmem:[#allocation2 + $0x108] sm:$0xff]
        %v6180 = vld [vmem:[#allocation2 + $0x110] sm:$0xff]
        %v6181 = vld [vmem:[#allocation2 + $0x118] sm:$0xff]
        %v6182 = vld [vmem:[%s3376] sm:$0x3]
        %v6184 = vsel %vm863, %v6166, 0
        %v6187 = vsel %vm863, %v6167, 0
        %v6190 = vsel %vm863, %v6168, 0
        %v6193 = vsel %vm863, %v6169, 0
        %v6196 = vsel %vm863, %v6170, 0
        %v6199 = vsel %vm863, %v6171, 0
        %v6202 = vsel %vm863, %v6172, 0
        %v6205 = vsel %vm863, %v6173, 0
        %v6208 = vsel %vm863, %v6174, 0
        %v6211 = vsel %vm863, %v6175, 0
        %v6214 = vsel %vm863, %v6176, 0
        %v6217 = vsel %vm863, %v6177, 0
        %v6220 = vsel %vm863, %v6178, 0
        %v6223 = vsel %vm863, %v6179, 0
        %v6226 = vsel %vm863, %v6180, 0
        %v6229 = vsel %vm863, %v6181, 0
        %v6232 = vsel %vm1401, %v6182, 0
        %6234 = vmatprep.subr.bf16.mxu0 0
        %6235 = vmatpush1.bf16.msra.mxu0 %v6232
        %6236 = vmatprep.subr.bf16.mxu0 0
        %6237 = vmatpush1.bf16.msra.mxu0 0
        %6238 = vmatprep.subr.bf16.mxu0 0
        %6239 = vmatpush1.bf16.msra.mxu0 0
        %6240 = vmatprep.subr.bf16.mxu0 0
        %6241 = vmatpush1.bf16.msra.mxu0 0
        %6242 = vmatprep.subr.bf16.mxu0 0
        %6243 = vmatpush1.bf16.msra.mxu0 0
        %6244 = vmatprep.subr.bf16.mxu0 0
        %6245 = vmatpush1.bf16.msra.mxu0 0
        %6246 = vmatprep.subr.bf16.mxu0 0
        %6247 = vmatpush1.bf16.msra.mxu0 0
        %6248 = vmatprep.subr.bf16.mxu0 0
        %6249 = vmatpush1.bf16.msra.mxu0 0
        %6250 = vmatprep.subr.bf16.mxu0 0
        %6251 = vmatpush1.bf16.msra.mxu0 0
        %6252 = vmatprep.subr.bf16.mxu0 0
        %6253 = vmatpush1.bf16.msra.mxu0 0
        %6254 = vmatprep.subr.bf16.mxu0 0
        %6255 = vmatpush1.bf16.msra.mxu0 0
        %6256 = vmatprep.subr.bf16.mxu0 0
        %6257 = vmatpush1.bf16.msra.mxu0 0
        %6258 = vmatprep.subr.bf16.mxu0 0
        %6259 = vmatpush1.bf16.msra.mxu0 0
        %6260 = vmatprep.subr.bf16.mxu0 0
        %6261 = vmatpush1.bf16.msra.mxu0 0
        %6262 = vmatprep.subr.bf16.mxu0 0
        %6263 = vmatpush1.bf16.msra.mxu0 0
        %6264 = vmatprep.subr.bf16.mxu0 0
        %6265 = vmatpush1.bf16.msra.mxu0 0
        %6266 = vmatprep.mubr.bf16.mxu0 0
        %6267 = vmatmul.mubr.bf16.gmra.mrb[0].mxu0 %v6184
        %v6268 = vpop.f32.mrb[0].mxu0
        %v6269 = vadd.f32 0.0, %v6268
        %v6270 = vpop.f32.mrb[0].mxu0
        %v6271 = vpop.f32.mrb[0].mxu0
        %v6272 = vadd.f32 0.0, %v6271
        %v6273 = vpop.f32.mrb[0].mxu0
        %6274 = vmatprep.mubr.bf16.mxu0 0
        %6275 = vmatmul.mubr.bf16.gmra.mrb[0].mxu0 %v6187
        %v6276 = vpop.f32.mrb[0].mxu0
        %v6277 = vadd.f32 0.0, %v6276
        %v6278 = vpop.f32.mrb[0].mxu0
        %v6279 = vpop.f32.mrb[0].mxu0
        %v6280 = vadd.f32 0.0, %v6279
        %v6281 = vpop.f32.mrb[0].mxu0
        %6282 = vmatprep.mubr.bf16.mxu0 0
        %6283 = vmatmul.mubr.bf16.gmra.mrb[0].mxu0 %v6190
        %v6284 = vpop.f32.mrb[0].mxu0
        %v6285 = vadd.f32 0.0, %v6284
        %v6286 = vpop.f32.mrb[0].mxu0
        %v6287 = vpop.f32.mrb[0].mxu0
        %v6288 = vadd.f32 0.0, %v6287
        %v6289 = vpop.f32.mrb[0].mxu0
        %6290 = vmatprep.mubr.bf16.mxu0 0
        %6291 = vmatmul.mubr.bf16.gmra.mrb[0].mxu0 %v6193
        %v6292 = vpop.f32.mrb[0].mxu0
        %v6293 = vadd.f32 0.0, %v6292
        %v6294 = vpop.f32.mrb[0].mxu0
        %v6295 = vpop.f32.mrb[0].mxu0
        %v6296 = vadd.f32 0.0, %v6295
        %v6297 = vpop.f32.mrb[0].mxu0
        %6298 = vmatprep.mubr.bf16.mxu0 0
        %6299 = vmatmul.mubr.bf16.gmra.mrb[0].mxu0 %v6196
        %v6300 = vpop.f32.mrb[0].mxu0
        %v6301 = vadd.f32 0.0, %v6300
        %v6302 = vpop.f32.mrb[0].mxu0
        %v6303 = vpop.f32.mrb[0].mxu0
        %v6304 = vadd.f32 0.0, %v6303
        %v6305 = vpop.f32.mrb[0].mxu0
        %6306 = vmatprep.mubr.bf16.mxu0 0
        %6307 = vmatmul.mubr.bf16.gmra.mrb[0].mxu0 %v6199
        %v6308 = vpop.f32.mrb[0].mxu0
        %v6309 = vadd.f32 0.0, %v6308
        %v6310 = vpop.f32.mrb[0].mxu0
        %v6311 = vpop.f32.mrb[0].mxu0
        %v6312 = vadd.f32 0.0, %v6311
        %v6313 = vpop.f32.mrb[0].mxu0
        %6314 = vmatprep.mubr.bf16.mxu0 0
        %6315 = vmatmul.mubr.bf16.gmra.mrb[0].mxu0 %v6202
        %v6316 = vpop.f32.mrb[0].mxu0
        %v6317 = vadd.f32 0.0, %v6316
        %v6318 = vpop.f32.mrb[0].mxu0
        %v6319 = vpop.f32.mrb[0].mxu0
        %v6320 = vadd.f32 0.0, %v6319
        %v6321 = vpop.f32.mrb[0].mxu0
        %6322 = vmatprep.mubr.bf16.mxu0 0
        %6323 = vmatmul.mubr.bf16.gmra.mrb[0].mxu0 %v6205
        %v6324 = vpop.f32.mrb[0].mxu0
        %v6325 = vadd.f32 0.0, %v6324
        %v6326 = vpop.f32.mrb[0].mxu0
        %v6327 = vpop.f32.mrb[0].mxu0
        %v6328 = vadd.f32 0.0, %v6327
        %v6329 = vpop.f32.mrb[0].mxu0
        %6330 = vmatprep.mubr.bf16.mxu0 0
        %6331 = vmatmul.mubr.bf16.gmra.mrb[0].mxu0 %v6208
        %v6332 = vpop.f32.mrb[0].mxu0
        %v6333 = vadd.f32 0.0, %v6332
        %v6334 = vpop.f32.mrb[0].mxu0
        %v6335 = vpop.f32.mrb[0].mxu0
        %v6336 = vadd.f32 0.0, %v6335
        %v6337 = vpop.f32.mrb[0].mxu0
        %6338 = vmatprep.mubr.bf16.mxu0 0
        %6339 = vmatmul.mubr.bf16.gmra.mrb[0].mxu0 %v6211
        %v6340 = vpop.f32.mrb[0].mxu0
        %v6341 = vadd.f32 0.0, %v6340
        %v6342 = vpop.f32.mrb[0].mxu0
        %v6343 = vpop.f32.mrb[0].mxu0
        %v6344 = vadd.f32 0.0, %v6343
        %v6345 = vpop.f32.mrb[0].mxu0
        %6346 = vmatprep.mubr.bf16.mxu0 0
        %6347 = vmatmul.mubr.bf16.gmra.mrb[0].mxu0 %v6214
        %v6348 = vpop.f32.mrb[0].mxu0
        %v6349 = vadd.f32 0.0, %v6348
        %v6350 = vpop.f32.mrb[0].mxu0
        %v6351 = vpop.f32.mrb[0].mxu0
        %v6352 = vadd.f32 0.0, %v6351
        %v6353 = vpop.f32.mrb[0].mxu0
        %6354 = vmatprep.mubr.bf16.mxu0 0
        %6355 = vmatmul.mubr.bf16.gmra.mrb[0].mxu0 %v6217
        %v6356 = vpop.f32.mrb[0].mxu0
        %v6357 = vadd.f32 0.0, %v6356
        %v6358 = vpop.f32.mrb[0].mxu0
        %v6359 = vpop.f32.mrb[0].mxu0
        %v6360 = vadd.f32 0.0, %v6359
        %v6361 = vpop.f32.mrb[0].mxu0
        %6362 = vmatprep.mubr.bf16.mxu0 0
        %6363 = vmatmul.mubr.bf16.gmra.mrb[0].mxu0 %v6220
        %v6364 = vpop.f32.mrb[0].mxu0
        %v6365 = vadd.f32 0.0, %v6364
        %v6366 = vpop.f32.mrb[0].mxu0
        %v6367 = vpop.f32.mrb[0].mxu0
        %v6368 = vadd.f32 0.0, %v6367
        %v6369 = vpop.f32.mrb[0].mxu0
        %6370 = vmatprep.mubr.bf16.mxu0 0
        %6371 = vmatmul.mubr.bf16.gmra.mrb[0].mxu0 %v6223
        %v6372 = vpop.f32.mrb[0].mxu0
        %v6373 = vadd.f32 0.0, %v6372
        %v6374 = vpop.f32.mrb[0].mxu0
        %v6375 = vpop.f32.mrb[0].mxu0
        %v6376 = vadd.f32 0.0, %v6375
        %v6377 = vpop.f32.mrb[0].mxu0
        %6378 = vmatprep.mubr.bf16.mxu0 0
        %6379 = vmatmul.mubr.bf16.gmra.mrb[0].mxu0 %v6226
        %v6380 = vpop.f32.mrb[0].mxu0
        %v6381 = vadd.f32 0.0, %v6380
        %v6382 = vpop.f32.mrb[0].mxu0
        %v6383 = vpop.f32.mrb[0].mxu0
        %v6384 = vadd.f32 0.0, %v6383
        %v6385 = vpop.f32.mrb[0].mxu0
        %6386 = vmatprep.mubr.bf16.mxu0 0
        %6387 = vmatmul.mubr.bf16.gmra.mrb[0].mxu0 %v6229
        %v6388 = vpop.f32.mrb[0].mxu0
        %v6389 = vadd.f32 0.0, %v6388
        %v6390 = vpop.f32.mrb[0].mxu0
        %v6391 = vpop.f32.mrb[0].mxu0
        %v6392 = vadd.f32 0.0, %v6391
        %v6393 = vpop.f32.mrb[0].mxu0
        %6394 = vdwg.mxu0
        %v6395 = vadd.f32 %v6134, %v6269
        %v6396 = vadd.f32 %v6135, %v6272
        %v6397 = vadd.f32 %v6136, %v6277
        %v6398 = vadd.f32 %v6137, %v6280
        %v6399 = vadd.f32 %v6138, %v6285
        %v6400 = vadd.f32 %v6139, %v6288
        %v6401 = vadd.f32 %v6140, %v6293
        %v6402 = vadd.f32 %v6141, %v6296
        %v6403 = vadd.f32 %v6142, %v6301
        %v6404 = vadd.f32 %v6143, %v6304
        %v6405 = vadd.f32 %v6144, %v6309
        %v6406 = vadd.f32 %v6145, %v6312
        %v6407 = vadd.f32 %v6146, %v6317
        %v6408 = vadd.f32 %v6147, %v6320
        %v6409 = vadd.f32 %v6148, %v6325
        %v6410 = vadd.f32 %v6149, %v6328
        %v6411 = vadd.f32 %v6150, %v6333
        %v6412 = vadd.f32 %v6151, %v6336
        %v6413 = vadd.f32 %v6152, %v6341
        %v6414 = vadd.f32 %v6153, %v6344
        %v6415 = vadd.f32 %v6154, %v6349
        %v6416 = vadd.f32 %v6155, %v6352
        %v6417 = vadd.f32 %v6156, %v6357
        %v6418 = vadd.f32 %v6157, %v6360
        %v6419 = vadd.f32 %v6158, %v6365
        %v6420 = vadd.f32 %v6159, %v6368
        %v6421 = vadd.f32 %v6160, %v6373
        %v6422 = vadd.f32 %v6161, %v6376
        %v6423 = vadd.f32 %v6162, %v6381
        %v6424 = vadd.f32 %v6163, %v6384
        %v6425 = vadd.f32 %v6164, %v6389
        %v6426 = vadd.f32 %v6165, %v6392
        %v6427 = vld [vmem:[#allocation3 + $0xa0] sm:$0xff]
        %v6428 = vld [vmem:[#allocation3 + $0xa8] sm:$0xff]
        %v6429 = vld [vmem:[#allocation3 + $0xb0] sm:$0xff]
        %v6430 = vld [vmem:[#allocation3 + $0xb8] sm:$0xff]
        %v6431 = vld [vmem:[#allocation3 + $0xc0] sm:$0xff]
        %v6432 = vld [vmem:[#allocation3 + $0xc8] sm:$0xff]
        %v6433 = vld [vmem:[#allocation3 + $0xd0] sm:$0xff]
        %v6434 = vld [vmem:[#allocation3 + $0xd8] sm:$0xff]
        %v6435 = vld [vmem:[#allocation3 + $0xe0] sm:$0xff]
        %v6436 = vld [vmem:[#allocation3 + $0xe8] sm:$0xff]
        %v6437 = vld [vmem:[#allocation3 + $0xf0] sm:$0xff]
        %v6438 = vld [vmem:[#allocation3 + $0xf8] sm:$0xff]
        %v6439 = vld [vmem:[#allocation3 + $0x100] sm:$0xff]
        %v6440 = vld [vmem:[#allocation3 + $0x108] sm:$0xff]
        %v6441 = vld [vmem:[#allocation3 + $0x110] sm:$0xff]
        %v6442 = vld [vmem:[#allocation3 + $0x118] sm:$0xff]
        %v6443 = vld [vmem:[%s3638] sm:$0x3]
        %v6445 = vsel %vm863, %v6427, 0
        %v6448 = vsel %vm863, %v6428, 0
        %v6451 = vsel %vm863, %v6429, 0
        %v6454 = vsel %vm863, %v6430, 0
        %v6457 = vsel %vm863, %v6431, 0
        %v6460 = vsel %vm863, %v6432, 0
        %v6463 = vsel %vm863, %v6433, 0
        %v6466 = vsel %vm863, %v6434, 0
        %v6469 = vsel %vm863, %v6435, 0
        %v6472 = vsel %vm863, %v6436, 0
        %v6475 = vsel %vm863, %v6437, 0
        %v6478 = vsel %vm863, %v6438, 0
        %v6481 = vsel %vm863, %v6439, 0
        %v6484 = vsel %vm863, %v6440, 0
        %v6487 = vsel %vm863, %v6441, 0
        %v6490 = vsel %vm863, %v6442, 0
        %v6493 = vsel %vm1401, %v6443, 0
        %6495 = vmatprep.subr.bf16.mxu0 0
        %6496 = vmatpush1.bf16.msra.mxu0 %v6493
        %6497 = vmatprep.subr.bf16.mxu0 0
        %6498 = vmatpush1.bf16.msra.mxu0 0
        %6499 = vmatprep.subr.bf16.mxu0 0
        %6500 = vmatpush1.bf16.msra.mxu0 0
        %6501 = vmatprep.subr.bf16.mxu0 0
        %6502 = vmatpush1.bf16.msra.mxu0 0
        %6503 = vmatprep.subr.bf16.mxu0 0
        %6504 = vmatpush1.bf16.msra.mxu0 0
        %6505 = vmatprep.subr.bf16.mxu0 0
        %6506 = vmatpush1.bf16.msra.mxu0 0
        %6507 = vmatprep.subr.bf16.mxu0 0
        %6508 = vmatpush1.bf16.msra.mxu0 0
        %6509 = vmatprep.subr.bf16.mxu0 0
        %6510 = vmatpush1.bf16.msra.mxu0 0
        %6511 = vmatprep.subr.bf16.mxu0 0
        %6512 = vmatpush1.bf16.msra.mxu0 0
        %6513 = vmatprep.subr.bf16.mxu0 0
        %6514 = vmatpush1.bf16.msra.mxu0 0
        %6515 = vmatprep.subr.bf16.mxu0 0
        %6516 = vmatpush1.bf16.msra.mxu0 0
        %6517 = vmatprep.subr.bf16.mxu0 0
        %6518 = vmatpush1.bf16.msra.mxu0 0
        %6519 = vmatprep.subr.bf16.mxu0 0
        %6520 = vmatpush1.bf16.msra.mxu0 0
        %6521 = vmatprep.subr.bf16.mxu0 0
        %6522 = vmatpush1.bf16.msra.mxu0 0
        %6523 = vmatprep.subr.bf16.mxu0 0
        %6524 = vmatpush1.bf16.msra.mxu0 0
        %6525 = vmatprep.subr.bf16.mxu0 0
        %6526 = vmatpush1.bf16.msra.mxu0 0
        %6527 = vmatprep.mubr.bf16.mxu0 0
        %6528 = vmatmul.mubr.bf16.gmra.mrb[0].mxu0 %v6445
        %v6529 = vpop.f32.mrb[0].mxu0
        %v6530 = vadd.f32 0.0, %v6529
        %v6531 = vpop.f32.mrb[0].mxu0
        %v6532 = vpop.f32.mrb[0].mxu0
        %v6533 = vadd.f32 0.0, %v6532
        %v6534 = vpop.f32.mrb[0].mxu0
        %6535 = vmatprep.mubr.bf16.mxu0 0
        %6536 = vmatmul.mubr.bf16.gmra.mrb[0].mxu0 %v6448
        %v6537 = vpop.f32.mrb[0].mxu0
        %v6538 = vadd.f32 0.0, %v6537
        %v6539 = vpop.f32.mrb[0].mxu0
        %v6540 = vpop.f32.mrb[0].mxu0
        %v6541 = vadd.f32 0.0, %v6540
        %v6542 = vpop.f32.mrb[0].mxu0
        %6543 = vmatprep.mubr.bf16.mxu0 0
        %6544 = vmatmul.mubr.bf16.gmra.mrb[0].mxu0 %v6451
        %v6545 = vpop.f32.mrb[0].mxu0
        %v6546 = vadd.f32 0.0, %v6545
        %v6547 = vpop.f32.mrb[0].mxu0
        %v6548 = vpop.f32.mrb[0].mxu0
        %v6549 = vadd.f32 0.0, %v6548
        %v6550 = vpop.f32.mrb[0].mxu0
        %6551 = vmatprep.mubr.bf16.mxu0 0
        %6552 = vmatmul.mubr.bf16.gmra.mrb[0].mxu0 %v6454
        %v6553 = vpop.f32.mrb[0].mxu0
        %v6554 = vadd.f32 0.0, %v6553
        %v6555 = vpop.f32.mrb[0].mxu0
        %v6556 = vpop.f32.mrb[0].mxu0
        %v6557 = vadd.f32 0.0, %v6556
        %v6558 = vpop.f32.mrb[0].mxu0
        %6559 = vmatprep.mubr.bf16.mxu0 0
        %6560 = vmatmul.mubr.bf16.gmra.mrb[0].mxu0 %v6457
        %v6561 = vpop.f32.mrb[0].mxu0
        %v6562 = vadd.f32 0.0, %v6561
        %v6563 = vpop.f32.mrb[0].mxu0
        %v6564 = vpop.f32.mrb[0].mxu0
        %v6565 = vadd.f32 0.0, %v6564
        %v6566 = vpop.f32.mrb[0].mxu0
        %6567 = vmatprep.mubr.bf16.mxu0 0
        %6568 = vmatmul.mubr.bf16.gmra.mrb[0].mxu0 %v6460
        %v6569 = vpop.f32.mrb[0].mxu0
        %v6570 = vadd.f32 0.0, %v6569
        %v6571 = vpop.f32.mrb[0].mxu0
        %v6572 = vpop.f32.mrb[0].mxu0
        %v6573 = vadd.f32 0.0, %v6572
        %v6574 = vpop.f32.mrb[0].mxu0
        %6575 = vmatprep.mubr.bf16.mxu0 0
        %6576 = vmatmul.mubr.bf16.gmra.mrb[0].mxu0 %v6463
        %v6577 = vpop.f32.mrb[0].mxu0
        %v6578 = vadd.f32 0.0, %v6577
        %v6579 = vpop.f32.mrb[0].mxu0
        %v6580 = vpop.f32.mrb[0].mxu0
        %v6581 = vadd.f32 0.0, %v6580
        %v6582 = vpop.f32.mrb[0].mxu0
        %6583 = vmatprep.mubr.bf16.mxu0 0
        %6584 = vmatmul.mubr.bf16.gmra.mrb[0].mxu0 %v6466
        %v6585 = vpop.f32.mrb[0].mxu0
        %v6586 = vadd.f32 0.0, %v6585
        %v6587 = vpop.f32.mrb[0].mxu0
        %v6588 = vpop.f32.mrb[0].mxu0
        %v6589 = vadd.f32 0.0, %v6588
        %v6590 = vpop.f32.mrb[0].mxu0
        %6591 = vmatprep.mubr.bf16.mxu0 0
        %6592 = vmatmul.mubr.bf16.gmra.mrb[0].mxu0 %v6469
        %v6593 = vpop.f32.mrb[0].mxu0
        %v6594 = vadd.f32 0.0, %v6593
        %v6595 = vpop.f32.mrb[0].mxu0
        %v6596 = vpop.f32.mrb[0].mxu0
        %v6597 = vadd.f32 0.0, %v6596
        %v6598 = vpop.f32.mrb[0].mxu0
        %6599 = vmatprep.mubr.bf16.mxu0 0
        %6600 = vmatmul.mubr.bf16.gmra.mrb[0].mxu0 %v6472
        %v6601 = vpop.f32.mrb[0].mxu0
        %v6602 = vadd.f32 0.0, %v6601
        %v6603 = vpop.f32.mrb[0].mxu0
        %v6604 = vpop.f32.mrb[0].mxu0
        %v6605 = vadd.f32 0.0, %v6604
        %v6606 = vpop.f32.mrb[0].mxu0
        %6607 = vmatprep.mubr.bf16.mxu0 0
        %6608 = vmatmul.mubr.bf16.gmra.mrb[0].mxu0 %v6475
        %v6609 = vpop.f32.mrb[0].mxu0
        %v6610 = vadd.f32 0.0, %v6609
        %v6611 = vpop.f32.mrb[0].mxu0
        %v6612 = vpop.f32.mrb[0].mxu0
        %v6613 = vadd.f32 0.0, %v6612
        %v6614 = vpop.f32.mrb[0].mxu0
        %6615 = vmatprep.mubr.bf16.mxu0 0
        %6616 = vmatmul.mubr.bf16.gmra.mrb[0].mxu0 %v6478
        %v6617 = vpop.f32.mrb[0].mxu0
        %v6618 = vadd.f32 0.0, %v6617
        %v6619 = vpop.f32.mrb[0].mxu0
        %v6620 = vpop.f32.mrb[0].mxu0
        %v6621 = vadd.f32 0.0, %v6620
        %v6622 = vpop.f32.mrb[0].mxu0
        %6623 = vmatprep.mubr.bf16.mxu0 0
        %6624 = vmatmul.mubr.bf16.gmra.mrb[0].mxu0 %v6481
        %v6625 = vpop.f32.mrb[0].mxu0
        %v6626 = vadd.f32 0.0, %v6625
        %v6627 = vpop.f32.mrb[0].mxu0
        %v6628 = vpop.f32.mrb[0].mxu0
        %v6629 = vadd.f32 0.0, %v6628
        %v6630 = vpop.f32.mrb[0].mxu0
        %6631 = vmatprep.mubr.bf16.mxu0 0
        %6632 = vmatmul.mubr.bf16.gmra.mrb[0].mxu0 %v6484
        %v6633 = vpop.f32.mrb[0].mxu0
        %v6634 = vadd.f32 0.0, %v6633
        %v6635 = vpop.f32.mrb[0].mxu0
        %v6636 = vpop.f32.mrb[0].mxu0
        %v6637 = vadd.f32 0.0, %v6636
        %v6638 = vpop.f32.mrb[0].mxu0
        %6639 = vmatprep.mubr.bf16.mxu0 0
        %6640 = vmatmul.mubr.bf16.gmra.mrb[0].mxu0 %v6487
        %v6641 = vpop.f32.mrb[0].mxu0
        %v6642 = vadd.f32 0.0, %v6641
        %v6643 = vpop.f32.mrb[0].mxu0
        %v6644 = vpop.f32.mrb[0].mxu0
        %v6645 = vadd.f32 0.0, %v6644
        %v6646 = vpop.f32.mrb[0].mxu0
        %6647 = vmatprep.mubr.bf16.mxu0 0
        %6648 = vmatmul.mubr.bf16.gmra.mrb[0].mxu0 %v6490
        %v6649 = vpop.f32.mrb[0].mxu0
        %v6650 = vadd.f32 0.0, %v6649
        %v6651 = vpop.f32.mrb[0].mxu0
        %v6652 = vpop.f32.mrb[0].mxu0
        %v6653 = vadd.f32 0.0, %v6652
        %v6654 = vpop.f32.mrb[0].mxu0
        %6655 = vdwg.mxu0
        %v6656 = vadd.f32 %v6395, %v6530
        %v6657 = vadd.f32 %v6396, %v6533
        %v6658 = vadd.f32 %v6397, %v6538
        %v6659 = vadd.f32 %v6398, %v6541
        %v6660 = vadd.f32 %v6399, %v6546
        %v6661 = vadd.f32 %v6400, %v6549
        %v6662 = vadd.f32 %v6401, %v6554
        %v6663 = vadd.f32 %v6402, %v6557
        %v6664 = vadd.f32 %v6403, %v6562
        %v6665 = vadd.f32 %v6404, %v6565
        %v6666 = vadd.f32 %v6405, %v6570
        %v6667 = vadd.f32 %v6406, %v6573
        %v6668 = vadd.f32 %v6407, %v6578
        %v6669 = vadd.f32 %v6408, %v6581
        %v6670 = vadd.f32 %v6409, %v6586
        %v6671 = vadd.f32 %v6410, %v6589
        %v6672 = vadd.f32 %v6411, %v6594
        %v6673 = vadd.f32 %v6412, %v6597
        %v6674 = vadd.f32 %v6413, %v6602
        %v6675 = vadd.f32 %v6414, %v6605
        %v6676 = vadd.f32 %v6415, %v6610
        %v6677 = vadd.f32 %v6416, %v6613
        %v6678 = vadd.f32 %v6417, %v6618
        %v6679 = vadd.f32 %v6418, %v6621
        %v6680 = vadd.f32 %v6419, %v6626
        %v6681 = vadd.f32 %v6420, %v6629
        %v6682 = vadd.f32 %v6421, %v6634
        %v6683 = vadd.f32 %v6422, %v6637
        %v6684 = vadd.f32 %v6423, %v6642
        %v6685 = vadd.f32 %v6424, %v6645
        %v6686 = vadd.f32 %v6425, %v6650
        %v6687 = vadd.f32 %v6426, %v6653
        %v6688 = vld [vmem:[%s3] sm:$0x1]
        %v6690 = vlaneseq
        %v6691 = vshrl.u32 %v6690, 7
        %v6692 = vsub.s32 0, %v6691
        %v6693 = vrot.slane %v6688, %v6692
        %v6695 = vadd.f32 %v6656, %v6693
        %v6696 = vadd.f32 %v6657, %v6693
        %v6697 = vadd.f32 %v6658, %v6693
        %v6698 = vadd.f32 %v6659, %v6693
        %v6699 = vadd.f32 %v6660, %v6693
        %v6700 = vadd.f32 %v6661, %v6693
        %v6701 = vadd.f32 %v6662, %v6693
        %v6702 = vadd.f32 %v6663, %v6693
        %v6703 = vadd.f32 %v6664, %v6693
        %v6704 = vadd.f32 %v6665, %v6693
        %v6705 = vadd.f32 %v6666, %v6693
        %v6706 = vadd.f32 %v6667, %v6693
        %v6707 = vadd.f32 %v6668, %v6693
        %v6708 = vadd.f32 %v6669, %v6693
        %v6709 = vadd.f32 %v6670, %v6693
        %v6710 = vadd.f32 %v6671, %v6693
        %v6711 = vadd.f32 %v6672, %v6693
        %v6712 = vadd.f32 %v6673, %v6693
        %v6713 = vadd.f32 %v6674, %v6693
        %v6714 = vadd.f32 %v6675, %v6693
        %v6715 = vadd.f32 %v6676, %v6693
        %v6716 = vadd.f32 %v6677, %v6693
        %v6717 = vadd.f32 %v6678, %v6693
        %v6718 = vadd.f32 %v6679, %v6693
        %v6719 = vadd.f32 %v6680, %v6693
        %v6720 = vadd.f32 %v6681, %v6693
        %v6721 = vadd.f32 %v6682, %v6693
        %v6722 = vadd.f32 %v6683, %v6693
        %v6723 = vadd.f32 %v6684, %v6693
        %v6724 = vadd.f32 %v6685, %v6693
        %v6725 = vadd.f32 %v6686, %v6693
        %v6726 = vadd.f32 %v6687, %v6693
        %v6727 = vmax.f32 %v6695, 0.0
        %v6728 = vmax.f32 %v6696, 0.0
        %v6729 = vmax.f32 %v6697, 0.0
        %v6730 = vmax.f32 %v6698, 0.0
        %v6731 = vmax.f32 %v6699, 0.0
        %v6732 = vmax.f32 %v6700, 0.0
        %v6733 = vmax.f32 %v6701, 0.0
        %v6734 = vmax.f32 %v6702, 0.0
        %v6735 = vmax.f32 %v6703, 0.0
        %v6736 = vmax.f32 %v6704, 0.0
        %v6737 = vmax.f32 %v6705, 0.0
        %v6738 = vmax.f32 %v6706, 0.0
        %v6739 = vmax.f32 %v6707, 0.0
        %v6740 = vmax.f32 %v6708, 0.0
        %v6741 = vmax.f32 %v6709, 0.0
        %v6742 = vmax.f32 %v6710, 0.0
        %v6743 = vmax.f32 %v6711, 0.0
        %v6744 = vmax.f32 %v6712, 0.0
        %v6745 = vmax.f32 %v6713, 0.0
        %v6746 = vmax.f32 %v6714, 0.0
        %v6747 = vmax.f32 %v6715, 0.0
        %v6748 = vmax.f32 %v6716, 0.0
        %v6749 = vmax.f32 %v6717, 0.0
        %v6750 = vmax.f32 %v6718, 0.0
        %v6751 = vmax.f32 %v6719, 0.0
        %v6752 = vmax.f32 %v6720, 0.0
        %v6753 = vmax.f32 %v6721, 0.0
        %v6754 = vmax.f32 %v6722, 0.0
        %v6755 = vmax.f32 %v6723, 0.0
        %v6756 = vmax.f32 %v6724, 0.0
        %v6757 = vmax.f32 %v6725, 0.0
        %v6758 = vmax.f32 %v6726, 0.0
        %v6759 = vpack.c.bf16 %v6728, %v6727
        %v6760 = vpack.c.bf16 %v6730, %v6729
        %v6761 = vpack.c.bf16 %v6732, %v6731
        %v6762 = vpack.c.bf16 %v6734, %v6733
        %v6763 = vpack.c.bf16 %v6736, %v6735
        %v6764 = vpack.c.bf16 %v6738, %v6737
        %v6765 = vpack.c.bf16 %v6740, %v6739
        %v6766 = vpack.c.bf16 %v6742, %v6741
        %v6767 = vpack.c.bf16 %v6744, %v6743
        %v6768 = vpack.c.bf16 %v6746, %v6745
        %v6769 = vpack.c.bf16 %v6748, %v6747
        %v6770 = vpack.c.bf16 %v6750, %v6749
        %v6771 = vpack.c.bf16 %v6752, %v6751
        %v6772 = vpack.c.bf16 %v6754, %v6753
        %v6773 = vpack.c.bf16 %v6756, %v6755
        %v6774 = vpack.c.bf16 %v6758, %v6757
        %v6791 = vunpack.c.l.b16 %v6759
        %v6792 = vunpack.c.h.b16 %v6759
        %v6793 = vunpack.c.l.b16 %v6760
        %v6794 = vunpack.c.h.b16 %v6760
        %v6795 = vunpack.c.l.b16 %v6761
        %v6796 = vunpack.c.h.b16 %v6761
        %v6797 = vunpack.c.l.b16 %v6762
        %v6798 = vunpack.c.h.b16 %v6762
        %v6799 = vunpack.c.l.b16 %v6763
        %v6800 = vunpack.c.h.b16 %v6763
        %v6801 = vunpack.c.l.b16 %v6764
        %v6802 = vunpack.c.h.b16 %v6764
        %v6803 = vunpack.c.l.b16 %v6765
        %v6804 = vunpack.c.h.b16 %v6765
        %v6805 = vunpack.c.l.b16 %v6766
        %v6806 = vunpack.c.h.b16 %v6766
        %v6807 = vunpack.c.l.b16 %v6767
        %v6808 = vunpack.c.h.b16 %v6767
        %v6809 = vunpack.c.l.b16 %v6768
        %v6810 = vunpack.c.h.b16 %v6768
        %v6811 = vunpack.c.l.b16 %v6769
        %v6812 = vunpack.c.h.b16 %v6769
        %v6813 = vunpack.c.l.b16 %v6770
        %v6814 = vunpack.c.h.b16 %v6770
        %v6815 = vunpack.c.l.b16 %v6771
        %v6816 = vunpack.c.h.b16 %v6771
        %v6817 = vunpack.c.l.b16 %v6772
        %v6818 = vunpack.c.h.b16 %v6772
        %v6819 = vunpack.c.l.b16 %v6773
        %v6820 = vunpack.c.h.b16 %v6773
        %v6821 = vunpack.c.l.b16 %v6774
        %v6822 = vunpack.c.h.b16 %v6774
        %v6823 = vpack.c.b16 %v6791, %v6791
        %v6824 = vpack.c.b16 %v6792, %v6792
        %v6825 = vpack.c.b16 %v6793, %v6793
        %v6826 = vpack.c.b16 %v6794, %v6794
        %v6827 = vpack.c.b16 %v6795, %v6795
        %v6828 = vpack.c.b16 %v6796, %v6796
        %v6829 = vpack.c.b16 %v6797, %v6797
        %v6830 = vpack.c.b16 %v6798, %v6798
        %v6831 = vpack.c.b16 %v6799, %v6799
        %v6832 = vpack.c.b16 %v6800, %v6800
        %v6833 = vpack.c.b16 %v6801, %v6801
        %v6834 = vpack.c.b16 %v6802, %v6802
        %v6835 = vpack.c.b16 %v6803, %v6803
        %v6836 = vpack.c.b16 %v6804, %v6804
        %v6837 = vpack.c.b16 %v6805, %v6805
        %v6838 = vpack.c.b16 %v6806, %v6806
        %v6839 = vpack.c.b16 %v6807, %v6807
        %v6840 = vpack.c.b16 %v6808, %v6808
        %v6841 = vpack.c.b16 %v6809, %v6809
        %v6842 = vpack.c.b16 %v6810, %v6810
        %v6843 = vpack.c.b16 %v6811, %v6811
        %v6844 = vpack.c.b16 %v6812, %v6812
        %v6845 = vpack.c.b16 %v6813, %v6813
        %v6846 = vpack.c.b16 %v6814, %v6814
        %v6847 = vpack.c.b16 %v6815, %v6815
        %v6848 = vpack.c.b16 %v6816, %v6816
        %v6849 = vpack.c.b16 %v6817, %v6817
        %v6850 = vpack.c.b16 %v6818, %v6818
        %v6851 = vpack.c.b16 %v6819, %v6819
        %v6852 = vpack.c.b16 %v6820, %v6820
        %v6853 = vpack.c.b16 %v6821, %v6821
        %v6854 = vpack.c.b16 %v6822, %v6822
        %6887 = vst [vmem:[%s271 + $0x80] sm:$0xf] %v6823
        %6888 = vst [vmem:[%s271 + $0x84] sm:$0xf] %v6824
        %6889 = vst [vmem:[%s271 + $0x88] sm:$0xf] %v6825
        %6890 = vst [vmem:[%s271 + $0x8c] sm:$0xf] %v6826
        %6891 = vst [vmem:[%s271 + $0x90] sm:$0xf] %v6827
        %6892 = vst [vmem:[%s271 + $0x94] sm:$0xf] %v6828
        %6893 = vst [vmem:[%s271 + $0x98] sm:$0xf] %v6829
        %6894 = vst [vmem:[%s271 + $0x9c] sm:$0xf] %v6830
        %6895 = vst [vmem:[%s271 + $0xa0] sm:$0xf] %v6831
        %6896 = vst [vmem:[%s271 + $0xa4] sm:$0xf] %v6832
        %6897 = vst [vmem:[%s271 + $0xa8] sm:$0xf] %v6833
        %6898 = vst [vmem:[%s271 + $0xac] sm:$0xf] %v6834
        %6899 = vst [vmem:[%s271 + $0xb0] sm:$0xf] %v6835
        %6900 = vst [vmem:[%s271 + $0xb4] sm:$0xf] %v6836
        %6901 = vst [vmem:[%s271 + $0xb8] sm:$0xf] %v6837
        %6902 = vst [vmem:[%s271 + $0xbc] sm:$0xf] %v6838
        %6903 = vst [vmem:[%s271 + $0xc0] sm:$0xf] %v6839
        %6904 = vst [vmem:[%s271 + $0xc4] sm:$0xf] %v6840
        %6905 = vst [vmem:[%s271 + $0xc8] sm:$0xf] %v6841
        %6906 = vst [vmem:[%s271 + $0xcc] sm:$0xf] %v6842
        %6907 = vst [vmem:[%s271 + $0xd0] sm:$0xf] %v6843
        %6908 = vst [vmem:[%s271 + $0xd4] sm:$0xf] %v6844
        %6909 = vst [vmem:[%s271 + $0xd8] sm:$0xf] %v6845
        %6910 = vst [vmem:[%s271 + $0xdc] sm:$0xf] %v6846
        %6911 = vst [vmem:[%s271 + $0xe0] sm:$0xf] %v6847
        %6912 = vst [vmem:[%s271 + $0xe4] sm:$0xf] %v6848
        %6913 = vst [vmem:[%s271 + $0xe8] sm:$0xf] %v6849
        %6914 = vst [vmem:[%s271 + $0xec] sm:$0xf] %v6850
        %6915 = vst [vmem:[%s271 + $0xf0] sm:$0xf] %v6851
        %6916 = vst [vmem:[%s271 + $0xf4] sm:$0xf] %v6852
        %6917 = vst [vmem:[%s271 + $0xf8] sm:$0xf] %v6853
        %6918 = vst [vmem:[%s271 + $0xfc] sm:$0xf] %v6854
        %v6919 = vld [vmem:[%s1] sm:$0xf]
        %v6920 = vld [vmem:[%s271] sm:$0xf]
        %v6921 = vld [vmem:[%s271 + $0x4] sm:$0xf]
        %v6922 = vld [vmem:[%s271 + $0x8] sm:$0xf]
        %v6923 = vld [vmem:[%s271 + $0xc] sm:$0xf]
        %v6924 = vld [vmem:[%s271 + $0x10] sm:$0xf]
        %v6925 = vld [vmem:[%s271 + $0x14] sm:$0xf]
        %v6926 = vld [vmem:[%s271 + $0x18] sm:$0xf]
        %v6927 = vld [vmem:[%s271 + $0x1c] sm:$0xf]
        %v6928 = vld [vmem:[%s271 + $0x20] sm:$0xf]
        %v6929 = vld [vmem:[%s271 + $0x24] sm:$0xf]
        %v6930 = vld [vmem:[%s271 + $0x28] sm:$0xf]
        %v6931 = vld [vmem:[%s271 + $0x2c] sm:$0xf]
        %v6932 = vld [vmem:[%s271 + $0x30] sm:$0xf]
        %v6933 = vld [vmem:[%s271 + $0x34] sm:$0xf]
        %v6934 = vld [vmem:[%s271 + $0x38] sm:$0xf]
        %v6935 = vld [vmem:[%s271 + $0x3c] sm:$0xf]
        %v6936 = vld [vmem:[%s271 + $0x40] sm:$0xf]
        %v6937 = vld [vmem:[%s271 + $0x44] sm:$0xf]
        %v6938 = vld [vmem:[%s271 + $0x48] sm:$0xf]
        %v6939 = vld [vmem:[%s271 + $0x4c] sm:$0xf]
        %v6940 = vld [vmem:[%s271 + $0x50] sm:$0xf]
        %v6941 = vld [vmem:[%s271 + $0x54] sm:$0xf]
        %v6942 = vld [vmem:[%s271 + $0x58] sm:$0xf]
        %v6943 = vld [vmem:[%s271 + $0x5c] sm:$0xf]
        %v6944 = vld [vmem:[%s271 + $0x60] sm:$0xf]
        %v6945 = vld [vmem:[%s271 + $0x64] sm:$0xf]
        %v6946 = vld [vmem:[%s271 + $0x68] sm:$0xf]
        %v6947 = vld [vmem:[%s271 + $0x6c] sm:$0xf]
        %v6948 = vld [vmem:[%s271 + $0x70] sm:$0xf]
        %v6949 = vld [vmem:[%s271 + $0x74] sm:$0xf]
        %v6950 = vld [vmem:[%s271 + $0x78] sm:$0xf]
        %v6951 = vld [vmem:[%s271 + $0x7c] sm:$0xf]
        %v6952 = vld [vmem:[%s271 + $0x80] sm:$0xf]
        %v6953 = vld [vmem:[%s271 + $0x84] sm:$0xf]
        %v6954 = vld [vmem:[%s271 + $0x88] sm:$0xf]
        %v6955 = vld [vmem:[%s271 + $0x8c] sm:$0xf]
        %v6956 = vld [vmem:[%s271 + $0x90] sm:$0xf]
        %v6957 = vld [vmem:[%s271 + $0x94] sm:$0xf]
        %v6958 = vld [vmem:[%s271 + $0x98] sm:$0xf]
        %v6959 = vld [vmem:[%s271 + $0x9c] sm:$0xf]
        %v6960 = vld [vmem:[%s271 + $0xa0] sm:$0xf]
        %v6961 = vld [vmem:[%s271 + $0xa4] sm:$0xf]
        %v6962 = vld [vmem:[%s271 + $0xa8] sm:$0xf]
        %v6963 = vld [vmem:[%s271 + $0xac] sm:$0xf]
        %v6964 = vld [vmem:[%s271 + $0xb0] sm:$0xf]
        %v6965 = vld [vmem:[%s271 + $0xb4] sm:$0xf]
        %v6966 = vld [vmem:[%s271 + $0xb8] sm:$0xf]
        %v6967 = vld [vmem:[%s271 + $0xbc] sm:$0xf]
        %v6968 = vld [vmem:[%s271 + $0xc0] sm:$0xf]
        %v6969 = vld [vmem:[%s271 + $0xc4] sm:$0xf]
        %v6970 = vld [vmem:[%s271 + $0xc8] sm:$0xf]
        %v6971 = vld [vmem:[%s271 + $0xcc] sm:$0xf]
        %v6972 = vld [vmem:[%s271 + $0xd0] sm:$0xf]
        %v6973 = vld [vmem:[%s271 + $0xd4] sm:$0xf]
        %v6974 = vld [vmem:[%s271 + $0xd8] sm:$0xf]
        %v6975 = vld [vmem:[%s271 + $0xdc] sm:$0xf]
        %v6976 = vld [vmem:[%s271 + $0xe0] sm:$0xf]
        %v6977 = vld [vmem:[%s271 + $0xe4] sm:$0xf]
        %v6978 = vld [vmem:[%s271 + $0xe8] sm:$0xf]
        %v6979 = vld [vmem:[%s271 + $0xec] sm:$0xf]
        %v6980 = vld [vmem:[%s271 + $0xf0] sm:$0xf]
        %v6981 = vld [vmem:[%s271 + $0xf4] sm:$0xf]
        %v6982 = vld [vmem:[%s271 + $0xf8] sm:$0xf]
        %v6983 = vld [vmem:[%s271 + $0xfc] sm:$0xf]
        %v6986 = vunpack.c.l.s4 1966171168
        %v6987 = vunpack.c.0.s8 %v6986
        %v6988 = vlaneseq
        %v6989 = vshrl.u32 %v6988, 7
        %v6990 = vsub.s32 %v6987, %v6989
        %v6991 = vrot.slane %v6919, %v6990
        %v6992 = vcombine.high %v6991, %v6991
        %v6994 = vunpack.c.l.s4 1966171168
        %v6995 = vunpack.c.0.s8 %v6994
        %v6996 = vlaneseq
        %v6997 = vshrl.u32 %v6996, 7
        %v6998 = vsub.s32 %v6995, %v6997
        %v6999 = vrot.slane %v6991, %v6998
        %v7001 = vunpack.c.l.s4 1966171168
        %v7002 = vunpack.c.0.s8 %v7001
        %v7003 = vlaneseq
        %v7004 = vshrl.u32 %v7003, 7
        %v7005 = vsub.s32 %v7002, %v7004
        %v7006 = vrot.slane %v6992, %v7005
        %v7007 = vcombine.high %v6999, %v6999
        %v7008 = vcombine.high %v7006, %v7006
        %v7077 = vunpack.c.l.b16 %v6920
        %v7078 = vunpack.c.l.b16 %v6921
        %v7079 = vunpack.c.l.b16 %v6922
        %v7080 = vunpack.c.l.b16 %v6923
        %v7081 = vunpack.c.l.b16 %v6924
        %v7082 = vunpack.c.l.b16 %v6925
        %v7083 = vunpack.c.l.b16 %v6926
        %v7084 = vunpack.c.l.b16 %v6927
        %v7085 = vunpack.c.l.b16 %v6928
        %v7086 = vunpack.c.l.b16 %v6929
        %v7087 = vunpack.c.l.b16 %v6930
        %v7088 = vunpack.c.l.b16 %v6931
        %v7089 = vunpack.c.l.b16 %v6932
        %v7090 = vunpack.c.l.b16 %v6933
        %v7091 = vunpack.c.l.b16 %v6934
        %v7092 = vunpack.c.l.b16 %v6935
        %v7093 = vunpack.c.l.b16 %v6936
        %v7094 = vunpack.c.l.b16 %v6937
        %v7095 = vunpack.c.l.b16 %v6938
        %v7096 = vunpack.c.l.b16 %v6939
        %v7097 = vunpack.c.l.b16 %v6940
        %v7098 = vunpack.c.l.b16 %v6941
        %v7099 = vunpack.c.l.b16 %v6942
        %v7100 = vunpack.c.l.b16 %v6943
        %v7101 = vunpack.c.l.b16 %v6944
        %v7102 = vunpack.c.l.b16 %v6945
        %v7103 = vunpack.c.l.b16 %v6946
        %v7104 = vunpack.c.l.b16 %v6947
        %v7105 = vunpack.c.l.b16 %v6948
        %v7106 = vunpack.c.l.b16 %v6949
        %v7107 = vunpack.c.l.b16 %v6950
        %v7108 = vunpack.c.l.b16 %v6951
        %v7109 = vunpack.c.l.b16 %v6952
        %v7110 = vunpack.c.l.b16 %v6953
        %v7111 = vunpack.c.l.b16 %v6954
        %v7112 = vunpack.c.l.b16 %v6955
        %v7113 = vunpack.c.l.b16 %v6956
        %v7114 = vunpack.c.l.b16 %v6957
        %v7115 = vunpack.c.l.b16 %v6958
        %v7116 = vunpack.c.l.b16 %v6959
        %v7117 = vunpack.c.l.b16 %v6960
        %v7118 = vunpack.c.l.b16 %v6961
        %v7119 = vunpack.c.l.b16 %v6962
        %v7120 = vunpack.c.l.b16 %v6963
        %v7121 = vunpack.c.l.b16 %v6964
        %v7122 = vunpack.c.l.b16 %v6965
        %v7123 = vunpack.c.l.b16 %v6966
        %v7124 = vunpack.c.l.b16 %v6967
        %v7125 = vunpack.c.l.b16 %v6968
        %v7126 = vunpack.c.l.b16 %v6969
        %v7127 = vunpack.c.l.b16 %v6970
        %v7128 = vunpack.c.l.b16 %v6971
        %v7129 = vunpack.c.l.b16 %v6972
        %v7130 = vunpack.c.l.b16 %v6973
        %v7131 = vunpack.c.l.b16 %v6974
        %v7132 = vunpack.c.l.b16 %v6975
        %v7133 = vunpack.c.l.b16 %v6976
        %v7134 = vunpack.c.l.b16 %v6977
        %v7135 = vunpack.c.l.b16 %v6978
        %v7136 = vunpack.c.l.b16 %v6979
        %v7137 = vunpack.c.l.b16 %v6980
        %v7138 = vunpack.c.l.b16 %v6981
        %v7139 = vunpack.c.l.b16 %v6982
        %v7140 = vunpack.c.l.b16 %v6983
        %v7141 = vpack.c.b16 %v7078, %v7077
        %v7142 = vpack.c.b16 %v7080, %v7079
        %v7143 = vpack.c.b16 %v7082, %v7081
        %v7144 = vpack.c.b16 %v7084, %v7083
        %v7145 = vpack.c.b16 %v7086, %v7085
        %v7146 = vpack.c.b16 %v7088, %v7087
        %v7147 = vpack.c.b16 %v7090, %v7089
        %v7148 = vpack.c.b16 %v7092, %v7091
        %v7149 = vpack.c.b16 %v7094, %v7093
        %v7150 = vpack.c.b16 %v7096, %v7095
        %v7151 = vpack.c.b16 %v7098, %v7097
        %v7152 = vpack.c.b16 %v7100, %v7099
        %v7153 = vpack.c.b16 %v7102, %v7101
        %v7154 = vpack.c.b16 %v7104, %v7103
        %v7155 = vpack.c.b16 %v7106, %v7105
        %v7156 = vpack.c.b16 %v7108, %v7107
        %v7157 = vpack.c.b16 %v7110, %v7109
        %v7158 = vpack.c.b16 %v7112, %v7111
        %v7159 = vpack.c.b16 %v7114, %v7113
        %v7160 = vpack.c.b16 %v7116, %v7115
        %v7161 = vpack.c.b16 %v7118, %v7117
        %v7162 = vpack.c.b16 %v7120, %v7119
        %v7163 = vpack.c.b16 %v7122, %v7121
        %v7164 = vpack.c.b16 %v7124, %v7123
        %v7165 = vpack.c.b16 %v7126, %v7125
        %v7166 = vpack.c.b16 %v7128, %v7127
        %v7167 = vpack.c.b16 %v7130, %v7129
        %v7168 = vpack.c.b16 %v7132, %v7131
        %v7169 = vpack.c.b16 %v7134, %v7133
        %v7170 = vpack.c.b16 %v7136, %v7135
        %v7171 = vpack.c.b16 %v7138, %v7137
        %v7172 = vpack.c.b16 %v7140, %v7139
        %7205 = vmatprep.subr.bf16.mxu0 0
        %7206 = vmatpush1.bf16.msra.mxu0 %v7141
        %7207 = vmatprep.subr.bf16.mxu0 0
        %7208 = vmatpush1.bf16.msra.mxu0 %v7142
        %7209 = vmatprep.subr.bf16.mxu0 0
        %7210 = vmatpush1.bf16.msra.mxu0 %v7143
        %7211 = vmatprep.subr.bf16.mxu0 0
        %7212 = vmatpush1.bf16.msra.mxu0 %v7144
        %7213 = vmatprep.subr.bf16.mxu0 0
        %7214 = vmatpush1.bf16.msra.mxu0 %v7145
        %7215 = vmatprep.subr.bf16.mxu0 0
        %7216 = vmatpush1.bf16.msra.mxu0 %v7146
        %7217 = vmatprep.subr.bf16.mxu0 0
        %7218 = vmatpush1.bf16.msra.mxu0 %v7147
        %7219 = vmatprep.subr.bf16.mxu0 0
        %7220 = vmatpush1.bf16.msra.mxu0 %v7148
        %7221 = vmatprep.subr.bf16.mxu0 0
        %7222 = vmatpush1.bf16.msra.mxu0 %v7149
        %7223 = vmatprep.subr.bf16.mxu0 0
        %7224 = vmatpush1.bf16.msra.mxu0 %v7150
        %7225 = vmatprep.subr.bf16.mxu0 0
        %7226 = vmatpush1.bf16.msra.mxu0 %v7151
        %7227 = vmatprep.subr.bf16.mxu0 0
        %7228 = vmatpush1.bf16.msra.mxu0 %v7152
        %7229 = vmatprep.subr.bf16.mxu0 0
        %7230 = vmatpush1.bf16.msra.mxu0 %v7153
        %7231 = vmatprep.subr.bf16.mxu0 0
        %7232 = vmatpush1.bf16.msra.mxu0 %v7154
        %7233 = vmatprep.subr.bf16.mxu0 0
        %7234 = vmatpush1.bf16.msra.mxu0 %v7155
        %7235 = vmatprep.subr.bf16.mxu0 0
        %7236 = vmatpush1.bf16.msra.mxu0 %v7156
        %7237 = vmatprep.mubr.bf16.mxu0 %v7006
        %7238 = vmatmul.mubr.bf16.gmra.mrb[0].mxu0 %v6999
        %v7239 = vpop.f32.mrb[0].mxu0
        %v7240 = vadd.f32 0.0, %v7239
        %v7241 = vpop.f32.mrb[0].mxu0
        %v7242 = vpop.f32.mrb[0].mxu0
        %v7243 = vpop.f32.mrb[0].mxu0
        %7244 = vdwg.mxu0
        %7245 = vmatprep.subr.bf16.mxu0 0
        %7246 = vmatpush1.bf16.msra.mxu0 %v7157
        %7247 = vmatprep.subr.bf16.mxu0 0
        %7248 = vmatpush1.bf16.msra.mxu0 %v7158
        %7249 = vmatprep.subr.bf16.mxu0 0
        %7250 = vmatpush1.bf16.msra.mxu0 %v7159
        %7251 = vmatprep.subr.bf16.mxu0 0
        %7252 = vmatpush1.bf16.msra.mxu0 %v7160
        %7253 = vmatprep.subr.bf16.mxu0 0
        %7254 = vmatpush1.bf16.msra.mxu0 %v7161
        %7255 = vmatprep.subr.bf16.mxu0 0
        %7256 = vmatpush1.bf16.msra.mxu0 %v7162
        %7257 = vmatprep.subr.bf16.mxu0 0
        %7258 = vmatpush1.bf16.msra.mxu0 %v7163
        %7259 = vmatprep.subr.bf16.mxu0 0
        %7260 = vmatpush1.bf16.msra.mxu0 %v7164
        %7261 = vmatprep.subr.bf16.mxu0 0
        %7262 = vmatpush1.bf16.msra.mxu0 %v7165
        %7263 = vmatprep.subr.bf16.mxu0 0
        %7264 = vmatpush1.bf16.msra.mxu0 %v7166
        %7265 = vmatprep.subr.bf16.mxu0 0
        %7266 = vmatpush1.bf16.msra.mxu0 %v7167
        %7267 = vmatprep.subr.bf16.mxu0 0
        %7268 = vmatpush1.bf16.msra.mxu0 %v7168
        %7269 = vmatprep.subr.bf16.mxu0 0
        %7270 = vmatpush1.bf16.msra.mxu0 %v7169
        %7271 = vmatprep.subr.bf16.mxu0 0
        %7272 = vmatpush1.bf16.msra.mxu0 %v7170
        %7273 = vmatprep.subr.bf16.mxu0 0
        %7274 = vmatpush1.bf16.msra.mxu0 %v7171
        %7275 = vmatprep.subr.bf16.mxu0 0
        %7276 = vmatpush1.bf16.msra.mxu0 %v7172
        %7277 = vmatprep.mubr.bf16.mxu0 %v7008
        %7278 = vmatmul.mubr.bf16.gmra.mrb[0].mxu0 %v7007
        %v7279 = vpop.f32.mrb[0].mxu0
        %v7280 = vadd.f32 %v7240, %v7279
        %v7281 = vpop.f32.mrb[0].mxu0
        %v7282 = vpop.f32.mrb[0].mxu0
        %v7283 = vpop.f32.mrb[0].mxu0
        %7284 = vdwg.mxu0
        %v7285 = vmul.f32 %v7280, 0.00390625
        %v7286 = vld [vmem:[%s4] sm:$0xf]
        %v7287 = vld [vmem:[%s4 + $0x4] sm:$0xf]
        %v7288 = vld [vmem:[%s4 + $0x8] sm:$0xf]
        %v7289 = vld [vmem:[%s4 + $0xc] sm:$0xf]
        %v7290 = vld [vmem:[%s4 + $0x10] sm:$0xf]
        %v7291 = vld [vmem:[%s4 + $0x14] sm:$0xf]
        %v7292 = vld [vmem:[%s4 + $0x18] sm:$0xf]
        %v7293 = vld [vmem:[%s4 + $0x1c] sm:$0xf]
        %v7294 = vld [vmem:[%s4 + $0x20] sm:$0xf]
        %v7295 = vld [vmem:[%s4 + $0x24] sm:$0xf]
        %v7296 = vld [vmem:[%s4 + $0x28] sm:$0xf]
        %v7297 = vld [vmem:[%s4 + $0x2c] sm:$0xf]
        %v7298 = vld [vmem:[%s4 + $0x30] sm:$0xf]
        %v7299 = vld [vmem:[%s4 + $0x34] sm:$0xf]
        %v7300 = vld [vmem:[%s4 + $0x38] sm:$0xf]
        %v7301 = vld [vmem:[%s4 + $0x3c] sm:$0xf]
        %v7302 = vunpack.c.l.bf16 %v7286
        %v7303 = vunpack.c.l.bf16 %v7287
        %v7304 = vunpack.c.l.bf16 %v7288
        %v7305 = vunpack.c.l.bf16 %v7289
        %v7306 = vunpack.c.l.bf16 %v7290
        %v7307 = vunpack.c.l.bf16 %v7291
        %v7308 = vunpack.c.l.bf16 %v7292
        %v7309 = vunpack.c.l.bf16 %v7293
        %v7310 = vunpack.c.l.bf16 %v7294
        %v7311 = vunpack.c.l.bf16 %v7295
        %v7312 = vunpack.c.l.bf16 %v7296
        %v7313 = vunpack.c.l.bf16 %v7297
        %v7314 = vunpack.c.l.bf16 %v7298
        %v7315 = vunpack.c.l.bf16 %v7299
        %v7316 = vunpack.c.l.bf16 %v7300
        %v7317 = vunpack.c.l.bf16 %v7301
        %7318 = vmatprep.subr.mxu0 0.0
        %7319 = vmatpush1.msra.mxu0 %v7302
        %7320 = vmatprep.subr.mxu0 0.0
        %7321 = vmatpush1.msra.mxu0 %v7303
        %7322 = vmatprep.subr.mxu0 0.0
        %7323 = vmatpush1.msra.mxu0 %v7304
        %7324 = vmatprep.subr.mxu0 0.0
        %7325 = vmatpush1.msra.mxu0 %v7305
        %7326 = vmatprep.subr.mxu0 0.0
        %7327 = vmatpush1.msra.mxu0 %v7306
        %7328 = vmatprep.subr.mxu0 0.0
        %7329 = vmatpush1.msra.mxu0 %v7307
        %7330 = vmatprep.subr.mxu0 0.0
        %7331 = vmatpush1.msra.mxu0 %v7308
        %7332 = vmatprep.subr.mxu0 0.0
        %7333 = vmatpush1.msra.mxu0 %v7309
        %7334 = vmatprep.subr.mxu0 0.0
        %7335 = vmatpush1.msra.mxu0 %v7310
        %7336 = vmatprep.subr.mxu0 0.0
        %7337 = vmatpush1.msra.mxu0 %v7311
        %7338 = vmatprep.subr.mxu0 0.0
        %7339 = vmatpush1.msra.mxu0 %v7312
        %7340 = vmatprep.subr.mxu0 0.0
        %7341 = vmatpush1.msra.mxu0 %v7313
        %7342 = vmatprep.subr.mxu0 0.0
        %7343 = vmatpush1.msra.mxu0 %v7314
        %7344 = vmatprep.subr.mxu0 0.0
        %7345 = vmatpush1.msra.mxu0 %v7315
        %7346 = vmatprep.subr.mxu0 0.0
        %7347 = vmatpush1.msra.mxu0 %v7316
        %7348 = vmatprep.subr.mxu0 0.0
        %7349 = vmatpush1.msra.mxu0 %v7317
        %7350 = vmatprep.subr.mxu0 0.0
        %7351 = vmatpush1.msra.mxu0 0.0
        %7352 = vmatprep.subr.mxu0 0.0
        %7353 = vmatpush1.msra.mxu0 0.0
        %7354 = vmatprep.subr.mxu0 0.0
        %7355 = vmatpush1.msra.mxu0 0.0
        %7356 = vmatprep.subr.mxu0 0.0
        %7357 = vmatpush1.msra.mxu0 0.0
        %7358 = vmatprep.subr.mxu0 0.0
        %7359 = vmatpush1.msra.mxu0 0.0
        %7360 = vmatprep.subr.mxu0 0.0
        %7361 = vmatpush1.msra.mxu0 0.0
        %7362 = vmatprep.subr.mxu0 0.0
        %7363 = vmatpush1.msra.mxu0 0.0
        %7364 = vmatprep.subr.mxu0 0.0
        %7365 = vmatpush1.msra.mxu0 0.0
        %7366 = vmatprep.subr.mxu0 0.0
        %7367 = vmatpush1.msra.mxu0 0.0
        %7368 = vmatprep.subr.mxu0 0.0
        %7369 = vmatpush1.msra.mxu0 0.0
        %7370 = vmatprep.subr.mxu0 0.0
        %7371 = vmatpush1.msra.mxu0 0.0
        %7372 = vmatprep.subr.mxu0 0.0
        %7373 = vmatpush1.msra.mxu0 0.0
        %7374 = vmatprep.subr.mxu0 0.0
        %7375 = vmatpush1.msra.mxu0 0.0
        %7376 = vmatprep.subr.mxu0 0.0
        %7377 = vmatpush1.msra.mxu0 0.0
        %7378 = vmatprep.subr.mxu0 0.0
        %7379 = vmatpush1.msra.mxu0 0.0
        %7380 = vmatprep.subr.mxu0 0.0
        %7381 = vmatpush1.msra.mxu0 0.0
        %7382 = vmatprep.mubr.f32.mxu0 0.0
        %7383 = vmatmul.mubr.f32.gmra.mrb[0].mxu0 %v7285
        %v7384 = vpop.f32.mrb[0].mxu0
        %v7385 = vadd.f32 0.0, %v7384
        %v7386 = vpop.f32.mrb[0].mxu0
        %7387 = vdwg.mxu0
        %v7388 = vld [vmem:[%s5] sm:$0x1]
        %v7389 = vmul.f32 %v7385, %v7388
        %v7390 = vld [vmem:[%s6] sm:$0x1]
        %v7391 = vadd.f32 %v7389, %v7390
        %v7392 = vxor.u32 %v7391, 2147483648
        %v7393 = vmul.f32 %v7392, 1.442695
        %v7394 = vpow.pop %v7393
        %v7395 = vadd.f32 %v7394, 1.0
        %v7396 = vrcp.pop %v7395
        %v7397 = vmul.f32 1.0, %v7396
        %v7398 = vunpack.c.l.bf16 %v6920
        %v7399 = vunpack.c.l.bf16 %v6921
        %v7400 = vunpack.c.l.bf16 %v6922
        %v7401 = vunpack.c.l.bf16 %v6923
        %v7402 = vunpack.c.l.bf16 %v6924
        %v7403 = vunpack.c.l.bf16 %v6925
        %v7404 = vunpack.c.l.bf16 %v6926
        %v7405 = vunpack.c.l.bf16 %v6927
        %v7406 = vunpack.c.l.bf16 %v6928
        %v7407 = vunpack.c.l.bf16 %v6929
        %v7408 = vunpack.c.l.bf16 %v6930
        %v7409 = vunpack.c.l.bf16 %v6931
        %v7410 = vunpack.c.l.bf16 %v6932
        %v7411 = vunpack.c.l.bf16 %v6933
        %v7412 = vunpack.c.l.bf16 %v6934
        %v7413 = vunpack.c.l.bf16 %v6935
        %v7414 = vunpack.c.l.bf16 %v6936
        %v7415 = vunpack.c.l.bf16 %v6937
        %v7416 = vunpack.c.l.bf16 %v6938
        %v7417 = vunpack.c.l.bf16 %v6939
        %v7418 = vunpack.c.l.bf16 %v6940
        %v7419 = vunpack.c.l.bf16 %v6941
        %v7420 = vunpack.c.l.bf16 %v6942
        %v7421 = vunpack.c.l.bf16 %v6943
        %v7422 = vunpack.c.l.bf16 %v6944
        %v7423 = vunpack.c.l.bf16 %v6945
        %v7424 = vunpack.c.l.bf16 %v6946
        %v7425 = vunpack.c.l.bf16 %v6947
        %v7426 = vunpack.c.l.bf16 %v6948
        %v7427 = vunpack.c.l.bf16 %v6949
        %v7428 = vunpack.c.l.bf16 %v6950
        %v7429 = vunpack.c.l.bf16 %v6951
        %v7430 = vunpack.c.l.bf16 %v6952
        %v7431 = vunpack.c.l.bf16 %v6953
        %v7432 = vunpack.c.l.bf16 %v6954
        %v7433 = vunpack.c.l.bf16 %v6955
        %v7434 = vunpack.c.l.bf16 %v6956
        %v7435 = vunpack.c.l.bf16 %v6957
        %v7436 = vunpack.c.l.bf16 %v6958
        %v7437 = vunpack.c.l.bf16 %v6959
        %v7438 = vunpack.c.l.bf16 %v6960
        %v7439 = vunpack.c.l.bf16 %v6961
        %v7440 = vunpack.c.l.bf16 %v6962
        %v7441 = vunpack.c.l.bf16 %v6963
        %v7442 = vunpack.c.l.bf16 %v6964
        %v7443 = vunpack.c.l.bf16 %v6965
        %v7444 = vunpack.c.l.bf16 %v6966
        %v7445 = vunpack.c.l.bf16 %v6967
        %v7446 = vunpack.c.l.bf16 %v6968
        %v7447 = vunpack.c.l.bf16 %v6969
        %v7448 = vunpack.c.l.bf16 %v6970
        %v7449 = vunpack.c.l.bf16 %v6971
        %v7450 = vunpack.c.l.bf16 %v6972
        %v7451 = vunpack.c.l.bf16 %v6973
        %v7452 = vunpack.c.l.bf16 %v6974
        %v7453 = vunpack.c.l.bf16 %v6975
        %v7454 = vunpack.c.l.bf16 %v6976
        %v7455 = vunpack.c.l.bf16 %v6977
        %v7456 = vunpack.c.l.bf16 %v6978
        %v7457 = vunpack.c.l.bf16 %v6979
        %v7458 = vunpack.c.l.bf16 %v6980
        %v7459 = vunpack.c.l.bf16 %v6981
        %v7460 = vunpack.c.l.bf16 %v6982
        %v7461 = vunpack.c.l.bf16 %v6983
        %v7462 = vlaneseq
        %v7463 = vshrl.u32 %v7462, 7
        %v7464 = vsub.s32 0, %v7463
        %v7465 = vrot.slane %v7397, %v7464
        %v7466 = vmul.f32 %v7398, %v7465
        %v7467 = vmul.f32 %v7399, %v7465
        %v7468 = vmul.f32 %v7400, %v7465
        %v7469 = vmul.f32 %v7401, %v7465
        %v7470 = vmul.f32 %v7402, %v7465
        %v7471 = vmul.f32 %v7403, %v7465
        %v7472 = vmul.f32 %v7404, %v7465
        %v7473 = vmul.f32 %v7405, %v7465
        %v7474 = vmul.f32 %v7406, %v7465
        %v7475 = vmul.f32 %v7407, %v7465
        %v7476 = vmul.f32 %v7408, %v7465
        %v7477 = vmul.f32 %v7409, %v7465
        %v7478 = vmul.f32 %v7410, %v7465
        %v7479 = vmul.f32 %v7411, %v7465
        %v7480 = vmul.f32 %v7412, %v7465
        %v7481 = vmul.f32 %v7413, %v7465
        %v7482 = vmul.f32 %v7414, %v7465
        %v7483 = vmul.f32 %v7415, %v7465
        %v7484 = vmul.f32 %v7416, %v7465
        %v7485 = vmul.f32 %v7417, %v7465
        %v7486 = vmul.f32 %v7418, %v7465
        %v7487 = vmul.f32 %v7419, %v7465
        %v7488 = vmul.f32 %v7420, %v7465
        %v7489 = vmul.f32 %v7421, %v7465
        %v7490 = vmul.f32 %v7422, %v7465
        %v7491 = vmul.f32 %v7423, %v7465
        %v7492 = vmul.f32 %v7424, %v7465
        %v7493 = vmul.f32 %v7425, %v7465
        %v7494 = vmul.f32 %v7426, %v7465
        %v7495 = vmul.f32 %v7427, %v7465
        %v7496 = vmul.f32 %v7428, %v7465
        %v7497 = vmul.f32 %v7429, %v7465
        %v7498 = vmul.f32 %v7430, %v7465
        %v7499 = vmul.f32 %v7431, %v7465
        %v7500 = vmul.f32 %v7432, %v7465
        %v7501 = vmul.f32 %v7433, %v7465
        %v7502 = vmul.f32 %v7434, %v7465
        %v7503 = vmul.f32 %v7435, %v7465
        %v7504 = vmul.f32 %v7436, %v7465
        %v7505 = vmul.f32 %v7437, %v7465
        %v7506 = vmul.f32 %v7438, %v7465
        %v7507 = vmul.f32 %v7439, %v7465
        %v7508 = vmul.f32 %v7440, %v7465
        %v7509 = vmul.f32 %v7441, %v7465
        %v7510 = vmul.f32 %v7442, %v7465
        %v7511 = vmul.f32 %v7443, %v7465
        %v7512 = vmul.f32 %v7444, %v7465
        %v7513 = vmul.f32 %v7445, %v7465
        %v7514 = vmul.f32 %v7446, %v7465
        %v7515 = vmul.f32 %v7447, %v7465
        %v7516 = vmul.f32 %v7448, %v7465
        %v7517 = vmul.f32 %v7449, %v7465
        %v7518 = vmul.f32 %v7450, %v7465
        %v7519 = vmul.f32 %v7451, %v7465
        %v7520 = vmul.f32 %v7452, %v7465
        %v7521 = vmul.f32 %v7453, %v7465
        %v7522 = vmul.f32 %v7454, %v7465
        %v7523 = vmul.f32 %v7455, %v7465
        %v7524 = vmul.f32 %v7456, %v7465
        %v7525 = vmul.f32 %v7457, %v7465
        %v7526 = vmul.f32 %v7458, %v7465
        %v7527 = vmul.f32 %v7459, %v7465
        %v7528 = vmul.f32 %v7460, %v7465
        %v7529 = vmul.f32 %v7461, %v7465
        %v7530 = vpack.c.bf16 %v7467, %v7466
        %v7531 = vpack.c.bf16 %v7469, %v7468
        %v7532 = vpack.c.bf16 %v7471, %v7470
        %v7533 = vpack.c.bf16 %v7473, %v7472
        %v7534 = vpack.c.bf16 %v7475, %v7474
        %v7535 = vpack.c.bf16 %v7477, %v7476
        %v7536 = vpack.c.bf16 %v7479, %v7478
        %v7537 = vpack.c.bf16 %v7481, %v7480
        %v7538 = vpack.c.bf16 %v7483, %v7482
        %v7539 = vpack.c.bf16 %v7485, %v7484
        %v7540 = vpack.c.bf16 %v7487, %v7486
        %v7541 = vpack.c.bf16 %v7489, %v7488
        %v7542 = vpack.c.bf16 %v7491, %v7490
        %v7543 = vpack.c.bf16 %v7493, %v7492
        %v7544 = vpack.c.bf16 %v7495, %v7494
        %v7545 = vpack.c.bf16 %v7497, %v7496
        %v7546 = vpack.c.bf16 %v7499, %v7498
        %v7547 = vpack.c.bf16 %v7501, %v7500
        %v7548 = vpack.c.bf16 %v7503, %v7502
        %v7549 = vpack.c.bf16 %v7505, %v7504
        %v7550 = vpack.c.bf16 %v7507, %v7506
        %v7551 = vpack.c.bf16 %v7509, %v7508
        %v7552 = vpack.c.bf16 %v7511, %v7510
        %v7553 = vpack.c.bf16 %v7513, %v7512
        %v7554 = vpack.c.bf16 %v7515, %v7514
        %v7555 = vpack.c.bf16 %v7517, %v7516
        %v7556 = vpack.c.bf16 %v7519, %v7518
        %v7557 = vpack.c.bf16 %v7521, %v7520
        %v7558 = vpack.c.bf16 %v7523, %v7522
        %v7559 = vpack.c.bf16 %v7525, %v7524
        %v7560 = vpack.c.bf16 %v7527, %v7526
        %v7561 = vpack.c.bf16 %v7529, %v7528
        %v7594 = vunpack.c.l.b16 %v7530
        %v7595 = vunpack.c.h.b16 %v7530
        %v7596 = vunpack.c.l.b16 %v7531
        %v7597 = vunpack.c.h.b16 %v7531
        %v7598 = vunpack.c.l.b16 %v7532
        %v7599 = vunpack.c.h.b16 %v7532
        %v7600 = vunpack.c.l.b16 %v7533
        %v7601 = vunpack.c.h.b16 %v7533
        %v7602 = vunpack.c.l.b16 %v7534
        %v7603 = vunpack.c.h.b16 %v7534
        %v7604 = vunpack.c.l.b16 %v7535
        %v7605 = vunpack.c.h.b16 %v7535
        %v7606 = vunpack.c.l.b16 %v7536
        %v7607 = vunpack.c.h.b16 %v7536
        %v7608 = vunpack.c.l.b16 %v7537
        %v7609 = vunpack.c.h.b16 %v7537
        %v7610 = vunpack.c.l.b16 %v7538
        %v7611 = vunpack.c.h.b16 %v7538
        %v7612 = vunpack.c.l.b16 %v7539
        %v7613 = vunpack.c.h.b16 %v7539
        %v7614 = vunpack.c.l.b16 %v7540
        %v7615 = vunpack.c.h.b16 %v7540
        %v7616 = vunpack.c.l.b16 %v7541
        %v7617 = vunpack.c.h.b16 %v7541
        %v7618 = vunpack.c.l.b16 %v7542
        %v7619 = vunpack.c.h.b16 %v7542
        %v7620 = vunpack.c.l.b16 %v7543
        %v7621 = vunpack.c.h.b16 %v7543
        %v7622 = vunpack.c.l.b16 %v7544
        %v7623 = vunpack.c.h.b16 %v7544
        %v7624 = vunpack.c.l.b16 %v7545
        %v7625 = vunpack.c.h.b16 %v7545
        %v7626 = vunpack.c.l.b16 %v7546
        %v7627 = vunpack.c.h.b16 %v7546
        %v7628 = vunpack.c.l.b16 %v7547
        %v7629 = vunpack.c.h.b16 %v7547
        %v7630 = vunpack.c.l.b16 %v7548
        %v7631 = vunpack.c.h.b16 %v7548
        %v7632 = vunpack.c.l.b16 %v7549
        %v7633 = vunpack.c.h.b16 %v7549
        %v7634 = vunpack.c.l.b16 %v7550
        %v7635 = vunpack.c.h.b16 %v7550
        %v7636 = vunpack.c.l.b16 %v7551
        %v7637 = vunpack.c.h.b16 %v7551
        %v7638 = vunpack.c.l.b16 %v7552
        %v7639 = vunpack.c.h.b16 %v7552
        %v7640 = vunpack.c.l.b16 %v7553
        %v7641 = vunpack.c.h.b16 %v7553
        %v7642 = vunpack.c.l.b16 %v7554
        %v7643 = vunpack.c.h.b16 %v7554
        %v7644 = vunpack.c.l.b16 %v7555
        %v7645 = vunpack.c.h.b16 %v7555
        %v7646 = vunpack.c.l.b16 %v7556
        %v7647 = vunpack.c.h.b16 %v7556
        %v7648 = vunpack.c.l.b16 %v7557
        %v7649 = vunpack.c.h.b16 %v7557
        %v7650 = vunpack.c.l.b16 %v7558
        %v7651 = vunpack.c.h.b16 %v7558
        %v7652 = vunpack.c.l.b16 %v7559
        %v7653 = vunpack.c.h.b16 %v7559
        %v7654 = vunpack.c.l.b16 %v7560
        %v7655 = vunpack.c.h.b16 %v7560
        %v7656 = vunpack.c.l.b16 %v7561
        %v7657 = vunpack.c.h.b16 %v7561
        %v7658 = vpack.c.b16 %v7594, %v7594
        %v7659 = vpack.c.b16 %v7595, %v7595
        %v7660 = vpack.c.b16 %v7596, %v7596
        %v7661 = vpack.c.b16 %v7597, %v7597
        %v7662 = vpack.c.b16 %v7598, %v7598
        %v7663 = vpack.c.b16 %v7599, %v7599
        %v7664 = vpack.c.b16 %v7600, %v7600
        %v7665 = vpack.c.b16 %v7601, %v7601
        %v7666 = vpack.c.b16 %v7602, %v7602
        %v7667 = vpack.c.b16 %v7603, %v7603
        %v7668 = vpack.c.b16 %v7604, %v7604
        %v7669 = vpack.c.b16 %v7605, %v7605
        %v7670 = vpack.c.b16 %v7606, %v7606
        %v7671 = vpack.c.b16 %v7607, %v7607
        %v7672 = vpack.c.b16 %v7608, %v7608
        %v7673 = vpack.c.b16 %v7609, %v7609
        %v7674 = vpack.c.b16 %v7610, %v7610
        %v7675 = vpack.c.b16 %v7611, %v7611
        %v7676 = vpack.c.b16 %v7612, %v7612
        %v7677 = vpack.c.b16 %v7613, %v7613
        %v7678 = vpack.c.b16 %v7614, %v7614
        %v7679 = vpack.c.b16 %v7615, %v7615
        %v7680 = vpack.c.b16 %v7616, %v7616
        %v7681 = vpack.c.b16 %v7617, %v7617
        %v7682 = vpack.c.b16 %v7618, %v7618
        %v7683 = vpack.c.b16 %v7619, %v7619
        %v7684 = vpack.c.b16 %v7620, %v7620
        %v7685 = vpack.c.b16 %v7621, %v7621
        %v7686 = vpack.c.b16 %v7622, %v7622
        %v7687 = vpack.c.b16 %v7623, %v7623
        %v7688 = vpack.c.b16 %v7624, %v7624
        %v7689 = vpack.c.b16 %v7625, %v7625
        %v7690 = vpack.c.b16 %v7626, %v7626
        %v7691 = vpack.c.b16 %v7627, %v7627
        %v7692 = vpack.c.b16 %v7628, %v7628
        %v7693 = vpack.c.b16 %v7629, %v7629
        %v7694 = vpack.c.b16 %v7630, %v7630
        %v7695 = vpack.c.b16 %v7631, %v7631
        %v7696 = vpack.c.b16 %v7632, %v7632
        %v7697 = vpack.c.b16 %v7633, %v7633
        %v7698 = vpack.c.b16 %v7634, %v7634
        %v7699 = vpack.c.b16 %v7635, %v7635
        %v7700 = vpack.c.b16 %v7636, %v7636
        %v7701 = vpack.c.b16 %v7637, %v7637
        %v7702 = vpack.c.b16 %v7638, %v7638
        %v7703 = vpack.c.b16 %v7639, %v7639
        %v7704 = vpack.c.b16 %v7640, %v7640
        %v7705 = vpack.c.b16 %v7641, %v7641
        %v7706 = vpack.c.b16 %v7642, %v7642
        %v7707 = vpack.c.b16 %v7643, %v7643
        %v7708 = vpack.c.b16 %v7644, %v7644
        %v7709 = vpack.c.b16 %v7645, %v7645
        %v7710 = vpack.c.b16 %v7646, %v7646
        %v7711 = vpack.c.b16 %v7647, %v7647
        %v7712 = vpack.c.b16 %v7648, %v7648
        %v7713 = vpack.c.b16 %v7649, %v7649
        %v7714 = vpack.c.b16 %v7650, %v7650
        %v7715 = vpack.c.b16 %v7651, %v7651
        %v7716 = vpack.c.b16 %v7652, %v7652
        %v7717 = vpack.c.b16 %v7653, %v7653
        %v7718 = vpack.c.b16 %v7654, %v7654
        %v7719 = vpack.c.b16 %v7655, %v7655
        %v7720 = vpack.c.b16 %v7656, %v7656
        %v7721 = vpack.c.b16 %v7657, %v7657
        %7786 = vst [vmem:[%s271] sm:$0xf] %v7658
        %7787 = vst [vmem:[%s271 + $0x4] sm:$0xf] %v7659
        %7788 = vst [vmem:[%s271 + $0x8] sm:$0xf] %v7660
        %7789 = vst [vmem:[%s271 + $0xc] sm:$0xf] %v7661
        %7790 = vst [vmem:[%s271 + $0x10] sm:$0xf] %v7662
        %7791 = vst [vmem:[%s271 + $0x14] sm:$0xf] %v7663
        %7792 = vst [vmem:[%s271 + $0x18] sm:$0xf] %v7664
        %7793 = vst [vmem:[%s271 + $0x1c] sm:$0xf] %v7665
        %7794 = vst [vmem:[%s271 + $0x20] sm:$0xf] %v7666
        %7795 = vst [vmem:[%s271 + $0x24] sm:$0xf] %v7667
        %7796 = vst [vmem:[%s271 + $0x28] sm:$0xf] %v7668
        %7797 = vst [vmem:[%s271 + $0x2c] sm:$0xf] %v7669
        %7798 = vst [vmem:[%s271 + $0x30] sm:$0xf] %v7670
        %7799 = vst [vmem:[%s271 + $0x34] sm:$0xf] %v7671
        %7800 = vst [vmem:[%s271 + $0x38] sm:$0xf] %v7672
        %7801 = vst [vmem:[%s271 + $0x3c] sm:$0xf] %v7673
        %7802 = vst [vmem:[%s271 + $0x40] sm:$0xf] %v7674
        %7803 = vst [vmem:[%s271 + $0x44] sm:$0xf] %v7675
        %7804 = vst [vmem:[%s271 + $0x48] sm:$0xf] %v7676
        %7805 = vst [vmem:[%s271 + $0x4c] sm:$0xf] %v7677
        %7806 = vst [vmem:[%s271 + $0x50] sm:$0xf] %v7678
        %7807 = vst [vmem:[%s271 + $0x54] sm:$0xf] %v7679
        %7808 = vst [vmem:[%s271 + $0x58] sm:$0xf] %v7680
        %7809 = vst [vmem:[%s271 + $0x5c] sm:$0xf] %v7681
        %7810 = vst [vmem:[%s271 + $0x60] sm:$0xf] %v7682
        %7811 = vst [vmem:[%s271 + $0x64] sm:$0xf] %v7683
        %7812 = vst [vmem:[%s271 + $0x68] sm:$0xf] %v7684
        %7813 = vst [vmem:[%s271 + $0x6c] sm:$0xf] %v7685
        %7814 = vst [vmem:[%s271 + $0x70] sm:$0xf] %v7686
        %7815 = vst [vmem:[%s271 + $0x74] sm:$0xf] %v7687
        %7816 = vst [vmem:[%s271 + $0x78] sm:$0xf] %v7688
        %7817 = vst [vmem:[%s271 + $0x7c] sm:$0xf] %v7689
        %7818 = vst [vmem:[%s271 + $0x80] sm:$0xf] %v7690
        %7819 = vst [vmem:[%s271 + $0x84] sm:$0xf] %v7691
        %7820 = vst [vmem:[%s271 + $0x88] sm:$0xf] %v7692
        %7821 = vst [vmem:[%s271 + $0x8c] sm:$0xf] %v7693
        %7822 = vst [vmem:[%s271 + $0x90] sm:$0xf] %v7694
        %7823 = vst [vmem:[%s271 + $0x94] sm:$0xf] %v7695
        %7824 = vst [vmem:[%s271 + $0x98] sm:$0xf] %v7696
        %7825 = vst [vmem:[%s271 + $0x9c] sm:$0xf] %v7697
        %7826 = vst [vmem:[%s271 + $0xa0] sm:$0xf] %v7698
        %7827 = vst [vmem:[%s271 + $0xa4] sm:$0xf] %v7699
        %7828 = vst [vmem:[%s271 + $0xa8] sm:$0xf] %v7700
        %7829 = vst [vmem:[%s271 + $0xac] sm:$0xf] %v7701
        %7830 = vst [vmem:[%s271 + $0xb0] sm:$0xf] %v7702
        %7831 = vst [vmem:[%s271 + $0xb4] sm:$0xf] %v7703
        %7832 = vst [vmem:[%s271 + $0xb8] sm:$0xf] %v7704
        %7833 = vst [vmem:[%s271 + $0xbc] sm:$0xf] %v7705
        %7834 = vst [vmem:[%s271 + $0xc0] sm:$0xf] %v7706
        %7835 = vst [vmem:[%s271 + $0xc4] sm:$0xf] %v7707
        %7836 = vst [vmem:[%s271 + $0xc8] sm:$0xf] %v7708
        %7837 = vst [vmem:[%s271 + $0xcc] sm:$0xf] %v7709
        %7838 = vst [vmem:[%s271 + $0xd0] sm:$0xf] %v7710
        %7839 = vst [vmem:[%s271 + $0xd4] sm:$0xf] %v7711
        %7840 = vst [vmem:[%s271 + $0xd8] sm:$0xf] %v7712
        %7841 = vst [vmem:[%s271 + $0xdc] sm:$0xf] %v7713
        %7842 = vst [vmem:[%s271 + $0xe0] sm:$0xf] %v7714
        %7843 = vst [vmem:[%s271 + $0xe4] sm:$0xf] %v7715
        %7844 = vst [vmem:[%s271 + $0xe8] sm:$0xf] %v7716
        %7845 = vst [vmem:[%s271 + $0xec] sm:$0xf] %v7717
        %7846 = vst [vmem:[%s271 + $0xf0] sm:$0xf] %v7718
        %7847 = vst [vmem:[%s271 + $0xf4] sm:$0xf] %v7719
        %7848 = vst [vmem:[%s271 + $0xf8] sm:$0xf] %v7720
        %7849 = vst [vmem:[%s271 + $0xfc] sm:$0xf] %v7721
        %s7850 = sand.u32 %s181, 1
        %s7851 = scalar_lea.sflag [#allocation5], %s7850
        %s7852 = sand.u32 %s181, 1
        %s7853 = smul.addr %s7852, 256
        %s7854 = scalar_lea.vmem [#allocation4], %s7853
        // Predicated region
        $region49: #{tpu_custom_call.1} parent=47 // pred_check
          %p7855 = pneg %p191
        $region50: #{tpu_custom_call.1} parent=47 // pred_check_branch
          %7857 = sbr.rel (%p7855) target = $region52
        $region51: #{tpu_custom_call.1} parent=47 // pred_region
          %s7859 = ssub.s32 4096, 4096
          %7860 = vsyncadd %s7851, %s7859
          %s7861 = smul.addr %s21, 64
          %s7862 = smul.addr %s7861, 64
          %s7863 = scalar_lea.hbm %s7, %s7862
          %s7864 = sshll.u32 %s7854, 4
          %s7865 = int_to_ptr.vmem [resolvable:$true] %s7864
          %7870 = dma.vmem_to_hbm [thread:$0]  %s7865, 4096, %s7863, %s7851, 64, 64, 4
        $region52: #{tpu_custom_call.1} parent=47 // pred_fallthru
          _
      $region48: #{tpu_custom_call.1} parent=5 // pred_fallthru
        _
      %p7871 = scmp.le.s32.totalorder 2, %s16
      // Predicated region
      $region53: #{tpu_custom_call.1} parent=5 // pred_check
        %p7872 = pneg %p7871
      $region54: #{tpu_custom_call.1} parent=5 // pred_check_branch
        %7874 = sbr.rel (%p7872) target = $region56
      $region55: #{tpu_custom_call.1} parent=5 // pred_region
        %s7875 = ssub.s32 %s16, 2
        // Predicated region
        $region57: #{tpu_custom_call.1} parent=55 // pred_check
          %p7876 = pneg %p197
        $region58: #{tpu_custom_call.1} parent=55 // pred_check_branch
          %7878 = sbr.rel (%p7876) target = $region60
        $region59: #{tpu_custom_call.1} parent=55 // pred_region
          %s7879 = sand.u32 %s182, 1
          %s7880 = scalar_lea.sflag [#allocation5], %s7879
          %s7881 = sand.u32 %s182, 1
          %s7882 = smul.addr %s7881, 256
          %s7883 = scalar_lea.vmem [#allocation4], %s7882
          %7884 = dma.done %s7880, 4096
        $region60: #{tpu_custom_call.1} parent=55 // pred_fallthru
          _
      $region56: #{tpu_custom_call.1} parent=5 // pred_fallthru
        _
    $region6: #{tpu_custom_call.1} parent=1 // loop_footer
      %s20 = sadd.s32 1, %s16
    $region7: #{tpu_custom_call.1} parent=1 // loop_footer_branch
      %15 = sbr.rel target = $region3
    $region8: #{tpu_custom_call.1} parent=1 // loop_exit
      _
    %7885 = vsyncpa [#allocation5], 1
    %s7886 = scalar_lea.sflag [#allocation5], 1
    %7887 = vsyncpa %s7886, 1

</llo_original>
